<compile_context>
chip_gen: v7x
topology: tpu7x:2x2x1
jax: 0.10.0
libtpu: 0.0.40
codegen_flags: <defaults>
</compile_context>

<pallas_src>
import functools

import jax
import jax.numpy as jnp
from jax import lax
from jax.experimental import pallas as pl
from jax.experimental.pallas import tpu as pltpu


# ----------------------------------------------------------------------------
# Hardware / tiling helpers
# ----------------------------------------------------------------------------
def _vmem_capacity_bytes():
    try:
        cap = int(pltpu.get_tpu_info().vmem_capacity_bytes)
        if cap > 0:
            return cap
    except Exception:
        pass
    return 64 * 1024 * 1024   # conservative default (v7x per-core VMEM)


def _pass1_tile_rows(hin, win, cin, cout, budget):
    """Largest original-image row count per pass-1 tile fitting the VMEM budget."""
    wp = win + 2
    for tr in range(hin, 0, -1):
        work = (2 * ((tr + 2) * wp * cin * 2)     # bf16 halo input tile (double-buffered)
                + 2 * (72 * cin * cout)           # bf16 folded weight (double-buffered)
                + 2 * (8 * tr * win * cout)       # bf16 y tile (double-buffered)
                + 16 * tr * win * cout            # f32 accumulator + centered temp
                + 24 * tr * win * cin)            # patch-slice temporaries
        if work <= budget:
            return tr
    return 1


def _pass2_row_mult(T, base_rows, wcols, budget):
    """Pick m | T so pass-2 blocks span m*base_rows rows and fit the budget."""
    per_row = 20 * wcols     # bf16 in + f32 out (double-buffered) + f32 temps
    cap = max(1, budget // max(per_row * base_rows, 1))
    for m in range(min(T, cap), 0, -1):
        if T % m == 0 and (m == T or (base_rows * m) % 8 == 0):
            return m
    return T


# ----------------------------------------------------------------------------
# Weight fold
# ----------------------------------------------------------------------------
def _subpixel_weights(w_oihw):
    """Fold Upsample(2x) + ReplicationPad2d(1) + Conv2d(3x3) into per-tap
    sub-pixel weights of shape (2, 3, 3, Cin, 2*Cout) such that

      out[n, 2i+a, 2j+b, co] =
          sum_{ty,tx,ci} xpad[n, i+ty, j+tx, ci] * W[a, ty, tx, ci, b*Cout+co]

    where xpad is the edge-padded ORIGINAL-resolution NHWC image."""
    Cout, Cin, _, _ = w_oihw.shape
    w = w_oihw.astype(jnp.float32)
    wbig = jnp.zeros((2, 3, 3, Cin, 2, Cout), jnp.float32)
    for a in range(2):
        for b in range(2):
            for ky in range(3):
                for kx in range(3):
                    ty = (a + ky + 1) // 2
                    tx = (b + kx + 1) // 2
                    wbig = wbig.at[a, ty, tx, :, b, :].add(w[:, :, ky, kx].T)
    return wbig.reshape(2, 3, 3, Cin, 2 * Cout)


# Structurally non-zero padded-original row taps per output sub-pixel row a.
_TAP_ROWS = ((0, 1), (1, 2))


# ----------------------------------------------------------------------------
# Pass 1: in-kernel im2col sub-pixel conv (bf16 MXU, f32 acc) + BN statistics
# ----------------------------------------------------------------------------
def _conv_stats_kernel(x_ref, w_ref, y_ref, sum_ref, m2_ref, *,
                       tr, win, cin, cout, hin, nrt):
    # x_ref  : (tr+2, win+2, cin)        bf16 halo row-tile of edge-padded input
    # w_ref  : (2, 3, 3, cin, 2*cout)    bf16 folded sub-pixel weights
    # y_ref  : (tr, 2, win, 2*cout)      bf16 conv output, columns = (b, cout)
    # sum_ref: (2, 2*cout)               f32 per-tile column sums (row = a)
    # m2_ref : (2, 2*cout)               f32 per-tile centered sum-of-squares
    r = pl.program_id(0) % nrt
    valid_rows = jnp.minimum(tr, hin - r * tr)        # rows inside the real image
    n_valid = valid_rows * win
    inv_n = 1.0 / n_valid.astype(jnp.float32)

    for a in (0, 1):
        acc = jnp.zeros((tr * win, 2 * cout), jnp.float32)
        for ty in _TAP_ROWS[a]:
            for tx in range(3):
                xs = x_ref[ty:ty + tr, tx:tx + win, :].reshape(tr * win, cin)
                acc = acc + jnp.dot(xs, w_ref[a, ty, tx],
                                    preferred_element_type=jnp.float32)
        y_ref[:, a, :, :] = acc.reshape(tr, win, 2 * cout).astype(y_ref.dtype)

        # BN statistics over valid rows only (rows of H-padding tiles masked out).
        mask = lax.broadcasted_iota(jnp.int32, acc.shape, 0) < n_valid
        accm = jnp.where(mask, acc, 0.0)
        colsum = jnp.sum(accm, axis=0, keepdims=True)             # (1, 2*cout)
        centered = jnp.where(mask, acc - colsum * inv_n, 0.0)
        sum_ref[a:a + 1, :] = colsum
        m2_ref[a:a + 1, :] = jnp.sum(centered * centered, axis=0, keepdims=True)


# ----------------------------------------------------------------------------
# Pass 2: folded BatchNorm (scale/shift) + LeakyReLU, lane-dense layout
# ----------------------------------------------------------------------------
def _bn_lrelu_kernel(y_ref, scale_ref, shift_ref, o_ref, *, neg_slope):
    y = y_ref[...].astype(jnp.float32) * scale_ref[...] + shift_ref[...]
    o_ref[...] = jnp.where(y >= 0, y, neg_slope * y)


# ----------------------------------------------------------------------------
# Wrapper
# ----------------------------------------------------------------------------
def decoder_block(x_nchw, w_oihw, bias, gamma, beta, *, eps=1e-3,
                  neg_slope=0.2):
    # Train-mode BatchNorm subtracts the batch mean right after the conv, so a
    # per-channel constant bias cancels exactly -> drop the add.  (If eval-mode
    # running-stats BN were needed, the bias would have to be reinstated.)
    del bias

    N, Cin, Hin, Win = x_nchw.shape
    Cout = w_oihw.shape[0]
    H, W = 2 * Hin, 2 * Win
    Wp = Win + 2
    C2 = 2 * Cout
    Wcols = Win * C2                  # = W * Cout  (lane-dense pass-2 width)

    cap = _vmem_capacity_bytes()
    budget = min(int(cap * 0.40), 48 * 1024 * 1024)
    vmem_limit = min(int(cap * 0.85), 110 * 1024 * 1024)

    TR = _pass1_tile_rows(Hin, Win, Cin, Cout, budget)
    nrt = pl.cdiv(Hin, TR)
    Hpad = nrt * TR
    T = N * nrt

    # --- boundary layout: cast to bf16 BEFORE any layout pass; every reshape
    # below is a contiguous merge/split (free) ---
    xb = x_nchw.astype(jnp.bfloat16)
    x = jnp.transpose(xb, (0, 2, 3, 1))                                  # NHWC
    xpad = jnp.pad(x, ((0, 0), (1, 1), (1, 1), (0, 0)), mode="edge")
    if Hpad > Hin:
        # Zero rows: their conv outputs are masked out of the BN statistics
        # and sliced off the final output.
        xpad = jnp.pad(xpad, ((0, 0), (0, Hpad - Hin), (0, 0), (0, 0)))
    # Row tiles with a 2-row halo (tiny duplication of the cheapest tensor).
    x_tiles = jnp.stack([xpad[:, r * TR:r * TR + TR + 2] for r in range(nrt)],
                        axis=1).reshape(T, TR + 2, Wp, Cin)

    wbig = _subpixel_weights(w_oihw).astype(jnp.bfloat16)   # (2,3,3,Cin,2*Cout)

    kern1 = functools.partial(_conv_stats_kernel, tr=TR, win=Win, cin=Cin,
                              cout=Cout, hin=Hin, nrt=nrt)
    y, sums, m2s = pl.pallas_call(
        kern1,
        out_shape=(
            jax.ShapeDtypeStruct((T, TR, 2, Win, C2), jnp.bfloat16),
            jax.ShapeDtypeStruct((T, 2, C2), jnp.float32),
            jax.ShapeDtypeStruct((T, 2, C2), jnp.float32),
        ),
        grid=(T,),
        in_specs=[
            pl.BlockSpec((None, TR + 2, Wp, Cin), lambda t: (t, 0, 0, 0)),
            pl.BlockSpec((2, 3, 3, Cin, C2), lambda t: (0, 0, 0, 0, 0)),
        ],
        out_specs=(
            pl.BlockSpec((None, TR, 2, Win, C2), lambda t: (t, 0, 0, 0, 0)),
            pl.BlockSpec((None, 2, C2), lambda t: (t, 0, 0)),
            pl.BlockSpec((None, 2, C2), lambda t: (t, 0, 0)),
        ),
        compiler_params=pltpu.CompilerParams(
            dimension_semantics=("parallel",),
            vmem_limit_bytes=vmem_limit),
    )(x_tiles, wbig)

    # --- global train-mode BN statistics: parallel Chan merge of per-tile
    # centered moments (no E[x^2]-E[x]^2 cancellation across the batch) ---
    s4 = sums.reshape(T, 2, 2, Cout)
    m4 = m2s.reshape(T, 2, 2, Cout)
    r_idx = jnp.arange(T) % nrt
    n_g = (jnp.minimum(TR, Hin - r_idx * TR) * Win).astype(jnp.float32)
    count = jnp.float32(N * H * W)
    mean_c = s4.sum(axis=(0, 1, 2)) / count                       # (Cout,)
    mean_g = s4 / n_g[:, None, None, None]
    dev = mean_g - mean_c
    var_c = (m4 + n_g[:, None, None, None] * dev * dev).sum(axis=(0, 1, 2)) / count
    scale_c = gamma.astype(jnp.float32) * lax.rsqrt(var_c + eps)
    shift_c = beta.astype(jnp.float32) - mean_c * scale_c
    scale_row = jnp.tile(scale_c, 2 * Win).reshape(1, Wcols)
    shift_row = jnp.tile(shift_c, 2 * Win).reshape(1, Wcols)

    # --- pass 2: folded BN + LeakyReLU on a lane-dense (rows, W*Cout) view ---
    rows = T * TR * 2                                             # = N * Hpad * 2
    y2 = y.reshape(rows, Wcols)                                   # free reshape
    m = _pass2_row_mult(T, 2 * TR, Wcols, budget)
    tr2 = m * 2 * TR
    out2 = pl.pallas_call(
        functools.partial(_bn_lrelu_kernel, neg_slope=neg_slope),
        out_shape=jax.ShapeDtypeStruct((rows, Wcols), jnp.float32),
        grid=(rows // tr2,),
        in_specs=[
            pl.BlockSpec((tr2, Wcols), lambda i: (i, 0)),
            pl.BlockSpec((1, Wcols), lambda i: (0, 0)),
            pl.BlockSpec((1, Wcols), lambda i: (0, 0)),
        ],
        out_specs=pl.BlockSpec((tr2, Wcols), lambda i: (i, 0)),
        compiler_params=pltpu.CompilerParams(
            dimension_semantics=("parallel",),
            vmem_limit_bytes=vmem_limit),
    )(y2, scale_row, shift_row)

    # Sub-pixel layout -> NHWC is a pure reshape; drop H-padding rows; one
    # NHWC -> NCHW transpose at the model boundary.
    out = out2.reshape(N, 2 * Hpad, W, Cout)[:, :H]
    return jnp.transpose(out, (0, 3, 1, 2))


# ----------------------------------------------------------------------------
# Pure-JAX reference (exact PyTorch semantics, incl. the bias it cancels)
# ----------------------------------------------------------------------------
def decoder_block_ref(x_nchw, w_oihw, bias, gamma, beta, *, eps=1e-3,
                      neg_slope=0.2):
    x = jnp.repeat(jnp.repeat(x_nchw, 2, axis=2), 2, axis=3)
    xpad = jnp.pad(x, ((0, 0), (0, 0), (1, 1), (1, 1)), mode="edge")
    y = lax.conv_general_dilated(
        xpad, w_oihw, window_strides=(1, 1), padding="VALID",
        dimension_numbers=("NCHW", "OIHW", "NCHW"))
    y = y + bias[None, :, None, None]
    mean = jnp.mean(y, axis=(0, 2, 3), keepdims=True)
    var = jnp.mean(jnp.square(y - mean), axis=(0, 2, 3), keepdims=True)
    y = (y - mean) / jnp.sqrt(var + eps)
    y = y * gamma[None, :, None, None] + beta[None, :, None, None]
    return jnp.where(y >= 0, y, neg_slope * y)


if __name__ == "__main__":
    # Small shapes: batch=2, in_channels=4, out_channels=8, spatial=16x16.
    N, Cin, Cout, S = 2, 4, 8, 16
    key = jax.random.PRNGKey(0)
    kx, kw, kb, kg, kbe = jax.random.split(key, 5)

    x = jax.random.normal(kx, (N, Cin, S, S), jnp.float32)
    w = 0.1 * jax.random.normal(kw, (Cout, Cin, 3, 3), jnp.float32)
    b = 0.1 * jax.random.normal(kb, (Cout,), jnp.float32)
    gamma = 1.0 + 0.1 * jax.random.normal(kg, (Cout,), jnp.float32)
    beta = 0.1 * jax.random.normal(kbe, (Cout,), jnp.float32)

    fwd = jax.jit(lambda *args: decoder_block(*args, eps=1e-3))
    out = jax.block_until_ready(fwd(x, w, b, gamma, beta))

    ref = decoder_block_ref(x, w, b, gamma, beta, eps=1e-3)
    assert out.shape == (N, Cout, 2 * S, 2 * S), out.shape
    # Tolerance reflects bf16 MXU operands + bf16 conv-output storage
    # (normalized output is ~unit scale, so a few 1e-3 of rounding is expected).
    assert jnp.allclose(out, ref, atol=2e-2, rtol=2e-2), \
        float(jnp.max(jnp.abs(out - ref)))

    print("KERNEL_OK")
</pallas_src>

<mosaic_0001>
module attributes {stable_mosaic.version = 11 : i64} {
  func.func @_conv_stats_kernel(%arg0: i32, %arg1: memref<1x18x18x4xbf16, #tpu.memory_space<vmem>>, %arg2: memref<2x3x3x4x16xbf16, #tpu.memory_space<vmem>>, %arg3: memref<1x16x2x16x16xbf16, #tpu.memory_space<vmem>>, %arg4: memref<1x2x16xf32, #tpu.memory_space<vmem>>, %arg5: memref<1x2x16xf32, #tpu.memory_space<vmem>>) attributes {dimension_semantics = [#tpu.dimension_semantics<parallel>], iteration_bounds = array<i64: 2>, scalar_prefetch = 0 : i64, scratch_operands = 0 : i64, tpu.core_type = #tpu.core_type<tc>, window_params = [{transform_indices = @transform_0, window_bounds = array<i64: 1, 18, 18, 4>}, {pipeline_mode = #tpu.pipeline_mode<synchronous>, transform_indices = @transform_1, window_bounds = array<i64: 2, 3, 3, 4, 16>}, {transform_indices = @transform_2, window_bounds = array<i64: 1, 16, 2, 16, 16>}, {transform_indices = @transform_3, window_bounds = array<i64: 1, 2, 16>}, {transform_indices = @transform_4, window_bounds = array<i64: 1, 2, 16>}]} {
    %c1_i32 = arith.constant 1 : i32
    %c0_i32 = arith.constant 0 : i32
    %0 = arith.cmpi eq, %c1_i32, %c0_i32 : i32
    %c1_i32_0 = arith.constant 1 : i32
    %1 = arith.select %0, %c1_i32_0, %c1_i32 : i32
    %2 = arith.remsi %arg0, %1 : i32
    %c0_i32_1 = arith.constant 0 : i32
    %3 = arith.cmpi ne, %2, %c0_i32_1 : i32
    %c0_i32_2 = arith.constant 0 : i32
    %4 = arith.cmpi slt, %2, %c0_i32_2 : i32
    %c0_i32_3 = arith.constant 0 : i32
    %5 = arith.cmpi slt, %1, %c0_i32_3 : i32
    %6 = arith.xori %4, %5 : i1
    %7 = arith.andi %6, %3 : i1
    %8 = arith.addi %2, %1 : i32
    %9 = arith.select %7, %8, %2 : i32
    %c16_i32 = arith.constant 16 : i32
    %10 = arith.muli %9, %c16_i32 : i32
    %c16_i32_4 = arith.constant 16 : i32
    %11 = arith.subi %c16_i32_4, %10 : i32
    %c16_i32_5 = arith.constant 16 : i32
    %12 = arith.minsi %c16_i32_5, %11 : i32
    %c16_i32_6 = arith.constant 16 : i32
    %13 = arith.muli %12, %c16_i32_6 : i32
    %14 = arith.sitofp %13 : i32 to f32
    %cst = arith.constant 1.000000e+00 : f32
    %15 = arith.divf %cst, %14 : f32
    %cst_7 = arith.constant 0.000000e+00 : f32
    %16 = vector.broadcast %cst_7 : f32 to vector<256x16xf32>
    %c0 = arith.constant 0 : index
    %c0_8 = arith.constant 0 : index
    %c0_9 = arith.constant 0 : index
    %c0_10 = arith.constant 0 : index
    %17 = vector.load %arg1[%c0, %c0_8, %c0_9, %c0_10] : memref<1x18x18x4xbf16, #tpu.memory_space<vmem>>, vector<1x16x16x4xbf16>
    %18 = vector.shape_cast %17 : vector<1x16x16x4xbf16> to vector<16x16x4xbf16>
    %19 = vector.shape_cast %18 : vector<16x16x4xbf16> to vector<256x4xbf16>
    %c0_11 = arith.constant 0 : index
    %c0_12 = arith.constant 0 : index
    %c0_13 = arith.constant 0 : index
    %c0_14 = arith.constant 0 : index
    %c0_15 = arith.constant 0 : index
    %20 = vector.load %arg2[%c0_11, %c0_12, %c0_13, %c0_14, %c0_15] : memref<2x3x3x4x16xbf16, #tpu.memory_space<vmem>>, vector<1x1x1x4x16xbf16>
    %21 = vector.shape_cast %20 : vector<1x1x1x4x16xbf16> to vector<4x16xbf16>
    %cst_16 = arith.constant dense<0.000000e+00> : vector<256x16xf32>
    %22 = tpu.matmul %19, %21, %cst_16 {dimension_numbers = #tpu.dot_dimension_numbers<[1], [0], [0], [1], [0, 0, 1, 1], [], []>} : vector<256x4xbf16>, vector<4x16xbf16>, vector<256x16xf32> -> vector<256x16xf32>
    %23 = arith.addf %16, %22 : vector<256x16xf32>
    %c0_17 = arith.constant 0 : index
    %c0_18 = arith.constant 0 : index
    %c1 = arith.constant 1 : index
    %c0_19 = arith.constant 0 : index
    %24 = vector.load %arg1[%c0_17, %c0_18, %c1, %c0_19] : memref<1x18x18x4xbf16, #tpu.memory_space<vmem>>, vector<1x16x16x4xbf16>
    %25 = vector.shape_cast %24 : vector<1x16x16x4xbf16> to vector<16x16x4xbf16>
    %26 = vector.shape_cast %25 : vector<16x16x4xbf16> to vector<256x4xbf16>
    %c0_20 = arith.constant 0 : index
    %c0_21 = arith.constant 0 : index
    %c1_22 = arith.constant 1 : index
    %c0_23 = arith.constant 0 : index
    %c0_24 = arith.constant 0 : index
    %27 = vector.load %arg2[%c0_20, %c0_21, %c1_22, %c0_23, %c0_24] : memref<2x3x3x4x16xbf16, #tpu.memory_space<vmem>>, vector<1x1x1x4x16xbf16>
    %28 = vector.shape_cast %27 : vector<1x1x1x4x16xbf16> to vector<4x16xbf16>
    %cst_25 = arith.constant dense<0.000000e+00> : vector<256x16xf32>
    %29 = tpu.matmul %26, %28, %cst_25 {dimension_numbers = #tpu.dot_dimension_numbers<[1], [0], [0], [1], [0, 0, 1, 1], [], []>} : vector<256x4xbf16>, vector<4x16xbf16>, vector<256x16xf32> -> vector<256x16xf32>
    %30 = arith.addf %23, %29 : vector<256x16xf32>
    %c0_26 = arith.constant 0 : index
    %c0_27 = arith.constant 0 : index
    %c2 = arith.constant 2 : index
    %c0_28 = arith.constant 0 : index
    %31 = vector.load %arg1[%c0_26, %c0_27, %c2, %c0_28] : memref<1x18x18x4xbf16, #tpu.memory_space<vmem>>, vector<1x16x16x4xbf16>
    %32 = vector.shape_cast %31 : vector<1x16x16x4xbf16> to vector<16x16x4xbf16>
    %33 = vector.shape_cast %32 : vector<16x16x4xbf16> to vector<256x4xbf16>
    %c0_29 = arith.constant 0 : index
    %c0_30 = arith.constant 0 : index
    %c2_31 = arith.constant 2 : index
    %c0_32 = arith.constant 0 : index
    %c0_33 = arith.constant 0 : index
    %34 = vector.load %arg2[%c0_29, %c0_30, %c2_31, %c0_32, %c0_33] : memref<2x3x3x4x16xbf16, #tpu.memory_space<vmem>>, vector<1x1x1x4x16xbf16>
    %35 = vector.shape_cast %34 : vector<1x1x1x4x16xbf16> to vector<4x16xbf16>
    %cst_34 = arith.constant dense<0.000000e+00> : vector<256x16xf32>
    %36 = tpu.matmul %33, %35, %cst_34 {dimension_numbers = #tpu.dot_dimension_numbers<[1], [0], [0], [1], [0, 0, 1, 1], [], []>} : vector<256x4xbf16>, vector<4x16xbf16>, vector<256x16xf32> -> vector<256x16xf32>
    %37 = arith.addf %30, %36 : vector<256x16xf32>
    %c0_35 = arith.constant 0 : index
    %c1_36 = arith.constant 1 : index
    %c0_37 = arith.constant 0 : index
    %c0_38 = arith.constant 0 : index
    %38 = vector.load %arg1[%c0_35, %c1_36, %c0_37, %c0_38] : memref<1x18x18x4xbf16, #tpu.memory_space<vmem>>, vector<1x16x16x4xbf16>
    %39 = vector.shape_cast %38 : vector<1x16x16x4xbf16> to vector<16x16x4xbf16>
    %40 = vector.shape_cast %39 : vector<16x16x4xbf16> to vector<256x4xbf16>
    %c0_39 = arith.constant 0 : index
    %c1_40 = arith.constant 1 : index
    %c0_41 = arith.constant 0 : index
    %c0_42 = arith.constant 0 : index
    %c0_43 = arith.constant 0 : index
    %41 = vector.load %arg2[%c0_39, %c1_40, %c0_41, %c0_42, %c0_43] : memref<2x3x3x4x16xbf16, #tpu.memory_space<vmem>>, vector<1x1x1x4x16xbf16>
    %42 = vector.shape_cast %41 : vector<1x1x1x4x16xbf16> to vector<4x16xbf16>
    %cst_44 = arith.constant dense<0.000000e+00> : vector<256x16xf32>
    %43 = tpu.matmul %40, %42, %cst_44 {dimension_numbers = #tpu.dot_dimension_numbers<[1], [0], [0], [1], [0, 0, 1, 1], [], []>} : vector<256x4xbf16>, vector<4x16xbf16>, vector<256x16xf32> -> vector<256x16xf32>
    %44 = arith.addf %37, %43 : vector<256x16xf32>
    %c0_45 = arith.constant 0 : index
    %c1_46 = arith.constant 1 : index
    %c1_47 = arith.constant 1 : index
    %c0_48 = arith.constant 0 : index
    %45 = vector.load %arg1[%c0_45, %c1_46, %c1_47, %c0_48] : memref<1x18x18x4xbf16, #tpu.memory_space<vmem>>, vector<1x16x16x4xbf16>
    %46 = vector.shape_cast %45 : vector<1x16x16x4xbf16> to vector<16x16x4xbf16>
    %47 = vector.shape_cast %46 : vector<16x16x4xbf16> to vector<256x4xbf16>
    %c0_49 = arith.constant 0 : index
    %c1_50 = arith.constant 1 : index
    %c1_51 = arith.constant 1 : index
    %c0_52 = arith.constant 0 : index
    %c0_53 = arith.constant 0 : index
    %48 = vector.load %arg2[%c0_49, %c1_50, %c1_51, %c0_52, %c0_53] : memref<2x3x3x4x16xbf16, #tpu.memory_space<vmem>>, vector<1x1x1x4x16xbf16>
    %49 = vector.shape_cast %48 : vector<1x1x1x4x16xbf16> to vector<4x16xbf16>
    %cst_54 = arith.constant dense<0.000000e+00> : vector<256x16xf32>
    %50 = tpu.matmul %47, %49, %cst_54 {dimension_numbers = #tpu.dot_dimension_numbers<[1], [0], [0], [1], [0, 0, 1, 1], [], []>} : vector<256x4xbf16>, vector<4x16xbf16>, vector<256x16xf32> -> vector<256x16xf32>
    %51 = arith.addf %44, %50 : vector<256x16xf32>
    %c0_55 = arith.constant 0 : index
    %c1_56 = arith.constant 1 : index
    %c2_57 = arith.constant 2 : index
    %c0_58 = arith.constant 0 : index
    %52 = vector.load %arg1[%c0_55, %c1_56, %c2_57, %c0_58] : memref<1x18x18x4xbf16, #tpu.memory_space<vmem>>, vector<1x16x16x4xbf16>
    %53 = vector.shape_cast %52 : vector<1x16x16x4xbf16> to vector<16x16x4xbf16>
    %54 = vector.shape_cast %53 : vector<16x16x4xbf16> to vector<256x4xbf16>
    %c0_59 = arith.constant 0 : index
    %c1_60 = arith.constant 1 : index
    %c2_61 = arith.constant 2 : index
    %c0_62 = arith.constant 0 : index
    %c0_63 = arith.constant 0 : index
    %55 = vector.load %arg2[%c0_59, %c1_60, %c2_61, %c0_62, %c0_63] : memref<2x3x3x4x16xbf16, #tpu.memory_space<vmem>>, vector<1x1x1x4x16xbf16>
    %56 = vector.shape_cast %55 : vector<1x1x1x4x16xbf16> to vector<4x16xbf16>
    %cst_64 = arith.constant dense<0.000000e+00> : vector<256x16xf32>
    %57 = tpu.matmul %54, %56, %cst_64 {dimension_numbers = #tpu.dot_dimension_numbers<[1], [0], [0], [1], [0, 0, 1, 1], [], []>} : vector<256x4xbf16>, vector<4x16xbf16>, vector<256x16xf32> -> vector<256x16xf32>
    %58 = arith.addf %51, %57 : vector<256x16xf32>
    %59 = vector.shape_cast %58 : vector<256x16xf32> to vector<16x16x16xf32>
    %60 = arith.truncf %59 : vector<16x16x16xf32> to vector<16x16x16xbf16>
    %c0_65 = arith.constant 0 : index
    %c0_66 = arith.constant 0 : index
    %c0_67 = arith.constant 0 : index
    %c0_68 = arith.constant 0 : index
    %c0_69 = arith.constant 0 : index
    %61 = vector.load %arg3[%c0_65, %c0_66, %c0_67, %c0_68, %c0_69] : memref<1x16x2x16x16xbf16, #tpu.memory_space<vmem>>, vector<1x16x1x16x16xbf16>
    %62 = vector.shape_cast %61 : vector<1x16x1x16x16xbf16> to vector<16x16x16xbf16>
    %63 = vector.shape_cast %60 : vector<16x16x16xbf16> to vector<1x16x1x16x16xbf16>
    tpu.vector_store %arg3[%c0_65, %c0_66, %c0_67, %c0_68, %c0_69], %63 {strides = array<i32>} : memref<1x16x2x16x16xbf16, #tpu.memory_space<vmem>>, vector<1x16x1x16x16xbf16>,
    %64 = tpu.iota {dimensions = array<i32: 0>} : vector<256x16xi32>
    %65 = vector.broadcast %13 : i32 to vector<256x16xi32>
    %66 = arith.cmpi slt, %64, %65 : vector<256x16xi32>
    %cst_70 = arith.constant 0.000000e+00 : f32
    %67 = vector.broadcast %cst_70 : f32 to vector<256x16xf32>
    %68 = arith.select %66, %58, %67 : vector<256x16xi1>, vector<256x16xf32>
    %cst_71 = arith.constant dense<0.000000e+00> : vector<16xf32>
    %69 = vector.multi_reduction <add>, %68, %cst_71 [0] : vector<256x16xf32> to vector<16xf32>
    %70 = vector.shape_cast %69 : vector<16xf32> to vector<1x16xf32>
    %71 = vector.broadcast %15 : f32 to vector<1x16xf32>
    %72 = arith.mulf %70, %71 : vector<1x16xf32>
    %73 = vector.broadcast %72 : vector<1x16xf32> to vector<256x16xf32>
    %74 = arith.subf %58, %73 : vector<256x16xf32>
    %cst_72 = arith.constant 0.000000e+00 : f32
    %75 = vector.broadcast %cst_72 : f32 to vector<256x16xf32>
    %76 = arith.select %66, %74, %75 : vector<256x16xi1>, vector<256x16xf32>
    %c0_73 = arith.constant 0 : index
    %c0_74 = arith.constant 0 : index
    %c0_75 = arith.constant 0 : index
    %77 = vector.load %arg4[%c0_73, %c0_74, %c0_75] : memref<1x2x16xf32, #tpu.memory_space<vmem>>, vector<1x1x16xf32>
    %78 = vector.shape_cast %77 : vector<1x1x16xf32> to vector<1x16xf32>
    %79 = vector.shape_cast %70 : vector<1x16xf32> to vector<1x1x16xf32>
    tpu.vector_store %arg4[%c0_73, %c0_74, %c0_75], %79 {strides = array<i32>} : memref<1x2x16xf32, #tpu.memory_space<vmem>>, vector<1x1x16xf32>,
    %80 = arith.mulf %76, %76 : vector<256x16xf32>
    %cst_76 = arith.constant dense<0.000000e+00> : vector<16xf32>
    %81 = vector.multi_reduction <add>, %80, %cst_76 [0] : vector<256x16xf32> to vector<16xf32>
    %82 = vector.shape_cast %81 : vector<16xf32> to vector<1x16xf32>
    %c0_77 = arith.constant 0 : index
    %c0_78 = arith.constant 0 : index
    %c0_79 = arith.constant 0 : index
    %83 = vector.load %arg5[%c0_77, %c0_78, %c0_79] : memref<1x2x16xf32, #tpu.memory_space<vmem>>, vector<1x1x16xf32>
    %84 = vector.shape_cast %83 : vector<1x1x16xf32> to vector<1x16xf32>
    %85 = vector.shape_cast %82 : vector<1x16xf32> to vector<1x1x16xf32>
    tpu.vector_store %arg5[%c0_77, %c0_78, %c0_79], %85 {strides = array<i32>} : memref<1x2x16xf32, #tpu.memory_space<vmem>>, vector<1x1x16xf32>,
    %cst_80 = arith.constant 0.000000e+00 : f32
    %86 = vector.broadcast %cst_80 : f32 to vector<256x16xf32>
    %c0_81 = arith.constant 0 : index
    %c1_82 = arith.constant 1 : index
    %c0_83 = arith.constant 0 : index
    %c0_84 = arith.constant 0 : index
    %87 = vector.load %arg1[%c0_81, %c1_82, %c0_83, %c0_84] : memref<1x18x18x4xbf16, #tpu.memory_space<vmem>>, vector<1x16x16x4xbf16>
    %88 = vector.shape_cast %87 : vector<1x16x16x4xbf16> to vector<16x16x4xbf16>
    %89 = vector.shape_cast %88 : vector<16x16x4xbf16> to vector<256x4xbf16>
    %c1_85 = arith.constant 1 : index
    %c1_86 = arith.constant 1 : index
    %c0_87 = arith.constant 0 : index
    %c0_88 = arith.constant 0 : index
    %c0_89 = arith.constant 0 : index
    %90 = vector.load %arg2[%c1_85, %c1_86, %c0_87, %c0_88, %c0_89] : memref<2x3x3x4x16xbf16, #tpu.memory_space<vmem>>, vector<1x1x1x4x16xbf16>
    %91 = vector.shape_cast %90 : vector<1x1x1x4x16xbf16> to vector<4x16xbf16>
    %cst_90 = arith.constant dense<0.000000e+00> : vector<256x16xf32>
    %92 = tpu.matmul %89, %91, %cst_90 {dimension_numbers = #tpu.dot_dimension_numbers<[1], [0], [0], [1], [0, 0, 1, 1], [], []>} : vector<256x4xbf16>, vector<4x16xbf16>, vector<256x16xf32> -> vector<256x16xf32>
    %93 = arith.addf %86, %92 : vector<256x16xf32>
    %c0_91 = arith.constant 0 : index
    %c1_92 = arith.constant 1 : index
    %c1_93 = arith.constant 1 : index
    %c0_94 = arith.constant 0 : index
    %94 = vector.load %arg1[%c0_91, %c1_92, %c1_93, %c0_94] : memref<1x18x18x4xbf16, #tpu.memory_space<vmem>>, vector<1x16x16x4xbf16>
    %95 = vector.shape_cast %94 : vector<1x16x16x4xbf16> to vector<16x16x4xbf16>
    %96 = vector.shape_cast %95 : vector<16x16x4xbf16> to vector<256x4xbf16>
    %c1_95 = arith.constant 1 : index
    %c1_96 = arith.constant 1 : index
    %c1_97 = arith.constant 1 : index
    %c0_98 = arith.constant 0 : index
    %c0_99 = arith.constant 0 : index
    %97 = vector.load %arg2[%c1_95, %c1_96, %c1_97, %c0_98, %c0_99] : memref<2x3x3x4x16xbf16, #tpu.memory_space<vmem>>, vector<1x1x1x4x16xbf16>
    %98 = vector.shape_cast %97 : vector<1x1x1x4x16xbf16> to vector<4x16xbf16>
    %cst_100 = arith.constant dense<0.000000e+00> : vector<256x16xf32>
    %99 = tpu.matmul %96, %98, %cst_100 {dimension_numbers = #tpu.dot_dimension_numbers<[1], [0], [0], [1], [0, 0, 1, 1], [], []>} : vector<256x4xbf16>, vector<4x16xbf16>, vector<256x16xf32> -> vector<256x16xf32>
    %100 = arith.addf %93, %99 : vector<256x16xf32>
    %c0_101 = arith.constant 0 : index
    %c1_102 = arith.constant 1 : index
    %c2_103 = arith.constant 2 : index
    %c0_104 = arith.constant 0 : index
    %101 = vector.load %arg1[%c0_101, %c1_102, %c2_103, %c0_104] : memref<1x18x18x4xbf16, #tpu.memory_space<vmem>>, vector<1x16x16x4xbf16>
    %102 = vector.shape_cast %101 : vector<1x16x16x4xbf16> to vector<16x16x4xbf16>
    %103 = vector.shape_cast %102 : vector<16x16x4xbf16> to vector<256x4xbf16>
    %c1_105 = arith.constant 1 : index
    %c1_106 = arith.constant 1 : index
    %c2_107 = arith.constant 2 : index
    %c0_108 = arith.constant 0 : index
    %c0_109 = arith.constant 0 : index
    %104 = vector.load %arg2[%c1_105, %c1_106, %c2_107, %c0_108, %c0_109] : memref<2x3x3x4x16xbf16, #tpu.memory_space<vmem>>, vector<1x1x1x4x16xbf16>
    %105 = vector.shape_cast %104 : vector<1x1x1x4x16xbf16> to vector<4x16xbf16>
    %cst_110 = arith.constant dense<0.000000e+00> : vector<256x16xf32>
    %106 = tpu.matmul %103, %105, %cst_110 {dimension_numbers = #tpu.dot_dimension_numbers<[1], [0], [0], [1], [0, 0, 1, 1], [], []>} : vector<256x4xbf16>, vector<4x16xbf16>, vector<256x16xf32> -> vector<256x16xf32>
    %107 = arith.addf %100, %106 : vector<256x16xf32>
    %c0_111 = arith.constant 0 : index
    %c2_112 = arith.constant 2 : index
    %c0_113 = arith.constant 0 : index
    %c0_114 = arith.constant 0 : index
    %108 = vector.load %arg1[%c0_111, %c2_112, %c0_113, %c0_114] : memref<1x18x18x4xbf16, #tpu.memory_space<vmem>>, vector<1x16x16x4xbf16>
    %109 = vector.shape_cast %108 : vector<1x16x16x4xbf16> to vector<16x16x4xbf16>
    %110 = vector.shape_cast %109 : vector<16x16x4xbf16> to vector<256x4xbf16>
    %c1_115 = arith.constant 1 : index
    %c2_116 = arith.constant 2 : index
    %c0_117 = arith.constant 0 : index
    %c0_118 = arith.constant 0 : index
    %c0_119 = arith.constant 0 : index
    %111 = vector.load %arg2[%c1_115, %c2_116, %c0_117, %c0_118, %c0_119] : memref<2x3x3x4x16xbf16, #tpu.memory_space<vmem>>, vector<1x1x1x4x16xbf16>
    %112 = vector.shape_cast %111 : vector<1x1x1x4x16xbf16> to vector<4x16xbf16>
    %cst_120 = arith.constant dense<0.000000e+00> : vector<256x16xf32>
    %113 = tpu.matmul %110, %112, %cst_120 {dimension_numbers = #tpu.dot_dimension_numbers<[1], [0], [0], [1], [0, 0, 1, 1], [], []>} : vector<256x4xbf16>, vector<4x16xbf16>, vector<256x16xf32> -> vector<256x16xf32>
    %114 = arith.addf %107, %113 : vector<256x16xf32>
    %c0_121 = arith.constant 0 : index
    %c2_122 = arith.constant 2 : index
    %c1_123 = arith.constant 1 : index
    %c0_124 = arith.constant 0 : index
    %115 = vector.load %arg1[%c0_121, %c2_122, %c1_123, %c0_124] : memref<1x18x18x4xbf16, #tpu.memory_space<vmem>>, vector<1x16x16x4xbf16>
    %116 = vector.shape_cast %115 : vector<1x16x16x4xbf16> to vector<16x16x4xbf16>
    %117 = vector.shape_cast %116 : vector<16x16x4xbf16> to vector<256x4xbf16>
    %c1_125 = arith.constant 1 : index
    %c2_126 = arith.constant 2 : index
    %c1_127 = arith.constant 1 : index
    %c0_128 = arith.constant 0 : index
    %c0_129 = arith.constant 0 : index
    %118 = vector.load %arg2[%c1_125, %c2_126, %c1_127, %c0_128, %c0_129] : memref<2x3x3x4x16xbf16, #tpu.memory_space<vmem>>, vector<1x1x1x4x16xbf16>
    %119 = vector.shape_cast %118 : vector<1x1x1x4x16xbf16> to vector<4x16xbf16>
    %cst_130 = arith.constant dense<0.000000e+00> : vector<256x16xf32>
    %120 = tpu.matmul %117, %119, %cst_130 {dimension_numbers = #tpu.dot_dimension_numbers<[1], [0], [0], [1], [0, 0, 1, 1], [], []>} : vector<256x4xbf16>, vector<4x16xbf16>, vector<256x16xf32> -> vector<256x16xf32>
    %121 = arith.addf %114, %120 : vector<256x16xf32>
    %c0_131 = arith.constant 0 : index
    %c2_132 = arith.constant 2 : index
    %c2_133 = arith.constant 2 : index
    %c0_134 = arith.constant 0 : index
    %122 = vector.load %arg1[%c0_131, %c2_132, %c2_133, %c0_134] : memref<1x18x18x4xbf16, #tpu.memory_space<vmem>>, vector<1x16x16x4xbf16>
    %123 = vector.shape_cast %122 : vector<1x16x16x4xbf16> to vector<16x16x4xbf16>
    %124 = vector.shape_cast %123 : vector<16x16x4xbf16> to vector<256x4xbf16>
    %c1_135 = arith.constant 1 : index
    %c2_136 = arith.constant 2 : index
    %c2_137 = arith.constant 2 : index
    %c0_138 = arith.constant 0 : index
    %c0_139 = arith.constant 0 : index
    %125 = vector.load %arg2[%c1_135, %c2_136, %c2_137, %c0_138, %c0_139] : memref<2x3x3x4x16xbf16, #tpu.memory_space<vmem>>, vector<1x1x1x4x16xbf16>
    %126 = vector.shape_cast %125 : vector<1x1x1x4x16xbf16> to vector<4x16xbf16>
    %cst_140 = arith.constant dense<0.000000e+00> : vector<256x16xf32>
    %127 = tpu.matmul %124, %126, %cst_140 {dimension_numbers = #tpu.dot_dimension_numbers<[1], [0], [0], [1], [0, 0, 1, 1], [], []>} : vector<256x4xbf16>, vector<4x16xbf16>, vector<256x16xf32> -> vector<256x16xf32>
    %128 = arith.addf %121, %127 : vector<256x16xf32>
    %129 = vector.shape_cast %128 : vector<256x16xf32> to vector<16x16x16xf32>
    %130 = arith.truncf %129 : vector<16x16x16xf32> to vector<16x16x16xbf16>
    %c0_141 = arith.constant 0 : index
    %c0_142 = arith.constant 0 : index
    %c1_143 = arith.constant 1 : index
    %c0_144 = arith.constant 0 : index
    %c0_145 = arith.constant 0 : index
    %131 = vector.load %arg3[%c0_141, %c0_142, %c1_143, %c0_144, %c0_145] : memref<1x16x2x16x16xbf16, #tpu.memory_space<vmem>>, vector<1x16x1x16x16xbf16>
    %132 = vector.shape_cast %131 : vector<1x16x1x16x16xbf16> to vector<16x16x16xbf16>
    %133 = vector.shape_cast %130 : vector<16x16x16xbf16> to vector<1x16x1x16x16xbf16>
    tpu.vector_store %arg3[%c0_141, %c0_142, %c1_143, %c0_144, %c0_145], %133 {strides = array<i32>} : memref<1x16x2x16x16xbf16, #tpu.memory_space<vmem>>, vector<1x16x1x16x16xbf16>,
    %134 = tpu.iota {dimensions = array<i32: 0>} : vector<256x16xi32>
    %135 = vector.broadcast %13 : i32 to vector<256x16xi32>
    %136 = arith.cmpi slt, %134, %135 : vector<256x16xi32>
    %cst_146 = arith.constant 0.000000e+00 : f32
    %137 = vector.broadcast %cst_146 : f32 to vector<256x16xf32>
    %138 = arith.select %136, %128, %137 : vector<256x16xi1>, vector<256x16xf32>
    %cst_147 = arith.constant dense<0.000000e+00> : vector<16xf32>
    %139 = vector.multi_reduction <add>, %138, %cst_147 [0] : vector<256x16xf32> to vector<16xf32>
    %140 = vector.shape_cast %139 : vector<16xf32> to vector<1x16xf32>
    %141 = vector.broadcast %15 : f32 to vector<1x16xf32>
    %142 = arith.mulf %140, %141 : vector<1x16xf32>
    %143 = vector.broadcast %142 : vector<1x16xf32> to vector<256x16xf32>
    %144 = arith.subf %128, %143 : vector<256x16xf32>
    %cst_148 = arith.constant 0.000000e+00 : f32
    %145 = vector.broadcast %cst_148 : f32 to vector<256x16xf32>
    %146 = arith.select %136, %144, %145 : vector<256x16xi1>, vector<256x16xf32>
    %c0_149 = arith.constant 0 : index
    %c1_150 = arith.constant 1 : index
    %c0_151 = arith.constant 0 : index
    %147 = vector.load %arg4[%c0_149, %c1_150, %c0_151] : memref<1x2x16xf32, #tpu.memory_space<vmem>>, vector<1x1x16xf32>
    %148 = vector.shape_cast %147 : vector<1x1x16xf32> to vector<1x16xf32>
    %149 = vector.shape_cast %140 : vector<1x16xf32> to vector<1x1x16xf32>
    tpu.vector_store %arg4[%c0_149, %c1_150, %c0_151], %149 {strides = array<i32>} : memref<1x2x16xf32, #tpu.memory_space<vmem>>, vector<1x1x16xf32>,
    %150 = arith.mulf %146, %146 : vector<256x16xf32>
    %cst_152 = arith.constant dense<0.000000e+00> : vector<16xf32>
    %151 = vector.multi_reduction <add>, %150, %cst_152 [0] : vector<256x16xf32> to vector<16xf32>
    %152 = vector.shape_cast %151 : vector<16xf32> to vector<1x16xf32>
    %c0_153 = arith.constant 0 : index
    %c1_154 = arith.constant 1 : index
    %c0_155 = arith.constant 0 : index
    %153 = vector.load %arg5[%c0_153, %c1_154, %c0_155] : memref<1x2x16xf32, #tpu.memory_space<vmem>>, vector<1x1x16xf32>
    %154 = vector.shape_cast %153 : vector<1x1x16xf32> to vector<1x16xf32>
    %155 = vector.shape_cast %152 : vector<1x16xf32> to vector<1x1x16xf32>
    tpu.vector_store %arg5[%c0_153, %c1_154, %c0_155], %155 {strides = array<i32>} : memref<1x2x16xf32, #tpu.memory_space<vmem>>, vector<1x1x16xf32>,
    return
  }
  func.func @transform_0(%arg0: i32) -> (i32, i32, i32, i32) {
    %c0_i32 = arith.constant 0 : i32
    %c0_i32_0 = arith.constant 0 : i32
    %c0_i32_1 = arith.constant 0 : i32
    %c0_i32_2 = arith.constant 0 : i32
    return %arg0, %c0_i32, %c0_i32_0, %c0_i32_1 : i32, i32, i32, i32
  }
  func.func @transform_1(%arg0: i32) -> (i32, i32, i32, i32, i32) {
    %c0_i32 = arith.constant 0 : i32
    %c0_i32_0 = arith.constant 0 : i32
    %c0_i32_1 = arith.constant 0 : i32
    %c0_i32_2 = arith.constant 0 : i32
    %c0_i32_3 = arith.constant 0 : i32
    %c0_i32_4 = arith.constant 0 : i32
    return %c0_i32, %c0_i32_0, %c0_i32_1, %c0_i32_2, %c0_i32_3 : i32, i32, i32, i32, i32
  }
  func.func @transform_2(%arg0: i32) -> (i32, i32, i32, i32, i32) {
    %c0_i32 = arith.constant 0 : i32
    %c0_i32_0 = arith.constant 0 : i32
    %c0_i32_1 = arith.constant 0 : i32
    %c0_i32_2 = arith.constant 0 : i32
    %c0_i32_3 = arith.constant 0 : i32
    return %arg0, %c0_i32, %c0_i32_0, %c0_i32_1, %c0_i32_2 : i32, i32, i32, i32, i32
  }
  func.func @transform_3(%arg0: i32) -> (i32, i32, i32) {
    %c0_i32 = arith.constant 0 : i32
    %c0_i32_0 = arith.constant 0 : i32
    %c0_i32_1 = arith.constant 0 : i32
    return %arg0, %c0_i32, %c0_i32_0 : i32, i32, i32
  }
  func.func @transform_4(%arg0: i32) -> (i32, i32, i32) {
    %c0_i32 = arith.constant 0 : i32
    %c0_i32_0 = arith.constant 0 : i32
    %c0_i32_1 = arith.constant 0 : i32
    return %arg0, %c0_i32, %c0_i32_0 : i32, i32, i32
  }
}

module attributes {stable_mosaic.version = 11 : i64} {
  func.func @_bn_lrelu_kernel(%arg0: i32, %arg1: memref<64x256xbf16, #tpu.memory_space<vmem>>, %arg2: memref<1x256xf32, #tpu.memory_space<vmem>>, %arg3: memref<1x256xf32, #tpu.memory_space<vmem>>, %arg4: memref<64x256xf32, #tpu.memory_space<vmem>>) attributes {dimension_semantics = [#tpu.dimension_semantics<parallel>], iteration_bounds = array<i64: 1>, scalar_prefetch = 0 : i64, scratch_operands = 0 : i64, tpu.core_type = #tpu.core_type<tc>, window_params = [{transform_indices = @transform_0, window_bounds = array<i64: 64, 256>}, {pipeline_mode = #tpu.pipeline_mode<synchronous>, transform_indices = @transform_1, window_bounds = array<i64: 1, 256>}, {pipeline_mode = #tpu.pipeline_mode<synchronous>, transform_indices = @transform_2, window_bounds = array<i64: 1, 256>}, {transform_indices = @transform_3, window_bounds = array<i64: 64, 256>}]} {
    %c0 = arith.constant 0 : index
    %c0_0 = arith.constant 0 : index
    %0 = vector.load %arg1[%c0, %c0_0] : memref<64x256xbf16, #tpu.memory_space<vmem>>, vector<64x256xbf16>
    %1 = arith.extf %0 : vector<64x256xbf16> to vector<64x256xf32>
    %c0_1 = arith.constant 0 : index
    %c0_2 = arith.constant 0 : index
    %2 = vector.load %arg2[%c0_1, %c0_2] : memref<1x256xf32, #tpu.memory_space<vmem>>, vector<1x256xf32>
    %3 = vector.broadcast %2 : vector<1x256xf32> to vector<64x256xf32>
    %4 = arith.mulf %1, %3 : vector<64x256xf32>
    %c0_3 = arith.constant 0 : index
    %c0_4 = arith.constant 0 : index
    %5 = vector.load %arg3[%c0_3, %c0_4] : memref<1x256xf32, #tpu.memory_space<vmem>>, vector<1x256xf32>
    %6 = vector.broadcast %5 : vector<1x256xf32> to vector<64x256xf32>
    %7 = arith.addf %4, %6 : vector<64x256xf32>
    %cst = arith.constant 0.000000e+00 : f32
    %8 = vector.broadcast %cst : f32 to vector<64x256xf32>
    %9 = arith.cmpf oge, %7, %8 : vector<64x256xf32>
    %cst_5 = arith.constant 2.000000e-01 : f32
    %10 = vector.broadcast %cst_5 : f32 to vector<64x256xf32>
    %11 = arith.mulf %10, %7 : vector<64x256xf32>
    %12 = arith.select %9, %7, %11 : vector<64x256xi1>, vector<64x256xf32>
    %c0_6 = arith.constant 0 : index
    %c0_7 = arith.constant 0 : index
    %13 = vector.load %arg4[%c0_6, %c0_7] : memref<64x256xf32, #tpu.memory_space<vmem>>, vector<64x256xf32>
    tpu.vector_store %arg4[%c0_6, %c0_7], %12 {strides = array<i32>} : memref<64x256xf32, #tpu.memory_space<vmem>>, vector<64x256xf32>,
    return
  }
  func.func @transform_0(%arg0: i32) -> (i32, i32) {
    %c0_i32 = arith.constant 0 : i32
    %c0_i32_0 = arith.constant 0 : i32
    return %arg0, %c0_i32 : i32, i32
  }
  func.func @transform_1(%arg0: i32) -> (i32, i32) {
    %c0_i32 = arith.constant 0 : i32
    %c0_i32_0 = arith.constant 0 : i32
    %c0_i32_1 = arith.constant 0 : i32
    return %c0_i32, %c0_i32_0 : i32, i32
  }
  func.func @transform_2(%arg0: i32) -> (i32, i32) {
    %c0_i32 = arith.constant 0 : i32
    %c0_i32_0 = arith.constant 0 : i32
    %c0_i32_1 = arith.constant 0 : i32
    return %c0_i32, %c0_i32_0 : i32, i32
  }
  func.func @transform_3(%arg0: i32) -> (i32, i32) {
    %c0_i32 = arith.constant 0 : i32
    %c0_i32_0 = arith.constant 0 : i32
    return %arg0, %c0_i32 : i32, i32
  }
}

</mosaic_0001>

<llo_original>
// kernel: tile.18
$region0: #{tile.18}
  #allocation0 [shape = 's32[1]{0}', space=sflag, size = 0x4, scoped, tag = 'scoped memory for tile.18']
  %s0 = inlined_call_operand.vmem [shape: f32[8], index: 0, kind: input, shape index: {}]
  %s1 = inlined_call_operand.vmem [shape: f32[32,8], index: 1, kind: output, shape index: {}]
  // Predicated region
  $region2: #{tile.18} parent=0 // pred_check
    _
  $region3: #{tile.18} parent=0 // pred_check_branch
    %3 = sbr.rel (0) target = $region5
  $region4: #{tile.18} parent=0 // pred_region
    _
  $region5: #{tile.18} parent=0 // pred_fallthru
    _
  %v4 = vld [vmem:[%s0] ss:$0 sm:$0xff]
  %5 = vst [vmem:[%s1] sm:$0xff] %v4
  %s6 = scalar_lea.vmem %s1, 8
  %7 = vst [vmem:[%s6] sm:$0xff] %v4
  %s8 = scalar_lea.vmem %s1, 16
  %9 = vst [vmem:[%s8] sm:$0xff] %v4
  %s10 = scalar_lea.vmem %s1, 24
  %11 = vst [vmem:[%s10] sm:$0xff] %v4

// kernel: tile.19
$region0: #{tile.19}
  %s0 = inlined_call_operand.vmem [shape: f32[32,8], index: 0, kind: input, shape index: {}]
  %s1 = inlined_call_operand.vmem [shape: f32[1,256], index: 1, kind: output, shape index: {}]
  $region1: #{tile.19} parent=0
    #allocation0 [shape = 'u8[8192]{0}', space=vmem, size = 0x2000, scoped, tag = 'scoped mem for output reshape']
    %s2 = smov 3
    %v3 = vld [vmem:[%s0] ss:$16 sm:%s2]
    %vm4 = vcmask 64512
    %5 = vst.msk [vmem:[#allocation0] ss:$8 sm:$0x3] %vm4, %v3
    %s6 = scalar_lea.vmem %s0, 15
    %s7 = smov 3
    %v8 = vld [vmem:[%s6] ss:$16 sm:%s7]
    %9 = vrot.lane.b32.xlu0 %v8, 120
    %v10 = vpop.permute.xlu0 %9
    %vm11 = vcmask 1048512
    %12 = vst.msk [vmem:[#allocation0] ss:$8 sm:$0x3] %vm11, %v10
    %s13 = scalar_lea.vmem %s0, 14
    %s14 = smov 3
    %v15 = vld [vmem:[%s13] ss:$16 sm:%s14]
    %16 = vrot.lane.b32.xlu0 %v15, 112
    %v17 = vpop.permute.xlu0 %16
    %vm18 = vcmask 982912
    %19 = vst.msk [vmem:[#allocation0] ss:$8 sm:$0x3] %vm18, %v17
    %s20 = scalar_lea.vmem %s0, 13
    %s21 = smov 3
    %v22 = vld [vmem:[%s20] ss:$16 sm:%s21]
    %23 = vrot.lane.b32.xlu0 %v22, 104
    %v24 = vpop.permute.xlu0 %23
    %vm25 = vcmask 917312
    %26 = vst.msk [vmem:[#allocation0] ss:$8 sm:$0x3] %vm25, %v24
    %s27 = scalar_lea.vmem %s0, 12
    %s28 = smov 3
    %v29 = vld [vmem:[%s27] ss:$16 sm:%s28]
    %30 = vrot.lane.b32.xlu0 %v29, 96
    %v31 = vpop.permute.xlu0 %30
    %vm32 = vcmask 851712
    %33 = vst.msk [vmem:[#allocation0] ss:$8 sm:$0x3] %vm32, %v31
    %s34 = scalar_lea.vmem %s0, 11
    %s35 = smov 3
    %v36 = vld [vmem:[%s34] ss:$16 sm:%s35]
    %37 = vrot.lane.b32.xlu0 %v36, 88
    %v38 = vpop.permute.xlu0 %37
    %vm39 = vcmask 786112
    %40 = vst.msk [vmem:[#allocation0] ss:$8 sm:$0x3] %vm39, %v38
    %s41 = scalar_lea.vmem %s0, 10
    %s42 = smov 3
    %v43 = vld [vmem:[%s41] ss:$16 sm:%s42]
    %44 = vrot.lane.b32.xlu0 %v43, 80
    %v45 = vpop.permute.xlu0 %44
    %vm46 = vcmask 720512
    %47 = vst.msk [vmem:[#allocation0] ss:$8 sm:$0x3] %vm46, %v45
    %s48 = scalar_lea.vmem %s0, 9
    %s49 = smov 3
    %v50 = vld [vmem:[%s48] ss:$16 sm:%s49]
    %51 = vrot.lane.b32.xlu0 %v50, 72
    %v52 = vpop.permute.xlu0 %51
    %vm53 = vcmask 654912
    %54 = vst.msk [vmem:[#allocation0] ss:$8 sm:$0x3] %vm53, %v52
    %s55 = scalar_lea.vmem %s0, 8
    %s56 = smov 3
    %v57 = vld [vmem:[%s55] ss:$16 sm:%s56]
    %58 = vrot.lane.b32.xlu0 %v57, 64
    %v59 = vpop.permute.xlu0 %58
    %vm60 = vcmask 589312
    %61 = vst.msk [vmem:[#allocation0] ss:$8 sm:$0x3] %vm60, %v59
    %s62 = scalar_lea.vmem %s0, 7
    %s63 = smov 3
    %v64 = vld [vmem:[%s62] ss:$16 sm:%s63]
    %65 = vrot.lane.b32.xlu0 %v64, 56
    %v66 = vpop.permute.xlu0 %65
    %vm67 = vcmask 523712
    %68 = vst.msk [vmem:[#allocation0] ss:$8 sm:$0x3] %vm67, %v66
    %s69 = scalar_lea.vmem %s0, 6
    %s70 = smov 3
    %v71 = vld [vmem:[%s69] ss:$16 sm:%s70]
    %72 = vrot.lane.b32.xlu0 %v71, 48
    %v73 = vpop.permute.xlu0 %72
    %vm74 = vcmask 458112
    %75 = vst.msk [vmem:[#allocation0] ss:$8 sm:$0x3] %vm74, %v73
    %s76 = scalar_lea.vmem %s0, 5
    %s77 = smov 3
    %v78 = vld [vmem:[%s76] ss:$16 sm:%s77]
    %79 = vrot.lane.b32.xlu0 %v78, 40
    %v80 = vpop.permute.xlu0 %79
    %vm81 = vcmask 392512
    %82 = vst.msk [vmem:[#allocation0] ss:$8 sm:$0x3] %vm81, %v80
    %s83 = scalar_lea.vmem %s0, 4
    %s84 = smov 3
    %v85 = vld [vmem:[%s83] ss:$16 sm:%s84]
    %86 = vrot.lane.b32.xlu0 %v85, 32
    %v87 = vpop.permute.xlu0 %86
    %vm88 = vcmask 326912
    %89 = vst.msk [vmem:[#allocation0] ss:$8 sm:$0x3] %vm88, %v87
    %s90 = scalar_lea.vmem %s0, 3
    %s91 = smov 3
    %v92 = vld [vmem:[%s90] ss:$16 sm:%s91]
    %93 = vrot.lane.b32.xlu0 %v92, 24
    %v94 = vpop.permute.xlu0 %93
    %vm95 = vcmask 261312
    %96 = vst.msk [vmem:[#allocation0] ss:$8 sm:$0x3] %vm95, %v94
    %s97 = scalar_lea.vmem %s0, 2
    %s98 = smov 3
    %v99 = vld [vmem:[%s97] ss:$16 sm:%s98]
    %100 = vrot.lane.b32.xlu0 %v99, 16
    %v101 = vpop.permute.xlu0 %100
    %vm102 = vcmask 195712
    %103 = vst.msk [vmem:[#allocation0] ss:$8 sm:$0x3] %vm102, %v101
    %s104 = scalar_lea.vmem %s0, 1
    %s105 = smov 3
    %v106 = vld [vmem:[%s104] ss:$16 sm:%s105]
    %107 = vrot.lane.b32.xlu0 %v106, 8
    %v108 = vpop.permute.xlu0 %107
    %vm109 = vcmask 130112
    %110 = vst.msk [vmem:[#allocation0] ss:$8 sm:$0x3] %vm109, %v108
    %s112 = sshllo.u32 0, 1
    %v114 = vld [vmem:[#allocation0] sm:%s112]
    %s115 = sshllo.u32 0, 1
    %116 = vst [vmem:[%s1] sm:%s115] %v114
    %s117 = scalar_lea.vmem [#allocation0], 8
    %v118 = vld [vmem:[%s117] sm:%s112]
    %s119 = sshllo.u32 0, 1
    %s120 = scalar_lea.vmem %s1, 1
    %121 = vst [vmem:[%s120] sm:%s119] %v118

// kernel: _lambda_.3
$region0: #{_lambda_.3}
  #allocation0 [shape = 'u32[]', space=smem, size = 0x4, offset = 0x4, fixed_abs, tag = 'smem constant byte address 0x4 - core index']
  #allocation1 [shape = 'u32[144,128]{1,0:T(1,128)}', space=vmem, size = 0x12000, scoped, tag = 'internal scratch']
  %s0 = inlined_call_operand.vmem [shape: bf16[64,256], index: 0, kind: input, shape index: {}]
  %s1 = inlined_call_operand.vmem [shape: f32[1,256], index: 1, kind: input, shape index: {}]
  %s2 = inlined_call_operand.vmem [shape: f32[1,256], index: 2, kind: input, shape index: {}]
  %s3 = inlined_call_operand.vmem [shape: f32[64,256], index: 3, kind: output, shape index: {}]
  %s4 = sld [smem:[#allocation0]]
  $region22: #{_lambda_.3} parent=0
    _
  %s6 = ssub.s32 1, %s4
  %s7 = scalar_select 0, %s6, %s4
  // Predicated region
  $region2: #{_lambda_.3} parent=0 // pred_check
    _
  $region3: #{_lambda_.3} parent=0 // pred_check_branch
    %9 = sbr.rel (0) target = $region5
  $region4: #{_lambda_.3} parent=0 // pred_region
    _
  $region5: #{_lambda_.3} parent=0 // pred_fallthru
    _
  // Predicated region
  $region6: #{_lambda_.3} parent=0 // pred_check
    _
  $region7: #{_lambda_.3} parent=0 // pred_check_branch
    %11 = sbr.rel (0) target = $region9
  $region8: #{_lambda_.3} parent=0 // pred_region
    _
  $region9: #{_lambda_.3} parent=0 // pred_fallthru
    _
  // Predicated region
  $region10: #{_lambda_.3} parent=0 // pred_check
    _
  $region11: #{_lambda_.3} parent=0 // pred_check_branch
    %13 = sbr.rel (0) target = $region13
  $region12: #{_lambda_.3} parent=0 // pred_region
    _
  $region13: #{_lambda_.3} parent=0 // pred_fallthru
    _
  %v14 = vld [vmem:[%s0] sm:$0xff]
  %v15 = vld [vmem:[%s0 + $0x8] sm:$0xff]
  %v16 = vld [vmem:[%s0 + $0x10] sm:$0xff]
  %v17 = vld [vmem:[%s0 + $0x18] sm:$0xff]
  %v18 = vld [vmem:[%s0 + $0x20] sm:$0xff]
  %v19 = vld [vmem:[%s0 + $0x28] sm:$0xff]
  %v20 = vld [vmem:[%s0 + $0x30] sm:$0xff]
  %v21 = vld [vmem:[%s0 + $0x38] sm:$0xff]
  %v22 = vunpack.c.l.bf16 %v14
  %v23 = vunpack.c.h.bf16 %v14
  %v24 = vunpack.c.l.bf16 %v15
  %v25 = vunpack.c.h.bf16 %v15
  %v26 = vunpack.c.l.bf16 %v16
  %v27 = vunpack.c.h.bf16 %v16
  %v28 = vunpack.c.l.bf16 %v17
  %v29 = vunpack.c.h.bf16 %v17
  %v30 = vunpack.c.l.bf16 %v18
  %v31 = vunpack.c.h.bf16 %v18
  %v32 = vunpack.c.l.bf16 %v19
  %v33 = vunpack.c.h.bf16 %v19
  %v34 = vunpack.c.l.bf16 %v20
  %v35 = vunpack.c.h.bf16 %v20
  %v36 = vunpack.c.l.bf16 %v21
  %v37 = vunpack.c.h.bf16 %v21
  %v38 = vld [vmem:[%s1] sm:$0x3]
  %v40 = vlaneseq
  %v41 = vshrl.u32 %v40, 7
  %v42 = vsub.s32 0, %v41
  %v43 = vrot.slane %v38, %v42
  %v44 = vlaneseq
  %v45 = vshrl.u32 %v44, 7
  %v46 = vsub.s32 1, %v45
  %v47 = vrot.slane %v38, %v46
  %v50 = vmul.f32 %v22, %v43
  %v51 = vmul.f32 %v23, %v47
  %v52 = vmul.f32 %v24, %v43
  %v53 = vmul.f32 %v25, %v47
  %v54 = vmul.f32 %v26, %v43
  %v55 = vmul.f32 %v27, %v47
  %v56 = vmul.f32 %v28, %v43
  %v57 = vmul.f32 %v29, %v47
  %v58 = vmul.f32 %v30, %v43
  %v59 = vmul.f32 %v31, %v47
  %v60 = vmul.f32 %v32, %v43
  %v61 = vmul.f32 %v33, %v47
  %v62 = vmul.f32 %v34, %v43
  %v63 = vmul.f32 %v35, %v47
  %v64 = vmul.f32 %v36, %v43
  %v65 = vmul.f32 %v37, %v47
  %v66 = vld [vmem:[%s2] sm:$0x3]
  %v68 = vlaneseq
  %v69 = vshrl.u32 %v68, 7
  %v70 = vsub.s32 0, %v69
  %v71 = vrot.slane %v66, %v70
  %v72 = vlaneseq
  %v73 = vshrl.u32 %v72, 7
  %v74 = vsub.s32 1, %v73
  %v75 = vrot.slane %v66, %v74
  %v78 = vadd.f32 %v50, %v71
  %v79 = vadd.f32 %v51, %v75
  %v80 = vadd.f32 %v52, %v71
  %v81 = vadd.f32 %v53, %v75
  %v82 = vadd.f32 %v54, %v71
  %v83 = vadd.f32 %v55, %v75
  %v84 = vadd.f32 %v56, %v71
  %v85 = vadd.f32 %v57, %v75
  %v86 = vadd.f32 %v58, %v71
  %v87 = vadd.f32 %v59, %v75
  %v88 = vadd.f32 %v60, %v71
  %v89 = vadd.f32 %v61, %v75
  %v90 = vadd.f32 %v62, %v71
  %v91 = vadd.f32 %v63, %v75
  %v92 = vadd.f32 %v64, %v71
  %v93 = vadd.f32 %v65, %v75
  %vm94 = vcmp.ge.f32.partialorder %v78, 0.0
  %vm95 = vcmp.ge.f32.partialorder %v79, 0.0
  %vm96 = vcmp.ge.f32.partialorder %v80, 0.0
  %vm97 = vcmp.ge.f32.partialorder %v81, 0.0
  %vm98 = vcmp.ge.f32.partialorder %v82, 0.0
  %vm99 = vcmp.ge.f32.partialorder %v83, 0.0
  %vm100 = vcmp.ge.f32.partialorder %v84, 0.0
  %vm101 = vcmp.ge.f32.partialorder %v85, 0.0
  %vm102 = vcmp.ge.f32.partialorder %v86, 0.0
  %vm103 = vcmp.ge.f32.partialorder %v87, 0.0
  %vm104 = vcmp.ge.f32.partialorder %v88, 0.0
  %vm105 = vcmp.ge.f32.partialorder %v89, 0.0
  %vm106 = vcmp.ge.f32.partialorder %v90, 0.0
  %vm107 = vcmp.ge.f32.partialorder %v91, 0.0
  %vm108 = vcmp.ge.f32.partialorder %v92, 0.0
  %vm109 = vcmp.ge.f32.partialorder %v93, 0.0
  %v110 = vmul.f32 %v78, 0.2
  %v111 = vmul.f32 %v79, 0.2
  %v112 = vmul.f32 %v80, 0.2
  %v113 = vmul.f32 %v81, 0.2
  %v114 = vmul.f32 %v82, 0.2
  %v115 = vmul.f32 %v83, 0.2
  %v116 = vmul.f32 %v84, 0.2
  %v117 = vmul.f32 %v85, 0.2
  %v118 = vmul.f32 %v86, 0.2
  %v119 = vmul.f32 %v87, 0.2
  %v120 = vmul.f32 %v88, 0.2
  %v121 = vmul.f32 %v89, 0.2
  %v122 = vmul.f32 %v90, 0.2
  %v123 = vmul.f32 %v91, 0.2
  %v124 = vmul.f32 %v92, 0.2
  %v125 = vmul.f32 %v93, 0.2
  %v126 = vsel %vm94, %v78, %v110
  %v127 = vsel %vm95, %v79, %v111
  %v128 = vsel %vm96, %v80, %v112
  %v129 = vsel %vm97, %v81, %v113
  %v130 = vsel %vm98, %v82, %v114
  %v131 = vsel %vm99, %v83, %v115
  %v132 = vsel %vm100, %v84, %v116
  %v133 = vsel %vm101, %v85, %v117
  %v134 = vsel %vm102, %v86, %v118
  %v135 = vsel %vm103, %v87, %v119
  %v136 = vsel %vm104, %v88, %v120
  %v137 = vsel %vm105, %v89, %v121
  %v138 = vsel %vm106, %v90, %v122
  %v139 = vsel %vm107, %v91, %v123
  %v140 = vsel %vm108, %v92, %v124
  %v141 = vsel %vm109, %v93, %v125
  %142 = vst [vmem:[%s3] sm:$0xff] %v126
  %143 = vst [vmem:[%s3 + $0x8] sm:$0xff] %v127
  %144 = vst [vmem:[%s3 + $0x10] sm:$0xff] %v128
  %145 = vst [vmem:[%s3 + $0x18] sm:$0xff] %v129
  %146 = vst [vmem:[%s3 + $0x20] sm:$0xff] %v130
  %147 = vst [vmem:[%s3 + $0x28] sm:$0xff] %v131
  %148 = vst [vmem:[%s3 + $0x30] sm:$0xff] %v132
  %149 = vst [vmem:[%s3 + $0x38] sm:$0xff] %v133
  %150 = vst [vmem:[%s3 + $0x40] sm:$0xff] %v134
  %151 = vst [vmem:[%s3 + $0x48] sm:$0xff] %v135
  %152 = vst [vmem:[%s3 + $0x50] sm:$0xff] %v136
  %153 = vst [vmem:[%s3 + $0x58] sm:$0xff] %v137
  %154 = vst [vmem:[%s3 + $0x60] sm:$0xff] %v138
  %155 = vst [vmem:[%s3 + $0x68] sm:$0xff] %v139
  %156 = vst [vmem:[%s3 + $0x70] sm:$0xff] %v140
  %157 = vst [vmem:[%s3 + $0x78] sm:$0xff] %v141
  // Predicated region
  $region14: #{_lambda_.3} parent=0 // pred_check
    _
  $region15: #{_lambda_.3} parent=0 // pred_check_branch
    %159 = sbr.rel (0) target = $region17
  $region16: #{_lambda_.3} parent=0 // pred_region
    _
  $region17: #{_lambda_.3} parent=0 // pred_fallthru
    _
  // Predicated region
  $region18: #{_lambda_.3} parent=0 // pred_check
    _
  $region19: #{_lambda_.3} parent=0 // pred_check_branch
    %161 = sbr.rel (0) target = $region21
  $region20: #{_lambda_.3} parent=0 // pred_region
    _
  $region21: #{_lambda_.3} parent=0 // pred_fallthru
    _

// kernel: _lambda_.2
$region0: #{_lambda_.2}
  #allocation0 [shape = 'u32[]', space=smem, size = 0x4, offset = 0x4, fixed_abs, tag = 'smem constant byte address 0x4 - core index']
  #allocation1 [shape = 'u32[144,128]{1,0:T(1,128)}', space=vmem, size = 0x12000, scoped, tag = 'internal scratch']
  %s0 = inlined_call_operand.vmem [shape: bf16[2,18,18,4], index: 0, kind: input, shape index: {}]
  %s1 = inlined_call_operand.vmem [shape: bf16[2,3,3,4,16], index: 1, kind: input, shape index: {}]
  %s2 = inlined_call_operand.vmem [shape: bf16[2,16,2,16,16], index: 2, kind: output, shape index: {0}]
  %s3 = inlined_call_operand.vmem [shape: f32[2,2,16], index: 3, kind: output, shape index: {1}]
  %s4 = inlined_call_operand.vmem [shape: f32[2,2,16], index: 4, kind: output, shape index: {2}]
  %5 = xla_tuple %s2, %s3, %s4
  %s6 = sld [smem:[#allocation0]]
  $region57: #{_lambda_.2} parent=0
    _
  %s8 = ssub.s32 1, %s6
  %s9 = scalar_select 0, %s8, %s6
  loop: start=0, step=1, limit=4
  $region2: #{_lambda_.2} parent=0 // loop_pre_header
    _
  $region3: #{_lambda_.2} parent=0 // loop_header
    %s11 = sphi 0, %s15
    %p12 = scmp.ge.s32.totalorder %s11, 4
    %s21 = sphi 0, %s23
    %s24 = sphi 0, %s21
    %s25 = sphi 0, %s24
    %s41 = sphi 0, %s25
    %s45 = sphi 0, %s45
    %s47 = sphi 0, %s45
    %s48 = sphi 0, %s47
    %s62 = sphi 0, %s48
    %s68 = sphi 0, %s70
    %s71 = sphi 0, %s68
    %s72 = sphi 0, %s71
    %s88 = sphi 0, %s72
    %s94 = sphi 0, %s96
    %s97 = sphi 0, %s94
    %s98 = sphi 0, %s97
    %s114 = sphi 0, %s98
    %s120 = sphi 0, %s122
    %s123 = sphi 0, %s120
    %s124 = sphi 0, %s123
    %s140 = sphi 0, %s124
  $region4: #{_lambda_.2} parent=0 // loop_header_branch
    %14 = sbr.rel (%p12) target = $region8
  $region5: #{_lambda_.2} parent=0 // loop_body
    %s16 = ssub.s32 %s11, 1
    %s17 = ssub.s32 %s11, 2
    %s18 = sadd.s32 %s11, 1
    %s19 = ssub.s32 %s11, %s18
    %p20 = scmp.eq.s32.totalorder %s19, 0
    %s22 = sadd.s32 %s21, 1
    %s23 = scalar_select %p20, %s21, %s22
    %p26 = pneg %p20
    %p27 = scmp.eq.s32.totalorder %s11, 1
    %p28 = por %p26, %p27
    %p29 = scmp.ne.s32.totalorder %s21, %s24
    %p30 = scmp.eq.s32.totalorder %s11, 0
    %p31 = por %p29, %p30
    %p32 = scmp.ne.s32.totalorder %s21, %s24
    %p33 = scmp.eq.s32.totalorder %s16, 1
    %p34 = por %p32, %p33
    %p35 = scmp.ne.s32.totalorder %s24, %s25
    %p36 = scmp.eq.s32.totalorder %s16, 0
    %p37 = por %p35, %p36
    %p38 = scmp.ne.s32.totalorder %s24, %s25
    %p39 = scmp.eq.s32.totalorder %s17, 1
    %p40 = por %p38, %p39
    %p42 = scmp.ne.s32.totalorder %s25, %s41
    %p43 = scmp.eq.s32.totalorder %s17, 0
    %p44 = por %p42, %p43
    %s46 = sadd.s32 %s45, 1
    %p49 = scmp.eq.s32.totalorder %s11, 1
    %p50 = scmp.ne.s32.totalorder %s45, %s47
    %p51 = scmp.eq.s32.totalorder %s11, 0
    %p52 = por %p50, %p51
    %p53 = scmp.ne.s32.totalorder %s45, %s47
    %p54 = scmp.eq.s32.totalorder %s16, 1
    %p55 = por %p53, %p54
    %p56 = scmp.ne.s32.totalorder %s47, %s48
    %p57 = scmp.eq.s32.totalorder %s16, 0
    %p58 = por %p56, %p57
    %p59 = scmp.ne.s32.totalorder %s47, %s48
    %p60 = scmp.eq.s32.totalorder %s17, 1
    %p61 = por %p59, %p60
    %p63 = scmp.ne.s32.totalorder %s48, %s62
    %p64 = scmp.eq.s32.totalorder %s17, 0
    %p65 = por %p63, %p64
    %s66 = ssub.s32 %s11, %s18
    %p67 = scmp.eq.s32.totalorder %s66, 0
    %s69 = sadd.s32 %s68, 1
    %s70 = scalar_select %p67, %s68, %s69
    %p73 = pneg %p67
    %p74 = scmp.eq.s32.totalorder %s11, 1
    %p75 = por %p73, %p74
    %p76 = scmp.ne.s32.totalorder %s68, %s71
    %p77 = scmp.eq.s32.totalorder %s11, 0
    %p78 = por %p76, %p77
    %p79 = scmp.ne.s32.totalorder %s68, %s71
    %p80 = scmp.eq.s32.totalorder %s16, 1
    %p81 = por %p79, %p80
    %p82 = scmp.ne.s32.totalorder %s71, %s72
    %p83 = scmp.eq.s32.totalorder %s16, 0
    %p84 = por %p82, %p83
    %p85 = scmp.ne.s32.totalorder %s71, %s72
    %p86 = scmp.eq.s32.totalorder %s17, 1
    %p87 = por %p85, %p86
    %p89 = scmp.ne.s32.totalorder %s72, %s88
    %p90 = scmp.eq.s32.totalorder %s17, 0
    %p91 = por %p89, %p90
    %s92 = ssub.s32 %s11, %s18
    %p93 = scmp.eq.s32.totalorder %s92, 0
    %s95 = sadd.s32 %s94, 1
    %s96 = scalar_select %p93, %s94, %s95
    %p99 = pneg %p93
    %p100 = scmp.eq.s32.totalorder %s11, 1
    %p101 = por %p99, %p100
    %p102 = scmp.ne.s32.totalorder %s94, %s97
    %p103 = scmp.eq.s32.totalorder %s11, 0
    %p104 = por %p102, %p103
    %p105 = scmp.ne.s32.totalorder %s94, %s97
    %p106 = scmp.eq.s32.totalorder %s16, 1
    %p107 = por %p105, %p106
    %p108 = scmp.ne.s32.totalorder %s97, %s98
    %p109 = scmp.eq.s32.totalorder %s16, 0
    %p110 = por %p108, %p109
    %p111 = scmp.ne.s32.totalorder %s97, %s98
    %p112 = scmp.eq.s32.totalorder %s17, 1
    %p113 = por %p111, %p112
    %p115 = scmp.ne.s32.totalorder %s98, %s114
    %p116 = scmp.eq.s32.totalorder %s17, 0
    %p117 = por %p115, %p116
    %s118 = ssub.s32 %s11, %s18
    %p119 = scmp.eq.s32.totalorder %s118, 0
    %s121 = sadd.s32 %s120, 1
    %s122 = scalar_select %p119, %s120, %s121
    %p125 = pneg %p119
    %p126 = scmp.eq.s32.totalorder %s11, 1
    %p127 = por %p125, %p126
    %p128 = scmp.ne.s32.totalorder %s120, %s123
    %p129 = scmp.eq.s32.totalorder %s11, 0
    %p130 = por %p128, %p129
    %p131 = scmp.ne.s32.totalorder %s120, %s123
    %p132 = scmp.eq.s32.totalorder %s16, 1
    %p133 = por %p131, %p132
    %p134 = scmp.ne.s32.totalorder %s123, %s124
    %p135 = scmp.eq.s32.totalorder %s16, 0
    %p136 = por %p134, %p135
    %p137 = scmp.ne.s32.totalorder %s123, %s124
    %p138 = scmp.eq.s32.totalorder %s17, 1
    %p139 = por %p137, %p138
    %p141 = scmp.ne.s32.totalorder %s124, %s140
    %p142 = scmp.eq.s32.totalorder %s17, 0
    %p143 = por %p141, %p142
    %p144 = scmp.le.s32.totalorder 1, %s11
    %p145 = scmp.lt.s32.totalorder %s11, 3
    %p146 = pnand %p144, %p145
    %p147 = pneg %p146
    // Predicated region
    $region9: #{_lambda_.2} parent=5 // pred_check
      _
    $region10: #{_lambda_.2} parent=5 // pred_check_branch
      %149 = sbr.rel (%p146) target = $region12
    $region11: #{_lambda_.2} parent=5 // pred_region
      %s150 = ssub.s32 %s11, 1
      // Predicated region
      $region13: #{_lambda_.2} parent=11 // pred_check
        %p151 = pneg %p58
      $region14: #{_lambda_.2} parent=11 // pred_check_branch
        %153 = sbr.rel (%p151) target = $region16
      $region15: #{_lambda_.2} parent=11 // pred_region
        _
      $region16: #{_lambda_.2} parent=11 // pred_fallthru
        _
    $region12: #{_lambda_.2} parent=5 // pred_fallthru
      _
    %p154 = scmp.lt.s32.totalorder %s11, 2
    // Predicated region
    $region17: #{_lambda_.2} parent=5 // pred_check
      %p155 = pneg %p154
    $region18: #{_lambda_.2} parent=5 // pred_check_branch
      %157 = sbr.rel (%p155) target = $region20
    $region19: #{_lambda_.2} parent=5 // pred_region
      // Predicated region
      $region21: #{_lambda_.2} parent=19 // pred_check
        %p158 = pneg %p31
      $region22: #{_lambda_.2} parent=19 // pred_check_branch
        %160 = sbr.rel (%p158) target = $region24
      $region23: #{_lambda_.2} parent=19 // pred_region
        %p161 = scmp.lt.s32.totalorder %s11, 1
        %s162 = scalar_select %p161, %s11, 1
        %s163 = smul.addr %s162, 54
        %s164 = smul.addr %s163, 4
        %s165 = scalar_lea.vmem %s0, %s164
      $region24: #{_lambda_.2} parent=19 // pred_fallthru
        _
    $region20: #{_lambda_.2} parent=5 // pred_fallthru
      _
    %p166 = scmp.le.s32.totalorder 1, %s11
    %p167 = scmp.lt.s32.totalorder %s11, 3
    %p168 = pnand %p166, %p167
    %p169 = pneg %p168
    // Predicated region
    $region25: #{_lambda_.2} parent=5 // pred_check
      _
    $region26: #{_lambda_.2} parent=5 // pred_check_branch
      %171 = sbr.rel (%p168) target = $region28
    $region27: #{_lambda_.2} parent=5 // pred_region
      %s172 = ssub.s32 %s11, 1
      %p173 = scmp.lt.s32.totalorder %s16, 1
      %s174 = scalar_select %p173, %s16, 1
      %s175 = smul.addr %s174, 54
      %s176 = smul.addr %s175, 4
      %s177 = scalar_lea.vmem %s0, %s176
      %p178 = pneg %p37
      %p179 = pneg %p34
      %p180 = pneg %p58
      %p181 = pneg %p55
      %p182 = pneg %p84
      %p183 = pneg %p81
      %p184 = scmp.lt.s32.totalorder %s16, 1
      %s185 = scalar_select %p184, %s16, 1
      %s186 = smul.addr %s185, 64
      %s187 = smul.addr %s186, 4
      %s188 = scalar_lea.vmem %s2, %s187
      %p189 = pneg %p110
      %p190 = pneg %p107
      %p191 = scmp.lt.s32.totalorder %s16, 1
      %s192 = scalar_select %p191, %s16, 1
      %s193 = smul.addr %s192, 2
      %s194 = scalar_lea.vmem %s3, %s193
      %p195 = pneg %p136
      %p196 = pneg %p133
      %p197 = scmp.lt.s32.totalorder %s16, 1
      %s198 = scalar_select %p197, %s16, 1
      %s199 = smul.addr %s198, 2
      %s200 = scalar_lea.vmem %s4, %s199
      %p201 = scmp.lt.s32.totalorder %s16, 1
      %s202 = scalar_select %p201, %s16, 1
      %s203 = smul.addr %s202, 54
      %s204 = smul.addr %s203, 4
      %s205 = scalar_lea.vmem %s0, %s204
      %p206 = scmp.lt.s32.totalorder %s16, 1
      %s207 = scalar_select %p206, %s16, 1
      %s208 = smul.addr %s207, 64
      %s209 = smul.addr %s208, 4
      %s210 = scalar_lea.vmem %s2, %s209
      %p211 = scmp.lt.s32.totalorder %s16, 1
      %s212 = scalar_select %p211, %s16, 1
      %s213 = smul.addr %s212, 2
      %s214 = scalar_lea.vmem %s3, %s213
      %p215 = scmp.lt.s32.totalorder %s16, 1
      %s216 = scalar_select %p215, %s16, 1
      %s217 = smul.addr %s216, 2
      %s218 = scalar_lea.vmem %s4, %s217
      %v220 = vld [vmem:[%s205] sm:$0xf]
      %v221 = vld [vmem:[%s205 + $0x4] sm:$0xf]
      %v222 = vld [vmem:[%s205 + $0xc] sm:$0xf]
      %v223 = vld [vmem:[%s205 + $0x10] sm:$0xf]
      %v224 = vld [vmem:[%s205 + $0x18] sm:$0xf]
      %v225 = vld [vmem:[%s205 + $0x1c] sm:$0xf]
      %v226 = vld [vmem:[%s205 + $0x24] sm:$0xf]
      %v227 = vld [vmem:[%s205 + $0x28] sm:$0xf]
      %v228 = vld [vmem:[%s205 + $0x30] sm:$0xf]
      %v229 = vld [vmem:[%s205 + $0x34] sm:$0xf]
      %v230 = vld [vmem:[%s205 + $0x3c] sm:$0xf]
      %v231 = vld [vmem:[%s205 + $0x40] sm:$0xf]
      %v232 = vld [vmem:[%s205 + $0x48] sm:$0xf]
      %v233 = vld [vmem:[%s205 + $0x4c] sm:$0xf]
      %v234 = vld [vmem:[%s205 + $0x54] sm:$0xf]
      %v235 = vld [vmem:[%s205 + $0x58] sm:$0xf]
      %v236 = vld [vmem:[%s205 + $0x60] sm:$0xf]
      %v237 = vld [vmem:[%s205 + $0x64] sm:$0xf]
      %v238 = vld [vmem:[%s205 + $0x6c] sm:$0xf]
      %v239 = vld [vmem:[%s205 + $0x70] sm:$0xf]
      %v240 = vld [vmem:[%s205 + $0x78] sm:$0xf]
      %v241 = vld [vmem:[%s205 + $0x7c] sm:$0xf]
      %v242 = vld [vmem:[%s205 + $0x84] sm:$0xf]
      %v243 = vld [vmem:[%s205 + $0x88] sm:$0xf]
      %v244 = vld [vmem:[%s205 + $0x90] sm:$0xf]
      %v245 = vld [vmem:[%s205 + $0x94] sm:$0xf]
      %v246 = vld [vmem:[%s205 + $0x9c] sm:$0xf]
      %v247 = vld [vmem:[%s205 + $0xa0] sm:$0xf]
      %v248 = vld [vmem:[%s205 + $0xa8] sm:$0xf]
      %v249 = vld [vmem:[%s205 + $0xac] sm:$0xf]
      %v250 = vld [vmem:[%s205 + $0xb4] sm:$0xf]
      %v251 = vld [vmem:[%s205 + $0xb8] sm:$0xf]
      %v252 = vld [vmem:[%s1] sm:$0x3]
      %v253 = vld [vmem:[%s205 + $0x8] sm:$0x1]
      %v254 = vld [vmem:[%s205 + $0x14] sm:$0x1]
      %v255 = vld [vmem:[%s205 + $0x20] sm:$0x1]
      %v256 = vld [vmem:[%s205 + $0x2c] sm:$0x1]
      %v257 = vld [vmem:[%s205 + $0x38] sm:$0x1]
      %v258 = vld [vmem:[%s205 + $0x44] sm:$0x1]
      %v259 = vld [vmem:[%s205 + $0x50] sm:$0x1]
      %v260 = vld [vmem:[%s205 + $0x5c] sm:$0x1]
      %v261 = vld [vmem:[%s205 + $0x68] sm:$0x1]
      %v262 = vld [vmem:[%s205 + $0x74] sm:$0x1]
      %v263 = vld [vmem:[%s205 + $0x80] sm:$0x1]
      %v264 = vld [vmem:[%s205 + $0x8c] sm:$0x1]
      %v265 = vld [vmem:[%s205 + $0x98] sm:$0x1]
      %v266 = vld [vmem:[%s205 + $0xa4] sm:$0x1]
      %v267 = vld [vmem:[%s205 + $0xb0] sm:$0x1]
      %v268 = vld [vmem:[%s205 + $0xbc] sm:$0x1]
      %vm269 = vsmask.f32 3328
      %vm270 = vsmask.f32 7440
      %vm271 = vmor %vm269, %vm270
      %v273 = vshrl.u32 %v220, 16
      %v275 = vrot.slane %v273, 4
      %v276 = vshll.u32 %v220, 16
      %v278 = vrot.slane %v276, 5
      %v279 = vor.u32 %v275, %v278
      %v280 = vrot.slane %v279, 4
      %v282 = vshll.u32 %v221, 16
      %v284 = vrot.slane %v282, 5
      %v285 = vsel %vm271, %v280, %v284
      %v286 = vshrl.u32 %v221, 16
      %v288 = vrot.slane %v286, 4
      %v289 = vor.u32 %v288, %v284
      %v290 = vrot.slane %v289, 4
      %v292 = vshll.u32 %v253, 16
      %v294 = vrot.slane %v292, 5
      %v295 = vsel %vm271, %v290, %v294
      %v297 = vshrl.u32 %v222, 16
      %v299 = vrot.slane %v297, 4
      %v300 = vshll.u32 %v222, 16
      %v302 = vrot.slane %v300, 5
      %v303 = vor.u32 %v299, %v302
      %v304 = vrot.slane %v303, 4
      %v306 = vshll.u32 %v223, 16
      %v308 = vrot.slane %v306, 5
      %v309 = vsel %vm271, %v304, %v308
      %v310 = vshrl.u32 %v223, 16
      %v312 = vrot.slane %v310, 4
      %v313 = vor.u32 %v312, %v308
      %v314 = vrot.slane %v313, 4
      %v316 = vshll.u32 %v254, 16
      %v318 = vrot.slane %v316, 5
      %v319 = vsel %vm271, %v314, %v318
      %v321 = vshrl.u32 %v224, 16
      %v323 = vrot.slane %v321, 4
      %v324 = vshll.u32 %v224, 16
      %v326 = vrot.slane %v324, 5
      %v327 = vor.u32 %v323, %v326
      %v328 = vrot.slane %v327, 4
      %v330 = vshll.u32 %v225, 16
      %v332 = vrot.slane %v330, 5
      %v333 = vsel %vm271, %v328, %v332
      %v334 = vshrl.u32 %v225, 16
      %v336 = vrot.slane %v334, 4
      %v337 = vor.u32 %v336, %v332
      %v338 = vrot.slane %v337, 4
      %v340 = vshll.u32 %v255, 16
      %v342 = vrot.slane %v340, 5
      %v343 = vsel %vm271, %v338, %v342
      %v345 = vshrl.u32 %v226, 16
      %v347 = vrot.slane %v345, 4
      %v348 = vshll.u32 %v226, 16
      %v350 = vrot.slane %v348, 5
      %v351 = vor.u32 %v347, %v350
      %v352 = vrot.slane %v351, 4
      %v354 = vshll.u32 %v227, 16
      %v356 = vrot.slane %v354, 5
      %v357 = vsel %vm271, %v352, %v356
      %v358 = vshrl.u32 %v227, 16
      %v360 = vrot.slane %v358, 4
      %v361 = vor.u32 %v360, %v356
      %v362 = vrot.slane %v361, 4
      %v364 = vshll.u32 %v256, 16
      %v366 = vrot.slane %v364, 5
      %v367 = vsel %vm271, %v362, %v366
      %v369 = vshrl.u32 %v228, 16
      %v371 = vrot.slane %v369, 4
      %v372 = vshll.u32 %v228, 16
      %v374 = vrot.slane %v372, 5
      %v375 = vor.u32 %v371, %v374
      %v376 = vrot.slane %v375, 4
      %v378 = vshll.u32 %v229, 16
      %v380 = vrot.slane %v378, 5
      %v381 = vsel %vm271, %v376, %v380
      %v382 = vshrl.u32 %v229, 16
      %v384 = vrot.slane %v382, 4
      %v385 = vor.u32 %v384, %v380
      %v386 = vrot.slane %v385, 4
      %v388 = vshll.u32 %v257, 16
      %v390 = vrot.slane %v388, 5
      %v391 = vsel %vm271, %v386, %v390
      %v393 = vshrl.u32 %v230, 16
      %v395 = vrot.slane %v393, 4
      %v396 = vshll.u32 %v230, 16
      %v398 = vrot.slane %v396, 5
      %v399 = vor.u32 %v395, %v398
      %v400 = vrot.slane %v399, 4
      %v402 = vshll.u32 %v231, 16
      %v404 = vrot.slane %v402, 5
      %v405 = vsel %vm271, %v400, %v404
      %v406 = vshrl.u32 %v231, 16
      %v408 = vrot.slane %v406, 4
      %v409 = vor.u32 %v408, %v404
      %v410 = vrot.slane %v409, 4
      %v412 = vshll.u32 %v258, 16
      %v414 = vrot.slane %v412, 5
      %v415 = vsel %vm271, %v410, %v414
      %v417 = vshrl.u32 %v232, 16
      %v419 = vrot.slane %v417, 4
      %v420 = vshll.u32 %v232, 16
      %v422 = vrot.slane %v420, 5
      %v423 = vor.u32 %v419, %v422
      %v424 = vrot.slane %v423, 4
      %v426 = vshll.u32 %v233, 16
      %v428 = vrot.slane %v426, 5
      %v429 = vsel %vm271, %v424, %v428
      %v430 = vshrl.u32 %v233, 16
      %v432 = vrot.slane %v430, 4
      %v433 = vor.u32 %v432, %v428
      %v434 = vrot.slane %v433, 4
      %v436 = vshll.u32 %v259, 16
      %v438 = vrot.slane %v436, 5
      %v439 = vsel %vm271, %v434, %v438
      %v441 = vshrl.u32 %v234, 16
      %v443 = vrot.slane %v441, 4
      %v444 = vshll.u32 %v234, 16
      %v446 = vrot.slane %v444, 5
      %v447 = vor.u32 %v443, %v446
      %v448 = vrot.slane %v447, 4
      %v450 = vshll.u32 %v235, 16
      %v452 = vrot.slane %v450, 5
      %v453 = vsel %vm271, %v448, %v452
      %v454 = vshrl.u32 %v235, 16
      %v456 = vrot.slane %v454, 4
      %v457 = vor.u32 %v456, %v452
      %v458 = vrot.slane %v457, 4
      %v460 = vshll.u32 %v260, 16
      %v462 = vrot.slane %v460, 5
      %v463 = vsel %vm271, %v458, %v462
      %v465 = vshrl.u32 %v236, 16
      %v467 = vrot.slane %v465, 4
      %v468 = vshll.u32 %v236, 16
      %v470 = vrot.slane %v468, 5
      %v471 = vor.u32 %v467, %v470
      %v472 = vrot.slane %v471, 4
      %v474 = vshll.u32 %v237, 16
      %v476 = vrot.slane %v474, 5
      %v477 = vsel %vm271, %v472, %v476
      %v478 = vshrl.u32 %v237, 16
      %v480 = vrot.slane %v478, 4
      %v481 = vor.u32 %v480, %v476
      %v482 = vrot.slane %v481, 4
      %v484 = vshll.u32 %v261, 16
      %v486 = vrot.slane %v484, 5
      %v487 = vsel %vm271, %v482, %v486
      %v489 = vshrl.u32 %v238, 16
      %v491 = vrot.slane %v489, 4
      %v492 = vshll.u32 %v238, 16
      %v494 = vrot.slane %v492, 5
      %v495 = vor.u32 %v491, %v494
      %v496 = vrot.slane %v495, 4
      %v498 = vshll.u32 %v239, 16
      %v500 = vrot.slane %v498, 5
      %v501 = vsel %vm271, %v496, %v500
      %v502 = vshrl.u32 %v239, 16
      %v504 = vrot.slane %v502, 4
      %v505 = vor.u32 %v504, %v500
      %v506 = vrot.slane %v505, 4
      %v508 = vshll.u32 %v262, 16
      %v510 = vrot.slane %v508, 5
      %v511 = vsel %vm271, %v506, %v510
      %v513 = vshrl.u32 %v240, 16
      %v515 = vrot.slane %v513, 4
      %v516 = vshll.u32 %v240, 16
      %v518 = vrot.slane %v516, 5
      %v519 = vor.u32 %v515, %v518
      %v520 = vrot.slane %v519, 4
      %v522 = vshll.u32 %v241, 16
      %v524 = vrot.slane %v522, 5
      %v525 = vsel %vm271, %v520, %v524
      %v526 = vshrl.u32 %v241, 16
      %v528 = vrot.slane %v526, 4
      %v529 = vor.u32 %v528, %v524
      %v530 = vrot.slane %v529, 4
      %v532 = vshll.u32 %v263, 16
      %v534 = vrot.slane %v532, 5
      %v535 = vsel %vm271, %v530, %v534
      %v537 = vshrl.u32 %v242, 16
      %v539 = vrot.slane %v537, 4
      %v540 = vshll.u32 %v242, 16
      %v542 = vrot.slane %v540, 5
      %v543 = vor.u32 %v539, %v542
      %v544 = vrot.slane %v543, 4
      %v546 = vshll.u32 %v243, 16
      %v548 = vrot.slane %v546, 5
      %v549 = vsel %vm271, %v544, %v548
      %v550 = vshrl.u32 %v243, 16
      %v552 = vrot.slane %v550, 4
      %v553 = vor.u32 %v552, %v548
      %v554 = vrot.slane %v553, 4
      %v556 = vshll.u32 %v264, 16
      %v558 = vrot.slane %v556, 5
      %v559 = vsel %vm271, %v554, %v558
      %v561 = vshrl.u32 %v244, 16
      %v563 = vrot.slane %v561, 4
      %v564 = vshll.u32 %v244, 16
      %v566 = vrot.slane %v564, 5
      %v567 = vor.u32 %v563, %v566
      %v568 = vrot.slane %v567, 4
      %v570 = vshll.u32 %v245, 16
      %v572 = vrot.slane %v570, 5
      %v573 = vsel %vm271, %v568, %v572
      %v574 = vshrl.u32 %v245, 16
      %v576 = vrot.slane %v574, 4
      %v577 = vor.u32 %v576, %v572
      %v578 = vrot.slane %v577, 4
      %v580 = vshll.u32 %v265, 16
      %v582 = vrot.slane %v580, 5
      %v583 = vsel %vm271, %v578, %v582
      %v585 = vshrl.u32 %v246, 16
      %v587 = vrot.slane %v585, 4
      %v588 = vshll.u32 %v246, 16
      %v590 = vrot.slane %v588, 5
      %v591 = vor.u32 %v587, %v590
      %v592 = vrot.slane %v591, 4
      %v594 = vshll.u32 %v247, 16
      %v596 = vrot.slane %v594, 5
      %v597 = vsel %vm271, %v592, %v596
      %v598 = vshrl.u32 %v247, 16
      %v600 = vrot.slane %v598, 4
      %v601 = vor.u32 %v600, %v596
      %v602 = vrot.slane %v601, 4
      %v604 = vshll.u32 %v266, 16
      %v606 = vrot.slane %v604, 5
      %v607 = vsel %vm271, %v602, %v606
      %v609 = vshrl.u32 %v248, 16
      %v611 = vrot.slane %v609, 4
      %v612 = vshll.u32 %v248, 16
      %v614 = vrot.slane %v612, 5
      %v615 = vor.u32 %v611, %v614
      %v616 = vrot.slane %v615, 4
      %v618 = vshll.u32 %v249, 16
      %v620 = vrot.slane %v618, 5
      %v621 = vsel %vm271, %v616, %v620
      %v622 = vshrl.u32 %v249, 16
      %v624 = vrot.slane %v622, 4
      %v625 = vor.u32 %v624, %v620
      %v626 = vrot.slane %v625, 4
      %v628 = vshll.u32 %v267, 16
      %v630 = vrot.slane %v628, 5
      %v631 = vsel %vm271, %v626, %v630
      %v633 = vshrl.u32 %v250, 16
      %v635 = vrot.slane %v633, 4
      %v636 = vshll.u32 %v250, 16
      %v638 = vrot.slane %v636, 5
      %v639 = vor.u32 %v635, %v638
      %v640 = vrot.slane %v639, 4
      %v642 = vshll.u32 %v251, 16
      %v644 = vrot.slane %v642, 5
      %v645 = vsel %vm271, %v640, %v644
      %v646 = vshrl.u32 %v251, 16
      %v648 = vrot.slane %v646, 4
      %v649 = vor.u32 %v648, %v644
      %v650 = vrot.slane %v649, 4
      %v652 = vshll.u32 %v268, 16
      %v654 = vrot.slane %v652, 5
      %v655 = vsel %vm271, %v650, %v654
      %s656 = scalar_lea.vmem %s1, 2
      %v657 = vld [vmem:[%s656] sm:$0x3]
      %v658 = vunpack.c.l.b16 %v285
      %v659 = vunpack.c.l.b16 %v295
      %v660 = vunpack.c.l.b16 %v309
      %v661 = vunpack.c.l.b16 %v319
      %v662 = vunpack.c.l.b16 %v333
      %v663 = vunpack.c.l.b16 %v343
      %v664 = vunpack.c.l.b16 %v357
      %v665 = vunpack.c.l.b16 %v367
      %v666 = vunpack.c.l.b16 %v381
      %v667 = vunpack.c.l.b16 %v391
      %v668 = vunpack.c.l.b16 %v405
      %v669 = vunpack.c.l.b16 %v415
      %v670 = vunpack.c.l.b16 %v429
      %v671 = vunpack.c.l.b16 %v439
      %v672 = vunpack.c.l.b16 %v453
      %v673 = vunpack.c.l.b16 %v463
      %v674 = vunpack.c.l.b16 %v477
      %v675 = vunpack.c.l.b16 %v487
      %v676 = vunpack.c.l.b16 %v501
      %v677 = vunpack.c.l.b16 %v511
      %v678 = vunpack.c.l.b16 %v525
      %v679 = vunpack.c.l.b16 %v535
      %v680 = vunpack.c.l.b16 %v549
      %v681 = vunpack.c.l.b16 %v559
      %v682 = vunpack.c.l.b16 %v573
      %v683 = vunpack.c.l.b16 %v583
      %v684 = vunpack.c.l.b16 %v597
      %v685 = vunpack.c.l.b16 %v607
      %v686 = vunpack.c.l.b16 %v621
      %v687 = vunpack.c.l.b16 %v631
      %v688 = vunpack.c.l.b16 %v645
      %v689 = vunpack.c.l.b16 %v655
      %v690 = vpack.c.b16 %v659, %v658
      %v691 = vpack.c.b16 %v661, %v660
      %v692 = vpack.c.b16 %v663, %v662
      %v693 = vpack.c.b16 %v665, %v664
      %v694 = vpack.c.b16 %v667, %v666
      %v695 = vpack.c.b16 %v669, %v668
      %v696 = vpack.c.b16 %v671, %v670
      %v697 = vpack.c.b16 %v673, %v672
      %v698 = vpack.c.b16 %v675, %v674
      %v699 = vpack.c.b16 %v677, %v676
      %v700 = vpack.c.b16 %v679, %v678
      %v701 = vpack.c.b16 %v681, %v680
      %v702 = vpack.c.b16 %v683, %v682
      %v703 = vpack.c.b16 %v685, %v684
      %v704 = vpack.c.b16 %v687, %v686
      %v705 = vpack.c.b16 %v689, %v688
      %vm706 = vcmask 31744
      %v708 = vsel %vm706, %v690, 0
      %v711 = vsel %vm706, %v691, 0
      %v714 = vsel %vm706, %v692, 0
      %v717 = vsel %vm706, %v693, 0
      %v720 = vsel %vm706, %v694, 0
      %v723 = vsel %vm706, %v695, 0
      %v726 = vsel %vm706, %v696, 0
      %v729 = vsel %vm706, %v697, 0
      %v732 = vsel %vm706, %v698, 0
      %v735 = vsel %vm706, %v699, 0
      %v738 = vsel %vm706, %v700, 0
      %v741 = vsel %vm706, %v701, 0
      %v744 = vsel %vm706, %v702, 0
      %v747 = vsel %vm706, %v703, 0
      %v750 = vsel %vm706, %v704, 0
      %v753 = vsel %vm706, %v705, 0
      %vm755 = vcmask 1041408
      %v757 = vsel %vm755, %v657, 0
      %759 = vmatprep.subr.bf16.mxu0 0
      %760 = vmatpush1.bf16.msra.mxu0 %v757
      %761 = vmatprep.subr.bf16.mxu0 0
      %762 = vmatpush1.bf16.msra.mxu0 0
      %763 = vmatprep.subr.bf16.mxu0 0
      %764 = vmatpush1.bf16.msra.mxu0 0
      %765 = vmatprep.subr.bf16.mxu0 0
      %766 = vmatpush1.bf16.msra.mxu0 0
      %767 = vmatprep.subr.bf16.mxu0 0
      %768 = vmatpush1.bf16.msra.mxu0 0
      %769 = vmatprep.subr.bf16.mxu0 0
      %770 = vmatpush1.bf16.msra.mxu0 0
      %771 = vmatprep.subr.bf16.mxu0 0
      %772 = vmatpush1.bf16.msra.mxu0 0
      %773 = vmatprep.subr.bf16.mxu0 0
      %774 = vmatpush1.bf16.msra.mxu0 0
      %775 = vmatprep.subr.bf16.mxu0 0
      %776 = vmatpush1.bf16.msra.mxu0 0
      %777 = vmatprep.subr.bf16.mxu0 0
      %778 = vmatpush1.bf16.msra.mxu0 0
      %779 = vmatprep.subr.bf16.mxu0 0
      %780 = vmatpush1.bf16.msra.mxu0 0
      %781 = vmatprep.subr.bf16.mxu0 0
      %782 = vmatpush1.bf16.msra.mxu0 0
      %783 = vmatprep.subr.bf16.mxu0 0
      %784 = vmatpush1.bf16.msra.mxu0 0
      %785 = vmatprep.subr.bf16.mxu0 0
      %786 = vmatpush1.bf16.msra.mxu0 0
      %787 = vmatprep.subr.bf16.mxu0 0
      %788 = vmatpush1.bf16.msra.mxu0 0
      %789 = vmatprep.subr.bf16.mxu0 0
      %790 = vmatpush1.bf16.msra.mxu0 0
      %791 = vmatprep.mubr.bf16.mxu0 0
      %792 = vmatmul.mubr.bf16.gmra.mrb[0].mxu0 %v708
      %v793 = vpop.f32.mrb[0].mxu0
      %v794 = vadd.f32 0.0, %v793
      %v795 = vpop.f32.mrb[0].mxu0
      %v796 = vpop.f32.mrb[0].mxu0
      %v797 = vadd.f32 0.0, %v796
      %v798 = vpop.f32.mrb[0].mxu0
      %799 = vmatprep.mubr.bf16.mxu0 0
      %800 = vmatmul.mubr.bf16.gmra.mrb[0].mxu0 %v711
      %v801 = vpop.f32.mrb[0].mxu0
      %v802 = vadd.f32 0.0, %v801
      %v803 = vpop.f32.mrb[0].mxu0
      %v804 = vpop.f32.mrb[0].mxu0
      %v805 = vadd.f32 0.0, %v804
      %v806 = vpop.f32.mrb[0].mxu0
      %807 = vmatprep.mubr.bf16.mxu0 0
      %808 = vmatmul.mubr.bf16.gmra.mrb[0].mxu0 %v714
      %v809 = vpop.f32.mrb[0].mxu0
      %v810 = vadd.f32 0.0, %v809
      %v811 = vpop.f32.mrb[0].mxu0
      %v812 = vpop.f32.mrb[0].mxu0
      %v813 = vadd.f32 0.0, %v812
      %v814 = vpop.f32.mrb[0].mxu0
      %815 = vmatprep.mubr.bf16.mxu0 0
      %816 = vmatmul.mubr.bf16.gmra.mrb[0].mxu0 %v717
      %v817 = vpop.f32.mrb[0].mxu0
      %v818 = vadd.f32 0.0, %v817
      %v819 = vpop.f32.mrb[0].mxu0
      %v820 = vpop.f32.mrb[0].mxu0
      %v821 = vadd.f32 0.0, %v820
      %v822 = vpop.f32.mrb[0].mxu0
      %823 = vmatprep.mubr.bf16.mxu0 0
      %824 = vmatmul.mubr.bf16.gmra.mrb[0].mxu0 %v720
      %v825 = vpop.f32.mrb[0].mxu0
      %v826 = vadd.f32 0.0, %v825
      %v827 = vpop.f32.mrb[0].mxu0
      %v828 = vpop.f32.mrb[0].mxu0
      %v829 = vadd.f32 0.0, %v828
      %v830 = vpop.f32.mrb[0].mxu0
      %831 = vmatprep.mubr.bf16.mxu0 0
      %832 = vmatmul.mubr.bf16.gmra.mrb[0].mxu0 %v723
      %v833 = vpop.f32.mrb[0].mxu0
      %v834 = vadd.f32 0.0, %v833
      %v835 = vpop.f32.mrb[0].mxu0
      %v836 = vpop.f32.mrb[0].mxu0
      %v837 = vadd.f32 0.0, %v836
      %v838 = vpop.f32.mrb[0].mxu0
      %839 = vmatprep.mubr.bf16.mxu0 0
      %840 = vmatmul.mubr.bf16.gmra.mrb[0].mxu0 %v726
      %v841 = vpop.f32.mrb[0].mxu0
      %v842 = vadd.f32 0.0, %v841
      %v843 = vpop.f32.mrb[0].mxu0
      %v844 = vpop.f32.mrb[0].mxu0
      %v845 = vadd.f32 0.0, %v844
      %v846 = vpop.f32.mrb[0].mxu0
      %847 = vmatprep.mubr.bf16.mxu0 0
      %848 = vmatmul.mubr.bf16.gmra.mrb[0].mxu0 %v729
      %v849 = vpop.f32.mrb[0].mxu0
      %v850 = vadd.f32 0.0, %v849
      %v851 = vpop.f32.mrb[0].mxu0
      %v852 = vpop.f32.mrb[0].mxu0
      %v853 = vadd.f32 0.0, %v852
      %v854 = vpop.f32.mrb[0].mxu0
      %855 = vmatprep.mubr.bf16.mxu0 0
      %856 = vmatmul.mubr.bf16.gmra.mrb[0].mxu0 %v732
      %v857 = vpop.f32.mrb[0].mxu0
      %v858 = vadd.f32 0.0, %v857
      %v859 = vpop.f32.mrb[0].mxu0
      %v860 = vpop.f32.mrb[0].mxu0
      %v861 = vadd.f32 0.0, %v860
      %v862 = vpop.f32.mrb[0].mxu0
      %863 = vmatprep.mubr.bf16.mxu0 0
      %864 = vmatmul.mubr.bf16.gmra.mrb[0].mxu0 %v735
      %v865 = vpop.f32.mrb[0].mxu0
      %v866 = vadd.f32 0.0, %v865
      %v867 = vpop.f32.mrb[0].mxu0
      %v868 = vpop.f32.mrb[0].mxu0
      %v869 = vadd.f32 0.0, %v868
      %v870 = vpop.f32.mrb[0].mxu0
      %871 = vmatprep.mubr.bf16.mxu0 0
      %872 = vmatmul.mubr.bf16.gmra.mrb[0].mxu0 %v738
      %v873 = vpop.f32.mrb[0].mxu0
      %v874 = vadd.f32 0.0, %v873
      %v875 = vpop.f32.mrb[0].mxu0
      %v876 = vpop.f32.mrb[0].mxu0
      %v877 = vadd.f32 0.0, %v876
      %v878 = vpop.f32.mrb[0].mxu0
      %879 = vmatprep.mubr.bf16.mxu0 0
      %880 = vmatmul.mubr.bf16.gmra.mrb[0].mxu0 %v741
      %v881 = vpop.f32.mrb[0].mxu0
      %v882 = vadd.f32 0.0, %v881
      %v883 = vpop.f32.mrb[0].mxu0
      %v884 = vpop.f32.mrb[0].mxu0
      %v885 = vadd.f32 0.0, %v884
      %v886 = vpop.f32.mrb[0].mxu0
      %887 = vmatprep.mubr.bf16.mxu0 0
      %888 = vmatmul.mubr.bf16.gmra.mrb[0].mxu0 %v744
      %v889 = vpop.f32.mrb[0].mxu0
      %v890 = vadd.f32 0.0, %v889
      %v891 = vpop.f32.mrb[0].mxu0
      %v892 = vpop.f32.mrb[0].mxu0
      %v893 = vadd.f32 0.0, %v892
      %v894 = vpop.f32.mrb[0].mxu0
      %895 = vmatprep.mubr.bf16.mxu0 0
      %896 = vmatmul.mubr.bf16.gmra.mrb[0].mxu0 %v747
      %v897 = vpop.f32.mrb[0].mxu0
      %v898 = vadd.f32 0.0, %v897
      %v899 = vpop.f32.mrb[0].mxu0
      %v900 = vpop.f32.mrb[0].mxu0
      %v901 = vadd.f32 0.0, %v900
      %v902 = vpop.f32.mrb[0].mxu0
      %903 = vmatprep.mubr.bf16.mxu0 0
      %904 = vmatmul.mubr.bf16.gmra.mrb[0].mxu0 %v750
      %v905 = vpop.f32.mrb[0].mxu0
      %v906 = vadd.f32 0.0, %v905
      %v907 = vpop.f32.mrb[0].mxu0
      %v908 = vpop.f32.mrb[0].mxu0
      %v909 = vadd.f32 0.0, %v908
      %v910 = vpop.f32.mrb[0].mxu0
      %911 = vmatprep.mubr.bf16.mxu0 0
      %912 = vmatmul.mubr.bf16.gmra.mrb[0].mxu0 %v753
      %v913 = vpop.f32.mrb[0].mxu0
      %v914 = vadd.f32 0.0, %v913
      %v915 = vpop.f32.mrb[0].mxu0
      %v916 = vpop.f32.mrb[0].mxu0
      %v917 = vadd.f32 0.0, %v916
      %v918 = vpop.f32.mrb[0].mxu0
      %919 = vdwg.mxu0
      %v952 = vunpack.c.l.b16 %v220
      %v953 = vunpack.c.l.b16 %v221
      %v954 = vunpack.c.l.b16 %v222
      %v955 = vunpack.c.l.b16 %v223
      %v956 = vunpack.c.l.b16 %v224
      %v957 = vunpack.c.l.b16 %v225
      %v958 = vunpack.c.l.b16 %v226
      %v959 = vunpack.c.l.b16 %v227
      %v960 = vunpack.c.l.b16 %v228
      %v961 = vunpack.c.l.b16 %v229
      %v962 = vunpack.c.l.b16 %v230
      %v963 = vunpack.c.l.b16 %v231
      %v964 = vunpack.c.l.b16 %v232
      %v965 = vunpack.c.l.b16 %v233
      %v966 = vunpack.c.l.b16 %v234
      %v967 = vunpack.c.l.b16 %v235
      %v968 = vunpack.c.l.b16 %v236
      %v969 = vunpack.c.l.b16 %v237
      %v970 = vunpack.c.l.b16 %v238
      %v971 = vunpack.c.l.b16 %v239
      %v972 = vunpack.c.l.b16 %v240
      %v973 = vunpack.c.l.b16 %v241
      %v974 = vunpack.c.l.b16 %v242
      %v975 = vunpack.c.l.b16 %v243
      %v976 = vunpack.c.l.b16 %v244
      %v977 = vunpack.c.l.b16 %v245
      %v978 = vunpack.c.l.b16 %v246
      %v979 = vunpack.c.l.b16 %v247
      %v980 = vunpack.c.l.b16 %v248
      %v981 = vunpack.c.l.b16 %v249
      %v982 = vunpack.c.l.b16 %v250
      %v983 = vunpack.c.l.b16 %v251
      %v984 = vpack.c.b16 %v953, %v952
      %v985 = vpack.c.b16 %v955, %v954
      %v986 = vpack.c.b16 %v957, %v956
      %v987 = vpack.c.b16 %v959, %v958
      %v988 = vpack.c.b16 %v961, %v960
      %v989 = vpack.c.b16 %v963, %v962
      %v990 = vpack.c.b16 %v965, %v964
      %v991 = vpack.c.b16 %v967, %v966
      %v992 = vpack.c.b16 %v969, %v968
      %v993 = vpack.c.b16 %v971, %v970
      %v994 = vpack.c.b16 %v973, %v972
      %v995 = vpack.c.b16 %v975, %v974
      %v996 = vpack.c.b16 %v977, %v976
      %v997 = vpack.c.b16 %v979, %v978
      %v998 = vpack.c.b16 %v981, %v980
      %v999 = vpack.c.b16 %v983, %v982
      %v1001 = vsel %vm706, %v984, 0
      %v1004 = vsel %vm706, %v985, 0
      %v1007 = vsel %vm706, %v986, 0
      %v1010 = vsel %vm706, %v987, 0
      %v1013 = vsel %vm706, %v988, 0
      %v1016 = vsel %vm706, %v989, 0
      %v1019 = vsel %vm706, %v990, 0
      %v1022 = vsel %vm706, %v991, 0
      %v1025 = vsel %vm706, %v992, 0
      %v1028 = vsel %vm706, %v993, 0
      %v1031 = vsel %vm706, %v994, 0
      %v1034 = vsel %vm706, %v995, 0
      %v1037 = vsel %vm706, %v996, 0
      %v1040 = vsel %vm706, %v997, 0
      %v1043 = vsel %vm706, %v998, 0
      %v1046 = vsel %vm706, %v999, 0
      %v1049 = vsel %vm755, %v252, 0
      %1051 = vmatprep.subr.bf16.mxu0 0
      %1052 = vmatpush1.bf16.msra.mxu0 %v1049
      %1053 = vmatprep.subr.bf16.mxu0 0
      %1054 = vmatpush1.bf16.msra.mxu0 0
      %1055 = vmatprep.subr.bf16.mxu0 0
      %1056 = vmatpush1.bf16.msra.mxu0 0
      %1057 = vmatprep.subr.bf16.mxu0 0
      %1058 = vmatpush1.bf16.msra.mxu0 0
      %1059 = vmatprep.subr.bf16.mxu0 0
      %1060 = vmatpush1.bf16.msra.mxu0 0
      %1061 = vmatprep.subr.bf16.mxu0 0
      %1062 = vmatpush1.bf16.msra.mxu0 0
      %1063 = vmatprep.subr.bf16.mxu0 0
      %1064 = vmatpush1.bf16.msra.mxu0 0
      %1065 = vmatprep.subr.bf16.mxu0 0
      %1066 = vmatpush1.bf16.msra.mxu0 0
      %1067 = vmatprep.subr.bf16.mxu0 0
      %1068 = vmatpush1.bf16.msra.mxu0 0
      %1069 = vmatprep.subr.bf16.mxu0 0
      %1070 = vmatpush1.bf16.msra.mxu0 0
      %1071 = vmatprep.subr.bf16.mxu0 0
      %1072 = vmatpush1.bf16.msra.mxu0 0
      %1073 = vmatprep.subr.bf16.mxu0 0
      %1074 = vmatpush1.bf16.msra.mxu0 0
      %1075 = vmatprep.subr.bf16.mxu0 0
      %1076 = vmatpush1.bf16.msra.mxu0 0
      %1077 = vmatprep.subr.bf16.mxu0 0
      %1078 = vmatpush1.bf16.msra.mxu0 0
      %1079 = vmatprep.subr.bf16.mxu0 0
      %1080 = vmatpush1.bf16.msra.mxu0 0
      %1081 = vmatprep.subr.bf16.mxu0 0
      %1082 = vmatpush1.bf16.msra.mxu0 0
      %1083 = vmatprep.mubr.bf16.mxu0 0
      %1084 = vmatmul.mubr.bf16.gmra.mrb[0].mxu0 %v1001
      %v1085 = vpop.f32.mrb[0].mxu0
      %v1086 = vadd.f32 %v794, %v1085
      %v1087 = vpop.f32.mrb[0].mxu0
      %v1088 = vpop.f32.mrb[0].mxu0
      %v1089 = vadd.f32 %v797, %v1088
      %v1090 = vpop.f32.mrb[0].mxu0
      %1091 = vmatprep.mubr.bf16.mxu0 0
      %1092 = vmatmul.mubr.bf16.gmra.mrb[0].mxu0 %v1004
      %v1093 = vpop.f32.mrb[0].mxu0
      %v1094 = vadd.f32 %v802, %v1093
      %v1095 = vpop.f32.mrb[0].mxu0
      %v1096 = vpop.f32.mrb[0].mxu0
      %v1097 = vadd.f32 %v805, %v1096
      %v1098 = vpop.f32.mrb[0].mxu0
      %1099 = vmatprep.mubr.bf16.mxu0 0
      %1100 = vmatmul.mubr.bf16.gmra.mrb[0].mxu0 %v1007
      %v1101 = vpop.f32.mrb[0].mxu0
      %v1102 = vadd.f32 %v810, %v1101
      %v1103 = vpop.f32.mrb[0].mxu0
      %v1104 = vpop.f32.mrb[0].mxu0
      %v1105 = vadd.f32 %v813, %v1104
      %v1106 = vpop.f32.mrb[0].mxu0
      %1107 = vmatprep.mubr.bf16.mxu0 0
      %1108 = vmatmul.mubr.bf16.gmra.mrb[0].mxu0 %v1010
      %v1109 = vpop.f32.mrb[0].mxu0
      %v1110 = vadd.f32 %v818, %v1109
      %v1111 = vpop.f32.mrb[0].mxu0
      %v1112 = vpop.f32.mrb[0].mxu0
      %v1113 = vadd.f32 %v821, %v1112
      %v1114 = vpop.f32.mrb[0].mxu0
      %1115 = vmatprep.mubr.bf16.mxu0 0
      %1116 = vmatmul.mubr.bf16.gmra.mrb[0].mxu0 %v1013
      %v1117 = vpop.f32.mrb[0].mxu0
      %v1118 = vadd.f32 %v826, %v1117
      %v1119 = vpop.f32.mrb[0].mxu0
      %v1120 = vpop.f32.mrb[0].mxu0
      %v1121 = vadd.f32 %v829, %v1120
      %v1122 = vpop.f32.mrb[0].mxu0
      %1123 = vmatprep.mubr.bf16.mxu0 0
      %1124 = vmatmul.mubr.bf16.gmra.mrb[0].mxu0 %v1016
      %v1125 = vpop.f32.mrb[0].mxu0
      %v1126 = vadd.f32 %v834, %v1125
      %v1127 = vpop.f32.mrb[0].mxu0
      %v1128 = vpop.f32.mrb[0].mxu0
      %v1129 = vadd.f32 %v837, %v1128
      %v1130 = vpop.f32.mrb[0].mxu0
      %1131 = vmatprep.mubr.bf16.mxu0 0
      %1132 = vmatmul.mubr.bf16.gmra.mrb[0].mxu0 %v1019
      %v1133 = vpop.f32.mrb[0].mxu0
      %v1134 = vadd.f32 %v842, %v1133
      %v1135 = vpop.f32.mrb[0].mxu0
      %v1136 = vpop.f32.mrb[0].mxu0
      %v1137 = vadd.f32 %v845, %v1136
      %v1138 = vpop.f32.mrb[0].mxu0
      %1139 = vmatprep.mubr.bf16.mxu0 0
      %1140 = vmatmul.mubr.bf16.gmra.mrb[0].mxu0 %v1022
      %v1141 = vpop.f32.mrb[0].mxu0
      %v1142 = vadd.f32 %v850, %v1141
      %v1143 = vpop.f32.mrb[0].mxu0
      %v1144 = vpop.f32.mrb[0].mxu0
      %v1145 = vadd.f32 %v853, %v1144
      %v1146 = vpop.f32.mrb[0].mxu0
      %1147 = vmatprep.mubr.bf16.mxu0 0
      %1148 = vmatmul.mubr.bf16.gmra.mrb[0].mxu0 %v1025
      %v1149 = vpop.f32.mrb[0].mxu0
      %v1150 = vadd.f32 %v858, %v1149
      %v1151 = vpop.f32.mrb[0].mxu0
      %v1152 = vpop.f32.mrb[0].mxu0
      %v1153 = vadd.f32 %v861, %v1152
      %v1154 = vpop.f32.mrb[0].mxu0
      %1155 = vmatprep.mubr.bf16.mxu0 0
      %1156 = vmatmul.mubr.bf16.gmra.mrb[0].mxu0 %v1028
      %v1157 = vpop.f32.mrb[0].mxu0
      %v1158 = vadd.f32 %v866, %v1157
      %v1159 = vpop.f32.mrb[0].mxu0
      %v1160 = vpop.f32.mrb[0].mxu0
      %v1161 = vadd.f32 %v869, %v1160
      %v1162 = vpop.f32.mrb[0].mxu0
      %1163 = vmatprep.mubr.bf16.mxu0 0
      %1164 = vmatmul.mubr.bf16.gmra.mrb[0].mxu0 %v1031
      %v1165 = vpop.f32.mrb[0].mxu0
      %v1166 = vadd.f32 %v874, %v1165
      %v1167 = vpop.f32.mrb[0].mxu0
      %v1168 = vpop.f32.mrb[0].mxu0
      %v1169 = vadd.f32 %v877, %v1168
      %v1170 = vpop.f32.mrb[0].mxu0
      %1171 = vmatprep.mubr.bf16.mxu0 0
      %1172 = vmatmul.mubr.bf16.gmra.mrb[0].mxu0 %v1034
      %v1173 = vpop.f32.mrb[0].mxu0
      %v1174 = vadd.f32 %v882, %v1173
      %v1175 = vpop.f32.mrb[0].mxu0
      %v1176 = vpop.f32.mrb[0].mxu0
      %v1177 = vadd.f32 %v885, %v1176
      %v1178 = vpop.f32.mrb[0].mxu0
      %1179 = vmatprep.mubr.bf16.mxu0 0
      %1180 = vmatmul.mubr.bf16.gmra.mrb[0].mxu0 %v1037
      %v1181 = vpop.f32.mrb[0].mxu0
      %v1182 = vadd.f32 %v890, %v1181
      %v1183 = vpop.f32.mrb[0].mxu0
      %v1184 = vpop.f32.mrb[0].mxu0
      %v1185 = vadd.f32 %v893, %v1184
      %v1186 = vpop.f32.mrb[0].mxu0
      %1187 = vmatprep.mubr.bf16.mxu0 0
      %1188 = vmatmul.mubr.bf16.gmra.mrb[0].mxu0 %v1040
      %v1189 = vpop.f32.mrb[0].mxu0
      %v1190 = vadd.f32 %v898, %v1189
      %v1191 = vpop.f32.mrb[0].mxu0
      %v1192 = vpop.f32.mrb[0].mxu0
      %v1193 = vadd.f32 %v901, %v1192
      %v1194 = vpop.f32.mrb[0].mxu0
      %1195 = vmatprep.mubr.bf16.mxu0 0
      %1196 = vmatmul.mubr.bf16.gmra.mrb[0].mxu0 %v1043
      %v1197 = vpop.f32.mrb[0].mxu0
      %v1198 = vadd.f32 %v906, %v1197
      %v1199 = vpop.f32.mrb[0].mxu0
      %v1200 = vpop.f32.mrb[0].mxu0
      %v1201 = vadd.f32 %v909, %v1200
      %v1202 = vpop.f32.mrb[0].mxu0
      %1203 = vmatprep.mubr.bf16.mxu0 0
      %1204 = vmatmul.mubr.bf16.gmra.mrb[0].mxu0 %v1046
      %v1205 = vpop.f32.mrb[0].mxu0
      %v1206 = vadd.f32 %v914, %v1205
      %v1207 = vpop.f32.mrb[0].mxu0
      %v1208 = vpop.f32.mrb[0].mxu0
      %v1209 = vadd.f32 %v917, %v1208
      %v1210 = vpop.f32.mrb[0].mxu0
      %1211 = vdwg.mxu0
      %v1212 = vld [vmem:[%s205] sm:$0xe]
      %v1213 = vld [vmem:[%s205 + $0xc] sm:$0xe]
      %v1214 = vld [vmem:[%s205 + $0x18] sm:$0xe]
      %v1215 = vld [vmem:[%s205 + $0x24] sm:$0xe]
      %v1216 = vld [vmem:[%s205 + $0x30] sm:$0xe]
      %v1217 = vld [vmem:[%s205 + $0x3c] sm:$0xe]
      %v1218 = vld [vmem:[%s205 + $0x48] sm:$0xe]
      %v1219 = vld [vmem:[%s205 + $0x54] sm:$0xe]
      %v1220 = vld [vmem:[%s205 + $0x60] sm:$0xe]
      %v1221 = vld [vmem:[%s205 + $0x6c] sm:$0xe]
      %v1222 = vld [vmem:[%s205 + $0x78] sm:$0xe]
      %v1223 = vld [vmem:[%s205 + $0x84] sm:$0xe]
      %v1224 = vld [vmem:[%s205 + $0x90] sm:$0xe]
      %v1225 = vld [vmem:[%s205 + $0x9c] sm:$0xe]
      %v1226 = vld [vmem:[%s205 + $0xa8] sm:$0xe]
      %v1227 = vld [vmem:[%s205 + $0xb4] sm:$0xe]
      %vm1260 = vcmask 1042432
      %vm1261 = vcmask 1046532
      %vm1262 = vmor %vm1260, %vm1261
      %v1263 = vrot.slane %v1212, 5
      %v1264 = vrot.slane %v1263, 4
      %v1265 = vrot.slane %v221, 5
      %v1266 = vsel %vm1262, %v1264, %v1265
      %v1267 = vrot.slane %v1265, 4
      %v1268 = vrot.slane %v253, 5
      %v1269 = vsel %vm1262, %v1267, %v1268
      %v1270 = vrot.slane %v1213, 5
      %v1271 = vrot.slane %v1270, 4
      %v1272 = vrot.slane %v223, 5
      %v1273 = vsel %vm1262, %v1271, %v1272
      %v1274 = vrot.slane %v1272, 4
      %v1275 = vrot.slane %v254, 5
      %v1276 = vsel %vm1262, %v1274, %v1275
      %v1277 = vrot.slane %v1214, 5
      %v1278 = vrot.slane %v1277, 4
      %v1279 = vrot.slane %v225, 5
      %v1280 = vsel %vm1262, %v1278, %v1279
      %v1281 = vrot.slane %v1279, 4
      %v1282 = vrot.slane %v255, 5
      %v1283 = vsel %vm1262, %v1281, %v1282
      %v1284 = vrot.slane %v1215, 5
      %v1285 = vrot.slane %v1284, 4
      %v1286 = vrot.slane %v227, 5
      %v1287 = vsel %vm1262, %v1285, %v1286
      %v1288 = vrot.slane %v1286, 4
      %v1289 = vrot.slane %v256, 5
      %v1290 = vsel %vm1262, %v1288, %v1289
      %v1291 = vrot.slane %v1216, 5
      %v1292 = vrot.slane %v1291, 4
      %v1293 = vrot.slane %v229, 5
      %v1294 = vsel %vm1262, %v1292, %v1293
      %v1295 = vrot.slane %v1293, 4
      %v1296 = vrot.slane %v257, 5
      %v1297 = vsel %vm1262, %v1295, %v1296
      %v1298 = vrot.slane %v1217, 5
      %v1299 = vrot.slane %v1298, 4
      %v1300 = vrot.slane %v231, 5
      %v1301 = vsel %vm1262, %v1299, %v1300
      %v1302 = vrot.slane %v1300, 4
      %v1303 = vrot.slane %v258, 5
      %v1304 = vsel %vm1262, %v1302, %v1303
      %v1305 = vrot.slane %v1218, 5
      %v1306 = vrot.slane %v1305, 4
      %v1307 = vrot.slane %v233, 5
      %v1308 = vsel %vm1262, %v1306, %v1307
      %v1309 = vrot.slane %v1307, 4
      %v1310 = vrot.slane %v259, 5
      %v1311 = vsel %vm1262, %v1309, %v1310
      %v1312 = vrot.slane %v1219, 5
      %v1313 = vrot.slane %v1312, 4
      %v1314 = vrot.slane %v235, 5
      %v1315 = vsel %vm1262, %v1313, %v1314
      %v1316 = vrot.slane %v1314, 4
      %v1317 = vrot.slane %v260, 5
      %v1318 = vsel %vm1262, %v1316, %v1317
      %v1319 = vrot.slane %v1220, 5
      %v1320 = vrot.slane %v1319, 4
      %v1321 = vrot.slane %v237, 5
      %v1322 = vsel %vm1262, %v1320, %v1321
      %v1323 = vrot.slane %v1321, 4
      %v1324 = vrot.slane %v261, 5
      %v1325 = vsel %vm1262, %v1323, %v1324
      %v1326 = vrot.slane %v1221, 5
      %v1327 = vrot.slane %v1326, 4
      %v1328 = vrot.slane %v239, 5
      %v1329 = vsel %vm1262, %v1327, %v1328
      %v1330 = vrot.slane %v1328, 4
      %v1331 = vrot.slane %v262, 5
      %v1332 = vsel %vm1262, %v1330, %v1331
      %v1333 = vrot.slane %v1222, 5
      %v1334 = vrot.slane %v1333, 4
      %v1335 = vrot.slane %v241, 5
      %v1336 = vsel %vm1262, %v1334, %v1335
      %v1337 = vrot.slane %v1335, 4
      %v1338 = vrot.slane %v263, 5
      %v1339 = vsel %vm1262, %v1337, %v1338
      %v1340 = vrot.slane %v1223, 5
      %v1341 = vrot.slane %v1340, 4
      %v1342 = vrot.slane %v243, 5
      %v1343 = vsel %vm1262, %v1341, %v1342
      %v1344 = vrot.slane %v1342, 4
      %v1345 = vrot.slane %v264, 5
      %v1346 = vsel %vm1262, %v1344, %v1345
      %v1347 = vrot.slane %v1224, 5
      %v1348 = vrot.slane %v1347, 4
      %v1349 = vrot.slane %v245, 5
      %v1350 = vsel %vm1262, %v1348, %v1349
      %v1351 = vrot.slane %v1349, 4
      %v1352 = vrot.slane %v265, 5
      %v1353 = vsel %vm1262, %v1351, %v1352
      %v1354 = vrot.slane %v1225, 5
      %v1355 = vrot.slane %v1354, 4
      %v1356 = vrot.slane %v247, 5
      %v1357 = vsel %vm1262, %v1355, %v1356
      %v1358 = vrot.slane %v1356, 4
      %v1359 = vrot.slane %v266, 5
      %v1360 = vsel %vm1262, %v1358, %v1359
      %v1361 = vrot.slane %v1226, 5
      %v1362 = vrot.slane %v1361, 4
      %v1363 = vrot.slane %v249, 5
      %v1364 = vsel %vm1262, %v1362, %v1363
      %v1365 = vrot.slane %v1363, 4
      %v1366 = vrot.slane %v267, 5
      %v1367 = vsel %vm1262, %v1365, %v1366
      %v1368 = vrot.slane %v1227, 5
      %v1369 = vrot.slane %v1368, 4
      %v1370 = vrot.slane %v251, 5
      %v1371 = vsel %vm1262, %v1369, %v1370
      %v1372 = vrot.slane %v1370, 4
      %v1373 = vrot.slane %v268, 5
      %v1374 = vsel %vm1262, %v1372, %v1373
      %s1375 = scalar_lea.vmem %s1, 4
      %v1376 = vld [vmem:[%s1375] sm:$0x3]
      %v1377 = vunpack.c.l.b16 %v1266
      %v1378 = vunpack.c.l.b16 %v1269
      %v1379 = vunpack.c.l.b16 %v1273
      %v1380 = vunpack.c.l.b16 %v1276
      %v1381 = vunpack.c.l.b16 %v1280
      %v1382 = vunpack.c.l.b16 %v1283
      %v1383 = vunpack.c.l.b16 %v1287
      %v1384 = vunpack.c.l.b16 %v1290
      %v1385 = vunpack.c.l.b16 %v1294
      %v1386 = vunpack.c.l.b16 %v1297
      %v1387 = vunpack.c.l.b16 %v1301
      %v1388 = vunpack.c.l.b16 %v1304
      %v1389 = vunpack.c.l.b16 %v1308
      %v1390 = vunpack.c.l.b16 %v1311
      %v1391 = vunpack.c.l.b16 %v1315
      %v1392 = vunpack.c.l.b16 %v1318
      %v1393 = vunpack.c.l.b16 %v1322
      %v1394 = vunpack.c.l.b16 %v1325
      %v1395 = vunpack.c.l.b16 %v1329
      %v1396 = vunpack.c.l.b16 %v1332
      %v1397 = vunpack.c.l.b16 %v1336
      %v1398 = vunpack.c.l.b16 %v1339
      %v1399 = vunpack.c.l.b16 %v1343
      %v1400 = vunpack.c.l.b16 %v1346
      %v1401 = vunpack.c.l.b16 %v1350
      %v1402 = vunpack.c.l.b16 %v1353
      %v1403 = vunpack.c.l.b16 %v1357
      %v1404 = vunpack.c.l.b16 %v1360
      %v1405 = vunpack.c.l.b16 %v1364
      %v1406 = vunpack.c.l.b16 %v1367
      %v1407 = vunpack.c.l.b16 %v1371
      %v1408 = vunpack.c.l.b16 %v1374
      %v1409 = vpack.c.b16 %v1378, %v1377
      %v1410 = vpack.c.b16 %v1380, %v1379
      %v1411 = vpack.c.b16 %v1382, %v1381
      %v1412 = vpack.c.b16 %v1384, %v1383
      %v1413 = vpack.c.b16 %v1386, %v1385
      %v1414 = vpack.c.b16 %v1388, %v1387
      %v1415 = vpack.c.b16 %v1390, %v1389
      %v1416 = vpack.c.b16 %v1392, %v1391
      %v1417 = vpack.c.b16 %v1394, %v1393
      %v1418 = vpack.c.b16 %v1396, %v1395
      %v1419 = vpack.c.b16 %v1398, %v1397
      %v1420 = vpack.c.b16 %v1400, %v1399
      %v1421 = vpack.c.b16 %v1402, %v1401
      %v1422 = vpack.c.b16 %v1404, %v1403
      %v1423 = vpack.c.b16 %v1406, %v1405
      %v1424 = vpack.c.b16 %v1408, %v1407
      %v1426 = vsel %vm706, %v1409, 0
      %v1429 = vsel %vm706, %v1410, 0
      %v1432 = vsel %vm706, %v1411, 0
      %v1435 = vsel %vm706, %v1412, 0
      %v1438 = vsel %vm706, %v1413, 0
      %v1441 = vsel %vm706, %v1414, 0
      %v1444 = vsel %vm706, %v1415, 0
      %v1447 = vsel %vm706, %v1416, 0
      %v1450 = vsel %vm706, %v1417, 0
      %v1453 = vsel %vm706, %v1418, 0
      %v1456 = vsel %vm706, %v1419, 0
      %v1459 = vsel %vm706, %v1420, 0
      %v1462 = vsel %vm706, %v1421, 0
      %v1465 = vsel %vm706, %v1422, 0
      %v1468 = vsel %vm706, %v1423, 0
      %v1471 = vsel %vm706, %v1424, 0
      %v1474 = vsel %vm755, %v1376, 0
      %1476 = vmatprep.subr.bf16.mxu0 0
      %1477 = vmatpush1.bf16.msra.mxu0 %v1474
      %1478 = vmatprep.subr.bf16.mxu0 0
      %1479 = vmatpush1.bf16.msra.mxu0 0
      %1480 = vmatprep.subr.bf16.mxu0 0
      %1481 = vmatpush1.bf16.msra.mxu0 0
      %1482 = vmatprep.subr.bf16.mxu0 0
      %1483 = vmatpush1.bf16.msra.mxu0 0
      %1484 = vmatprep.subr.bf16.mxu0 0
      %1485 = vmatpush1.bf16.msra.mxu0 0
      %1486 = vmatprep.subr.bf16.mxu0 0
      %1487 = vmatpush1.bf16.msra.mxu0 0
      %1488 = vmatprep.subr.bf16.mxu0 0
      %1489 = vmatpush1.bf16.msra.mxu0 0
      %1490 = vmatprep.subr.bf16.mxu0 0
      %1491 = vmatpush1.bf16.msra.mxu0 0
      %1492 = vmatprep.subr.bf16.mxu0 0
      %1493 = vmatpush1.bf16.msra.mxu0 0
      %1494 = vmatprep.subr.bf16.mxu0 0
      %1495 = vmatpush1.bf16.msra.mxu0 0
      %1496 = vmatprep.subr.bf16.mxu0 0
      %1497 = vmatpush1.bf16.msra.mxu0 0
      %1498 = vmatprep.subr.bf16.mxu0 0
      %1499 = vmatpush1.bf16.msra.mxu0 0
      %1500 = vmatprep.subr.bf16.mxu0 0
      %1501 = vmatpush1.bf16.msra.mxu0 0
      %1502 = vmatprep.subr.bf16.mxu0 0
      %1503 = vmatpush1.bf16.msra.mxu0 0
      %1504 = vmatprep.subr.bf16.mxu0 0
      %1505 = vmatpush1.bf16.msra.mxu0 0
      %1506 = vmatprep.subr.bf16.mxu0 0
      %1507 = vmatpush1.bf16.msra.mxu0 0
      %1508 = vmatprep.mubr.bf16.mxu0 0
      %1509 = vmatmul.mubr.bf16.gmra.mrb[0].mxu0 %v1426
      %v1510 = vpop.f32.mrb[0].mxu0
      %v1511 = vadd.f32 0.0, %v1510
      %v1512 = vpop.f32.mrb[0].mxu0
      %v1513 = vpop.f32.mrb[0].mxu0
      %v1514 = vadd.f32 0.0, %v1513
      %v1515 = vpop.f32.mrb[0].mxu0
      %1516 = vmatprep.mubr.bf16.mxu0 0
      %1517 = vmatmul.mubr.bf16.gmra.mrb[0].mxu0 %v1429
      %v1518 = vpop.f32.mrb[0].mxu0
      %v1519 = vadd.f32 0.0, %v1518
      %v1520 = vpop.f32.mrb[0].mxu0
      %v1521 = vpop.f32.mrb[0].mxu0
      %v1522 = vadd.f32 0.0, %v1521
      %v1523 = vpop.f32.mrb[0].mxu0
      %1524 = vmatprep.mubr.bf16.mxu0 0
      %1525 = vmatmul.mubr.bf16.gmra.mrb[0].mxu0 %v1432
      %v1526 = vpop.f32.mrb[0].mxu0
      %v1527 = vadd.f32 0.0, %v1526
      %v1528 = vpop.f32.mrb[0].mxu0
      %v1529 = vpop.f32.mrb[0].mxu0
      %v1530 = vadd.f32 0.0, %v1529
      %v1531 = vpop.f32.mrb[0].mxu0
      %1532 = vmatprep.mubr.bf16.mxu0 0
      %1533 = vmatmul.mubr.bf16.gmra.mrb[0].mxu0 %v1435
      %v1534 = vpop.f32.mrb[0].mxu0
      %v1535 = vadd.f32 0.0, %v1534
      %v1536 = vpop.f32.mrb[0].mxu0
      %v1537 = vpop.f32.mrb[0].mxu0
      %v1538 = vadd.f32 0.0, %v1537
      %v1539 = vpop.f32.mrb[0].mxu0
      %1540 = vmatprep.mubr.bf16.mxu0 0
      %1541 = vmatmul.mubr.bf16.gmra.mrb[0].mxu0 %v1438
      %v1542 = vpop.f32.mrb[0].mxu0
      %v1543 = vadd.f32 0.0, %v1542
      %v1544 = vpop.f32.mrb[0].mxu0
      %v1545 = vpop.f32.mrb[0].mxu0
      %v1546 = vadd.f32 0.0, %v1545
      %v1547 = vpop.f32.mrb[0].mxu0
      %1548 = vmatprep.mubr.bf16.mxu0 0
      %1549 = vmatmul.mubr.bf16.gmra.mrb[0].mxu0 %v1441
      %v1550 = vpop.f32.mrb[0].mxu0
      %v1551 = vadd.f32 0.0, %v1550
      %v1552 = vpop.f32.mrb[0].mxu0
      %v1553 = vpop.f32.mrb[0].mxu0
      %v1554 = vadd.f32 0.0, %v1553
      %v1555 = vpop.f32.mrb[0].mxu0
      %1556 = vmatprep.mubr.bf16.mxu0 0
      %1557 = vmatmul.mubr.bf16.gmra.mrb[0].mxu0 %v1444
      %v1558 = vpop.f32.mrb[0].mxu0
      %v1559 = vadd.f32 0.0, %v1558
      %v1560 = vpop.f32.mrb[0].mxu0
      %v1561 = vpop.f32.mrb[0].mxu0
      %v1562 = vadd.f32 0.0, %v1561
      %v1563 = vpop.f32.mrb[0].mxu0
      %1564 = vmatprep.mubr.bf16.mxu0 0
      %1565 = vmatmul.mubr.bf16.gmra.mrb[0].mxu0 %v1447
      %v1566 = vpop.f32.mrb[0].mxu0
      %v1567 = vadd.f32 0.0, %v1566
      %v1568 = vpop.f32.mrb[0].mxu0
      %v1569 = vpop.f32.mrb[0].mxu0
      %v1570 = vadd.f32 0.0, %v1569
      %v1571 = vpop.f32.mrb[0].mxu0
      %1572 = vmatprep.mubr.bf16.mxu0 0
      %1573 = vmatmul.mubr.bf16.gmra.mrb[0].mxu0 %v1450
      %v1574 = vpop.f32.mrb[0].mxu0
      %v1575 = vadd.f32 0.0, %v1574
      %v1576 = vpop.f32.mrb[0].mxu0
      %v1577 = vpop.f32.mrb[0].mxu0
      %v1578 = vadd.f32 0.0, %v1577
      %v1579 = vpop.f32.mrb[0].mxu0
      %1580 = vmatprep.mubr.bf16.mxu0 0
      %1581 = vmatmul.mubr.bf16.gmra.mrb[0].mxu0 %v1453
      %v1582 = vpop.f32.mrb[0].mxu0
      %v1583 = vadd.f32 0.0, %v1582
      %v1584 = vpop.f32.mrb[0].mxu0
      %v1585 = vpop.f32.mrb[0].mxu0
      %v1586 = vadd.f32 0.0, %v1585
      %v1587 = vpop.f32.mrb[0].mxu0
      %1588 = vmatprep.mubr.bf16.mxu0 0
      %1589 = vmatmul.mubr.bf16.gmra.mrb[0].mxu0 %v1456
      %v1590 = vpop.f32.mrb[0].mxu0
      %v1591 = vadd.f32 0.0, %v1590
      %v1592 = vpop.f32.mrb[0].mxu0
      %v1593 = vpop.f32.mrb[0].mxu0
      %v1594 = vadd.f32 0.0, %v1593
      %v1595 = vpop.f32.mrb[0].mxu0
      %1596 = vmatprep.mubr.bf16.mxu0 0
      %1597 = vmatmul.mubr.bf16.gmra.mrb[0].mxu0 %v1459
      %v1598 = vpop.f32.mrb[0].mxu0
      %v1599 = vadd.f32 0.0, %v1598
      %v1600 = vpop.f32.mrb[0].mxu0
      %v1601 = vpop.f32.mrb[0].mxu0
      %v1602 = vadd.f32 0.0, %v1601
      %v1603 = vpop.f32.mrb[0].mxu0
      %1604 = vmatprep.mubr.bf16.mxu0 0
      %1605 = vmatmul.mubr.bf16.gmra.mrb[0].mxu0 %v1462
      %v1606 = vpop.f32.mrb[0].mxu0
      %v1607 = vadd.f32 0.0, %v1606
      %v1608 = vpop.f32.mrb[0].mxu0
      %v1609 = vpop.f32.mrb[0].mxu0
      %v1610 = vadd.f32 0.0, %v1609
      %v1611 = vpop.f32.mrb[0].mxu0
      %1612 = vmatprep.mubr.bf16.mxu0 0
      %1613 = vmatmul.mubr.bf16.gmra.mrb[0].mxu0 %v1465
      %v1614 = vpop.f32.mrb[0].mxu0
      %v1615 = vadd.f32 0.0, %v1614
      %v1616 = vpop.f32.mrb[0].mxu0
      %v1617 = vpop.f32.mrb[0].mxu0
      %v1618 = vadd.f32 0.0, %v1617
      %v1619 = vpop.f32.mrb[0].mxu0
      %1620 = vmatprep.mubr.bf16.mxu0 0
      %1621 = vmatmul.mubr.bf16.gmra.mrb[0].mxu0 %v1468
      %v1622 = vpop.f32.mrb[0].mxu0
      %v1623 = vadd.f32 0.0, %v1622
      %v1624 = vpop.f32.mrb[0].mxu0
      %v1625 = vpop.f32.mrb[0].mxu0
      %v1626 = vadd.f32 0.0, %v1625
      %v1627 = vpop.f32.mrb[0].mxu0
      %1628 = vmatprep.mubr.bf16.mxu0 0
      %1629 = vmatmul.mubr.bf16.gmra.mrb[0].mxu0 %v1471
      %v1630 = vpop.f32.mrb[0].mxu0
      %v1631 = vadd.f32 0.0, %v1630
      %v1632 = vpop.f32.mrb[0].mxu0
      %v1633 = vpop.f32.mrb[0].mxu0
      %v1634 = vadd.f32 0.0, %v1633
      %v1635 = vpop.f32.mrb[0].mxu0
      %1636 = vdwg.mxu0
      %v1637 = vadd.f32 %v1086, %v1511
      %v1638 = vadd.f32 %v1089, %v1514
      %v1639 = vadd.f32 %v1094, %v1519
      %v1640 = vadd.f32 %v1097, %v1522
      %v1641 = vadd.f32 %v1102, %v1527
      %v1642 = vadd.f32 %v1105, %v1530
      %v1643 = vadd.f32 %v1110, %v1535
      %v1644 = vadd.f32 %v1113, %v1538
      %v1645 = vadd.f32 %v1118, %v1543
      %v1646 = vadd.f32 %v1121, %v1546
      %v1647 = vadd.f32 %v1126, %v1551
      %v1648 = vadd.f32 %v1129, %v1554
      %v1649 = vadd.f32 %v1134, %v1559
      %v1650 = vadd.f32 %v1137, %v1562
      %v1651 = vadd.f32 %v1142, %v1567
      %v1652 = vadd.f32 %v1145, %v1570
      %v1653 = vadd.f32 %v1150, %v1575
      %v1654 = vadd.f32 %v1153, %v1578
      %v1655 = vadd.f32 %v1158, %v1583
      %v1656 = vadd.f32 %v1161, %v1586
      %v1657 = vadd.f32 %v1166, %v1591
      %v1658 = vadd.f32 %v1169, %v1594
      %v1659 = vadd.f32 %v1174, %v1599
      %v1660 = vadd.f32 %v1177, %v1602
      %v1661 = vadd.f32 %v1182, %v1607
      %v1662 = vadd.f32 %v1185, %v1610
      %v1663 = vadd.f32 %v1190, %v1615
      %v1664 = vadd.f32 %v1193, %v1618
      %v1665 = vadd.f32 %v1198, %v1623
      %v1666 = vadd.f32 %v1201, %v1626
      %v1667 = vadd.f32 %v1206, %v1631
      %v1668 = vadd.f32 %v1209, %v1634
      %s1669 = scalar_lea.vmem %s205, 12
      %v1670 = vld [vmem:[%s1669] sm:$0xf]
      %v1671 = vld [vmem:[%s1669 + $0x4] sm:$0xf]
      %v1672 = vld [vmem:[%s1669 + $0xc] sm:$0xf]
      %v1673 = vld [vmem:[%s1669 + $0x10] sm:$0xf]
      %v1674 = vld [vmem:[%s1669 + $0x18] sm:$0xf]
      %v1675 = vld [vmem:[%s1669 + $0x1c] sm:$0xf]
      %v1676 = vld [vmem:[%s1669 + $0x24] sm:$0xf]
      %v1677 = vld [vmem:[%s1669 + $0x28] sm:$0xf]
      %v1678 = vld [vmem:[%s1669 + $0x30] sm:$0xf]
      %v1679 = vld [vmem:[%s1669 + $0x34] sm:$0xf]
      %v1680 = vld [vmem:[%s1669 + $0x3c] sm:$0xf]
      %v1681 = vld [vmem:[%s1669 + $0x40] sm:$0xf]
      %v1682 = vld [vmem:[%s1669 + $0x48] sm:$0xf]
      %v1683 = vld [vmem:[%s1669 + $0x4c] sm:$0xf]
      %v1684 = vld [vmem:[%s1669 + $0x54] sm:$0xf]
      %v1685 = vld [vmem:[%s1669 + $0x58] sm:$0xf]
      %v1686 = vld [vmem:[%s1669 + $0x60] sm:$0xf]
      %v1687 = vld [vmem:[%s1669 + $0x64] sm:$0xf]
      %v1688 = vld [vmem:[%s1669 + $0x6c] sm:$0xf]
      %v1689 = vld [vmem:[%s1669 + $0x70] sm:$0xf]
      %v1690 = vld [vmem:[%s1669 + $0x78] sm:$0xf]
      %v1691 = vld [vmem:[%s1669 + $0x7c] sm:$0xf]
      %v1692 = vld [vmem:[%s1669 + $0x84] sm:$0xf]
      %v1693 = vld [vmem:[%s1669 + $0x88] sm:$0xf]
      %v1694 = vld [vmem:[%s1669 + $0x90] sm:$0xf]
      %v1695 = vld [vmem:[%s1669 + $0x94] sm:$0xf]
      %v1696 = vld [vmem:[%s1669 + $0x9c] sm:$0xf]
      %v1697 = vld [vmem:[%s1669 + $0xa0] sm:$0xf]
      %v1698 = vld [vmem:[%s1669 + $0xa8] sm:$0xf]
      %v1699 = vld [vmem:[%s1669 + $0xac] sm:$0xf]
      %v1700 = vld [vmem:[%s1669 + $0xb4] sm:$0xf]
      %v1701 = vld [vmem:[%s1669 + $0xb8] sm:$0xf]
      %s1702 = scalar_lea.vmem %s1, 6
      %v1703 = vld [vmem:[%s1702] sm:$0x3]
      %v1736 = vunpack.c.l.b16 %v1670
      %v1737 = vunpack.c.l.b16 %v1671
      %v1738 = vunpack.c.l.b16 %v1672
      %v1739 = vunpack.c.l.b16 %v1673
      %v1740 = vunpack.c.l.b16 %v1674
      %v1741 = vunpack.c.l.b16 %v1675
      %v1742 = vunpack.c.l.b16 %v1676
      %v1743 = vunpack.c.l.b16 %v1677
      %v1744 = vunpack.c.l.b16 %v1678
      %v1745 = vunpack.c.l.b16 %v1679
      %v1746 = vunpack.c.l.b16 %v1680
      %v1747 = vunpack.c.l.b16 %v1681
      %v1748 = vunpack.c.l.b16 %v1682
      %v1749 = vunpack.c.l.b16 %v1683
      %v1750 = vunpack.c.l.b16 %v1684
      %v1751 = vunpack.c.l.b16 %v1685
      %v1752 = vunpack.c.l.b16 %v1686
      %v1753 = vunpack.c.l.b16 %v1687
      %v1754 = vunpack.c.l.b16 %v1688
      %v1755 = vunpack.c.l.b16 %v1689
      %v1756 = vunpack.c.l.b16 %v1690
      %v1757 = vunpack.c.l.b16 %v1691
      %v1758 = vunpack.c.l.b16 %v1692
      %v1759 = vunpack.c.l.b16 %v1693
      %v1760 = vunpack.c.l.b16 %v1694
      %v1761 = vunpack.c.l.b16 %v1695
      %v1762 = vunpack.c.l.b16 %v1696
      %v1763 = vunpack.c.l.b16 %v1697
      %v1764 = vunpack.c.l.b16 %v1698
      %v1765 = vunpack.c.l.b16 %v1699
      %v1766 = vunpack.c.l.b16 %v1700
      %v1767 = vunpack.c.l.b16 %v1701
      %v1768 = vpack.c.b16 %v1737, %v1736
      %v1769 = vpack.c.b16 %v1739, %v1738
      %v1770 = vpack.c.b16 %v1741, %v1740
      %v1771 = vpack.c.b16 %v1743, %v1742
      %v1772 = vpack.c.b16 %v1745, %v1744
      %v1773 = vpack.c.b16 %v1747, %v1746
      %v1774 = vpack.c.b16 %v1749, %v1748
      %v1775 = vpack.c.b16 %v1751, %v1750
      %v1776 = vpack.c.b16 %v1753, %v1752
      %v1777 = vpack.c.b16 %v1755, %v1754
      %v1778 = vpack.c.b16 %v1757, %v1756
      %v1779 = vpack.c.b16 %v1759, %v1758
      %v1780 = vpack.c.b16 %v1761, %v1760
      %v1781 = vpack.c.b16 %v1763, %v1762
      %v1782 = vpack.c.b16 %v1765, %v1764
      %v1783 = vpack.c.b16 %v1767, %v1766
      %v1785 = vsel %vm706, %v1768, 0
      %v1788 = vsel %vm706, %v1769, 0
      %v1791 = vsel %vm706, %v1770, 0
      %v1794 = vsel %vm706, %v1771, 0
      %v1797 = vsel %vm706, %v1772, 0
      %v1800 = vsel %vm706, %v1773, 0
      %v1803 = vsel %vm706, %v1774, 0
      %v1806 = vsel %vm706, %v1775, 0
      %v1809 = vsel %vm706, %v1776, 0
      %v1812 = vsel %vm706, %v1777, 0
      %v1815 = vsel %vm706, %v1778, 0
      %v1818 = vsel %vm706, %v1779, 0
      %v1821 = vsel %vm706, %v1780, 0
      %v1824 = vsel %vm706, %v1781, 0
      %v1827 = vsel %vm706, %v1782, 0
      %v1830 = vsel %vm706, %v1783, 0
      %v1833 = vsel %vm755, %v1703, 0
      %1835 = vmatprep.subr.bf16.mxu0 0
      %1836 = vmatpush1.bf16.msra.mxu0 %v1833
      %1837 = vmatprep.subr.bf16.mxu0 0
      %1838 = vmatpush1.bf16.msra.mxu0 0
      %1839 = vmatprep.subr.bf16.mxu0 0
      %1840 = vmatpush1.bf16.msra.mxu0 0
      %1841 = vmatprep.subr.bf16.mxu0 0
      %1842 = vmatpush1.bf16.msra.mxu0 0
      %1843 = vmatprep.subr.bf16.mxu0 0
      %1844 = vmatpush1.bf16.msra.mxu0 0
      %1845 = vmatprep.subr.bf16.mxu0 0
      %1846 = vmatpush1.bf16.msra.mxu0 0
      %1847 = vmatprep.subr.bf16.mxu0 0
      %1848 = vmatpush1.bf16.msra.mxu0 0
      %1849 = vmatprep.subr.bf16.mxu0 0
      %1850 = vmatpush1.bf16.msra.mxu0 0
      %1851 = vmatprep.subr.bf16.mxu0 0
      %1852 = vmatpush1.bf16.msra.mxu0 0
      %1853 = vmatprep.subr.bf16.mxu0 0
      %1854 = vmatpush1.bf16.msra.mxu0 0
      %1855 = vmatprep.subr.bf16.mxu0 0
      %1856 = vmatpush1.bf16.msra.mxu0 0
      %1857 = vmatprep.subr.bf16.mxu0 0
      %1858 = vmatpush1.bf16.msra.mxu0 0
      %1859 = vmatprep.subr.bf16.mxu0 0
      %1860 = vmatpush1.bf16.msra.mxu0 0
      %1861 = vmatprep.subr.bf16.mxu0 0
      %1862 = vmatpush1.bf16.msra.mxu0 0
      %1863 = vmatprep.subr.bf16.mxu0 0
      %1864 = vmatpush1.bf16.msra.mxu0 0
      %1865 = vmatprep.subr.bf16.mxu0 0
      %1866 = vmatpush1.bf16.msra.mxu0 0
      %1867 = vmatprep.mubr.bf16.mxu0 0
      %1868 = vmatmul.mubr.bf16.gmra.mrb[0].mxu0 %v1785
      %v1869 = vpop.f32.mrb[0].mxu0
      %v1870 = vadd.f32 0.0, %v1869
      %v1871 = vpop.f32.mrb[0].mxu0
      %v1872 = vpop.f32.mrb[0].mxu0
      %v1873 = vadd.f32 0.0, %v1872
      %v1874 = vpop.f32.mrb[0].mxu0
      %1875 = vmatprep.mubr.bf16.mxu0 0
      %1876 = vmatmul.mubr.bf16.gmra.mrb[0].mxu0 %v1788
      %v1877 = vpop.f32.mrb[0].mxu0
      %v1878 = vadd.f32 0.0, %v1877
      %v1879 = vpop.f32.mrb[0].mxu0
      %v1880 = vpop.f32.mrb[0].mxu0
      %v1881 = vadd.f32 0.0, %v1880
      %v1882 = vpop.f32.mrb[0].mxu0
      %1883 = vmatprep.mubr.bf16.mxu0 0
      %1884 = vmatmul.mubr.bf16.gmra.mrb[0].mxu0 %v1791
      %v1885 = vpop.f32.mrb[0].mxu0
      %v1886 = vadd.f32 0.0, %v1885
      %v1887 = vpop.f32.mrb[0].mxu0
      %v1888 = vpop.f32.mrb[0].mxu0
      %v1889 = vadd.f32 0.0, %v1888
      %v1890 = vpop.f32.mrb[0].mxu0
      %1891 = vmatprep.mubr.bf16.mxu0 0
      %1892 = vmatmul.mubr.bf16.gmra.mrb[0].mxu0 %v1794
      %v1893 = vpop.f32.mrb[0].mxu0
      %v1894 = vadd.f32 0.0, %v1893
      %v1895 = vpop.f32.mrb[0].mxu0
      %v1896 = vpop.f32.mrb[0].mxu0
      %v1897 = vadd.f32 0.0, %v1896
      %v1898 = vpop.f32.mrb[0].mxu0
      %1899 = vmatprep.mubr.bf16.mxu0 0
      %1900 = vmatmul.mubr.bf16.gmra.mrb[0].mxu0 %v1797
      %v1901 = vpop.f32.mrb[0].mxu0
      %v1902 = vadd.f32 0.0, %v1901
      %v1903 = vpop.f32.mrb[0].mxu0
      %v1904 = vpop.f32.mrb[0].mxu0
      %v1905 = vadd.f32 0.0, %v1904
      %v1906 = vpop.f32.mrb[0].mxu0
      %1907 = vmatprep.mubr.bf16.mxu0 0
      %1908 = vmatmul.mubr.bf16.gmra.mrb[0].mxu0 %v1800
      %v1909 = vpop.f32.mrb[0].mxu0
      %v1910 = vadd.f32 0.0, %v1909
      %v1911 = vpop.f32.mrb[0].mxu0
      %v1912 = vpop.f32.mrb[0].mxu0
      %v1913 = vadd.f32 0.0, %v1912
      %v1914 = vpop.f32.mrb[0].mxu0
      %1915 = vmatprep.mubr.bf16.mxu0 0
      %1916 = vmatmul.mubr.bf16.gmra.mrb[0].mxu0 %v1803
      %v1917 = vpop.f32.mrb[0].mxu0
      %v1918 = vadd.f32 0.0, %v1917
      %v1919 = vpop.f32.mrb[0].mxu0
      %v1920 = vpop.f32.mrb[0].mxu0
      %v1921 = vadd.f32 0.0, %v1920
      %v1922 = vpop.f32.mrb[0].mxu0
      %1923 = vmatprep.mubr.bf16.mxu0 0
      %1924 = vmatmul.mubr.bf16.gmra.mrb[0].mxu0 %v1806
      %v1925 = vpop.f32.mrb[0].mxu0
      %v1926 = vadd.f32 0.0, %v1925
      %v1927 = vpop.f32.mrb[0].mxu0
      %v1928 = vpop.f32.mrb[0].mxu0
      %v1929 = vadd.f32 0.0, %v1928
      %v1930 = vpop.f32.mrb[0].mxu0
      %1931 = vmatprep.mubr.bf16.mxu0 0
      %1932 = vmatmul.mubr.bf16.gmra.mrb[0].mxu0 %v1809
      %v1933 = vpop.f32.mrb[0].mxu0
      %v1934 = vadd.f32 0.0, %v1933
      %v1935 = vpop.f32.mrb[0].mxu0
      %v1936 = vpop.f32.mrb[0].mxu0
      %v1937 = vadd.f32 0.0, %v1936
      %v1938 = vpop.f32.mrb[0].mxu0
      %1939 = vmatprep.mubr.bf16.mxu0 0
      %1940 = vmatmul.mubr.bf16.gmra.mrb[0].mxu0 %v1812
      %v1941 = vpop.f32.mrb[0].mxu0
      %v1942 = vadd.f32 0.0, %v1941
      %v1943 = vpop.f32.mrb[0].mxu0
      %v1944 = vpop.f32.mrb[0].mxu0
      %v1945 = vadd.f32 0.0, %v1944
      %v1946 = vpop.f32.mrb[0].mxu0
      %1947 = vmatprep.mubr.bf16.mxu0 0
      %1948 = vmatmul.mubr.bf16.gmra.mrb[0].mxu0 %v1815
      %v1949 = vpop.f32.mrb[0].mxu0
      %v1950 = vadd.f32 0.0, %v1949
      %v1951 = vpop.f32.mrb[0].mxu0
      %v1952 = vpop.f32.mrb[0].mxu0
      %v1953 = vadd.f32 0.0, %v1952
      %v1954 = vpop.f32.mrb[0].mxu0
      %1955 = vmatprep.mubr.bf16.mxu0 0
      %1956 = vmatmul.mubr.bf16.gmra.mrb[0].mxu0 %v1818
      %v1957 = vpop.f32.mrb[0].mxu0
      %v1958 = vadd.f32 0.0, %v1957
      %v1959 = vpop.f32.mrb[0].mxu0
      %v1960 = vpop.f32.mrb[0].mxu0
      %v1961 = vadd.f32 0.0, %v1960
      %v1962 = vpop.f32.mrb[0].mxu0
      %1963 = vmatprep.mubr.bf16.mxu0 0
      %1964 = vmatmul.mubr.bf16.gmra.mrb[0].mxu0 %v1821
      %v1965 = vpop.f32.mrb[0].mxu0
      %v1966 = vadd.f32 0.0, %v1965
      %v1967 = vpop.f32.mrb[0].mxu0
      %v1968 = vpop.f32.mrb[0].mxu0
      %v1969 = vadd.f32 0.0, %v1968
      %v1970 = vpop.f32.mrb[0].mxu0
      %1971 = vmatprep.mubr.bf16.mxu0 0
      %1972 = vmatmul.mubr.bf16.gmra.mrb[0].mxu0 %v1824
      %v1973 = vpop.f32.mrb[0].mxu0
      %v1974 = vadd.f32 0.0, %v1973
      %v1975 = vpop.f32.mrb[0].mxu0
      %v1976 = vpop.f32.mrb[0].mxu0
      %v1977 = vadd.f32 0.0, %v1976
      %v1978 = vpop.f32.mrb[0].mxu0
      %1979 = vmatprep.mubr.bf16.mxu0 0
      %1980 = vmatmul.mubr.bf16.gmra.mrb[0].mxu0 %v1827
      %v1981 = vpop.f32.mrb[0].mxu0
      %v1982 = vadd.f32 0.0, %v1981
      %v1983 = vpop.f32.mrb[0].mxu0
      %v1984 = vpop.f32.mrb[0].mxu0
      %v1985 = vadd.f32 0.0, %v1984
      %v1986 = vpop.f32.mrb[0].mxu0
      %1987 = vmatprep.mubr.bf16.mxu0 0
      %1988 = vmatmul.mubr.bf16.gmra.mrb[0].mxu0 %v1830
      %v1989 = vpop.f32.mrb[0].mxu0
      %v1990 = vadd.f32 0.0, %v1989
      %v1991 = vpop.f32.mrb[0].mxu0
      %v1992 = vpop.f32.mrb[0].mxu0
      %v1993 = vadd.f32 0.0, %v1992
      %v1994 = vpop.f32.mrb[0].mxu0
      %1995 = vdwg.mxu0
      %v1996 = vadd.f32 %v1637, %v1870
      %v1997 = vadd.f32 %v1638, %v1873
      %v1998 = vadd.f32 %v1639, %v1878
      %v1999 = vadd.f32 %v1640, %v1881
      %v2000 = vadd.f32 %v1641, %v1886
      %v2001 = vadd.f32 %v1642, %v1889
      %v2002 = vadd.f32 %v1643, %v1894
      %v2003 = vadd.f32 %v1644, %v1897
      %v2004 = vadd.f32 %v1645, %v1902
      %v2005 = vadd.f32 %v1646, %v1905
      %v2006 = vadd.f32 %v1647, %v1910
      %v2007 = vadd.f32 %v1648, %v1913
      %v2008 = vadd.f32 %v1649, %v1918
      %v2009 = vadd.f32 %v1650, %v1921
      %v2010 = vadd.f32 %v1651, %v1926
      %v2011 = vadd.f32 %v1652, %v1929
      %v2012 = vadd.f32 %v1653, %v1934
      %v2013 = vadd.f32 %v1654, %v1937
      %v2014 = vadd.f32 %v1655, %v1942
      %v2015 = vadd.f32 %v1656, %v1945
      %v2016 = vadd.f32 %v1657, %v1950
      %v2017 = vadd.f32 %v1658, %v1953
      %v2018 = vadd.f32 %v1659, %v1958
      %v2019 = vadd.f32 %v1660, %v1961
      %v2020 = vadd.f32 %v1661, %v1966
      %v2021 = vadd.f32 %v1662, %v1969
      %v2022 = vadd.f32 %v1663, %v1974
      %v2023 = vadd.f32 %v1664, %v1977
      %v2024 = vadd.f32 %v1665, %v1982
      %v2025 = vadd.f32 %v1666, %v1985
      %v2026 = vadd.f32 %v1667, %v1990
      %v2027 = vadd.f32 %v1668, %v1993
      %v2028 = vld [vmem:[%s1669] sm:$0xf]
      %v2029 = vld [vmem:[%s1669 + $0x4] sm:$0xf]
      %v2030 = vld [vmem:[%s1669 + $0x8] sm:$0x1]
      %v2031 = vld [vmem:[%s1669 + $0xc] sm:$0xf]
      %v2032 = vld [vmem:[%s1669 + $0x10] sm:$0xf]
      %v2033 = vld [vmem:[%s1669 + $0x14] sm:$0x1]
      %v2034 = vld [vmem:[%s1669 + $0x18] sm:$0xf]
      %v2035 = vld [vmem:[%s1669 + $0x1c] sm:$0xf]
      %v2036 = vld [vmem:[%s1669 + $0x20] sm:$0x1]
      %v2037 = vld [vmem:[%s1669 + $0x24] sm:$0xf]
      %v2038 = vld [vmem:[%s1669 + $0x28] sm:$0xf]
      %v2039 = vld [vmem:[%s1669 + $0x2c] sm:$0x1]
      %v2040 = vld [vmem:[%s1669 + $0x30] sm:$0xf]
      %v2041 = vld [vmem:[%s1669 + $0x34] sm:$0xf]
      %v2042 = vld [vmem:[%s1669 + $0x38] sm:$0x1]
      %v2043 = vld [vmem:[%s1669 + $0x3c] sm:$0xf]
      %v2044 = vld [vmem:[%s1669 + $0x40] sm:$0xf]
      %v2045 = vld [vmem:[%s1669 + $0x44] sm:$0x1]
      %v2046 = vld [vmem:[%s1669 + $0x48] sm:$0xf]
      %v2047 = vld [vmem:[%s1669 + $0x4c] sm:$0xf]
      %v2048 = vld [vmem:[%s1669 + $0x50] sm:$0x1]
      %v2049 = vld [vmem:[%s1669 + $0x54] sm:$0xf]
      %v2050 = vld [vmem:[%s1669 + $0x58] sm:$0xf]
      %v2051 = vld [vmem:[%s1669 + $0x5c] sm:$0x1]
      %v2052 = vld [vmem:[%s1669 + $0x60] sm:$0xf]
      %v2053 = vld [vmem:[%s1669 + $0x64] sm:$0xf]
      %v2054 = vld [vmem:[%s1669 + $0x68] sm:$0x1]
      %v2055 = vld [vmem:[%s1669 + $0x6c] sm:$0xf]
      %v2056 = vld [vmem:[%s1669 + $0x70] sm:$0xf]
      %v2057 = vld [vmem:[%s1669 + $0x74] sm:$0x1]
      %v2058 = vld [vmem:[%s1669 + $0x78] sm:$0xf]
      %v2059 = vld [vmem:[%s1669 + $0x7c] sm:$0xf]
      %v2060 = vld [vmem:[%s1669 + $0x80] sm:$0x1]
      %v2061 = vld [vmem:[%s1669 + $0x84] sm:$0xf]
      %v2062 = vld [vmem:[%s1669 + $0x88] sm:$0xf]
      %v2063 = vld [vmem:[%s1669 + $0x8c] sm:$0x1]
      %v2064 = vld [vmem:[%s1669 + $0x90] sm:$0xf]
      %v2065 = vld [vmem:[%s1669 + $0x94] sm:$0xf]
      %v2066 = vld [vmem:[%s1669 + $0x98] sm:$0x1]
      %v2067 = vld [vmem:[%s1669 + $0x9c] sm:$0xf]
      %v2068 = vld [vmem:[%s1669 + $0xa0] sm:$0xf]
      %v2069 = vld [vmem:[%s1669 + $0xa4] sm:$0x1]
      %v2070 = vld [vmem:[%s1669 + $0xa8] sm:$0xf]
      %v2071 = vld [vmem:[%s1669 + $0xac] sm:$0xf]
      %v2072 = vld [vmem:[%s1669 + $0xb0] sm:$0x1]
      %v2073 = vld [vmem:[%s1669 + $0xb4] sm:$0xf]
      %v2074 = vld [vmem:[%s1669 + $0xb8] sm:$0xf]
      %v2075 = vld [vmem:[%s1669 + $0xbc] sm:$0x1]
      %v2077 = vshrl.u32 %v2028, 16
      %v2079 = vrot.slane %v2077, 4
      %v2080 = vshll.u32 %v2028, 16
      %v2082 = vrot.slane %v2080, 5
      %v2083 = vor.u32 %v2079, %v2082
      %v2084 = vrot.slane %v2083, 4
      %v2086 = vshll.u32 %v2029, 16
      %v2088 = vrot.slane %v2086, 5
      %v2089 = vsel %vm271, %v2084, %v2088
      %v2090 = vshrl.u32 %v2029, 16
      %v2092 = vrot.slane %v2090, 4
      %v2093 = vor.u32 %v2092, %v2088
      %v2094 = vrot.slane %v2093, 4
      %v2096 = vshll.u32 %v2030, 16
      %v2098 = vrot.slane %v2096, 5
      %v2099 = vsel %vm271, %v2094, %v2098
      %v2101 = vshrl.u32 %v2031, 16
      %v2103 = vrot.slane %v2101, 4
      %v2104 = vshll.u32 %v2031, 16
      %v2106 = vrot.slane %v2104, 5
      %v2107 = vor.u32 %v2103, %v2106
      %v2108 = vrot.slane %v2107, 4
      %v2110 = vshll.u32 %v2032, 16
      %v2112 = vrot.slane %v2110, 5
      %v2113 = vsel %vm271, %v2108, %v2112
      %v2114 = vshrl.u32 %v2032, 16
      %v2116 = vrot.slane %v2114, 4
      %v2117 = vor.u32 %v2116, %v2112
      %v2118 = vrot.slane %v2117, 4
      %v2120 = vshll.u32 %v2033, 16
      %v2122 = vrot.slane %v2120, 5
      %v2123 = vsel %vm271, %v2118, %v2122
      %v2125 = vshrl.u32 %v2034, 16
      %v2127 = vrot.slane %v2125, 4
      %v2128 = vshll.u32 %v2034, 16
      %v2130 = vrot.slane %v2128, 5
      %v2131 = vor.u32 %v2127, %v2130
      %v2132 = vrot.slane %v2131, 4
      %v2134 = vshll.u32 %v2035, 16
      %v2136 = vrot.slane %v2134, 5
      %v2137 = vsel %vm271, %v2132, %v2136
      %v2138 = vshrl.u32 %v2035, 16
      %v2140 = vrot.slane %v2138, 4
      %v2141 = vor.u32 %v2140, %v2136
      %v2142 = vrot.slane %v2141, 4
      %v2144 = vshll.u32 %v2036, 16
      %v2146 = vrot.slane %v2144, 5
      %v2147 = vsel %vm271, %v2142, %v2146
      %v2149 = vshrl.u32 %v2037, 16
      %v2151 = vrot.slane %v2149, 4
      %v2152 = vshll.u32 %v2037, 16
      %v2154 = vrot.slane %v2152, 5
      %v2155 = vor.u32 %v2151, %v2154
      %v2156 = vrot.slane %v2155, 4
      %v2158 = vshll.u32 %v2038, 16
      %v2160 = vrot.slane %v2158, 5
      %v2161 = vsel %vm271, %v2156, %v2160
      %v2162 = vshrl.u32 %v2038, 16
      %v2164 = vrot.slane %v2162, 4
      %v2165 = vor.u32 %v2164, %v2160
      %v2166 = vrot.slane %v2165, 4
      %v2168 = vshll.u32 %v2039, 16
      %v2170 = vrot.slane %v2168, 5
      %v2171 = vsel %vm271, %v2166, %v2170
      %v2173 = vshrl.u32 %v2040, 16
      %v2175 = vrot.slane %v2173, 4
      %v2176 = vshll.u32 %v2040, 16
      %v2178 = vrot.slane %v2176, 5
      %v2179 = vor.u32 %v2175, %v2178
      %v2180 = vrot.slane %v2179, 4
      %v2182 = vshll.u32 %v2041, 16
      %v2184 = vrot.slane %v2182, 5
      %v2185 = vsel %vm271, %v2180, %v2184
      %v2186 = vshrl.u32 %v2041, 16
      %v2188 = vrot.slane %v2186, 4
      %v2189 = vor.u32 %v2188, %v2184
      %v2190 = vrot.slane %v2189, 4
      %v2192 = vshll.u32 %v2042, 16
      %v2194 = vrot.slane %v2192, 5
      %v2195 = vsel %vm271, %v2190, %v2194
      %v2197 = vshrl.u32 %v2043, 16
      %v2199 = vrot.slane %v2197, 4
      %v2200 = vshll.u32 %v2043, 16
      %v2202 = vrot.slane %v2200, 5
      %v2203 = vor.u32 %v2199, %v2202
      %v2204 = vrot.slane %v2203, 4
      %v2206 = vshll.u32 %v2044, 16
      %v2208 = vrot.slane %v2206, 5
      %v2209 = vsel %vm271, %v2204, %v2208
      %v2210 = vshrl.u32 %v2044, 16
      %v2212 = vrot.slane %v2210, 4
      %v2213 = vor.u32 %v2212, %v2208
      %v2214 = vrot.slane %v2213, 4
      %v2216 = vshll.u32 %v2045, 16
      %v2218 = vrot.slane %v2216, 5
      %v2219 = vsel %vm271, %v2214, %v2218
      %v2221 = vshrl.u32 %v2046, 16
      %v2223 = vrot.slane %v2221, 4
      %v2224 = vshll.u32 %v2046, 16
      %v2226 = vrot.slane %v2224, 5
      %v2227 = vor.u32 %v2223, %v2226
      %v2228 = vrot.slane %v2227, 4
      %v2230 = vshll.u32 %v2047, 16
      %v2232 = vrot.slane %v2230, 5
      %v2233 = vsel %vm271, %v2228, %v2232
      %v2234 = vshrl.u32 %v2047, 16
      %v2236 = vrot.slane %v2234, 4
      %v2237 = vor.u32 %v2236, %v2232
      %v2238 = vrot.slane %v2237, 4
      %v2240 = vshll.u32 %v2048, 16
      %v2242 = vrot.slane %v2240, 5
      %v2243 = vsel %vm271, %v2238, %v2242
      %v2245 = vshrl.u32 %v2049, 16
      %v2247 = vrot.slane %v2245, 4
      %v2248 = vshll.u32 %v2049, 16
      %v2250 = vrot.slane %v2248, 5
      %v2251 = vor.u32 %v2247, %v2250
      %v2252 = vrot.slane %v2251, 4
      %v2254 = vshll.u32 %v2050, 16
      %v2256 = vrot.slane %v2254, 5
      %v2257 = vsel %vm271, %v2252, %v2256
      %v2258 = vshrl.u32 %v2050, 16
      %v2260 = vrot.slane %v2258, 4
      %v2261 = vor.u32 %v2260, %v2256
      %v2262 = vrot.slane %v2261, 4
      %v2264 = vshll.u32 %v2051, 16
      %v2266 = vrot.slane %v2264, 5
      %v2267 = vsel %vm271, %v2262, %v2266
      %v2269 = vshrl.u32 %v2052, 16
      %v2271 = vrot.slane %v2269, 4
      %v2272 = vshll.u32 %v2052, 16
      %v2274 = vrot.slane %v2272, 5
      %v2275 = vor.u32 %v2271, %v2274
      %v2276 = vrot.slane %v2275, 4
      %v2278 = vshll.u32 %v2053, 16
      %v2280 = vrot.slane %v2278, 5
      %v2281 = vsel %vm271, %v2276, %v2280
      %v2282 = vshrl.u32 %v2053, 16
      %v2284 = vrot.slane %v2282, 4
      %v2285 = vor.u32 %v2284, %v2280
      %v2286 = vrot.slane %v2285, 4
      %v2288 = vshll.u32 %v2054, 16
      %v2290 = vrot.slane %v2288, 5
      %v2291 = vsel %vm271, %v2286, %v2290
      %v2293 = vshrl.u32 %v2055, 16
      %v2295 = vrot.slane %v2293, 4
      %v2296 = vshll.u32 %v2055, 16
      %v2298 = vrot.slane %v2296, 5
      %v2299 = vor.u32 %v2295, %v2298
      %v2300 = vrot.slane %v2299, 4
      %v2302 = vshll.u32 %v2056, 16
      %v2304 = vrot.slane %v2302, 5
      %v2305 = vsel %vm271, %v2300, %v2304
      %v2306 = vshrl.u32 %v2056, 16
      %v2308 = vrot.slane %v2306, 4
      %v2309 = vor.u32 %v2308, %v2304
      %v2310 = vrot.slane %v2309, 4
      %v2312 = vshll.u32 %v2057, 16
      %v2314 = vrot.slane %v2312, 5
      %v2315 = vsel %vm271, %v2310, %v2314
      %v2317 = vshrl.u32 %v2058, 16
      %v2319 = vrot.slane %v2317, 4
      %v2320 = vshll.u32 %v2058, 16
      %v2322 = vrot.slane %v2320, 5
      %v2323 = vor.u32 %v2319, %v2322
      %v2324 = vrot.slane %v2323, 4
      %v2326 = vshll.u32 %v2059, 16
      %v2328 = vrot.slane %v2326, 5
      %v2329 = vsel %vm271, %v2324, %v2328
      %v2330 = vshrl.u32 %v2059, 16
      %v2332 = vrot.slane %v2330, 4
      %v2333 = vor.u32 %v2332, %v2328
      %v2334 = vrot.slane %v2333, 4
      %v2336 = vshll.u32 %v2060, 16
      %v2338 = vrot.slane %v2336, 5
      %v2339 = vsel %vm271, %v2334, %v2338
      %v2341 = vshrl.u32 %v2061, 16
      %v2343 = vrot.slane %v2341, 4
      %v2344 = vshll.u32 %v2061, 16
      %v2346 = vrot.slane %v2344, 5
      %v2347 = vor.u32 %v2343, %v2346
      %v2348 = vrot.slane %v2347, 4
      %v2350 = vshll.u32 %v2062, 16
      %v2352 = vrot.slane %v2350, 5
      %v2353 = vsel %vm271, %v2348, %v2352
      %v2354 = vshrl.u32 %v2062, 16
      %v2356 = vrot.slane %v2354, 4
      %v2357 = vor.u32 %v2356, %v2352
      %v2358 = vrot.slane %v2357, 4
      %v2360 = vshll.u32 %v2063, 16
      %v2362 = vrot.slane %v2360, 5
      %v2363 = vsel %vm271, %v2358, %v2362
      %v2365 = vshrl.u32 %v2064, 16
      %v2367 = vrot.slane %v2365, 4
      %v2368 = vshll.u32 %v2064, 16
      %v2370 = vrot.slane %v2368, 5
      %v2371 = vor.u32 %v2367, %v2370
      %v2372 = vrot.slane %v2371, 4
      %v2374 = vshll.u32 %v2065, 16
      %v2376 = vrot.slane %v2374, 5
      %v2377 = vsel %vm271, %v2372, %v2376
      %v2378 = vshrl.u32 %v2065, 16
      %v2380 = vrot.slane %v2378, 4
      %v2381 = vor.u32 %v2380, %v2376
      %v2382 = vrot.slane %v2381, 4
      %v2384 = vshll.u32 %v2066, 16
      %v2386 = vrot.slane %v2384, 5
      %v2387 = vsel %vm271, %v2382, %v2386
      %v2389 = vshrl.u32 %v2067, 16
      %v2391 = vrot.slane %v2389, 4
      %v2392 = vshll.u32 %v2067, 16
      %v2394 = vrot.slane %v2392, 5
      %v2395 = vor.u32 %v2391, %v2394
      %v2396 = vrot.slane %v2395, 4
      %v2398 = vshll.u32 %v2068, 16
      %v2400 = vrot.slane %v2398, 5
      %v2401 = vsel %vm271, %v2396, %v2400
      %v2402 = vshrl.u32 %v2068, 16
      %v2404 = vrot.slane %v2402, 4
      %v2405 = vor.u32 %v2404, %v2400
      %v2406 = vrot.slane %v2405, 4
      %v2408 = vshll.u32 %v2069, 16
      %v2410 = vrot.slane %v2408, 5
      %v2411 = vsel %vm271, %v2406, %v2410
      %v2413 = vshrl.u32 %v2070, 16
      %v2415 = vrot.slane %v2413, 4
      %v2416 = vshll.u32 %v2070, 16
      %v2418 = vrot.slane %v2416, 5
      %v2419 = vor.u32 %v2415, %v2418
      %v2420 = vrot.slane %v2419, 4
      %v2422 = vshll.u32 %v2071, 16
      %v2424 = vrot.slane %v2422, 5
      %v2425 = vsel %vm271, %v2420, %v2424
      %v2426 = vshrl.u32 %v2071, 16
      %v2428 = vrot.slane %v2426, 4
      %v2429 = vor.u32 %v2428, %v2424
      %v2430 = vrot.slane %v2429, 4
      %v2432 = vshll.u32 %v2072, 16
      %v2434 = vrot.slane %v2432, 5
      %v2435 = vsel %vm271, %v2430, %v2434
      %v2437 = vshrl.u32 %v2073, 16
      %v2439 = vrot.slane %v2437, 4
      %v2440 = vshll.u32 %v2073, 16
      %v2442 = vrot.slane %v2440, 5
      %v2443 = vor.u32 %v2439, %v2442
      %v2444 = vrot.slane %v2443, 4
      %v2446 = vshll.u32 %v2074, 16
      %v2448 = vrot.slane %v2446, 5
      %v2449 = vsel %vm271, %v2444, %v2448
      %v2450 = vshrl.u32 %v2074, 16
      %v2452 = vrot.slane %v2450, 4
      %v2453 = vor.u32 %v2452, %v2448
      %v2454 = vrot.slane %v2453, 4
      %v2456 = vshll.u32 %v2075, 16
      %v2458 = vrot.slane %v2456, 5
      %v2459 = vsel %vm271, %v2454, %v2458
      %s2460 = scalar_lea.vmem %s1, 8
      %v2461 = vld [vmem:[%s2460] sm:$0x3]
      %v2462 = vunpack.c.l.b16 %v2089
      %v2463 = vunpack.c.l.b16 %v2099
      %v2464 = vunpack.c.l.b16 %v2113
      %v2465 = vunpack.c.l.b16 %v2123
      %v2466 = vunpack.c.l.b16 %v2137
      %v2467 = vunpack.c.l.b16 %v2147
      %v2468 = vunpack.c.l.b16 %v2161
      %v2469 = vunpack.c.l.b16 %v2171
      %v2470 = vunpack.c.l.b16 %v2185
      %v2471 = vunpack.c.l.b16 %v2195
      %v2472 = vunpack.c.l.b16 %v2209
      %v2473 = vunpack.c.l.b16 %v2219
      %v2474 = vunpack.c.l.b16 %v2233
      %v2475 = vunpack.c.l.b16 %v2243
      %v2476 = vunpack.c.l.b16 %v2257
      %v2477 = vunpack.c.l.b16 %v2267
      %v2478 = vunpack.c.l.b16 %v2281
      %v2479 = vunpack.c.l.b16 %v2291
      %v2480 = vunpack.c.l.b16 %v2305
      %v2481 = vunpack.c.l.b16 %v2315
      %v2482 = vunpack.c.l.b16 %v2329
      %v2483 = vunpack.c.l.b16 %v2339
      %v2484 = vunpack.c.l.b16 %v2353
      %v2485 = vunpack.c.l.b16 %v2363
      %v2486 = vunpack.c.l.b16 %v2377
      %v2487 = vunpack.c.l.b16 %v2387
      %v2488 = vunpack.c.l.b16 %v2401
      %v2489 = vunpack.c.l.b16 %v2411
      %v2490 = vunpack.c.l.b16 %v2425
      %v2491 = vunpack.c.l.b16 %v2435
      %v2492 = vunpack.c.l.b16 %v2449
      %v2493 = vunpack.c.l.b16 %v2459
      %v2494 = vpack.c.b16 %v2463, %v2462
      %v2495 = vpack.c.b16 %v2465, %v2464
      %v2496 = vpack.c.b16 %v2467, %v2466
      %v2497 = vpack.c.b16 %v2469, %v2468
      %v2498 = vpack.c.b16 %v2471, %v2470
      %v2499 = vpack.c.b16 %v2473, %v2472
      %v2500 = vpack.c.b16 %v2475, %v2474
      %v2501 = vpack.c.b16 %v2477, %v2476
      %v2502 = vpack.c.b16 %v2479, %v2478
      %v2503 = vpack.c.b16 %v2481, %v2480
      %v2504 = vpack.c.b16 %v2483, %v2482
      %v2505 = vpack.c.b16 %v2485, %v2484
      %v2506 = vpack.c.b16 %v2487, %v2486
      %v2507 = vpack.c.b16 %v2489, %v2488
      %v2508 = vpack.c.b16 %v2491, %v2490
      %v2509 = vpack.c.b16 %v2493, %v2492
      %v2511 = vsel %vm706, %v2494, 0
      %v2514 = vsel %vm706, %v2495, 0
      %v2517 = vsel %vm706, %v2496, 0
      %v2520 = vsel %vm706, %v2497, 0
      %v2523 = vsel %vm706, %v2498, 0
      %v2526 = vsel %vm706, %v2499, 0
      %v2529 = vsel %vm706, %v2500, 0
      %v2532 = vsel %vm706, %v2501, 0
      %v2535 = vsel %vm706, %v2502, 0
      %v2538 = vsel %vm706, %v2503, 0
      %v2541 = vsel %vm706, %v2504, 0
      %v2544 = vsel %vm706, %v2505, 0
      %v2547 = vsel %vm706, %v2506, 0
      %v2550 = vsel %vm706, %v2507, 0
      %v2553 = vsel %vm706, %v2508, 0
      %v2556 = vsel %vm706, %v2509, 0
      %v2559 = vsel %vm755, %v2461, 0
      %2561 = vmatprep.subr.bf16.mxu0 0
      %2562 = vmatpush1.bf16.msra.mxu0 %v2559
      %2563 = vmatprep.subr.bf16.mxu0 0
      %2564 = vmatpush1.bf16.msra.mxu0 0
      %2565 = vmatprep.subr.bf16.mxu0 0
      %2566 = vmatpush1.bf16.msra.mxu0 0
      %2567 = vmatprep.subr.bf16.mxu0 0
      %2568 = vmatpush1.bf16.msra.mxu0 0
      %2569 = vmatprep.subr.bf16.mxu0 0
      %2570 = vmatpush1.bf16.msra.mxu0 0
      %2571 = vmatprep.subr.bf16.mxu0 0
      %2572 = vmatpush1.bf16.msra.mxu0 0
      %2573 = vmatprep.subr.bf16.mxu0 0
      %2574 = vmatpush1.bf16.msra.mxu0 0
      %2575 = vmatprep.subr.bf16.mxu0 0
      %2576 = vmatpush1.bf16.msra.mxu0 0
      %2577 = vmatprep.subr.bf16.mxu0 0
      %2578 = vmatpush1.bf16.msra.mxu0 0
      %2579 = vmatprep.subr.bf16.mxu0 0
      %2580 = vmatpush1.bf16.msra.mxu0 0
      %2581 = vmatprep.subr.bf16.mxu0 0
      %2582 = vmatpush1.bf16.msra.mxu0 0
      %2583 = vmatprep.subr.bf16.mxu0 0
      %2584 = vmatpush1.bf16.msra.mxu0 0
      %2585 = vmatprep.subr.bf16.mxu0 0
      %2586 = vmatpush1.bf16.msra.mxu0 0
      %2587 = vmatprep.subr.bf16.mxu0 0
      %2588 = vmatpush1.bf16.msra.mxu0 0
      %2589 = vmatprep.subr.bf16.mxu0 0
      %2590 = vmatpush1.bf16.msra.mxu0 0
      %2591 = vmatprep.subr.bf16.mxu0 0
      %2592 = vmatpush1.bf16.msra.mxu0 0
      %2593 = vmatprep.mubr.bf16.mxu0 0
      %2594 = vmatmul.mubr.bf16.gmra.mrb[0].mxu0 %v2511
      %v2595 = vpop.f32.mrb[0].mxu0
      %v2596 = vadd.f32 0.0, %v2595
      %v2597 = vpop.f32.mrb[0].mxu0
      %v2598 = vpop.f32.mrb[0].mxu0
      %v2599 = vadd.f32 0.0, %v2598
      %v2600 = vpop.f32.mrb[0].mxu0
      %2601 = vmatprep.mubr.bf16.mxu0 0
      %2602 = vmatmul.mubr.bf16.gmra.mrb[0].mxu0 %v2514
      %v2603 = vpop.f32.mrb[0].mxu0
      %v2604 = vadd.f32 0.0, %v2603
      %v2605 = vpop.f32.mrb[0].mxu0
      %v2606 = vpop.f32.mrb[0].mxu0
      %v2607 = vadd.f32 0.0, %v2606
      %v2608 = vpop.f32.mrb[0].mxu0
      %2609 = vmatprep.mubr.bf16.mxu0 0
      %2610 = vmatmul.mubr.bf16.gmra.mrb[0].mxu0 %v2517
      %v2611 = vpop.f32.mrb[0].mxu0
      %v2612 = vadd.f32 0.0, %v2611
      %v2613 = vpop.f32.mrb[0].mxu0
      %v2614 = vpop.f32.mrb[0].mxu0
      %v2615 = vadd.f32 0.0, %v2614
      %v2616 = vpop.f32.mrb[0].mxu0
      %2617 = vmatprep.mubr.bf16.mxu0 0
      %2618 = vmatmul.mubr.bf16.gmra.mrb[0].mxu0 %v2520
      %v2619 = vpop.f32.mrb[0].mxu0
      %v2620 = vadd.f32 0.0, %v2619
      %v2621 = vpop.f32.mrb[0].mxu0
      %v2622 = vpop.f32.mrb[0].mxu0
      %v2623 = vadd.f32 0.0, %v2622
      %v2624 = vpop.f32.mrb[0].mxu0
      %2625 = vmatprep.mubr.bf16.mxu0 0
      %2626 = vmatmul.mubr.bf16.gmra.mrb[0].mxu0 %v2523
      %v2627 = vpop.f32.mrb[0].mxu0
      %v2628 = vadd.f32 0.0, %v2627
      %v2629 = vpop.f32.mrb[0].mxu0
      %v2630 = vpop.f32.mrb[0].mxu0
      %v2631 = vadd.f32 0.0, %v2630
      %v2632 = vpop.f32.mrb[0].mxu0
      %2633 = vmatprep.mubr.bf16.mxu0 0
      %2634 = vmatmul.mubr.bf16.gmra.mrb[0].mxu0 %v2526
      %v2635 = vpop.f32.mrb[0].mxu0
      %v2636 = vadd.f32 0.0, %v2635
      %v2637 = vpop.f32.mrb[0].mxu0
      %v2638 = vpop.f32.mrb[0].mxu0
      %v2639 = vadd.f32 0.0, %v2638
      %v2640 = vpop.f32.mrb[0].mxu0
      %2641 = vmatprep.mubr.bf16.mxu0 0
      %2642 = vmatmul.mubr.bf16.gmra.mrb[0].mxu0 %v2529
      %v2643 = vpop.f32.mrb[0].mxu0
      %v2644 = vadd.f32 0.0, %v2643
      %v2645 = vpop.f32.mrb[0].mxu0
      %v2646 = vpop.f32.mrb[0].mxu0
      %v2647 = vadd.f32 0.0, %v2646
      %v2648 = vpop.f32.mrb[0].mxu0
      %2649 = vmatprep.mubr.bf16.mxu0 0
      %2650 = vmatmul.mubr.bf16.gmra.mrb[0].mxu0 %v2532
      %v2651 = vpop.f32.mrb[0].mxu0
      %v2652 = vadd.f32 0.0, %v2651
      %v2653 = vpop.f32.mrb[0].mxu0
      %v2654 = vpop.f32.mrb[0].mxu0
      %v2655 = vadd.f32 0.0, %v2654
      %v2656 = vpop.f32.mrb[0].mxu0
      %2657 = vmatprep.mubr.bf16.mxu0 0
      %2658 = vmatmul.mubr.bf16.gmra.mrb[0].mxu0 %v2535
      %v2659 = vpop.f32.mrb[0].mxu0
      %v2660 = vadd.f32 0.0, %v2659
      %v2661 = vpop.f32.mrb[0].mxu0
      %v2662 = vpop.f32.mrb[0].mxu0
      %v2663 = vadd.f32 0.0, %v2662
      %v2664 = vpop.f32.mrb[0].mxu0
      %2665 = vmatprep.mubr.bf16.mxu0 0
      %2666 = vmatmul.mubr.bf16.gmra.mrb[0].mxu0 %v2538
      %v2667 = vpop.f32.mrb[0].mxu0
      %v2668 = vadd.f32 0.0, %v2667
      %v2669 = vpop.f32.mrb[0].mxu0
      %v2670 = vpop.f32.mrb[0].mxu0
      %v2671 = vadd.f32 0.0, %v2670
      %v2672 = vpop.f32.mrb[0].mxu0
      %2673 = vmatprep.mubr.bf16.mxu0 0
      %2674 = vmatmul.mubr.bf16.gmra.mrb[0].mxu0 %v2541
      %v2675 = vpop.f32.mrb[0].mxu0
      %v2676 = vadd.f32 0.0, %v2675
      %v2677 = vpop.f32.mrb[0].mxu0
      %v2678 = vpop.f32.mrb[0].mxu0
      %v2679 = vadd.f32 0.0, %v2678
      %v2680 = vpop.f32.mrb[0].mxu0
      %2681 = vmatprep.mubr.bf16.mxu0 0
      %2682 = vmatmul.mubr.bf16.gmra.mrb[0].mxu0 %v2544
      %v2683 = vpop.f32.mrb[0].mxu0
      %v2684 = vadd.f32 0.0, %v2683
      %v2685 = vpop.f32.mrb[0].mxu0
      %v2686 = vpop.f32.mrb[0].mxu0
      %v2687 = vadd.f32 0.0, %v2686
      %v2688 = vpop.f32.mrb[0].mxu0
      %2689 = vmatprep.mubr.bf16.mxu0 0
      %2690 = vmatmul.mubr.bf16.gmra.mrb[0].mxu0 %v2547
      %v2691 = vpop.f32.mrb[0].mxu0
      %v2692 = vadd.f32 0.0, %v2691
      %v2693 = vpop.f32.mrb[0].mxu0
      %v2694 = vpop.f32.mrb[0].mxu0
      %v2695 = vadd.f32 0.0, %v2694
      %v2696 = vpop.f32.mrb[0].mxu0
      %2697 = vmatprep.mubr.bf16.mxu0 0
      %2698 = vmatmul.mubr.bf16.gmra.mrb[0].mxu0 %v2550
      %v2699 = vpop.f32.mrb[0].mxu0
      %v2700 = vadd.f32 0.0, %v2699
      %v2701 = vpop.f32.mrb[0].mxu0
      %v2702 = vpop.f32.mrb[0].mxu0
      %v2703 = vadd.f32 0.0, %v2702
      %v2704 = vpop.f32.mrb[0].mxu0
      %2705 = vmatprep.mubr.bf16.mxu0 0
      %2706 = vmatmul.mubr.bf16.gmra.mrb[0].mxu0 %v2553
      %v2707 = vpop.f32.mrb[0].mxu0
      %v2708 = vadd.f32 0.0, %v2707
      %v2709 = vpop.f32.mrb[0].mxu0
      %v2710 = vpop.f32.mrb[0].mxu0
      %v2711 = vadd.f32 0.0, %v2710
      %v2712 = vpop.f32.mrb[0].mxu0
      %2713 = vmatprep.mubr.bf16.mxu0 0
      %2714 = vmatmul.mubr.bf16.gmra.mrb[0].mxu0 %v2556
      %v2715 = vpop.f32.mrb[0].mxu0
      %v2716 = vadd.f32 0.0, %v2715
      %v2717 = vpop.f32.mrb[0].mxu0
      %v2718 = vpop.f32.mrb[0].mxu0
      %v2719 = vadd.f32 0.0, %v2718
      %v2720 = vpop.f32.mrb[0].mxu0
      %2721 = vdwg.mxu0
      %v2722 = vadd.f32 %v1996, %v2596
      %v2723 = vadd.f32 %v1997, %v2599
      %v2724 = vadd.f32 %v1998, %v2604
      %v2725 = vadd.f32 %v1999, %v2607
      %v2726 = vadd.f32 %v2000, %v2612
      %v2727 = vadd.f32 %v2001, %v2615
      %v2728 = vadd.f32 %v2002, %v2620
      %v2729 = vadd.f32 %v2003, %v2623
      %v2730 = vadd.f32 %v2004, %v2628
      %v2731 = vadd.f32 %v2005, %v2631
      %v2732 = vadd.f32 %v2006, %v2636
      %v2733 = vadd.f32 %v2007, %v2639
      %v2734 = vadd.f32 %v2008, %v2644
      %v2735 = vadd.f32 %v2009, %v2647
      %v2736 = vadd.f32 %v2010, %v2652
      %v2737 = vadd.f32 %v2011, %v2655
      %v2738 = vadd.f32 %v2012, %v2660
      %v2739 = vadd.f32 %v2013, %v2663
      %v2740 = vadd.f32 %v2014, %v2668
      %v2741 = vadd.f32 %v2015, %v2671
      %v2742 = vadd.f32 %v2016, %v2676
      %v2743 = vadd.f32 %v2017, %v2679
      %v2744 = vadd.f32 %v2018, %v2684
      %v2745 = vadd.f32 %v2019, %v2687
      %v2746 = vadd.f32 %v2020, %v2692
      %v2747 = vadd.f32 %v2021, %v2695
      %v2748 = vadd.f32 %v2022, %v2700
      %v2749 = vadd.f32 %v2023, %v2703
      %v2750 = vadd.f32 %v2024, %v2708
      %v2751 = vadd.f32 %v2025, %v2711
      %v2752 = vadd.f32 %v2026, %v2716
      %v2753 = vadd.f32 %v2027, %v2719
      %v2754 = vld [vmem:[%s1669] sm:$0xe]
      %v2755 = vld [vmem:[%s1669 + $0xc] sm:$0xe]
      %v2756 = vld [vmem:[%s1669 + $0x18] sm:$0xe]
      %v2757 = vld [vmem:[%s1669 + $0x24] sm:$0xe]
      %v2758 = vld [vmem:[%s1669 + $0x30] sm:$0xe]
      %v2759 = vld [vmem:[%s1669 + $0x3c] sm:$0xe]
      %v2760 = vld [vmem:[%s1669 + $0x48] sm:$0xe]
      %v2761 = vld [vmem:[%s1669 + $0x54] sm:$0xe]
      %v2762 = vld [vmem:[%s1669 + $0x60] sm:$0xe]
      %v2763 = vld [vmem:[%s1669 + $0x6c] sm:$0xe]
      %v2764 = vld [vmem:[%s1669 + $0x78] sm:$0xe]
      %v2765 = vld [vmem:[%s1669 + $0x84] sm:$0xe]
      %v2766 = vld [vmem:[%s1669 + $0x90] sm:$0xe]
      %v2767 = vld [vmem:[%s1669 + $0x9c] sm:$0xe]
      %v2768 = vld [vmem:[%s1669 + $0xa8] sm:$0xe]
      %v2769 = vld [vmem:[%s1669 + $0xb4] sm:$0xe]
      %v2818 = vrot.slane %v2754, 5
      %v2819 = vrot.slane %v2818, 4
      %v2820 = vrot.slane %v2029, 5
      %v2821 = vsel %vm1262, %v2819, %v2820
      %v2822 = vrot.slane %v2820, 4
      %v2823 = vrot.slane %v2030, 5
      %v2824 = vsel %vm1262, %v2822, %v2823
      %v2825 = vrot.slane %v2755, 5
      %v2826 = vrot.slane %v2825, 4
      %v2827 = vrot.slane %v2032, 5
      %v2828 = vsel %vm1262, %v2826, %v2827
      %v2829 = vrot.slane %v2827, 4
      %v2830 = vrot.slane %v2033, 5
      %v2831 = vsel %vm1262, %v2829, %v2830
      %v2832 = vrot.slane %v2756, 5
      %v2833 = vrot.slane %v2832, 4
      %v2834 = vrot.slane %v2035, 5
      %v2835 = vsel %vm1262, %v2833, %v2834
      %v2836 = vrot.slane %v2834, 4
      %v2837 = vrot.slane %v2036, 5
      %v2838 = vsel %vm1262, %v2836, %v2837
      %v2839 = vrot.slane %v2757, 5
      %v2840 = vrot.slane %v2839, 4
      %v2841 = vrot.slane %v2038, 5
      %v2842 = vsel %vm1262, %v2840, %v2841
      %v2843 = vrot.slane %v2841, 4
      %v2844 = vrot.slane %v2039, 5
      %v2845 = vsel %vm1262, %v2843, %v2844
      %v2846 = vrot.slane %v2758, 5
      %v2847 = vrot.slane %v2846, 4
      %v2848 = vrot.slane %v2041, 5
      %v2849 = vsel %vm1262, %v2847, %v2848
      %v2850 = vrot.slane %v2848, 4
      %v2851 = vrot.slane %v2042, 5
      %v2852 = vsel %vm1262, %v2850, %v2851
      %v2853 = vrot.slane %v2759, 5
      %v2854 = vrot.slane %v2853, 4
      %v2855 = vrot.slane %v2044, 5
      %v2856 = vsel %vm1262, %v2854, %v2855
      %v2857 = vrot.slane %v2855, 4
      %v2858 = vrot.slane %v2045, 5
      %v2859 = vsel %vm1262, %v2857, %v2858
      %v2860 = vrot.slane %v2760, 5
      %v2861 = vrot.slane %v2860, 4
      %v2862 = vrot.slane %v2047, 5
      %v2863 = vsel %vm1262, %v2861, %v2862
      %v2864 = vrot.slane %v2862, 4
      %v2865 = vrot.slane %v2048, 5
      %v2866 = vsel %vm1262, %v2864, %v2865
      %v2867 = vrot.slane %v2761, 5
      %v2868 = vrot.slane %v2867, 4
      %v2869 = vrot.slane %v2050, 5
      %v2870 = vsel %vm1262, %v2868, %v2869
      %v2871 = vrot.slane %v2869, 4
      %v2872 = vrot.slane %v2051, 5
      %v2873 = vsel %vm1262, %v2871, %v2872
      %v2874 = vrot.slane %v2762, 5
      %v2875 = vrot.slane %v2874, 4
      %v2876 = vrot.slane %v2053, 5
      %v2877 = vsel %vm1262, %v2875, %v2876
      %v2878 = vrot.slane %v2876, 4
      %v2879 = vrot.slane %v2054, 5
      %v2880 = vsel %vm1262, %v2878, %v2879
      %v2881 = vrot.slane %v2763, 5
      %v2882 = vrot.slane %v2881, 4
      %v2883 = vrot.slane %v2056, 5
      %v2884 = vsel %vm1262, %v2882, %v2883
      %v2885 = vrot.slane %v2883, 4
      %v2886 = vrot.slane %v2057, 5
      %v2887 = vsel %vm1262, %v2885, %v2886
      %v2888 = vrot.slane %v2764, 5
      %v2889 = vrot.slane %v2888, 4
      %v2890 = vrot.slane %v2059, 5
      %v2891 = vsel %vm1262, %v2889, %v2890
      %v2892 = vrot.slane %v2890, 4
      %v2893 = vrot.slane %v2060, 5
      %v2894 = vsel %vm1262, %v2892, %v2893
      %v2895 = vrot.slane %v2765, 5
      %v2896 = vrot.slane %v2895, 4
      %v2897 = vrot.slane %v2062, 5
      %v2898 = vsel %vm1262, %v2896, %v2897
      %v2899 = vrot.slane %v2897, 4
      %v2900 = vrot.slane %v2063, 5
      %v2901 = vsel %vm1262, %v2899, %v2900
      %v2902 = vrot.slane %v2766, 5
      %v2903 = vrot.slane %v2902, 4
      %v2904 = vrot.slane %v2065, 5
      %v2905 = vsel %vm1262, %v2903, %v2904
      %v2906 = vrot.slane %v2904, 4
      %v2907 = vrot.slane %v2066, 5
      %v2908 = vsel %vm1262, %v2906, %v2907
      %v2909 = vrot.slane %v2767, 5
      %v2910 = vrot.slane %v2909, 4
      %v2911 = vrot.slane %v2068, 5
      %v2912 = vsel %vm1262, %v2910, %v2911
      %v2913 = vrot.slane %v2911, 4
      %v2914 = vrot.slane %v2069, 5
      %v2915 = vsel %vm1262, %v2913, %v2914
      %v2916 = vrot.slane %v2768, 5
      %v2917 = vrot.slane %v2916, 4
      %v2918 = vrot.slane %v2071, 5
      %v2919 = vsel %vm1262, %v2917, %v2918
      %v2920 = vrot.slane %v2918, 4
      %v2921 = vrot.slane %v2072, 5
      %v2922 = vsel %vm1262, %v2920, %v2921
      %v2923 = vrot.slane %v2769, 5
      %v2924 = vrot.slane %v2923, 4
      %v2925 = vrot.slane %v2074, 5
      %v2926 = vsel %vm1262, %v2924, %v2925
      %v2927 = vrot.slane %v2925, 4
      %v2928 = vrot.slane %v2075, 5
      %v2929 = vsel %vm1262, %v2927, %v2928
      %s2930 = scalar_lea.vmem %s1, 10
      %v2931 = vld [vmem:[%s2930] sm:$0x3]
      %v2932 = vunpack.c.l.b16 %v2821
      %v2933 = vunpack.c.l.b16 %v2824
      %v2934 = vunpack.c.l.b16 %v2828
      %v2935 = vunpack.c.l.b16 %v2831
      %v2936 = vunpack.c.l.b16 %v2835
      %v2937 = vunpack.c.l.b16 %v2838
      %v2938 = vunpack.c.l.b16 %v2842
      %v2939 = vunpack.c.l.b16 %v2845
      %v2940 = vunpack.c.l.b16 %v2849
      %v2941 = vunpack.c.l.b16 %v2852
      %v2942 = vunpack.c.l.b16 %v2856
      %v2943 = vunpack.c.l.b16 %v2859
      %v2944 = vunpack.c.l.b16 %v2863
      %v2945 = vunpack.c.l.b16 %v2866
      %v2946 = vunpack.c.l.b16 %v2870
      %v2947 = vunpack.c.l.b16 %v2873
      %v2948 = vunpack.c.l.b16 %v2877
      %v2949 = vunpack.c.l.b16 %v2880
      %v2950 = vunpack.c.l.b16 %v2884
      %v2951 = vunpack.c.l.b16 %v2887
      %v2952 = vunpack.c.l.b16 %v2891
      %v2953 = vunpack.c.l.b16 %v2894
      %v2954 = vunpack.c.l.b16 %v2898
      %v2955 = vunpack.c.l.b16 %v2901
      %v2956 = vunpack.c.l.b16 %v2905
      %v2957 = vunpack.c.l.b16 %v2908
      %v2958 = vunpack.c.l.b16 %v2912
      %v2959 = vunpack.c.l.b16 %v2915
      %v2960 = vunpack.c.l.b16 %v2919
      %v2961 = vunpack.c.l.b16 %v2922
      %v2962 = vunpack.c.l.b16 %v2926
      %v2963 = vunpack.c.l.b16 %v2929
      %v2964 = vpack.c.b16 %v2933, %v2932
      %v2965 = vpack.c.b16 %v2935, %v2934
      %v2966 = vpack.c.b16 %v2937, %v2936
      %v2967 = vpack.c.b16 %v2939, %v2938
      %v2968 = vpack.c.b16 %v2941, %v2940
      %v2969 = vpack.c.b16 %v2943, %v2942
      %v2970 = vpack.c.b16 %v2945, %v2944
      %v2971 = vpack.c.b16 %v2947, %v2946
      %v2972 = vpack.c.b16 %v2949, %v2948
      %v2973 = vpack.c.b16 %v2951, %v2950
      %v2974 = vpack.c.b16 %v2953, %v2952
      %v2975 = vpack.c.b16 %v2955, %v2954
      %v2976 = vpack.c.b16 %v2957, %v2956
      %v2977 = vpack.c.b16 %v2959, %v2958
      %v2978 = vpack.c.b16 %v2961, %v2960
      %v2979 = vpack.c.b16 %v2963, %v2962
      %v2981 = vsel %vm706, %v2964, 0
      %v2984 = vsel %vm706, %v2965, 0
      %v2987 = vsel %vm706, %v2966, 0
      %v2990 = vsel %vm706, %v2967, 0
      %v2993 = vsel %vm706, %v2968, 0
      %v2996 = vsel %vm706, %v2969, 0
      %v2999 = vsel %vm706, %v2970, 0
      %v3002 = vsel %vm706, %v2971, 0
      %v3005 = vsel %vm706, %v2972, 0
      %v3008 = vsel %vm706, %v2973, 0
      %v3011 = vsel %vm706, %v2974, 0
      %v3014 = vsel %vm706, %v2975, 0
      %v3017 = vsel %vm706, %v2976, 0
      %v3020 = vsel %vm706, %v2977, 0
      %v3023 = vsel %vm706, %v2978, 0
      %v3026 = vsel %vm706, %v2979, 0
      %v3029 = vsel %vm755, %v2931, 0
      %3031 = vmatprep.subr.bf16.mxu0 0
      %3032 = vmatpush1.bf16.msra.mxu0 %v3029
      %3033 = vmatprep.subr.bf16.mxu0 0
      %3034 = vmatpush1.bf16.msra.mxu0 0
      %3035 = vmatprep.subr.bf16.mxu0 0
      %3036 = vmatpush1.bf16.msra.mxu0 0
      %3037 = vmatprep.subr.bf16.mxu0 0
      %3038 = vmatpush1.bf16.msra.mxu0 0
      %3039 = vmatprep.subr.bf16.mxu0 0
      %3040 = vmatpush1.bf16.msra.mxu0 0
      %3041 = vmatprep.subr.bf16.mxu0 0
      %3042 = vmatpush1.bf16.msra.mxu0 0
      %3043 = vmatprep.subr.bf16.mxu0 0
      %3044 = vmatpush1.bf16.msra.mxu0 0
      %3045 = vmatprep.subr.bf16.mxu0 0
      %3046 = vmatpush1.bf16.msra.mxu0 0
      %3047 = vmatprep.subr.bf16.mxu0 0
      %3048 = vmatpush1.bf16.msra.mxu0 0
      %3049 = vmatprep.subr.bf16.mxu0 0
      %3050 = vmatpush1.bf16.msra.mxu0 0
      %3051 = vmatprep.subr.bf16.mxu0 0
      %3052 = vmatpush1.bf16.msra.mxu0 0
      %3053 = vmatprep.subr.bf16.mxu0 0
      %3054 = vmatpush1.bf16.msra.mxu0 0
      %3055 = vmatprep.subr.bf16.mxu0 0
      %3056 = vmatpush1.bf16.msra.mxu0 0
      %3057 = vmatprep.subr.bf16.mxu0 0
      %3058 = vmatpush1.bf16.msra.mxu0 0
      %3059 = vmatprep.subr.bf16.mxu0 0
      %3060 = vmatpush1.bf16.msra.mxu0 0
      %3061 = vmatprep.subr.bf16.mxu0 0
      %3062 = vmatpush1.bf16.msra.mxu0 0
      %3063 = vmatprep.mubr.bf16.mxu0 0
      %3064 = vmatmul.mubr.bf16.gmra.mrb[0].mxu0 %v2981
      %v3065 = vpop.f32.mrb[0].mxu0
      %v3066 = vadd.f32 0.0, %v3065
      %v3067 = vpop.f32.mrb[0].mxu0
      %v3068 = vpop.f32.mrb[0].mxu0
      %v3069 = vadd.f32 0.0, %v3068
      %v3070 = vpop.f32.mrb[0].mxu0
      %3071 = vmatprep.mubr.bf16.mxu0 0
      %3072 = vmatmul.mubr.bf16.gmra.mrb[0].mxu0 %v2984
      %v3073 = vpop.f32.mrb[0].mxu0
      %v3074 = vadd.f32 0.0, %v3073
      %v3075 = vpop.f32.mrb[0].mxu0
      %v3076 = vpop.f32.mrb[0].mxu0
      %v3077 = vadd.f32 0.0, %v3076
      %v3078 = vpop.f32.mrb[0].mxu0
      %3079 = vmatprep.mubr.bf16.mxu0 0
      %3080 = vmatmul.mubr.bf16.gmra.mrb[0].mxu0 %v2987
      %v3081 = vpop.f32.mrb[0].mxu0
      %v3082 = vadd.f32 0.0, %v3081
      %v3083 = vpop.f32.mrb[0].mxu0
      %v3084 = vpop.f32.mrb[0].mxu0
      %v3085 = vadd.f32 0.0, %v3084
      %v3086 = vpop.f32.mrb[0].mxu0
      %3087 = vmatprep.mubr.bf16.mxu0 0
      %3088 = vmatmul.mubr.bf16.gmra.mrb[0].mxu0 %v2990
      %v3089 = vpop.f32.mrb[0].mxu0
      %v3090 = vadd.f32 0.0, %v3089
      %v3091 = vpop.f32.mrb[0].mxu0
      %v3092 = vpop.f32.mrb[0].mxu0
      %v3093 = vadd.f32 0.0, %v3092
      %v3094 = vpop.f32.mrb[0].mxu0
      %3095 = vmatprep.mubr.bf16.mxu0 0
      %3096 = vmatmul.mubr.bf16.gmra.mrb[0].mxu0 %v2993
      %v3097 = vpop.f32.mrb[0].mxu0
      %v3098 = vadd.f32 0.0, %v3097
      %v3099 = vpop.f32.mrb[0].mxu0
      %v3100 = vpop.f32.mrb[0].mxu0
      %v3101 = vadd.f32 0.0, %v3100
      %v3102 = vpop.f32.mrb[0].mxu0
      %3103 = vmatprep.mubr.bf16.mxu0 0
      %3104 = vmatmul.mubr.bf16.gmra.mrb[0].mxu0 %v2996
      %v3105 = vpop.f32.mrb[0].mxu0
      %v3106 = vadd.f32 0.0, %v3105
      %v3107 = vpop.f32.mrb[0].mxu0
      %v3108 = vpop.f32.mrb[0].mxu0
      %v3109 = vadd.f32 0.0, %v3108
      %v3110 = vpop.f32.mrb[0].mxu0
      %3111 = vmatprep.mubr.bf16.mxu0 0
      %3112 = vmatmul.mubr.bf16.gmra.mrb[0].mxu0 %v2999
      %v3113 = vpop.f32.mrb[0].mxu0
      %v3114 = vadd.f32 0.0, %v3113
      %v3115 = vpop.f32.mrb[0].mxu0
      %v3116 = vpop.f32.mrb[0].mxu0
      %v3117 = vadd.f32 0.0, %v3116
      %v3118 = vpop.f32.mrb[0].mxu0
      %3119 = vmatprep.mubr.bf16.mxu0 0
      %3120 = vmatmul.mubr.bf16.gmra.mrb[0].mxu0 %v3002
      %v3121 = vpop.f32.mrb[0].mxu0
      %v3122 = vadd.f32 0.0, %v3121
      %v3123 = vpop.f32.mrb[0].mxu0
      %v3124 = vpop.f32.mrb[0].mxu0
      %v3125 = vadd.f32 0.0, %v3124
      %v3126 = vpop.f32.mrb[0].mxu0
      %3127 = vmatprep.mubr.bf16.mxu0 0
      %3128 = vmatmul.mubr.bf16.gmra.mrb[0].mxu0 %v3005
      %v3129 = vpop.f32.mrb[0].mxu0
      %v3130 = vadd.f32 0.0, %v3129
      %v3131 = vpop.f32.mrb[0].mxu0
      %v3132 = vpop.f32.mrb[0].mxu0
      %v3133 = vadd.f32 0.0, %v3132
      %v3134 = vpop.f32.mrb[0].mxu0
      %3135 = vmatprep.mubr.bf16.mxu0 0
      %3136 = vmatmul.mubr.bf16.gmra.mrb[0].mxu0 %v3008
      %v3137 = vpop.f32.mrb[0].mxu0
      %v3138 = vadd.f32 0.0, %v3137
      %v3139 = vpop.f32.mrb[0].mxu0
      %v3140 = vpop.f32.mrb[0].mxu0
      %v3141 = vadd.f32 0.0, %v3140
      %v3142 = vpop.f32.mrb[0].mxu0
      %3143 = vmatprep.mubr.bf16.mxu0 0
      %3144 = vmatmul.mubr.bf16.gmra.mrb[0].mxu0 %v3011
      %v3145 = vpop.f32.mrb[0].mxu0
      %v3146 = vadd.f32 0.0, %v3145
      %v3147 = vpop.f32.mrb[0].mxu0
      %v3148 = vpop.f32.mrb[0].mxu0
      %v3149 = vadd.f32 0.0, %v3148
      %v3150 = vpop.f32.mrb[0].mxu0
      %3151 = vmatprep.mubr.bf16.mxu0 0
      %3152 = vmatmul.mubr.bf16.gmra.mrb[0].mxu0 %v3014
      %v3153 = vpop.f32.mrb[0].mxu0
      %v3154 = vadd.f32 0.0, %v3153
      %v3155 = vpop.f32.mrb[0].mxu0
      %v3156 = vpop.f32.mrb[0].mxu0
      %v3157 = vadd.f32 0.0, %v3156
      %v3158 = vpop.f32.mrb[0].mxu0
      %3159 = vmatprep.mubr.bf16.mxu0 0
      %3160 = vmatmul.mubr.bf16.gmra.mrb[0].mxu0 %v3017
      %v3161 = vpop.f32.mrb[0].mxu0
      %v3162 = vadd.f32 0.0, %v3161
      %v3163 = vpop.f32.mrb[0].mxu0
      %v3164 = vpop.f32.mrb[0].mxu0
      %v3165 = vadd.f32 0.0, %v3164
      %v3166 = vpop.f32.mrb[0].mxu0
      %3167 = vmatprep.mubr.bf16.mxu0 0
      %3168 = vmatmul.mubr.bf16.gmra.mrb[0].mxu0 %v3020
      %v3169 = vpop.f32.mrb[0].mxu0
      %v3170 = vadd.f32 0.0, %v3169
      %v3171 = vpop.f32.mrb[0].mxu0
      %v3172 = vpop.f32.mrb[0].mxu0
      %v3173 = vadd.f32 0.0, %v3172
      %v3174 = vpop.f32.mrb[0].mxu0
      %3175 = vmatprep.mubr.bf16.mxu0 0
      %3176 = vmatmul.mubr.bf16.gmra.mrb[0].mxu0 %v3023
      %v3177 = vpop.f32.mrb[0].mxu0
      %v3178 = vadd.f32 0.0, %v3177
      %v3179 = vpop.f32.mrb[0].mxu0
      %v3180 = vpop.f32.mrb[0].mxu0
      %v3181 = vadd.f32 0.0, %v3180
      %v3182 = vpop.f32.mrb[0].mxu0
      %3183 = vmatprep.mubr.bf16.mxu0 0
      %3184 = vmatmul.mubr.bf16.gmra.mrb[0].mxu0 %v3026
      %v3185 = vpop.f32.mrb[0].mxu0
      %v3186 = vadd.f32 0.0, %v3185
      %v3187 = vpop.f32.mrb[0].mxu0
      %v3188 = vpop.f32.mrb[0].mxu0
      %v3189 = vadd.f32 0.0, %v3188
      %v3190 = vpop.f32.mrb[0].mxu0
      %3191 = vdwg.mxu0
      %v3192 = vadd.f32 %v2722, %v3066
      %v3193 = vadd.f32 %v2723, %v3069
      %v3194 = vadd.f32 %v2724, %v3074
      %v3195 = vadd.f32 %v2725, %v3077
      %v3196 = vadd.f32 %v2726, %v3082
      %v3197 = vadd.f32 %v2727, %v3085
      %v3198 = vadd.f32 %v2728, %v3090
      %v3199 = vadd.f32 %v2729, %v3093
      %v3200 = vadd.f32 %v2730, %v3098
      %v3201 = vadd.f32 %v2731, %v3101
      %v3202 = vadd.f32 %v2732, %v3106
      %v3203 = vadd.f32 %v2733, %v3109
      %v3204 = vadd.f32 %v2734, %v3114
      %v3205 = vadd.f32 %v2735, %v3117
      %v3206 = vadd.f32 %v2736, %v3122
      %v3207 = vadd.f32 %v2737, %v3125
      %v3208 = vadd.f32 %v2738, %v3130
      %v3209 = vadd.f32 %v2739, %v3133
      %v3210 = vadd.f32 %v2740, %v3138
      %v3211 = vadd.f32 %v2741, %v3141
      %v3212 = vadd.f32 %v2742, %v3146
      %v3213 = vadd.f32 %v2743, %v3149
      %v3214 = vadd.f32 %v2744, %v3154
      %v3215 = vadd.f32 %v2745, %v3157
      %v3216 = vadd.f32 %v2746, %v3162
      %v3217 = vadd.f32 %v2747, %v3165
      %v3218 = vadd.f32 %v2748, %v3170
      %v3219 = vadd.f32 %v2749, %v3173
      %v3220 = vadd.f32 %v2750, %v3178
      %v3221 = vadd.f32 %v2751, %v3181
      %v3222 = vadd.f32 %v2752, %v3186
      %v3223 = vadd.f32 %v2753, %v3189
      %v3224 = vpack.c.bf16 %v3193, %v3192
      %v3225 = vpack.c.bf16 %v3195, %v3194
      %v3226 = vpack.c.bf16 %v3197, %v3196
      %v3227 = vpack.c.bf16 %v3199, %v3198
      %v3228 = vpack.c.bf16 %v3201, %v3200
      %v3229 = vpack.c.bf16 %v3203, %v3202
      %v3230 = vpack.c.bf16 %v3205, %v3204
      %v3231 = vpack.c.bf16 %v3207, %v3206
      %v3232 = vpack.c.bf16 %v3209, %v3208
      %v3233 = vpack.c.bf16 %v3211, %v3210
      %v3234 = vpack.c.bf16 %v3213, %v3212
      %v3235 = vpack.c.bf16 %v3215, %v3214
      %v3236 = vpack.c.bf16 %v3217, %v3216
      %v3237 = vpack.c.bf16 %v3219, %v3218
      %v3238 = vpack.c.bf16 %v3221, %v3220
      %v3239 = vpack.c.bf16 %v3223, %v3222
      %v3256 = vunpack.c.l.b16 %v3224
      %v3257 = vunpack.c.h.b16 %v3224
      %v3258 = vunpack.c.l.b16 %v3225
      %v3259 = vunpack.c.h.b16 %v3225
      %v3260 = vunpack.c.l.b16 %v3226
      %v3261 = vunpack.c.h.b16 %v3226
      %v3262 = vunpack.c.l.b16 %v3227
      %v3263 = vunpack.c.h.b16 %v3227
      %v3264 = vunpack.c.l.b16 %v3228
      %v3265 = vunpack.c.h.b16 %v3228
      %v3266 = vunpack.c.l.b16 %v3229
      %v3267 = vunpack.c.h.b16 %v3229
      %v3268 = vunpack.c.l.b16 %v3230
      %v3269 = vunpack.c.h.b16 %v3230
      %v3270 = vunpack.c.l.b16 %v3231
      %v3271 = vunpack.c.h.b16 %v3231
      %v3272 = vunpack.c.l.b16 %v3232
      %v3273 = vunpack.c.h.b16 %v3232
      %v3274 = vunpack.c.l.b16 %v3233
      %v3275 = vunpack.c.h.b16 %v3233
      %v3276 = vunpack.c.l.b16 %v3234
      %v3277 = vunpack.c.h.b16 %v3234
      %v3278 = vunpack.c.l.b16 %v3235
      %v3279 = vunpack.c.h.b16 %v3235
      %v3280 = vunpack.c.l.b16 %v3236
      %v3281 = vunpack.c.h.b16 %v3236
      %v3282 = vunpack.c.l.b16 %v3237
      %v3283 = vunpack.c.h.b16 %v3237
      %v3284 = vunpack.c.l.b16 %v3238
      %v3285 = vunpack.c.h.b16 %v3238
      %v3286 = vunpack.c.l.b16 %v3239
      %v3287 = vunpack.c.h.b16 %v3239
      %v3288 = vpack.c.b16 %v3256, %v3256
      %v3289 = vpack.c.b16 %v3257, %v3257
      %v3290 = vpack.c.b16 %v3258, %v3258
      %v3291 = vpack.c.b16 %v3259, %v3259
      %v3292 = vpack.c.b16 %v3260, %v3260
      %v3293 = vpack.c.b16 %v3261, %v3261
      %v3294 = vpack.c.b16 %v3262, %v3262
      %v3295 = vpack.c.b16 %v3263, %v3263
      %v3296 = vpack.c.b16 %v3264, %v3264
      %v3297 = vpack.c.b16 %v3265, %v3265
      %v3298 = vpack.c.b16 %v3266, %v3266
      %v3299 = vpack.c.b16 %v3267, %v3267
      %v3300 = vpack.c.b16 %v3268, %v3268
      %v3301 = vpack.c.b16 %v3269, %v3269
      %v3302 = vpack.c.b16 %v3270, %v3270
      %v3303 = vpack.c.b16 %v3271, %v3271
      %v3304 = vpack.c.b16 %v3272, %v3272
      %v3305 = vpack.c.b16 %v3273, %v3273
      %v3306 = vpack.c.b16 %v3274, %v3274
      %v3307 = vpack.c.b16 %v3275, %v3275
      %v3308 = vpack.c.b16 %v3276, %v3276
      %v3309 = vpack.c.b16 %v3277, %v3277
      %v3310 = vpack.c.b16 %v3278, %v3278
      %v3311 = vpack.c.b16 %v3279, %v3279
      %v3312 = vpack.c.b16 %v3280, %v3280
      %v3313 = vpack.c.b16 %v3281, %v3281
      %v3314 = vpack.c.b16 %v3282, %v3282
      %v3315 = vpack.c.b16 %v3283, %v3283
      %v3316 = vpack.c.b16 %v3284, %v3284
      %v3317 = vpack.c.b16 %v3285, %v3285
      %v3318 = vpack.c.b16 %v3286, %v3286
      %v3319 = vpack.c.b16 %v3287, %v3287
      %vm3352 = vcmask 125952
      %3353 = vst.msk [vmem:[%s210] sm:$0xf] %vm3352, %v3288
      %3354 = vst.msk [vmem:[%s210 + $0x4] sm:$0xf] %vm3352, %v3289
      %3355 = vst.msk [vmem:[%s210 + $0x10] sm:$0xf] %vm3352, %v3290
      %3356 = vst.msk [vmem:[%s210 + $0x14] sm:$0xf] %vm3352, %v3291
      %3357 = vst.msk [vmem:[%s210 + $0x20] sm:$0xf] %vm3352, %v3292
      %3358 = vst.msk [vmem:[%s210 + $0x24] sm:$0xf] %vm3352, %v3293
      %3359 = vst.msk [vmem:[%s210 + $0x30] sm:$0xf] %vm3352, %v3294
      %3360 = vst.msk [vmem:[%s210 + $0x34] sm:$0xf] %vm3352, %v3295
      %3361 = vst.msk [vmem:[%s210 + $0x40] sm:$0xf] %vm3352, %v3296
      %3362 = vst.msk [vmem:[%s210 + $0x44] sm:$0xf] %vm3352, %v3297
      %3363 = vst.msk [vmem:[%s210 + $0x50] sm:$0xf] %vm3352, %v3298
      %3364 = vst.msk [vmem:[%s210 + $0x54] sm:$0xf] %vm3352, %v3299
      %3365 = vst.msk [vmem:[%s210 + $0x60] sm:$0xf] %vm3352, %v3300
      %3366 = vst.msk [vmem:[%s210 + $0x64] sm:$0xf] %vm3352, %v3301
      %3367 = vst.msk [vmem:[%s210 + $0x70] sm:$0xf] %vm3352, %v3302
      %3368 = vst.msk [vmem:[%s210 + $0x74] sm:$0xf] %vm3352, %v3303
      %3369 = vst.msk [vmem:[%s210 + $0x80] sm:$0xf] %vm3352, %v3304
      %3370 = vst.msk [vmem:[%s210 + $0x84] sm:$0xf] %vm3352, %v3305
      %3371 = vst.msk [vmem:[%s210 + $0x90] sm:$0xf] %vm3352, %v3306
      %3372 = vst.msk [vmem:[%s210 + $0x94] sm:$0xf] %vm3352, %v3307
      %3373 = vst.msk [vmem:[%s210 + $0xa0] sm:$0xf] %vm3352, %v3308
      %3374 = vst.msk [vmem:[%s210 + $0xa4] sm:$0xf] %vm3352, %v3309
      %3375 = vst.msk [vmem:[%s210 + $0xb0] sm:$0xf] %vm3352, %v3310
      %3376 = vst.msk [vmem:[%s210 + $0xb4] sm:$0xf] %vm3352, %v3311
      %3377 = vst.msk [vmem:[%s210 + $0xc0] sm:$0xf] %vm3352, %v3312
      %3378 = vst.msk [vmem:[%s210 + $0xc4] sm:$0xf] %vm3352, %v3313
      %3379 = vst.msk [vmem:[%s210 + $0xd0] sm:$0xf] %vm3352, %v3314
      %3380 = vst.msk [vmem:[%s210 + $0xd4] sm:$0xf] %vm3352, %v3315
      %3381 = vst.msk [vmem:[%s210 + $0xe0] sm:$0xf] %vm3352, %v3316
      %3382 = vst.msk [vmem:[%s210 + $0xe4] sm:$0xf] %vm3352, %v3317
      %3383 = vst.msk [vmem:[%s210 + $0xf0] sm:$0xf] %vm3352, %v3318
      %3384 = vst.msk [vmem:[%s210 + $0xf4] sm:$0xf] %vm3352, %v3319
      %v3385 = vlaneseq
      %v3386 = vshrl.u32 %v3385, 7
      %v3387 = vadd.s32 %v3386, 8
      %v3388 = vadd.s32 %v3386, 16
      %v3389 = vadd.s32 %v3386, 24
      %v3390 = vadd.s32 %v3386, 32
      %v3391 = vadd.s32 %v3386, 40
      %v3392 = vadd.s32 %v3386, 48
      %v3393 = vadd.s32 %v3386, 56
      %v3394 = vadd.s32 %v3386, 64
      %v3395 = vadd.s32 %v3386, 72
      %v3396 = vadd.s32 %v3386, 80
      %v3397 = vadd.s32 %v3386, 88
      %v3398 = vadd.s32 %v3386, 96
      %v3399 = vadd.s32 %v3386, 104
      %v3400 = vadd.s32 %v3386, 112
      %v3401 = vadd.s32 %v3386, 120
      %v3402 = vadd.s32 %v3386, 128
      %v3403 = vadd.s32 %v3386, 136
      %v3404 = vadd.s32 %v3386, 144
      %v3405 = vadd.s32 %v3386, 152
      %v3406 = vadd.s32 %v3386, 160
      %v3407 = vadd.s32 %v3386, 168
      %v3408 = vadd.s32 %v3386, 176
      %v3409 = vadd.s32 %v3386, 184
      %v3410 = vadd.s32 %v3386, 192
      %v3411 = vadd.s32 %v3386, 200
      %v3412 = vadd.s32 %v3386, 208
      %v3413 = vadd.s32 %v3386, 216
      %v3414 = vadd.s32 %v3386, 224
      %v3415 = vadd.s32 %v3386, 232
      %v3416 = vadd.s32 %v3386, 240
      %v3417 = vadd.s32 %v3386, 248
      %vm3418 = vcmp.lt.s32.totalorder %v3386, 256
      %vm3419 = vcmp.lt.s32.totalorder %v3387, 256
      %vm3420 = vcmp.lt.s32.totalorder %v3388, 256
      %vm3421 = vcmp.lt.s32.totalorder %v3389, 256
      %vm3422 = vcmp.lt.s32.totalorder %v3390, 256
      %vm3423 = vcmp.lt.s32.totalorder %v3391, 256
      %vm3424 = vcmp.lt.s32.totalorder %v3392, 256
      %vm3425 = vcmp.lt.s32.totalorder %v3393, 256
      %vm3426 = vcmp.lt.s32.totalorder %v3394, 256
      %vm3427 = vcmp.lt.s32.totalorder %v3395, 256
      %vm3428 = vcmp.lt.s32.totalorder %v3396, 256
      %vm3429 = vcmp.lt.s32.totalorder %v3397, 256
      %vm3430 = vcmp.lt.s32.totalorder %v3398, 256
      %vm3431 = vcmp.lt.s32.totalorder %v3399, 256
      %vm3432 = vcmp.lt.s32.totalorder %v3400, 256
      %vm3433 = vcmp.lt.s32.totalorder %v3401, 256
      %vm3434 = vcmp.lt.s32.totalorder %v3402, 256
      %vm3435 = vcmp.lt.s32.totalorder %v3403, 256
      %vm3436 = vcmp.lt.s32.totalorder %v3404, 256
      %vm3437 = vcmp.lt.s32.totalorder %v3405, 256
      %vm3438 = vcmp.lt.s32.totalorder %v3406, 256
      %vm3439 = vcmp.lt.s32.totalorder %v3407, 256
      %vm3440 = vcmp.lt.s32.totalorder %v3408, 256
      %vm3441 = vcmp.lt.s32.totalorder %v3409, 256
      %vm3442 = vcmp.lt.s32.totalorder %v3410, 256
      %vm3443 = vcmp.lt.s32.totalorder %v3411, 256
      %vm3444 = vcmp.lt.s32.totalorder %v3412, 256
      %vm3445 = vcmp.lt.s32.totalorder %v3413, 256
      %vm3446 = vcmp.lt.s32.totalorder %v3414, 256
      %vm3447 = vcmp.lt.s32.totalorder %v3415, 256
      %vm3448 = vcmp.lt.s32.totalorder %v3416, 256
      %vm3449 = vcmp.lt.s32.totalorder %v3417, 256
      %v3450 = vsel %vm3418, %v3192, 0.0
      %v3451 = vsel %vm3419, %v3193, 0.0
      %v3452 = vsel %vm3420, %v3194, 0.0
      %v3453 = vsel %vm3421, %v3195, 0.0
      %v3454 = vsel %vm3422, %v3196, 0.0
      %v3455 = vsel %vm3423, %v3197, 0.0
      %v3456 = vsel %vm3424, %v3198, 0.0
      %v3457 = vsel %vm3425, %v3199, 0.0
      %v3458 = vsel %vm3426, %v3200, 0.0
      %v3459 = vsel %vm3427, %v3201, 0.0
      %v3460 = vsel %vm3428, %v3202, 0.0
      %v3461 = vsel %vm3429, %v3203, 0.0
      %v3462 = vsel %vm3430, %v3204, 0.0
      %v3463 = vsel %vm3431, %v3205, 0.0
      %v3464 = vsel %vm3432, %v3206, 0.0
      %v3465 = vsel %vm3433, %v3207, 0.0
      %v3466 = vsel %vm3434, %v3208, 0.0
      %v3467 = vsel %vm3435, %v3209, 0.0
      %v3468 = vsel %vm3436, %v3210, 0.0
      %v3469 = vsel %vm3437, %v3211, 0.0
      %v3470 = vsel %vm3438, %v3212, 0.0
      %v3471 = vsel %vm3439, %v3213, 0.0
      %v3472 = vsel %vm3440, %v3214, 0.0
      %v3473 = vsel %vm3441, %v3215, 0.0
      %v3474 = vsel %vm3442, %v3216, 0.0
      %v3475 = vsel %vm3443, %v3217, 0.0
      %v3476 = vsel %vm3444, %v3218, 0.0
      %v3477 = vsel %vm3445, %v3219, 0.0
      %v3478 = vsel %vm3446, %v3220, 0.0
      %v3479 = vsel %vm3447, %v3221, 0.0
      %v3480 = vsel %vm3448, %v3222, 0.0
      %v3481 = vsel %vm3449, %v3223, 0.0
      %vm3482 = vcmask 130048
      %v3483 = vsel %vm3482, %v3450, 0.0
      %v3484 = vsel %vm3482, %v3451, 0.0
      %v3485 = vadd.f32 %v3483, %v3484
      %v3486 = vsel %vm3482, %v3452, 0.0
      %v3487 = vadd.f32 %v3485, %v3486
      %v3488 = vsel %vm3482, %v3453, 0.0
      %v3489 = vadd.f32 %v3487, %v3488
      %v3490 = vsel %vm3482, %v3454, 0.0
      %v3491 = vadd.f32 %v3489, %v3490
      %v3492 = vsel %vm3482, %v3455, 0.0
      %v3493 = vadd.f32 %v3491, %v3492
      %v3494 = vsel %vm3482, %v3456, 0.0
      %v3495 = vadd.f32 %v3493, %v3494
      %v3496 = vsel %vm3482, %v3457, 0.0
      %v3497 = vadd.f32 %v3495, %v3496
      %v3498 = vsel %vm3482, %v3458, 0.0
      %v3499 = vadd.f32 %v3497, %v3498
      %v3500 = vsel %vm3482, %v3459, 0.0
      %v3501 = vadd.f32 %v3499, %v3500
      %v3502 = vsel %vm3482, %v3460, 0.0
      %v3503 = vadd.f32 %v3501, %v3502
      %v3504 = vsel %vm3482, %v3461, 0.0
      %v3505 = vadd.f32 %v3503, %v3504
      %v3506 = vsel %vm3482, %v3462, 0.0
      %v3507 = vadd.f32 %v3505, %v3506
      %v3508 = vsel %vm3482, %v3463, 0.0
      %v3509 = vadd.f32 %v3507, %v3508
      %v3510 = vsel %vm3482, %v3464, 0.0
      %v3511 = vadd.f32 %v3509, %v3510
      %v3512 = vsel %vm3482, %v3465, 0.0
      %v3513 = vadd.f32 %v3511, %v3512
      %v3514 = vsel %vm3482, %v3466, 0.0
      %v3515 = vadd.f32 %v3513, %v3514
      %v3516 = vsel %vm3482, %v3467, 0.0
      %v3517 = vadd.f32 %v3515, %v3516
      %v3518 = vsel %vm3482, %v3468, 0.0
      %v3519 = vadd.f32 %v3517, %v3518
      %v3520 = vsel %vm3482, %v3469, 0.0
      %v3521 = vadd.f32 %v3519, %v3520
      %v3522 = vsel %vm3482, %v3470, 0.0
      %v3523 = vadd.f32 %v3521, %v3522
      %v3524 = vsel %vm3482, %v3471, 0.0
      %v3525 = vadd.f32 %v3523, %v3524
      %v3526 = vsel %vm3482, %v3472, 0.0
      %v3527 = vadd.f32 %v3525, %v3526
      %v3528 = vsel %vm3482, %v3473, 0.0
      %v3529 = vadd.f32 %v3527, %v3528
      %v3530 = vsel %vm3482, %v3474, 0.0
      %v3531 = vadd.f32 %v3529, %v3530
      %v3532 = vsel %vm3482, %v3475, 0.0
      %v3533 = vadd.f32 %v3531, %v3532
      %v3534 = vsel %vm3482, %v3476, 0.0
      %v3535 = vadd.f32 %v3533, %v3534
      %v3536 = vsel %vm3482, %v3477, 0.0
      %v3537 = vadd.f32 %v3535, %v3536
      %v3538 = vsel %vm3482, %v3478, 0.0
      %v3539 = vadd.f32 %v3537, %v3538
      %v3540 = vsel %vm3482, %v3479, 0.0
      %v3541 = vadd.f32 %v3539, %v3540
      %v3542 = vsel %vm3482, %v3480, 0.0
      %v3543 = vadd.f32 %v3541, %v3542
      %v3544 = vsel %vm3482, %v3481, 0.0
      %v3545 = vadd.f32 %v3543, %v3544
      %v3546 = vrot.slane %v3545, 4
      %v3547 = vadd.f32 %v3545, %v3546
      %v3548 = vrot.slane %v3547, 2
      %v3549 = vadd.f32 %v3547, %v3548
      %v3550 = vrot.slane %v3549, 1
      %v3551 = vadd.f32 %v3549, %v3550
      %v3552 = vmul.f32 %v3551, 0.00390625
      %v3553 = vsub.f32 %v3192, %v3552
      %v3554 = vsub.f32 %v3193, %v3552
      %v3555 = vsub.f32 %v3194, %v3552
      %v3556 = vsub.f32 %v3195, %v3552
      %v3557 = vsub.f32 %v3196, %v3552
      %v3558 = vsub.f32 %v3197, %v3552
      %v3559 = vsub.f32 %v3198, %v3552
      %v3560 = vsub.f32 %v3199, %v3552
      %v3561 = vsub.f32 %v3200, %v3552
      %v3562 = vsub.f32 %v3201, %v3552
      %v3563 = vsub.f32 %v3202, %v3552
      %v3564 = vsub.f32 %v3203, %v3552
      %v3565 = vsub.f32 %v3204, %v3552
      %v3566 = vsub.f32 %v3205, %v3552
      %v3567 = vsub.f32 %v3206, %v3552
      %v3568 = vsub.f32 %v3207, %v3552
      %v3569 = vsub.f32 %v3208, %v3552
      %v3570 = vsub.f32 %v3209, %v3552
      %v3571 = vsub.f32 %v3210, %v3552
      %v3572 = vsub.f32 %v3211, %v3552
      %v3573 = vsub.f32 %v3212, %v3552
      %v3574 = vsub.f32 %v3213, %v3552
      %v3575 = vsub.f32 %v3214, %v3552
      %v3576 = vsub.f32 %v3215, %v3552
      %v3577 = vsub.f32 %v3216, %v3552
      %v3578 = vsub.f32 %v3217, %v3552
      %v3579 = vsub.f32 %v3218, %v3552
      %v3580 = vsub.f32 %v3219, %v3552
      %v3581 = vsub.f32 %v3220, %v3552
      %v3582 = vsub.f32 %v3221, %v3552
      %v3583 = vsub.f32 %v3222, %v3552
      %v3584 = vsub.f32 %v3223, %v3552
      %v3585 = vsel %vm3418, %v3553, 0.0
      %v3586 = vsel %vm3419, %v3554, 0.0
      %v3587 = vsel %vm3420, %v3555, 0.0
      %v3588 = vsel %vm3421, %v3556, 0.0
      %v3589 = vsel %vm3422, %v3557, 0.0
      %v3590 = vsel %vm3423, %v3558, 0.0
      %v3591 = vsel %vm3424, %v3559, 0.0
      %v3592 = vsel %vm3425, %v3560, 0.0
      %v3593 = vsel %vm3426, %v3561, 0.0
      %v3594 = vsel %vm3427, %v3562, 0.0
      %v3595 = vsel %vm3428, %v3563, 0.0
      %v3596 = vsel %vm3429, %v3564, 0.0
      %v3597 = vsel %vm3430, %v3565, 0.0
      %v3598 = vsel %vm3431, %v3566, 0.0
      %v3599 = vsel %vm3432, %v3567, 0.0
      %v3600 = vsel %vm3433, %v3568, 0.0
      %v3601 = vsel %vm3434, %v3569, 0.0
      %v3602 = vsel %vm3435, %v3570, 0.0
      %v3603 = vsel %vm3436, %v3571, 0.0
      %v3604 = vsel %vm3437, %v3572, 0.0
      %v3605 = vsel %vm3438, %v3573, 0.0
      %v3606 = vsel %vm3439, %v3574, 0.0
      %v3607 = vsel %vm3440, %v3575, 0.0
      %v3608 = vsel %vm3441, %v3576, 0.0
      %v3609 = vsel %vm3442, %v3577, 0.0
      %v3610 = vsel %vm3443, %v3578, 0.0
      %v3611 = vsel %vm3444, %v3579, 0.0
      %v3612 = vsel %vm3445, %v3580, 0.0
      %v3613 = vsel %vm3446, %v3581, 0.0
      %v3614 = vsel %vm3447, %v3582, 0.0
      %v3615 = vsel %vm3448, %v3583, 0.0
      %v3616 = vsel %vm3449, %v3584, 0.0
      %vm3617 = vcmask 122880
      %3618 = vst.msk [vmem:[%s214] sm:$0x1] %vm3617, %v3551
      %v3619 = vmul.f32 %v3585, %v3585
      %v3620 = vmul.f32 %v3586, %v3586
      %v3621 = vmul.f32 %v3587, %v3587
      %v3622 = vmul.f32 %v3588, %v3588
      %v3623 = vmul.f32 %v3589, %v3589
      %v3624 = vmul.f32 %v3590, %v3590
      %v3625 = vmul.f32 %v3591, %v3591
      %v3626 = vmul.f32 %v3592, %v3592
      %v3627 = vmul.f32 %v3593, %v3593
      %v3628 = vmul.f32 %v3594, %v3594
      %v3629 = vmul.f32 %v3595, %v3595
      %v3630 = vmul.f32 %v3596, %v3596
      %v3631 = vmul.f32 %v3597, %v3597
      %v3632 = vmul.f32 %v3598, %v3598
      %v3633 = vmul.f32 %v3599, %v3599
      %v3634 = vmul.f32 %v3600, %v3600
      %v3635 = vmul.f32 %v3601, %v3601
      %v3636 = vmul.f32 %v3602, %v3602
      %v3637 = vmul.f32 %v3603, %v3603
      %v3638 = vmul.f32 %v3604, %v3604
      %v3639 = vmul.f32 %v3605, %v3605
      %v3640 = vmul.f32 %v3606, %v3606
      %v3641 = vmul.f32 %v3607, %v3607
      %v3642 = vmul.f32 %v3608, %v3608
      %v3643 = vmul.f32 %v3609, %v3609
      %v3644 = vmul.f32 %v3610, %v3610
      %v3645 = vmul.f32 %v3611, %v3611
      %v3646 = vmul.f32 %v3612, %v3612
      %v3647 = vmul.f32 %v3613, %v3613
      %v3648 = vmul.f32 %v3614, %v3614
      %v3649 = vmul.f32 %v3615, %v3615
      %v3650 = vmul.f32 %v3616, %v3616
      %v3651 = vsel %vm3482, %v3619, 0.0
      %v3652 = vsel %vm3482, %v3620, 0.0
      %v3653 = vadd.f32 %v3651, %v3652
      %v3654 = vsel %vm3482, %v3621, 0.0
      %v3655 = vadd.f32 %v3653, %v3654
      %v3656 = vsel %vm3482, %v3622, 0.0
      %v3657 = vadd.f32 %v3655, %v3656
      %v3658 = vsel %vm3482, %v3623, 0.0
      %v3659 = vadd.f32 %v3657, %v3658
      %v3660 = vsel %vm3482, %v3624, 0.0
      %v3661 = vadd.f32 %v3659, %v3660
      %v3662 = vsel %vm3482, %v3625, 0.0
      %v3663 = vadd.f32 %v3661, %v3662
      %v3664 = vsel %vm3482, %v3626, 0.0
      %v3665 = vadd.f32 %v3663, %v3664
      %v3666 = vsel %vm3482, %v3627, 0.0
      %v3667 = vadd.f32 %v3665, %v3666
      %v3668 = vsel %vm3482, %v3628, 0.0
      %v3669 = vadd.f32 %v3667, %v3668
      %v3670 = vsel %vm3482, %v3629, 0.0
      %v3671 = vadd.f32 %v3669, %v3670
      %v3672 = vsel %vm3482, %v3630, 0.0
      %v3673 = vadd.f32 %v3671, %v3672
      %v3674 = vsel %vm3482, %v3631, 0.0
      %v3675 = vadd.f32 %v3673, %v3674
      %v3676 = vsel %vm3482, %v3632, 0.0
      %v3677 = vadd.f32 %v3675, %v3676
      %v3678 = vsel %vm3482, %v3633, 0.0
      %v3679 = vadd.f32 %v3677, %v3678
      %v3680 = vsel %vm3482, %v3634, 0.0
      %v3681 = vadd.f32 %v3679, %v3680
      %v3682 = vsel %vm3482, %v3635, 0.0
      %v3683 = vadd.f32 %v3681, %v3682
      %v3684 = vsel %vm3482, %v3636, 0.0
      %v3685 = vadd.f32 %v3683, %v3684
      %v3686 = vsel %vm3482, %v3637, 0.0
      %v3687 = vadd.f32 %v3685, %v3686
      %v3688 = vsel %vm3482, %v3638, 0.0
      %v3689 = vadd.f32 %v3687, %v3688
      %v3690 = vsel %vm3482, %v3639, 0.0
      %v3691 = vadd.f32 %v3689, %v3690
      %v3692 = vsel %vm3482, %v3640, 0.0
      %v3693 = vadd.f32 %v3691, %v3692
      %v3694 = vsel %vm3482, %v3641, 0.0
      %v3695 = vadd.f32 %v3693, %v3694
      %v3696 = vsel %vm3482, %v3642, 0.0
      %v3697 = vadd.f32 %v3695, %v3696
      %v3698 = vsel %vm3482, %v3643, 0.0
      %v3699 = vadd.f32 %v3697, %v3698
      %v3700 = vsel %vm3482, %v3644, 0.0
      %v3701 = vadd.f32 %v3699, %v3700
      %v3702 = vsel %vm3482, %v3645, 0.0
      %v3703 = vadd.f32 %v3701, %v3702
      %v3704 = vsel %vm3482, %v3646, 0.0
      %v3705 = vadd.f32 %v3703, %v3704
      %v3706 = vsel %vm3482, %v3647, 0.0
      %v3707 = vadd.f32 %v3705, %v3706
      %v3708 = vsel %vm3482, %v3648, 0.0
      %v3709 = vadd.f32 %v3707, %v3708
      %v3710 = vsel %vm3482, %v3649, 0.0
      %v3711 = vadd.f32 %v3709, %v3710
      %v3712 = vsel %vm3482, %v3650, 0.0
      %v3713 = vadd.f32 %v3711, %v3712
      %v3714 = vrot.slane %v3713, 4
      %v3715 = vadd.f32 %v3713, %v3714
      %v3716 = vrot.slane %v3715, 2
      %v3717 = vadd.f32 %v3715, %v3716
      %v3718 = vrot.slane %v3717, 1
      %v3719 = vadd.f32 %v3717, %v3718
      %3720 = vst.msk [vmem:[%s218] sm:$0x1] %vm3617, %v3719
      %v3721 = vld [vmem:[%s1669] sm:$0xf]
      %v3722 = vld [vmem:[%s1669 + $0x4] sm:$0xf]
      %v3723 = vld [vmem:[%s1669 + $0xc] sm:$0xf]
      %v3724 = vld [vmem:[%s1669 + $0x10] sm:$0xf]
      %v3725 = vld [vmem:[%s1669 + $0x18] sm:$0xf]
      %v3726 = vld [vmem:[%s1669 + $0x1c] sm:$0xf]
      %v3727 = vld [vmem:[%s1669 + $0x24] sm:$0xf]
      %v3728 = vld [vmem:[%s1669 + $0x28] sm:$0xf]
      %v3729 = vld [vmem:[%s1669 + $0x30] sm:$0xf]
      %v3730 = vld [vmem:[%s1669 + $0x34] sm:$0xf]
      %v3731 = vld [vmem:[%s1669 + $0x3c] sm:$0xf]
      %v3732 = vld [vmem:[%s1669 + $0x40] sm:$0xf]
      %v3733 = vld [vmem:[%s1669 + $0x48] sm:$0xf]
      %v3734 = vld [vmem:[%s1669 + $0x4c] sm:$0xf]
      %v3735 = vld [vmem:[%s1669 + $0x54] sm:$0xf]
      %v3736 = vld [vmem:[%s1669 + $0x58] sm:$0xf]
      %v3737 = vld [vmem:[%s1669 + $0x60] sm:$0xf]
      %v3738 = vld [vmem:[%s1669 + $0x64] sm:$0xf]
      %v3739 = vld [vmem:[%s1669 + $0x6c] sm:$0xf]
      %v3740 = vld [vmem:[%s1669 + $0x70] sm:$0xf]
      %v3741 = vld [vmem:[%s1669 + $0x78] sm:$0xf]
      %v3742 = vld [vmem:[%s1669 + $0x7c] sm:$0xf]
      %v3743 = vld [vmem:[%s1669 + $0x84] sm:$0xf]
      %v3744 = vld [vmem:[%s1669 + $0x88] sm:$0xf]
      %v3745 = vld [vmem:[%s1669 + $0x90] sm:$0xf]
      %v3746 = vld [vmem:[%s1669 + $0x94] sm:$0xf]
      %v3747 = vld [vmem:[%s1669 + $0x9c] sm:$0xf]
      %v3748 = vld [vmem:[%s1669 + $0xa0] sm:$0xf]
      %v3749 = vld [vmem:[%s1669 + $0xa8] sm:$0xf]
      %v3750 = vld [vmem:[%s1669 + $0xac] sm:$0xf]
      %v3751 = vld [vmem:[%s1669 + $0xb4] sm:$0xf]
      %v3752 = vld [vmem:[%s1669 + $0xb8] sm:$0xf]
      %s3753 = scalar_lea.vmem %s1, 24
      %v3754 = vld [vmem:[%s3753] sm:$0x3]
      %v3755 = vld [vmem:[%s1669 + $0x8] sm:$0x1]
      %v3756 = vld [vmem:[%s1669 + $0x14] sm:$0x1]
      %v3757 = vld [vmem:[%s1669 + $0x20] sm:$0x1]
      %v3758 = vld [vmem:[%s1669 + $0x2c] sm:$0x1]
      %v3759 = vld [vmem:[%s1669 + $0x38] sm:$0x1]
      %v3760 = vld [vmem:[%s1669 + $0x44] sm:$0x1]
      %v3761 = vld [vmem:[%s1669 + $0x50] sm:$0x1]
      %v3762 = vld [vmem:[%s1669 + $0x5c] sm:$0x1]
      %v3763 = vld [vmem:[%s1669 + $0x68] sm:$0x1]
      %v3764 = vld [vmem:[%s1669 + $0x74] sm:$0x1]
      %v3765 = vld [vmem:[%s1669 + $0x80] sm:$0x1]
      %v3766 = vld [vmem:[%s1669 + $0x8c] sm:$0x1]
      %v3767 = vld [vmem:[%s1669 + $0x98] sm:$0x1]
      %v3768 = vld [vmem:[%s1669 + $0xa4] sm:$0x1]
      %v3769 = vld [vmem:[%s1669 + $0xb0] sm:$0x1]
      %v3770 = vld [vmem:[%s1669 + $0xbc] sm:$0x1]
      %v3772 = vshrl.u32 %v3721, 16
      %v3774 = vrot.slane %v3772, 4
      %v3775 = vshll.u32 %v3721, 16
      %v3777 = vrot.slane %v3775, 5
      %v3778 = vor.u32 %v3774, %v3777
      %v3779 = vrot.slane %v3778, 4
      %v3781 = vshll.u32 %v3722, 16
      %v3783 = vrot.slane %v3781, 5
      %v3784 = vsel %vm271, %v3779, %v3783
      %v3785 = vshrl.u32 %v3722, 16
      %v3787 = vrot.slane %v3785, 4
      %v3788 = vor.u32 %v3787, %v3783
      %v3789 = vrot.slane %v3788, 4
      %v3791 = vshll.u32 %v3755, 16
      %v3793 = vrot.slane %v3791, 5
      %v3794 = vsel %vm271, %v3789, %v3793
      %v3796 = vshrl.u32 %v3723, 16
      %v3798 = vrot.slane %v3796, 4
      %v3799 = vshll.u32 %v3723, 16
      %v3801 = vrot.slane %v3799, 5
      %v3802 = vor.u32 %v3798, %v3801
      %v3803 = vrot.slane %v3802, 4
      %v3805 = vshll.u32 %v3724, 16
      %v3807 = vrot.slane %v3805, 5
      %v3808 = vsel %vm271, %v3803, %v3807
      %v3809 = vshrl.u32 %v3724, 16
      %v3811 = vrot.slane %v3809, 4
      %v3812 = vor.u32 %v3811, %v3807
      %v3813 = vrot.slane %v3812, 4
      %v3815 = vshll.u32 %v3756, 16
      %v3817 = vrot.slane %v3815, 5
      %v3818 = vsel %vm271, %v3813, %v3817
      %v3820 = vshrl.u32 %v3725, 16
      %v3822 = vrot.slane %v3820, 4
      %v3823 = vshll.u32 %v3725, 16
      %v3825 = vrot.slane %v3823, 5
      %v3826 = vor.u32 %v3822, %v3825
      %v3827 = vrot.slane %v3826, 4
      %v3829 = vshll.u32 %v3726, 16
      %v3831 = vrot.slane %v3829, 5
      %v3832 = vsel %vm271, %v3827, %v3831
      %v3833 = vshrl.u32 %v3726, 16
      %v3835 = vrot.slane %v3833, 4
      %v3836 = vor.u32 %v3835, %v3831
      %v3837 = vrot.slane %v3836, 4
      %v3839 = vshll.u32 %v3757, 16
      %v3841 = vrot.slane %v3839, 5
      %v3842 = vsel %vm271, %v3837, %v3841
      %v3844 = vshrl.u32 %v3727, 16
      %v3846 = vrot.slane %v3844, 4
      %v3847 = vshll.u32 %v3727, 16
      %v3849 = vrot.slane %v3847, 5
      %v3850 = vor.u32 %v3846, %v3849
      %v3851 = vrot.slane %v3850, 4
      %v3853 = vshll.u32 %v3728, 16
      %v3855 = vrot.slane %v3853, 5
      %v3856 = vsel %vm271, %v3851, %v3855
      %v3857 = vshrl.u32 %v3728, 16
      %v3859 = vrot.slane %v3857, 4
      %v3860 = vor.u32 %v3859, %v3855
      %v3861 = vrot.slane %v3860, 4
      %v3863 = vshll.u32 %v3758, 16
      %v3865 = vrot.slane %v3863, 5
      %v3866 = vsel %vm271, %v3861, %v3865
      %v3868 = vshrl.u32 %v3729, 16
      %v3870 = vrot.slane %v3868, 4
      %v3871 = vshll.u32 %v3729, 16
      %v3873 = vrot.slane %v3871, 5
      %v3874 = vor.u32 %v3870, %v3873
      %v3875 = vrot.slane %v3874, 4
      %v3877 = vshll.u32 %v3730, 16
      %v3879 = vrot.slane %v3877, 5
      %v3880 = vsel %vm271, %v3875, %v3879
      %v3881 = vshrl.u32 %v3730, 16
      %v3883 = vrot.slane %v3881, 4
      %v3884 = vor.u32 %v3883, %v3879
      %v3885 = vrot.slane %v3884, 4
      %v3887 = vshll.u32 %v3759, 16
      %v3889 = vrot.slane %v3887, 5
      %v3890 = vsel %vm271, %v3885, %v3889
      %v3892 = vshrl.u32 %v3731, 16
      %v3894 = vrot.slane %v3892, 4
      %v3895 = vshll.u32 %v3731, 16
      %v3897 = vrot.slane %v3895, 5
      %v3898 = vor.u32 %v3894, %v3897
      %v3899 = vrot.slane %v3898, 4
      %v3901 = vshll.u32 %v3732, 16
      %v3903 = vrot.slane %v3901, 5
      %v3904 = vsel %vm271, %v3899, %v3903
      %v3905 = vshrl.u32 %v3732, 16
      %v3907 = vrot.slane %v3905, 4
      %v3908 = vor.u32 %v3907, %v3903
      %v3909 = vrot.slane %v3908, 4
      %v3911 = vshll.u32 %v3760, 16
      %v3913 = vrot.slane %v3911, 5
      %v3914 = vsel %vm271, %v3909, %v3913
      %v3916 = vshrl.u32 %v3733, 16
      %v3918 = vrot.slane %v3916, 4
      %v3919 = vshll.u32 %v3733, 16
      %v3921 = vrot.slane %v3919, 5
      %v3922 = vor.u32 %v3918, %v3921
      %v3923 = vrot.slane %v3922, 4
      %v3925 = vshll.u32 %v3734, 16
      %v3927 = vrot.slane %v3925, 5
      %v3928 = vsel %vm271, %v3923, %v3927
      %v3929 = vshrl.u32 %v3734, 16
      %v3931 = vrot.slane %v3929, 4
      %v3932 = vor.u32 %v3931, %v3927
      %v3933 = vrot.slane %v3932, 4
      %v3935 = vshll.u32 %v3761, 16
      %v3937 = vrot.slane %v3935, 5
      %v3938 = vsel %vm271, %v3933, %v3937
      %v3940 = vshrl.u32 %v3735, 16
      %v3942 = vrot.slane %v3940, 4
      %v3943 = vshll.u32 %v3735, 16
      %v3945 = vrot.slane %v3943, 5
      %v3946 = vor.u32 %v3942, %v3945
      %v3947 = vrot.slane %v3946, 4
      %v3949 = vshll.u32 %v3736, 16
      %v3951 = vrot.slane %v3949, 5
      %v3952 = vsel %vm271, %v3947, %v3951
      %v3953 = vshrl.u32 %v3736, 16
      %v3955 = vrot.slane %v3953, 4
      %v3956 = vor.u32 %v3955, %v3951
      %v3957 = vrot.slane %v3956, 4
      %v3959 = vshll.u32 %v3762, 16
      %v3961 = vrot.slane %v3959, 5
      %v3962 = vsel %vm271, %v3957, %v3961
      %v3964 = vshrl.u32 %v3737, 16
      %v3966 = vrot.slane %v3964, 4
      %v3967 = vshll.u32 %v3737, 16
      %v3969 = vrot.slane %v3967, 5
      %v3970 = vor.u32 %v3966, %v3969
      %v3971 = vrot.slane %v3970, 4
      %v3973 = vshll.u32 %v3738, 16
      %v3975 = vrot.slane %v3973, 5
      %v3976 = vsel %vm271, %v3971, %v3975
      %v3977 = vshrl.u32 %v3738, 16
      %v3979 = vrot.slane %v3977, 4
      %v3980 = vor.u32 %v3979, %v3975
      %v3981 = vrot.slane %v3980, 4
      %v3983 = vshll.u32 %v3763, 16
      %v3985 = vrot.slane %v3983, 5
      %v3986 = vsel %vm271, %v3981, %v3985
      %v3988 = vshrl.u32 %v3739, 16
      %v3990 = vrot.slane %v3988, 4
      %v3991 = vshll.u32 %v3739, 16
      %v3993 = vrot.slane %v3991, 5
      %v3994 = vor.u32 %v3990, %v3993
      %v3995 = vrot.slane %v3994, 4
      %v3997 = vshll.u32 %v3740, 16
      %v3999 = vrot.slane %v3997, 5
      %v4000 = vsel %vm271, %v3995, %v3999
      %v4001 = vshrl.u32 %v3740, 16
      %v4003 = vrot.slane %v4001, 4
      %v4004 = vor.u32 %v4003, %v3999
      %v4005 = vrot.slane %v4004, 4
      %v4007 = vshll.u32 %v3764, 16
      %v4009 = vrot.slane %v4007, 5
      %v4010 = vsel %vm271, %v4005, %v4009
      %v4012 = vshrl.u32 %v3741, 16
      %v4014 = vrot.slane %v4012, 4
      %v4015 = vshll.u32 %v3741, 16
      %v4017 = vrot.slane %v4015, 5
      %v4018 = vor.u32 %v4014, %v4017
      %v4019 = vrot.slane %v4018, 4
      %v4021 = vshll.u32 %v3742, 16
      %v4023 = vrot.slane %v4021, 5
      %v4024 = vsel %vm271, %v4019, %v4023
      %v4025 = vshrl.u32 %v3742, 16
      %v4027 = vrot.slane %v4025, 4
      %v4028 = vor.u32 %v4027, %v4023
      %v4029 = vrot.slane %v4028, 4
      %v4031 = vshll.u32 %v3765, 16
      %v4033 = vrot.slane %v4031, 5
      %v4034 = vsel %vm271, %v4029, %v4033
      %v4036 = vshrl.u32 %v3743, 16
      %v4038 = vrot.slane %v4036, 4
      %v4039 = vshll.u32 %v3743, 16
      %v4041 = vrot.slane %v4039, 5
      %v4042 = vor.u32 %v4038, %v4041
      %v4043 = vrot.slane %v4042, 4
      %v4045 = vshll.u32 %v3744, 16
      %v4047 = vrot.slane %v4045, 5
      %v4048 = vsel %vm271, %v4043, %v4047
      %v4049 = vshrl.u32 %v3744, 16
      %v4051 = vrot.slane %v4049, 4
      %v4052 = vor.u32 %v4051, %v4047
      %v4053 = vrot.slane %v4052, 4
      %v4055 = vshll.u32 %v3766, 16
      %v4057 = vrot.slane %v4055, 5
      %v4058 = vsel %vm271, %v4053, %v4057
      %v4060 = vshrl.u32 %v3745, 16
      %v4062 = vrot.slane %v4060, 4
      %v4063 = vshll.u32 %v3745, 16
      %v4065 = vrot.slane %v4063, 5
      %v4066 = vor.u32 %v4062, %v4065
      %v4067 = vrot.slane %v4066, 4
      %v4069 = vshll.u32 %v3746, 16
      %v4071 = vrot.slane %v4069, 5
      %v4072 = vsel %vm271, %v4067, %v4071
      %v4073 = vshrl.u32 %v3746, 16
      %v4075 = vrot.slane %v4073, 4
      %v4076 = vor.u32 %v4075, %v4071
      %v4077 = vrot.slane %v4076, 4
      %v4079 = vshll.u32 %v3767, 16
      %v4081 = vrot.slane %v4079, 5
      %v4082 = vsel %vm271, %v4077, %v4081
      %v4084 = vshrl.u32 %v3747, 16
      %v4086 = vrot.slane %v4084, 4
      %v4087 = vshll.u32 %v3747, 16
      %v4089 = vrot.slane %v4087, 5
      %v4090 = vor.u32 %v4086, %v4089
      %v4091 = vrot.slane %v4090, 4
      %v4093 = vshll.u32 %v3748, 16
      %v4095 = vrot.slane %v4093, 5
      %v4096 = vsel %vm271, %v4091, %v4095
      %v4097 = vshrl.u32 %v3748, 16
      %v4099 = vrot.slane %v4097, 4
      %v4100 = vor.u32 %v4099, %v4095
      %v4101 = vrot.slane %v4100, 4
      %v4103 = vshll.u32 %v3768, 16
      %v4105 = vrot.slane %v4103, 5
      %v4106 = vsel %vm271, %v4101, %v4105
      %v4108 = vshrl.u32 %v3749, 16
      %v4110 = vrot.slane %v4108, 4
      %v4111 = vshll.u32 %v3749, 16
      %v4113 = vrot.slane %v4111, 5
      %v4114 = vor.u32 %v4110, %v4113
      %v4115 = vrot.slane %v4114, 4
      %v4117 = vshll.u32 %v3750, 16
      %v4119 = vrot.slane %v4117, 5
      %v4120 = vsel %vm271, %v4115, %v4119
      %v4121 = vshrl.u32 %v3750, 16
      %v4123 = vrot.slane %v4121, 4
      %v4124 = vor.u32 %v4123, %v4119
      %v4125 = vrot.slane %v4124, 4
      %v4127 = vshll.u32 %v3769, 16
      %v4129 = vrot.slane %v4127, 5
      %v4130 = vsel %vm271, %v4125, %v4129
      %v4132 = vshrl.u32 %v3751, 16
      %v4134 = vrot.slane %v4132, 4
      %v4135 = vshll.u32 %v3751, 16
      %v4137 = vrot.slane %v4135, 5
      %v4138 = vor.u32 %v4134, %v4137
      %v4139 = vrot.slane %v4138, 4
      %v4141 = vshll.u32 %v3752, 16
      %v4143 = vrot.slane %v4141, 5
      %v4144 = vsel %vm271, %v4139, %v4143
      %v4145 = vshrl.u32 %v3752, 16
      %v4147 = vrot.slane %v4145, 4
      %v4148 = vor.u32 %v4147, %v4143
      %v4149 = vrot.slane %v4148, 4
      %v4151 = vshll.u32 %v3770, 16
      %v4153 = vrot.slane %v4151, 5
      %v4154 = vsel %vm271, %v4149, %v4153
      %s4155 = scalar_lea.vmem %s1, 26
      %v4156 = vld [vmem:[%s4155] sm:$0x3]
      %v4157 = vunpack.c.l.b16 %v3784
      %v4158 = vunpack.c.l.b16 %v3794
      %v4159 = vunpack.c.l.b16 %v3808
      %v4160 = vunpack.c.l.b16 %v3818
      %v4161 = vunpack.c.l.b16 %v3832
      %v4162 = vunpack.c.l.b16 %v3842
      %v4163 = vunpack.c.l.b16 %v3856
      %v4164 = vunpack.c.l.b16 %v3866
      %v4165 = vunpack.c.l.b16 %v3880
      %v4166 = vunpack.c.l.b16 %v3890
      %v4167 = vunpack.c.l.b16 %v3904
      %v4168 = vunpack.c.l.b16 %v3914
      %v4169 = vunpack.c.l.b16 %v3928
      %v4170 = vunpack.c.l.b16 %v3938
      %v4171 = vunpack.c.l.b16 %v3952
      %v4172 = vunpack.c.l.b16 %v3962
      %v4173 = vunpack.c.l.b16 %v3976
      %v4174 = vunpack.c.l.b16 %v3986
      %v4175 = vunpack.c.l.b16 %v4000
      %v4176 = vunpack.c.l.b16 %v4010
      %v4177 = vunpack.c.l.b16 %v4024
      %v4178 = vunpack.c.l.b16 %v4034
      %v4179 = vunpack.c.l.b16 %v4048
      %v4180 = vunpack.c.l.b16 %v4058
      %v4181 = vunpack.c.l.b16 %v4072
      %v4182 = vunpack.c.l.b16 %v4082
      %v4183 = vunpack.c.l.b16 %v4096
      %v4184 = vunpack.c.l.b16 %v4106
      %v4185 = vunpack.c.l.b16 %v4120
      %v4186 = vunpack.c.l.b16 %v4130
      %v4187 = vunpack.c.l.b16 %v4144
      %v4188 = vunpack.c.l.b16 %v4154
      %v4189 = vpack.c.b16 %v4158, %v4157
      %v4190 = vpack.c.b16 %v4160, %v4159
      %v4191 = vpack.c.b16 %v4162, %v4161
      %v4192 = vpack.c.b16 %v4164, %v4163
      %v4193 = vpack.c.b16 %v4166, %v4165
      %v4194 = vpack.c.b16 %v4168, %v4167
      %v4195 = vpack.c.b16 %v4170, %v4169
      %v4196 = vpack.c.b16 %v4172, %v4171
      %v4197 = vpack.c.b16 %v4174, %v4173
      %v4198 = vpack.c.b16 %v4176, %v4175
      %v4199 = vpack.c.b16 %v4178, %v4177
      %v4200 = vpack.c.b16 %v4180, %v4179
      %v4201 = vpack.c.b16 %v4182, %v4181
      %v4202 = vpack.c.b16 %v4184, %v4183
      %v4203 = vpack.c.b16 %v4186, %v4185
      %v4204 = vpack.c.b16 %v4188, %v4187
      %v4206 = vsel %vm706, %v4189, 0
      %v4209 = vsel %vm706, %v4190, 0
      %v4212 = vsel %vm706, %v4191, 0
      %v4215 = vsel %vm706, %v4192, 0
      %v4218 = vsel %vm706, %v4193, 0
      %v4221 = vsel %vm706, %v4194, 0
      %v4224 = vsel %vm706, %v4195, 0
      %v4227 = vsel %vm706, %v4196, 0
      %v4230 = vsel %vm706, %v4197, 0
      %v4233 = vsel %vm706, %v4198, 0
      %v4236 = vsel %vm706, %v4199, 0
      %v4239 = vsel %vm706, %v4200, 0
      %v4242 = vsel %vm706, %v4201, 0
      %v4245 = vsel %vm706, %v4202, 0
      %v4248 = vsel %vm706, %v4203, 0
      %v4251 = vsel %vm706, %v4204, 0
      %v4254 = vsel %vm755, %v4156, 0
      %4256 = vmatprep.subr.bf16.mxu0 0
      %4257 = vmatpush1.bf16.msra.mxu0 %v4254
      %4258 = vmatprep.subr.bf16.mxu0 0
      %4259 = vmatpush1.bf16.msra.mxu0 0
      %4260 = vmatprep.subr.bf16.mxu0 0
      %4261 = vmatpush1.bf16.msra.mxu0 0
      %4262 = vmatprep.subr.bf16.mxu0 0
      %4263 = vmatpush1.bf16.msra.mxu0 0
      %4264 = vmatprep.subr.bf16.mxu0 0
      %4265 = vmatpush1.bf16.msra.mxu0 0
      %4266 = vmatprep.subr.bf16.mxu0 0
      %4267 = vmatpush1.bf16.msra.mxu0 0
      %4268 = vmatprep.subr.bf16.mxu0 0
      %4269 = vmatpush1.bf16.msra.mxu0 0
      %4270 = vmatprep.subr.bf16.mxu0 0
      %4271 = vmatpush1.bf16.msra.mxu0 0
      %4272 = vmatprep.subr.bf16.mxu0 0
      %4273 = vmatpush1.bf16.msra.mxu0 0
      %4274 = vmatprep.subr.bf16.mxu0 0
      %4275 = vmatpush1.bf16.msra.mxu0 0
      %4276 = vmatprep.subr.bf16.mxu0 0
      %4277 = vmatpush1.bf16.msra.mxu0 0
      %4278 = vmatprep.subr.bf16.mxu0 0
      %4279 = vmatpush1.bf16.msra.mxu0 0
      %4280 = vmatprep.subr.bf16.mxu0 0
      %4281 = vmatpush1.bf16.msra.mxu0 0
      %4282 = vmatprep.subr.bf16.mxu0 0
      %4283 = vmatpush1.bf16.msra.mxu0 0
      %4284 = vmatprep.subr.bf16.mxu0 0
      %4285 = vmatpush1.bf16.msra.mxu0 0
      %4286 = vmatprep.subr.bf16.mxu0 0
      %4287 = vmatpush1.bf16.msra.mxu0 0
      %4288 = vmatprep.mubr.bf16.mxu0 0
      %4289 = vmatmul.mubr.bf16.gmra.mrb[0].mxu0 %v4206
      %v4290 = vpop.f32.mrb[0].mxu0
      %v4291 = vadd.f32 0.0, %v4290
      %v4292 = vpop.f32.mrb[0].mxu0
      %v4293 = vpop.f32.mrb[0].mxu0
      %v4294 = vadd.f32 0.0, %v4293
      %v4295 = vpop.f32.mrb[0].mxu0
      %4296 = vmatprep.mubr.bf16.mxu0 0
      %4297 = vmatmul.mubr.bf16.gmra.mrb[0].mxu0 %v4209
      %v4298 = vpop.f32.mrb[0].mxu0
      %v4299 = vadd.f32 0.0, %v4298
      %v4300 = vpop.f32.mrb[0].mxu0
      %v4301 = vpop.f32.mrb[0].mxu0
      %v4302 = vadd.f32 0.0, %v4301
      %v4303 = vpop.f32.mrb[0].mxu0
      %4304 = vmatprep.mubr.bf16.mxu0 0
      %4305 = vmatmul.mubr.bf16.gmra.mrb[0].mxu0 %v4212
      %v4306 = vpop.f32.mrb[0].mxu0
      %v4307 = vadd.f32 0.0, %v4306
      %v4308 = vpop.f32.mrb[0].mxu0
      %v4309 = vpop.f32.mrb[0].mxu0
      %v4310 = vadd.f32 0.0, %v4309
      %v4311 = vpop.f32.mrb[0].mxu0
      %4312 = vmatprep.mubr.bf16.mxu0 0
      %4313 = vmatmul.mubr.bf16.gmra.mrb[0].mxu0 %v4215
      %v4314 = vpop.f32.mrb[0].mxu0
      %v4315 = vadd.f32 0.0, %v4314
      %v4316 = vpop.f32.mrb[0].mxu0
      %v4317 = vpop.f32.mrb[0].mxu0
      %v4318 = vadd.f32 0.0, %v4317
      %v4319 = vpop.f32.mrb[0].mxu0
      %4320 = vmatprep.mubr.bf16.mxu0 0
      %4321 = vmatmul.mubr.bf16.gmra.mrb[0].mxu0 %v4218
      %v4322 = vpop.f32.mrb[0].mxu0
      %v4323 = vadd.f32 0.0, %v4322
      %v4324 = vpop.f32.mrb[0].mxu0
      %v4325 = vpop.f32.mrb[0].mxu0
      %v4326 = vadd.f32 0.0, %v4325
      %v4327 = vpop.f32.mrb[0].mxu0
      %4328 = vmatprep.mubr.bf16.mxu0 0
      %4329 = vmatmul.mubr.bf16.gmra.mrb[0].mxu0 %v4221
      %v4330 = vpop.f32.mrb[0].mxu0
      %v4331 = vadd.f32 0.0, %v4330
      %v4332 = vpop.f32.mrb[0].mxu0
      %v4333 = vpop.f32.mrb[0].mxu0
      %v4334 = vadd.f32 0.0, %v4333
      %v4335 = vpop.f32.mrb[0].mxu0
      %4336 = vmatprep.mubr.bf16.mxu0 0
      %4337 = vmatmul.mubr.bf16.gmra.mrb[0].mxu0 %v4224
      %v4338 = vpop.f32.mrb[0].mxu0
      %v4339 = vadd.f32 0.0, %v4338
      %v4340 = vpop.f32.mrb[0].mxu0
      %v4341 = vpop.f32.mrb[0].mxu0
      %v4342 = vadd.f32 0.0, %v4341
      %v4343 = vpop.f32.mrb[0].mxu0
      %4344 = vmatprep.mubr.bf16.mxu0 0
      %4345 = vmatmul.mubr.bf16.gmra.mrb[0].mxu0 %v4227
      %v4346 = vpop.f32.mrb[0].mxu0
      %v4347 = vadd.f32 0.0, %v4346
      %v4348 = vpop.f32.mrb[0].mxu0
      %v4349 = vpop.f32.mrb[0].mxu0
      %v4350 = vadd.f32 0.0, %v4349
      %v4351 = vpop.f32.mrb[0].mxu0
      %4352 = vmatprep.mubr.bf16.mxu0 0
      %4353 = vmatmul.mubr.bf16.gmra.mrb[0].mxu0 %v4230
      %v4354 = vpop.f32.mrb[0].mxu0
      %v4355 = vadd.f32 0.0, %v4354
      %v4356 = vpop.f32.mrb[0].mxu0
      %v4357 = vpop.f32.mrb[0].mxu0
      %v4358 = vadd.f32 0.0, %v4357
      %v4359 = vpop.f32.mrb[0].mxu0
      %4360 = vmatprep.mubr.bf16.mxu0 0
      %4361 = vmatmul.mubr.bf16.gmra.mrb[0].mxu0 %v4233
      %v4362 = vpop.f32.mrb[0].mxu0
      %v4363 = vadd.f32 0.0, %v4362
      %v4364 = vpop.f32.mrb[0].mxu0
      %v4365 = vpop.f32.mrb[0].mxu0
      %v4366 = vadd.f32 0.0, %v4365
      %v4367 = vpop.f32.mrb[0].mxu0
      %4368 = vmatprep.mubr.bf16.mxu0 0
      %4369 = vmatmul.mubr.bf16.gmra.mrb[0].mxu0 %v4236
      %v4370 = vpop.f32.mrb[0].mxu0
      %v4371 = vadd.f32 0.0, %v4370
      %v4372 = vpop.f32.mrb[0].mxu0
      %v4373 = vpop.f32.mrb[0].mxu0
      %v4374 = vadd.f32 0.0, %v4373
      %v4375 = vpop.f32.mrb[0].mxu0
      %4376 = vmatprep.mubr.bf16.mxu0 0
      %4377 = vmatmul.mubr.bf16.gmra.mrb[0].mxu0 %v4239
      %v4378 = vpop.f32.mrb[0].mxu0
      %v4379 = vadd.f32 0.0, %v4378
      %v4380 = vpop.f32.mrb[0].mxu0
      %v4381 = vpop.f32.mrb[0].mxu0
      %v4382 = vadd.f32 0.0, %v4381
      %v4383 = vpop.f32.mrb[0].mxu0
      %4384 = vmatprep.mubr.bf16.mxu0 0
      %4385 = vmatmul.mubr.bf16.gmra.mrb[0].mxu0 %v4242
      %v4386 = vpop.f32.mrb[0].mxu0
      %v4387 = vadd.f32 0.0, %v4386
      %v4388 = vpop.f32.mrb[0].mxu0
      %v4389 = vpop.f32.mrb[0].mxu0
      %v4390 = vadd.f32 0.0, %v4389
      %v4391 = vpop.f32.mrb[0].mxu0
      %4392 = vmatprep.mubr.bf16.mxu0 0
      %4393 = vmatmul.mubr.bf16.gmra.mrb[0].mxu0 %v4245
      %v4394 = vpop.f32.mrb[0].mxu0
      %v4395 = vadd.f32 0.0, %v4394
      %v4396 = vpop.f32.mrb[0].mxu0
      %v4397 = vpop.f32.mrb[0].mxu0
      %v4398 = vadd.f32 0.0, %v4397
      %v4399 = vpop.f32.mrb[0].mxu0
      %4400 = vmatprep.mubr.bf16.mxu0 0
      %4401 = vmatmul.mubr.bf16.gmra.mrb[0].mxu0 %v4248
      %v4402 = vpop.f32.mrb[0].mxu0
      %v4403 = vadd.f32 0.0, %v4402
      %v4404 = vpop.f32.mrb[0].mxu0
      %v4405 = vpop.f32.mrb[0].mxu0
      %v4406 = vadd.f32 0.0, %v4405
      %v4407 = vpop.f32.mrb[0].mxu0
      %4408 = vmatprep.mubr.bf16.mxu0 0
      %4409 = vmatmul.mubr.bf16.gmra.mrb[0].mxu0 %v4251
      %v4410 = vpop.f32.mrb[0].mxu0
      %v4411 = vadd.f32 0.0, %v4410
      %v4412 = vpop.f32.mrb[0].mxu0
      %v4413 = vpop.f32.mrb[0].mxu0
      %v4414 = vadd.f32 0.0, %v4413
      %v4415 = vpop.f32.mrb[0].mxu0
      %4416 = vdwg.mxu0
      %v4449 = vunpack.c.l.b16 %v3721
      %v4450 = vunpack.c.l.b16 %v3722
      %v4451 = vunpack.c.l.b16 %v3723
      %v4452 = vunpack.c.l.b16 %v3724
      %v4453 = vunpack.c.l.b16 %v3725
      %v4454 = vunpack.c.l.b16 %v3726
      %v4455 = vunpack.c.l.b16 %v3727
      %v4456 = vunpack.c.l.b16 %v3728
      %v4457 = vunpack.c.l.b16 %v3729
      %v4458 = vunpack.c.l.b16 %v3730
      %v4459 = vunpack.c.l.b16 %v3731
      %v4460 = vunpack.c.l.b16 %v3732
      %v4461 = vunpack.c.l.b16 %v3733
      %v4462 = vunpack.c.l.b16 %v3734
      %v4463 = vunpack.c.l.b16 %v3735
      %v4464 = vunpack.c.l.b16 %v3736
      %v4465 = vunpack.c.l.b16 %v3737
      %v4466 = vunpack.c.l.b16 %v3738
      %v4467 = vunpack.c.l.b16 %v3739
      %v4468 = vunpack.c.l.b16 %v3740
      %v4469 = vunpack.c.l.b16 %v3741
      %v4470 = vunpack.c.l.b16 %v3742
      %v4471 = vunpack.c.l.b16 %v3743
      %v4472 = vunpack.c.l.b16 %v3744
      %v4473 = vunpack.c.l.b16 %v3745
      %v4474 = vunpack.c.l.b16 %v3746
      %v4475 = vunpack.c.l.b16 %v3747
      %v4476 = vunpack.c.l.b16 %v3748
      %v4477 = vunpack.c.l.b16 %v3749
      %v4478 = vunpack.c.l.b16 %v3750
      %v4479 = vunpack.c.l.b16 %v3751
      %v4480 = vunpack.c.l.b16 %v3752
      %v4481 = vpack.c.b16 %v4450, %v4449
      %v4482 = vpack.c.b16 %v4452, %v4451
      %v4483 = vpack.c.b16 %v4454, %v4453
      %v4484 = vpack.c.b16 %v4456, %v4455
      %v4485 = vpack.c.b16 %v4458, %v4457
      %v4486 = vpack.c.b16 %v4460, %v4459
      %v4487 = vpack.c.b16 %v4462, %v4461
      %v4488 = vpack.c.b16 %v4464, %v4463
      %v4489 = vpack.c.b16 %v4466, %v4465
      %v4490 = vpack.c.b16 %v4468, %v4467
      %v4491 = vpack.c.b16 %v4470, %v4469
      %v4492 = vpack.c.b16 %v4472, %v4471
      %v4493 = vpack.c.b16 %v4474, %v4473
      %v4494 = vpack.c.b16 %v4476, %v4475
      %v4495 = vpack.c.b16 %v4478, %v4477
      %v4496 = vpack.c.b16 %v4480, %v4479
      %v4498 = vsel %vm706, %v4481, 0
      %v4501 = vsel %vm706, %v4482, 0
      %v4504 = vsel %vm706, %v4483, 0
      %v4507 = vsel %vm706, %v4484, 0
      %v4510 = vsel %vm706, %v4485, 0
      %v4513 = vsel %vm706, %v4486, 0
      %v4516 = vsel %vm706, %v4487, 0
      %v4519 = vsel %vm706, %v4488, 0
      %v4522 = vsel %vm706, %v4489, 0
      %v4525 = vsel %vm706, %v4490, 0
      %v4528 = vsel %vm706, %v4491, 0
      %v4531 = vsel %vm706, %v4492, 0
      %v4534 = vsel %vm706, %v4493, 0
      %v4537 = vsel %vm706, %v4494, 0
      %v4540 = vsel %vm706, %v4495, 0
      %v4543 = vsel %vm706, %v4496, 0
      %v4546 = vsel %vm755, %v3754, 0
      %4548 = vmatprep.subr.bf16.mxu0 0
      %4549 = vmatpush1.bf16.msra.mxu0 %v4546
      %4550 = vmatprep.subr.bf16.mxu0 0
      %4551 = vmatpush1.bf16.msra.mxu0 0
      %4552 = vmatprep.subr.bf16.mxu0 0
      %4553 = vmatpush1.bf16.msra.mxu0 0
      %4554 = vmatprep.subr.bf16.mxu0 0
      %4555 = vmatpush1.bf16.msra.mxu0 0
      %4556 = vmatprep.subr.bf16.mxu0 0
      %4557 = vmatpush1.bf16.msra.mxu0 0
      %4558 = vmatprep.subr.bf16.mxu0 0
      %4559 = vmatpush1.bf16.msra.mxu0 0
      %4560 = vmatprep.subr.bf16.mxu0 0
      %4561 = vmatpush1.bf16.msra.mxu0 0
      %4562 = vmatprep.subr.bf16.mxu0 0
      %4563 = vmatpush1.bf16.msra.mxu0 0
      %4564 = vmatprep.subr.bf16.mxu0 0
      %4565 = vmatpush1.bf16.msra.mxu0 0
      %4566 = vmatprep.subr.bf16.mxu0 0
      %4567 = vmatpush1.bf16.msra.mxu0 0
      %4568 = vmatprep.subr.bf16.mxu0 0
      %4569 = vmatpush1.bf16.msra.mxu0 0
      %4570 = vmatprep.subr.bf16.mxu0 0
      %4571 = vmatpush1.bf16.msra.mxu0 0
      %4572 = vmatprep.subr.bf16.mxu0 0
      %4573 = vmatpush1.bf16.msra.mxu0 0
      %4574 = vmatprep.subr.bf16.mxu0 0
      %4575 = vmatpush1.bf16.msra.mxu0 0
      %4576 = vmatprep.subr.bf16.mxu0 0
      %4577 = vmatpush1.bf16.msra.mxu0 0
      %4578 = vmatprep.subr.bf16.mxu0 0
      %4579 = vmatpush1.bf16.msra.mxu0 0
      %4580 = vmatprep.mubr.bf16.mxu0 0
      %4581 = vmatmul.mubr.bf16.gmra.mrb[0].mxu0 %v4498
      %v4582 = vpop.f32.mrb[0].mxu0
      %v4583 = vadd.f32 %v4291, %v4582
      %v4584 = vpop.f32.mrb[0].mxu0
      %v4585 = vpop.f32.mrb[0].mxu0
      %v4586 = vadd.f32 %v4294, %v4585
      %v4587 = vpop.f32.mrb[0].mxu0
      %4588 = vmatprep.mubr.bf16.mxu0 0
      %4589 = vmatmul.mubr.bf16.gmra.mrb[0].mxu0 %v4501
      %v4590 = vpop.f32.mrb[0].mxu0
      %v4591 = vadd.f32 %v4299, %v4590
      %v4592 = vpop.f32.mrb[0].mxu0
      %v4593 = vpop.f32.mrb[0].mxu0
      %v4594 = vadd.f32 %v4302, %v4593
      %v4595 = vpop.f32.mrb[0].mxu0
      %4596 = vmatprep.mubr.bf16.mxu0 0
      %4597 = vmatmul.mubr.bf16.gmra.mrb[0].mxu0 %v4504
      %v4598 = vpop.f32.mrb[0].mxu0
      %v4599 = vadd.f32 %v4307, %v4598
      %v4600 = vpop.f32.mrb[0].mxu0
      %v4601 = vpop.f32.mrb[0].mxu0
      %v4602 = vadd.f32 %v4310, %v4601
      %v4603 = vpop.f32.mrb[0].mxu0
      %4604 = vmatprep.mubr.bf16.mxu0 0
      %4605 = vmatmul.mubr.bf16.gmra.mrb[0].mxu0 %v4507
      %v4606 = vpop.f32.mrb[0].mxu0
      %v4607 = vadd.f32 %v4315, %v4606
      %v4608 = vpop.f32.mrb[0].mxu0
      %v4609 = vpop.f32.mrb[0].mxu0
      %v4610 = vadd.f32 %v4318, %v4609
      %v4611 = vpop.f32.mrb[0].mxu0
      %4612 = vmatprep.mubr.bf16.mxu0 0
      %4613 = vmatmul.mubr.bf16.gmra.mrb[0].mxu0 %v4510
      %v4614 = vpop.f32.mrb[0].mxu0
      %v4615 = vadd.f32 %v4323, %v4614
      %v4616 = vpop.f32.mrb[0].mxu0
      %v4617 = vpop.f32.mrb[0].mxu0
      %v4618 = vadd.f32 %v4326, %v4617
      %v4619 = vpop.f32.mrb[0].mxu0
      %4620 = vmatprep.mubr.bf16.mxu0 0
      %4621 = vmatmul.mubr.bf16.gmra.mrb[0].mxu0 %v4513
      %v4622 = vpop.f32.mrb[0].mxu0
      %v4623 = vadd.f32 %v4331, %v4622
      %v4624 = vpop.f32.mrb[0].mxu0
      %v4625 = vpop.f32.mrb[0].mxu0
      %v4626 = vadd.f32 %v4334, %v4625
      %v4627 = vpop.f32.mrb[0].mxu0
      %4628 = vmatprep.mubr.bf16.mxu0 0
      %4629 = vmatmul.mubr.bf16.gmra.mrb[0].mxu0 %v4516
      %v4630 = vpop.f32.mrb[0].mxu0
      %v4631 = vadd.f32 %v4339, %v4630
      %v4632 = vpop.f32.mrb[0].mxu0
      %v4633 = vpop.f32.mrb[0].mxu0
      %v4634 = vadd.f32 %v4342, %v4633
      %v4635 = vpop.f32.mrb[0].mxu0
      %4636 = vmatprep.mubr.bf16.mxu0 0
      %4637 = vmatmul.mubr.bf16.gmra.mrb[0].mxu0 %v4519
      %v4638 = vpop.f32.mrb[0].mxu0
      %v4639 = vadd.f32 %v4347, %v4638
      %v4640 = vpop.f32.mrb[0].mxu0
      %v4641 = vpop.f32.mrb[0].mxu0
      %v4642 = vadd.f32 %v4350, %v4641
      %v4643 = vpop.f32.mrb[0].mxu0
      %4644 = vmatprep.mubr.bf16.mxu0 0
      %4645 = vmatmul.mubr.bf16.gmra.mrb[0].mxu0 %v4522
      %v4646 = vpop.f32.mrb[0].mxu0
      %v4647 = vadd.f32 %v4355, %v4646
      %v4648 = vpop.f32.mrb[0].mxu0
      %v4649 = vpop.f32.mrb[0].mxu0
      %v4650 = vadd.f32 %v4358, %v4649
      %v4651 = vpop.f32.mrb[0].mxu0
      %4652 = vmatprep.mubr.bf16.mxu0 0
      %4653 = vmatmul.mubr.bf16.gmra.mrb[0].mxu0 %v4525
      %v4654 = vpop.f32.mrb[0].mxu0
      %v4655 = vadd.f32 %v4363, %v4654
      %v4656 = vpop.f32.mrb[0].mxu0
      %v4657 = vpop.f32.mrb[0].mxu0
      %v4658 = vadd.f32 %v4366, %v4657
      %v4659 = vpop.f32.mrb[0].mxu0
      %4660 = vmatprep.mubr.bf16.mxu0 0
      %4661 = vmatmul.mubr.bf16.gmra.mrb[0].mxu0 %v4528
      %v4662 = vpop.f32.mrb[0].mxu0
      %v4663 = vadd.f32 %v4371, %v4662
      %v4664 = vpop.f32.mrb[0].mxu0
      %v4665 = vpop.f32.mrb[0].mxu0
      %v4666 = vadd.f32 %v4374, %v4665
      %v4667 = vpop.f32.mrb[0].mxu0
      %4668 = vmatprep.mubr.bf16.mxu0 0
      %4669 = vmatmul.mubr.bf16.gmra.mrb[0].mxu0 %v4531
      %v4670 = vpop.f32.mrb[0].mxu0
      %v4671 = vadd.f32 %v4379, %v4670
      %v4672 = vpop.f32.mrb[0].mxu0
      %v4673 = vpop.f32.mrb[0].mxu0
      %v4674 = vadd.f32 %v4382, %v4673
      %v4675 = vpop.f32.mrb[0].mxu0
      %4676 = vmatprep.mubr.bf16.mxu0 0
      %4677 = vmatmul.mubr.bf16.gmra.mrb[0].mxu0 %v4534
      %v4678 = vpop.f32.mrb[0].mxu0
      %v4679 = vadd.f32 %v4387, %v4678
      %v4680 = vpop.f32.mrb[0].mxu0
      %v4681 = vpop.f32.mrb[0].mxu0
      %v4682 = vadd.f32 %v4390, %v4681
      %v4683 = vpop.f32.mrb[0].mxu0
      %4684 = vmatprep.mubr.bf16.mxu0 0
      %4685 = vmatmul.mubr.bf16.gmra.mrb[0].mxu0 %v4537
      %v4686 = vpop.f32.mrb[0].mxu0
      %v4687 = vadd.f32 %v4395, %v4686
      %v4688 = vpop.f32.mrb[0].mxu0
      %v4689 = vpop.f32.mrb[0].mxu0
      %v4690 = vadd.f32 %v4398, %v4689
      %v4691 = vpop.f32.mrb[0].mxu0
      %4692 = vmatprep.mubr.bf16.mxu0 0
      %4693 = vmatmul.mubr.bf16.gmra.mrb[0].mxu0 %v4540
      %v4694 = vpop.f32.mrb[0].mxu0
      %v4695 = vadd.f32 %v4403, %v4694
      %v4696 = vpop.f32.mrb[0].mxu0
      %v4697 = vpop.f32.mrb[0].mxu0
      %v4698 = vadd.f32 %v4406, %v4697
      %v4699 = vpop.f32.mrb[0].mxu0
      %4700 = vmatprep.mubr.bf16.mxu0 0
      %4701 = vmatmul.mubr.bf16.gmra.mrb[0].mxu0 %v4543
      %v4702 = vpop.f32.mrb[0].mxu0
      %v4703 = vadd.f32 %v4411, %v4702
      %v4704 = vpop.f32.mrb[0].mxu0
      %v4705 = vpop.f32.mrb[0].mxu0
      %v4706 = vadd.f32 %v4414, %v4705
      %v4707 = vpop.f32.mrb[0].mxu0
      %4708 = vdwg.mxu0
      %v4709 = vld [vmem:[%s1669] sm:$0xe]
      %v4710 = vld [vmem:[%s1669 + $0xc] sm:$0xe]
      %v4711 = vld [vmem:[%s1669 + $0x18] sm:$0xe]
      %v4712 = vld [vmem:[%s1669 + $0x24] sm:$0xe]
      %v4713 = vld [vmem:[%s1669 + $0x30] sm:$0xe]
      %v4714 = vld [vmem:[%s1669 + $0x3c] sm:$0xe]
      %v4715 = vld [vmem:[%s1669 + $0x48] sm:$0xe]
      %v4716 = vld [vmem:[%s1669 + $0x54] sm:$0xe]
      %v4717 = vld [vmem:[%s1669 + $0x60] sm:$0xe]
      %v4718 = vld [vmem:[%s1669 + $0x6c] sm:$0xe]
      %v4719 = vld [vmem:[%s1669 + $0x78] sm:$0xe]
      %v4720 = vld [vmem:[%s1669 + $0x84] sm:$0xe]
      %v4721 = vld [vmem:[%s1669 + $0x90] sm:$0xe]
      %v4722 = vld [vmem:[%s1669 + $0x9c] sm:$0xe]
      %v4723 = vld [vmem:[%s1669 + $0xa8] sm:$0xe]
      %v4724 = vld [vmem:[%s1669 + $0xb4] sm:$0xe]
      %v4757 = vrot.slane %v4709, 5
      %v4758 = vrot.slane %v4757, 4
      %v4759 = vrot.slane %v3722, 5
      %v4760 = vsel %vm1262, %v4758, %v4759
      %v4761 = vrot.slane %v4759, 4
      %v4762 = vrot.slane %v3755, 5
      %v4763 = vsel %vm1262, %v4761, %v4762
      %v4764 = vrot.slane %v4710, 5
      %v4765 = vrot.slane %v4764, 4
      %v4766 = vrot.slane %v3724, 5
      %v4767 = vsel %vm1262, %v4765, %v4766
      %v4768 = vrot.slane %v4766, 4
      %v4769 = vrot.slane %v3756, 5
      %v4770 = vsel %vm1262, %v4768, %v4769
      %v4771 = vrot.slane %v4711, 5
      %v4772 = vrot.slane %v4771, 4
      %v4773 = vrot.slane %v3726, 5
      %v4774 = vsel %vm1262, %v4772, %v4773
      %v4775 = vrot.slane %v4773, 4
      %v4776 = vrot.slane %v3757, 5
      %v4777 = vsel %vm1262, %v4775, %v4776
      %v4778 = vrot.slane %v4712, 5
      %v4779 = vrot.slane %v4778, 4
      %v4780 = vrot.slane %v3728, 5
      %v4781 = vsel %vm1262, %v4779, %v4780
      %v4782 = vrot.slane %v4780, 4
      %v4783 = vrot.slane %v3758, 5
      %v4784 = vsel %vm1262, %v4782, %v4783
      %v4785 = vrot.slane %v4713, 5
      %v4786 = vrot.slane %v4785, 4
      %v4787 = vrot.slane %v3730, 5
      %v4788 = vsel %vm1262, %v4786, %v4787
      %v4789 = vrot.slane %v4787, 4
      %v4790 = vrot.slane %v3759, 5
      %v4791 = vsel %vm1262, %v4789, %v4790
      %v4792 = vrot.slane %v4714, 5
      %v4793 = vrot.slane %v4792, 4
      %v4794 = vrot.slane %v3732, 5
      %v4795 = vsel %vm1262, %v4793, %v4794
      %v4796 = vrot.slane %v4794, 4
      %v4797 = vrot.slane %v3760, 5
      %v4798 = vsel %vm1262, %v4796, %v4797
      %v4799 = vrot.slane %v4715, 5
      %v4800 = vrot.slane %v4799, 4
      %v4801 = vrot.slane %v3734, 5
      %v4802 = vsel %vm1262, %v4800, %v4801
      %v4803 = vrot.slane %v4801, 4
      %v4804 = vrot.slane %v3761, 5
      %v4805 = vsel %vm1262, %v4803, %v4804
      %v4806 = vrot.slane %v4716, 5
      %v4807 = vrot.slane %v4806, 4
      %v4808 = vrot.slane %v3736, 5
      %v4809 = vsel %vm1262, %v4807, %v4808
      %v4810 = vrot.slane %v4808, 4
      %v4811 = vrot.slane %v3762, 5
      %v4812 = vsel %vm1262, %v4810, %v4811
      %v4813 = vrot.slane %v4717, 5
      %v4814 = vrot.slane %v4813, 4
      %v4815 = vrot.slane %v3738, 5
      %v4816 = vsel %vm1262, %v4814, %v4815
      %v4817 = vrot.slane %v4815, 4
      %v4818 = vrot.slane %v3763, 5
      %v4819 = vsel %vm1262, %v4817, %v4818
      %v4820 = vrot.slane %v4718, 5
      %v4821 = vrot.slane %v4820, 4
      %v4822 = vrot.slane %v3740, 5
      %v4823 = vsel %vm1262, %v4821, %v4822
      %v4824 = vrot.slane %v4822, 4
      %v4825 = vrot.slane %v3764, 5
      %v4826 = vsel %vm1262, %v4824, %v4825
      %v4827 = vrot.slane %v4719, 5
      %v4828 = vrot.slane %v4827, 4
      %v4829 = vrot.slane %v3742, 5
      %v4830 = vsel %vm1262, %v4828, %v4829
      %v4831 = vrot.slane %v4829, 4
      %v4832 = vrot.slane %v3765, 5
      %v4833 = vsel %vm1262, %v4831, %v4832
      %v4834 = vrot.slane %v4720, 5
      %v4835 = vrot.slane %v4834, 4
      %v4836 = vrot.slane %v3744, 5
      %v4837 = vsel %vm1262, %v4835, %v4836
      %v4838 = vrot.slane %v4836, 4
      %v4839 = vrot.slane %v3766, 5
      %v4840 = vsel %vm1262, %v4838, %v4839
      %v4841 = vrot.slane %v4721, 5
      %v4842 = vrot.slane %v4841, 4
      %v4843 = vrot.slane %v3746, 5
      %v4844 = vsel %vm1262, %v4842, %v4843
      %v4845 = vrot.slane %v4843, 4
      %v4846 = vrot.slane %v3767, 5
      %v4847 = vsel %vm1262, %v4845, %v4846
      %v4848 = vrot.slane %v4722, 5
      %v4849 = vrot.slane %v4848, 4
      %v4850 = vrot.slane %v3748, 5
      %v4851 = vsel %vm1262, %v4849, %v4850
      %v4852 = vrot.slane %v4850, 4
      %v4853 = vrot.slane %v3768, 5
      %v4854 = vsel %vm1262, %v4852, %v4853
      %v4855 = vrot.slane %v4723, 5
      %v4856 = vrot.slane %v4855, 4
      %v4857 = vrot.slane %v3750, 5
      %v4858 = vsel %vm1262, %v4856, %v4857
      %v4859 = vrot.slane %v4857, 4
      %v4860 = vrot.slane %v3769, 5
      %v4861 = vsel %vm1262, %v4859, %v4860
      %v4862 = vrot.slane %v4724, 5
      %v4863 = vrot.slane %v4862, 4
      %v4864 = vrot.slane %v3752, 5
      %v4865 = vsel %vm1262, %v4863, %v4864
      %v4866 = vrot.slane %v4864, 4
      %v4867 = vrot.slane %v3770, 5
      %v4868 = vsel %vm1262, %v4866, %v4867
      %s4869 = scalar_lea.vmem %s1, 28
      %v4870 = vld [vmem:[%s4869] sm:$0x3]
      %v4871 = vunpack.c.l.b16 %v4760
      %v4872 = vunpack.c.l.b16 %v4763
      %v4873 = vunpack.c.l.b16 %v4767
      %v4874 = vunpack.c.l.b16 %v4770
      %v4875 = vunpack.c.l.b16 %v4774
      %v4876 = vunpack.c.l.b16 %v4777
      %v4877 = vunpack.c.l.b16 %v4781
      %v4878 = vunpack.c.l.b16 %v4784
      %v4879 = vunpack.c.l.b16 %v4788
      %v4880 = vunpack.c.l.b16 %v4791
      %v4881 = vunpack.c.l.b16 %v4795
      %v4882 = vunpack.c.l.b16 %v4798
      %v4883 = vunpack.c.l.b16 %v4802
      %v4884 = vunpack.c.l.b16 %v4805
      %v4885 = vunpack.c.l.b16 %v4809
      %v4886 = vunpack.c.l.b16 %v4812
      %v4887 = vunpack.c.l.b16 %v4816
      %v4888 = vunpack.c.l.b16 %v4819
      %v4889 = vunpack.c.l.b16 %v4823
      %v4890 = vunpack.c.l.b16 %v4826
      %v4891 = vunpack.c.l.b16 %v4830
      %v4892 = vunpack.c.l.b16 %v4833
      %v4893 = vunpack.c.l.b16 %v4837
      %v4894 = vunpack.c.l.b16 %v4840
      %v4895 = vunpack.c.l.b16 %v4844
      %v4896 = vunpack.c.l.b16 %v4847
      %v4897 = vunpack.c.l.b16 %v4851
      %v4898 = vunpack.c.l.b16 %v4854
      %v4899 = vunpack.c.l.b16 %v4858
      %v4900 = vunpack.c.l.b16 %v4861
      %v4901 = vunpack.c.l.b16 %v4865
      %v4902 = vunpack.c.l.b16 %v4868
      %v4903 = vpack.c.b16 %v4872, %v4871
      %v4904 = vpack.c.b16 %v4874, %v4873
      %v4905 = vpack.c.b16 %v4876, %v4875
      %v4906 = vpack.c.b16 %v4878, %v4877
      %v4907 = vpack.c.b16 %v4880, %v4879
      %v4908 = vpack.c.b16 %v4882, %v4881
      %v4909 = vpack.c.b16 %v4884, %v4883
      %v4910 = vpack.c.b16 %v4886, %v4885
      %v4911 = vpack.c.b16 %v4888, %v4887
      %v4912 = vpack.c.b16 %v4890, %v4889
      %v4913 = vpack.c.b16 %v4892, %v4891
      %v4914 = vpack.c.b16 %v4894, %v4893
      %v4915 = vpack.c.b16 %v4896, %v4895
      %v4916 = vpack.c.b16 %v4898, %v4897
      %v4917 = vpack.c.b16 %v4900, %v4899
      %v4918 = vpack.c.b16 %v4902, %v4901
      %v4920 = vsel %vm706, %v4903, 0
      %v4923 = vsel %vm706, %v4904, 0
      %v4926 = vsel %vm706, %v4905, 0
      %v4929 = vsel %vm706, %v4906, 0
      %v4932 = vsel %vm706, %v4907, 0
      %v4935 = vsel %vm706, %v4908, 0
      %v4938 = vsel %vm706, %v4909, 0
      %v4941 = vsel %vm706, %v4910, 0
      %v4944 = vsel %vm706, %v4911, 0
      %v4947 = vsel %vm706, %v4912, 0
      %v4950 = vsel %vm706, %v4913, 0
      %v4953 = vsel %vm706, %v4914, 0
      %v4956 = vsel %vm706, %v4915, 0
      %v4959 = vsel %vm706, %v4916, 0
      %v4962 = vsel %vm706, %v4917, 0
      %v4965 = vsel %vm706, %v4918, 0
      %v4968 = vsel %vm755, %v4870, 0
      %4970 = vmatprep.subr.bf16.mxu0 0
      %4971 = vmatpush1.bf16.msra.mxu0 %v4968
      %4972 = vmatprep.subr.bf16.mxu0 0
      %4973 = vmatpush1.bf16.msra.mxu0 0
      %4974 = vmatprep.subr.bf16.mxu0 0
      %4975 = vmatpush1.bf16.msra.mxu0 0
      %4976 = vmatprep.subr.bf16.mxu0 0
      %4977 = vmatpush1.bf16.msra.mxu0 0
      %4978 = vmatprep.subr.bf16.mxu0 0
      %4979 = vmatpush1.bf16.msra.mxu0 0
      %4980 = vmatprep.subr.bf16.mxu0 0
      %4981 = vmatpush1.bf16.msra.mxu0 0
      %4982 = vmatprep.subr.bf16.mxu0 0
      %4983 = vmatpush1.bf16.msra.mxu0 0
      %4984 = vmatprep.subr.bf16.mxu0 0
      %4985 = vmatpush1.bf16.msra.mxu0 0
      %4986 = vmatprep.subr.bf16.mxu0 0
      %4987 = vmatpush1.bf16.msra.mxu0 0
      %4988 = vmatprep.subr.bf16.mxu0 0
      %4989 = vmatpush1.bf16.msra.mxu0 0
      %4990 = vmatprep.subr.bf16.mxu0 0
      %4991 = vmatpush1.bf16.msra.mxu0 0
      %4992 = vmatprep.subr.bf16.mxu0 0
      %4993 = vmatpush1.bf16.msra.mxu0 0
      %4994 = vmatprep.subr.bf16.mxu0 0
      %4995 = vmatpush1.bf16.msra.mxu0 0
      %4996 = vmatprep.subr.bf16.mxu0 0
      %4997 = vmatpush1.bf16.msra.mxu0 0
      %4998 = vmatprep.subr.bf16.mxu0 0
      %4999 = vmatpush1.bf16.msra.mxu0 0
      %5000 = vmatprep.subr.bf16.mxu0 0
      %5001 = vmatpush1.bf16.msra.mxu0 0
      %5002 = vmatprep.mubr.bf16.mxu0 0
      %5003 = vmatmul.mubr.bf16.gmra.mrb[0].mxu0 %v4920
      %v5004 = vpop.f32.mrb[0].mxu0
      %v5005 = vadd.f32 0.0, %v5004
      %v5006 = vpop.f32.mrb[0].mxu0
      %v5007 = vpop.f32.mrb[0].mxu0
      %v5008 = vadd.f32 0.0, %v5007
      %v5009 = vpop.f32.mrb[0].mxu0
      %5010 = vmatprep.mubr.bf16.mxu0 0
      %5011 = vmatmul.mubr.bf16.gmra.mrb[0].mxu0 %v4923
      %v5012 = vpop.f32.mrb[0].mxu0
      %v5013 = vadd.f32 0.0, %v5012
      %v5014 = vpop.f32.mrb[0].mxu0
      %v5015 = vpop.f32.mrb[0].mxu0
      %v5016 = vadd.f32 0.0, %v5015
      %v5017 = vpop.f32.mrb[0].mxu0
      %5018 = vmatprep.mubr.bf16.mxu0 0
      %5019 = vmatmul.mubr.bf16.gmra.mrb[0].mxu0 %v4926
      %v5020 = vpop.f32.mrb[0].mxu0
      %v5021 = vadd.f32 0.0, %v5020
      %v5022 = vpop.f32.mrb[0].mxu0
      %v5023 = vpop.f32.mrb[0].mxu0
      %v5024 = vadd.f32 0.0, %v5023
      %v5025 = vpop.f32.mrb[0].mxu0
      %5026 = vmatprep.mubr.bf16.mxu0 0
      %5027 = vmatmul.mubr.bf16.gmra.mrb[0].mxu0 %v4929
      %v5028 = vpop.f32.mrb[0].mxu0
      %v5029 = vadd.f32 0.0, %v5028
      %v5030 = vpop.f32.mrb[0].mxu0
      %v5031 = vpop.f32.mrb[0].mxu0
      %v5032 = vadd.f32 0.0, %v5031
      %v5033 = vpop.f32.mrb[0].mxu0
      %5034 = vmatprep.mubr.bf16.mxu0 0
      %5035 = vmatmul.mubr.bf16.gmra.mrb[0].mxu0 %v4932
      %v5036 = vpop.f32.mrb[0].mxu0
      %v5037 = vadd.f32 0.0, %v5036
      %v5038 = vpop.f32.mrb[0].mxu0
      %v5039 = vpop.f32.mrb[0].mxu0
      %v5040 = vadd.f32 0.0, %v5039
      %v5041 = vpop.f32.mrb[0].mxu0
      %5042 = vmatprep.mubr.bf16.mxu0 0
      %5043 = vmatmul.mubr.bf16.gmra.mrb[0].mxu0 %v4935
      %v5044 = vpop.f32.mrb[0].mxu0
      %v5045 = vadd.f32 0.0, %v5044
      %v5046 = vpop.f32.mrb[0].mxu0
      %v5047 = vpop.f32.mrb[0].mxu0
      %v5048 = vadd.f32 0.0, %v5047
      %v5049 = vpop.f32.mrb[0].mxu0
      %5050 = vmatprep.mubr.bf16.mxu0 0
      %5051 = vmatmul.mubr.bf16.gmra.mrb[0].mxu0 %v4938
      %v5052 = vpop.f32.mrb[0].mxu0
      %v5053 = vadd.f32 0.0, %v5052
      %v5054 = vpop.f32.mrb[0].mxu0
      %v5055 = vpop.f32.mrb[0].mxu0
      %v5056 = vadd.f32 0.0, %v5055
      %v5057 = vpop.f32.mrb[0].mxu0
      %5058 = vmatprep.mubr.bf16.mxu0 0
      %5059 = vmatmul.mubr.bf16.gmra.mrb[0].mxu0 %v4941
      %v5060 = vpop.f32.mrb[0].mxu0
      %v5061 = vadd.f32 0.0, %v5060
      %v5062 = vpop.f32.mrb[0].mxu0
      %v5063 = vpop.f32.mrb[0].mxu0
      %v5064 = vadd.f32 0.0, %v5063
      %v5065 = vpop.f32.mrb[0].mxu0
      %5066 = vmatprep.mubr.bf16.mxu0 0
      %5067 = vmatmul.mubr.bf16.gmra.mrb[0].mxu0 %v4944
      %v5068 = vpop.f32.mrb[0].mxu0
      %v5069 = vadd.f32 0.0, %v5068
      %v5070 = vpop.f32.mrb[0].mxu0
      %v5071 = vpop.f32.mrb[0].mxu0
      %v5072 = vadd.f32 0.0, %v5071
      %v5073 = vpop.f32.mrb[0].mxu0
      %5074 = vmatprep.mubr.bf16.mxu0 0
      %5075 = vmatmul.mubr.bf16.gmra.mrb[0].mxu0 %v4947
      %v5076 = vpop.f32.mrb[0].mxu0
      %v5077 = vadd.f32 0.0, %v5076
      %v5078 = vpop.f32.mrb[0].mxu0
      %v5079 = vpop.f32.mrb[0].mxu0
      %v5080 = vadd.f32 0.0, %v5079
      %v5081 = vpop.f32.mrb[0].mxu0
      %5082 = vmatprep.mubr.bf16.mxu0 0
      %5083 = vmatmul.mubr.bf16.gmra.mrb[0].mxu0 %v4950
      %v5084 = vpop.f32.mrb[0].mxu0
      %v5085 = vadd.f32 0.0, %v5084
      %v5086 = vpop.f32.mrb[0].mxu0
      %v5087 = vpop.f32.mrb[0].mxu0
      %v5088 = vadd.f32 0.0, %v5087
      %v5089 = vpop.f32.mrb[0].mxu0
      %5090 = vmatprep.mubr.bf16.mxu0 0
      %5091 = vmatmul.mubr.bf16.gmra.mrb[0].mxu0 %v4953
      %v5092 = vpop.f32.mrb[0].mxu0
      %v5093 = vadd.f32 0.0, %v5092
      %v5094 = vpop.f32.mrb[0].mxu0
      %v5095 = vpop.f32.mrb[0].mxu0
      %v5096 = vadd.f32 0.0, %v5095
      %v5097 = vpop.f32.mrb[0].mxu0
      %5098 = vmatprep.mubr.bf16.mxu0 0
      %5099 = vmatmul.mubr.bf16.gmra.mrb[0].mxu0 %v4956
      %v5100 = vpop.f32.mrb[0].mxu0
      %v5101 = vadd.f32 0.0, %v5100
      %v5102 = vpop.f32.mrb[0].mxu0
      %v5103 = vpop.f32.mrb[0].mxu0
      %v5104 = vadd.f32 0.0, %v5103
      %v5105 = vpop.f32.mrb[0].mxu0
      %5106 = vmatprep.mubr.bf16.mxu0 0
      %5107 = vmatmul.mubr.bf16.gmra.mrb[0].mxu0 %v4959
      %v5108 = vpop.f32.mrb[0].mxu0
      %v5109 = vadd.f32 0.0, %v5108
      %v5110 = vpop.f32.mrb[0].mxu0
      %v5111 = vpop.f32.mrb[0].mxu0
      %v5112 = vadd.f32 0.0, %v5111
      %v5113 = vpop.f32.mrb[0].mxu0
      %5114 = vmatprep.mubr.bf16.mxu0 0
      %5115 = vmatmul.mubr.bf16.gmra.mrb[0].mxu0 %v4962
      %v5116 = vpop.f32.mrb[0].mxu0
      %v5117 = vadd.f32 0.0, %v5116
      %v5118 = vpop.f32.mrb[0].mxu0
      %v5119 = vpop.f32.mrb[0].mxu0
      %v5120 = vadd.f32 0.0, %v5119
      %v5121 = vpop.f32.mrb[0].mxu0
      %5122 = vmatprep.mubr.bf16.mxu0 0
      %5123 = vmatmul.mubr.bf16.gmra.mrb[0].mxu0 %v4965
      %v5124 = vpop.f32.mrb[0].mxu0
      %v5125 = vadd.f32 0.0, %v5124
      %v5126 = vpop.f32.mrb[0].mxu0
      %v5127 = vpop.f32.mrb[0].mxu0
      %v5128 = vadd.f32 0.0, %v5127
      %v5129 = vpop.f32.mrb[0].mxu0
      %5130 = vdwg.mxu0
      %v5131 = vadd.f32 %v4583, %v5005
      %v5132 = vadd.f32 %v4586, %v5008
      %v5133 = vadd.f32 %v4591, %v5013
      %v5134 = vadd.f32 %v4594, %v5016
      %v5135 = vadd.f32 %v4599, %v5021
      %v5136 = vadd.f32 %v4602, %v5024
      %v5137 = vadd.f32 %v4607, %v5029
      %v5138 = vadd.f32 %v4610, %v5032
      %v5139 = vadd.f32 %v4615, %v5037
      %v5140 = vadd.f32 %v4618, %v5040
      %v5141 = vadd.f32 %v4623, %v5045
      %v5142 = vadd.f32 %v4626, %v5048
      %v5143 = vadd.f32 %v4631, %v5053
      %v5144 = vadd.f32 %v4634, %v5056
      %v5145 = vadd.f32 %v4639, %v5061
      %v5146 = vadd.f32 %v4642, %v5064
      %v5147 = vadd.f32 %v4647, %v5069
      %v5148 = vadd.f32 %v4650, %v5072
      %v5149 = vadd.f32 %v4655, %v5077
      %v5150 = vadd.f32 %v4658, %v5080
      %v5151 = vadd.f32 %v4663, %v5085
      %v5152 = vadd.f32 %v4666, %v5088
      %v5153 = vadd.f32 %v4671, %v5093
      %v5154 = vadd.f32 %v4674, %v5096
      %v5155 = vadd.f32 %v4679, %v5101
      %v5156 = vadd.f32 %v4682, %v5104
      %v5157 = vadd.f32 %v4687, %v5109
      %v5158 = vadd.f32 %v4690, %v5112
      %v5159 = vadd.f32 %v4695, %v5117
      %v5160 = vadd.f32 %v4698, %v5120
      %v5161 = vadd.f32 %v4703, %v5125
      %v5162 = vadd.f32 %v4706, %v5128
      %s5163 = scalar_lea.vmem %s205, 24
      %v5164 = vld [vmem:[%s5163] sm:$0xf]
      %v5165 = vld [vmem:[%s5163 + $0x4] sm:$0xf]
      %v5166 = vld [vmem:[%s5163 + $0xc] sm:$0xf]
      %v5167 = vld [vmem:[%s5163 + $0x10] sm:$0xf]
      %v5168 = vld [vmem:[%s5163 + $0x18] sm:$0xf]
      %v5169 = vld [vmem:[%s5163 + $0x1c] sm:$0xf]
      %v5170 = vld [vmem:[%s5163 + $0x24] sm:$0xf]
      %v5171 = vld [vmem:[%s5163 + $0x28] sm:$0xf]
      %v5172 = vld [vmem:[%s5163 + $0x30] sm:$0xf]
      %v5173 = vld [vmem:[%s5163 + $0x34] sm:$0xf]
      %v5174 = vld [vmem:[%s5163 + $0x3c] sm:$0xf]
      %v5175 = vld [vmem:[%s5163 + $0x40] sm:$0xf]
      %v5176 = vld [vmem:[%s5163 + $0x48] sm:$0xf]
      %v5177 = vld [vmem:[%s5163 + $0x4c] sm:$0xf]
      %v5178 = vld [vmem:[%s5163 + $0x54] sm:$0xf]
      %v5179 = vld [vmem:[%s5163 + $0x58] sm:$0xf]
      %v5180 = vld [vmem:[%s5163 + $0x60] sm:$0xf]
      %v5181 = vld [vmem:[%s5163 + $0x64] sm:$0xf]
      %v5182 = vld [vmem:[%s5163 + $0x6c] sm:$0xf]
      %v5183 = vld [vmem:[%s5163 + $0x70] sm:$0xf]
      %v5184 = vld [vmem:[%s5163 + $0x78] sm:$0xf]
      %v5185 = vld [vmem:[%s5163 + $0x7c] sm:$0xf]
      %v5186 = vld [vmem:[%s5163 + $0x84] sm:$0xf]
      %v5187 = vld [vmem:[%s5163 + $0x88] sm:$0xf]
      %v5188 = vld [vmem:[%s5163 + $0x90] sm:$0xf]
      %v5189 = vld [vmem:[%s5163 + $0x94] sm:$0xf]
      %v5190 = vld [vmem:[%s5163 + $0x9c] sm:$0xf]
      %v5191 = vld [vmem:[%s5163 + $0xa0] sm:$0xf]
      %v5192 = vld [vmem:[%s5163 + $0xa8] sm:$0xf]
      %v5193 = vld [vmem:[%s5163 + $0xac] sm:$0xf]
      %v5194 = vld [vmem:[%s5163 + $0xb4] sm:$0xf]
      %v5195 = vld [vmem:[%s5163 + $0xb8] sm:$0xf]
      %s5196 = scalar_lea.vmem %s1, 30
      %v5197 = vld [vmem:[%s5196] sm:$0x3]
      %v5230 = vunpack.c.l.b16 %v5164
      %v5231 = vunpack.c.l.b16 %v5165
      %v5232 = vunpack.c.l.b16 %v5166
      %v5233 = vunpack.c.l.b16 %v5167
      %v5234 = vunpack.c.l.b16 %v5168
      %v5235 = vunpack.c.l.b16 %v5169
      %v5236 = vunpack.c.l.b16 %v5170
      %v5237 = vunpack.c.l.b16 %v5171
      %v5238 = vunpack.c.l.b16 %v5172
      %v5239 = vunpack.c.l.b16 %v5173
      %v5240 = vunpack.c.l.b16 %v5174
      %v5241 = vunpack.c.l.b16 %v5175
      %v5242 = vunpack.c.l.b16 %v5176
      %v5243 = vunpack.c.l.b16 %v5177
      %v5244 = vunpack.c.l.b16 %v5178
      %v5245 = vunpack.c.l.b16 %v5179
      %v5246 = vunpack.c.l.b16 %v5180
      %v5247 = vunpack.c.l.b16 %v5181
      %v5248 = vunpack.c.l.b16 %v5182
      %v5249 = vunpack.c.l.b16 %v5183
      %v5250 = vunpack.c.l.b16 %v5184
      %v5251 = vunpack.c.l.b16 %v5185
      %v5252 = vunpack.c.l.b16 %v5186
      %v5253 = vunpack.c.l.b16 %v5187
      %v5254 = vunpack.c.l.b16 %v5188
      %v5255 = vunpack.c.l.b16 %v5189
      %v5256 = vunpack.c.l.b16 %v5190
      %v5257 = vunpack.c.l.b16 %v5191
      %v5258 = vunpack.c.l.b16 %v5192
      %v5259 = vunpack.c.l.b16 %v5193
      %v5260 = vunpack.c.l.b16 %v5194
      %v5261 = vunpack.c.l.b16 %v5195
      %v5262 = vpack.c.b16 %v5231, %v5230
      %v5263 = vpack.c.b16 %v5233, %v5232
      %v5264 = vpack.c.b16 %v5235, %v5234
      %v5265 = vpack.c.b16 %v5237, %v5236
      %v5266 = vpack.c.b16 %v5239, %v5238
      %v5267 = vpack.c.b16 %v5241, %v5240
      %v5268 = vpack.c.b16 %v5243, %v5242
      %v5269 = vpack.c.b16 %v5245, %v5244
      %v5270 = vpack.c.b16 %v5247, %v5246
      %v5271 = vpack.c.b16 %v5249, %v5248
      %v5272 = vpack.c.b16 %v5251, %v5250
      %v5273 = vpack.c.b16 %v5253, %v5252
      %v5274 = vpack.c.b16 %v5255, %v5254
      %v5275 = vpack.c.b16 %v5257, %v5256
      %v5276 = vpack.c.b16 %v5259, %v5258
      %v5277 = vpack.c.b16 %v5261, %v5260
      %v5279 = vsel %vm706, %v5262, 0
      %v5282 = vsel %vm706, %v5263, 0
      %v5285 = vsel %vm706, %v5264, 0
      %v5288 = vsel %vm706, %v5265, 0
      %v5291 = vsel %vm706, %v5266, 0
      %v5294 = vsel %vm706, %v5267, 0
      %v5297 = vsel %vm706, %v5268, 0
      %v5300 = vsel %vm706, %v5269, 0
      %v5303 = vsel %vm706, %v5270, 0
      %v5306 = vsel %vm706, %v5271, 0
      %v5309 = vsel %vm706, %v5272, 0
      %v5312 = vsel %vm706, %v5273, 0
      %v5315 = vsel %vm706, %v5274, 0
      %v5318 = vsel %vm706, %v5275, 0
      %v5321 = vsel %vm706, %v5276, 0
      %v5324 = vsel %vm706, %v5277, 0
      %v5327 = vsel %vm755, %v5197, 0
      %5329 = vmatprep.subr.bf16.mxu0 0
      %5330 = vmatpush1.bf16.msra.mxu0 %v5327
      %5331 = vmatprep.subr.bf16.mxu0 0
      %5332 = vmatpush1.bf16.msra.mxu0 0
      %5333 = vmatprep.subr.bf16.mxu0 0
      %5334 = vmatpush1.bf16.msra.mxu0 0
      %5335 = vmatprep.subr.bf16.mxu0 0
      %5336 = vmatpush1.bf16.msra.mxu0 0
      %5337 = vmatprep.subr.bf16.mxu0 0
      %5338 = vmatpush1.bf16.msra.mxu0 0
      %5339 = vmatprep.subr.bf16.mxu0 0
      %5340 = vmatpush1.bf16.msra.mxu0 0
      %5341 = vmatprep.subr.bf16.mxu0 0
      %5342 = vmatpush1.bf16.msra.mxu0 0
      %5343 = vmatprep.subr.bf16.mxu0 0
      %5344 = vmatpush1.bf16.msra.mxu0 0
      %5345 = vmatprep.subr.bf16.mxu0 0
      %5346 = vmatpush1.bf16.msra.mxu0 0
      %5347 = vmatprep.subr.bf16.mxu0 0
      %5348 = vmatpush1.bf16.msra.mxu0 0
      %5349 = vmatprep.subr.bf16.mxu0 0
      %5350 = vmatpush1.bf16.msra.mxu0 0
      %5351 = vmatprep.subr.bf16.mxu0 0
      %5352 = vmatpush1.bf16.msra.mxu0 0
      %5353 = vmatprep.subr.bf16.mxu0 0
      %5354 = vmatpush1.bf16.msra.mxu0 0
      %5355 = vmatprep.subr.bf16.mxu0 0
      %5356 = vmatpush1.bf16.msra.mxu0 0
      %5357 = vmatprep.subr.bf16.mxu0 0
      %5358 = vmatpush1.bf16.msra.mxu0 0
      %5359 = vmatprep.subr.bf16.mxu0 0
      %5360 = vmatpush1.bf16.msra.mxu0 0
      %5361 = vmatprep.mubr.bf16.mxu0 0
      %5362 = vmatmul.mubr.bf16.gmra.mrb[0].mxu0 %v5279
      %v5363 = vpop.f32.mrb[0].mxu0
      %v5364 = vadd.f32 0.0, %v5363
      %v5365 = vpop.f32.mrb[0].mxu0
      %v5366 = vpop.f32.mrb[0].mxu0
      %v5367 = vadd.f32 0.0, %v5366
      %v5368 = vpop.f32.mrb[0].mxu0
      %5369 = vmatprep.mubr.bf16.mxu0 0
      %5370 = vmatmul.mubr.bf16.gmra.mrb[0].mxu0 %v5282
      %v5371 = vpop.f32.mrb[0].mxu0
      %v5372 = vadd.f32 0.0, %v5371
      %v5373 = vpop.f32.mrb[0].mxu0
      %v5374 = vpop.f32.mrb[0].mxu0
      %v5375 = vadd.f32 0.0, %v5374
      %v5376 = vpop.f32.mrb[0].mxu0
      %5377 = vmatprep.mubr.bf16.mxu0 0
      %5378 = vmatmul.mubr.bf16.gmra.mrb[0].mxu0 %v5285
      %v5379 = vpop.f32.mrb[0].mxu0
      %v5380 = vadd.f32 0.0, %v5379
      %v5381 = vpop.f32.mrb[0].mxu0
      %v5382 = vpop.f32.mrb[0].mxu0
      %v5383 = vadd.f32 0.0, %v5382
      %v5384 = vpop.f32.mrb[0].mxu0
      %5385 = vmatprep.mubr.bf16.mxu0 0
      %5386 = vmatmul.mubr.bf16.gmra.mrb[0].mxu0 %v5288
      %v5387 = vpop.f32.mrb[0].mxu0
      %v5388 = vadd.f32 0.0, %v5387
      %v5389 = vpop.f32.mrb[0].mxu0
      %v5390 = vpop.f32.mrb[0].mxu0
      %v5391 = vadd.f32 0.0, %v5390
      %v5392 = vpop.f32.mrb[0].mxu0
      %5393 = vmatprep.mubr.bf16.mxu0 0
      %5394 = vmatmul.mubr.bf16.gmra.mrb[0].mxu0 %v5291
      %v5395 = vpop.f32.mrb[0].mxu0
      %v5396 = vadd.f32 0.0, %v5395
      %v5397 = vpop.f32.mrb[0].mxu0
      %v5398 = vpop.f32.mrb[0].mxu0
      %v5399 = vadd.f32 0.0, %v5398
      %v5400 = vpop.f32.mrb[0].mxu0
      %5401 = vmatprep.mubr.bf16.mxu0 0
      %5402 = vmatmul.mubr.bf16.gmra.mrb[0].mxu0 %v5294
      %v5403 = vpop.f32.mrb[0].mxu0
      %v5404 = vadd.f32 0.0, %v5403
      %v5405 = vpop.f32.mrb[0].mxu0
      %v5406 = vpop.f32.mrb[0].mxu0
      %v5407 = vadd.f32 0.0, %v5406
      %v5408 = vpop.f32.mrb[0].mxu0
      %5409 = vmatprep.mubr.bf16.mxu0 0
      %5410 = vmatmul.mubr.bf16.gmra.mrb[0].mxu0 %v5297
      %v5411 = vpop.f32.mrb[0].mxu0
      %v5412 = vadd.f32 0.0, %v5411
      %v5413 = vpop.f32.mrb[0].mxu0
      %v5414 = vpop.f32.mrb[0].mxu0
      %v5415 = vadd.f32 0.0, %v5414
      %v5416 = vpop.f32.mrb[0].mxu0
      %5417 = vmatprep.mubr.bf16.mxu0 0
      %5418 = vmatmul.mubr.bf16.gmra.mrb[0].mxu0 %v5300
      %v5419 = vpop.f32.mrb[0].mxu0
      %v5420 = vadd.f32 0.0, %v5419
      %v5421 = vpop.f32.mrb[0].mxu0
      %v5422 = vpop.f32.mrb[0].mxu0
      %v5423 = vadd.f32 0.0, %v5422
      %v5424 = vpop.f32.mrb[0].mxu0
      %5425 = vmatprep.mubr.bf16.mxu0 0
      %5426 = vmatmul.mubr.bf16.gmra.mrb[0].mxu0 %v5303
      %v5427 = vpop.f32.mrb[0].mxu0
      %v5428 = vadd.f32 0.0, %v5427
      %v5429 = vpop.f32.mrb[0].mxu0
      %v5430 = vpop.f32.mrb[0].mxu0
      %v5431 = vadd.f32 0.0, %v5430
      %v5432 = vpop.f32.mrb[0].mxu0
      %5433 = vmatprep.mubr.bf16.mxu0 0
      %5434 = vmatmul.mubr.bf16.gmra.mrb[0].mxu0 %v5306
      %v5435 = vpop.f32.mrb[0].mxu0
      %v5436 = vadd.f32 0.0, %v5435
      %v5437 = vpop.f32.mrb[0].mxu0
      %v5438 = vpop.f32.mrb[0].mxu0
      %v5439 = vadd.f32 0.0, %v5438
      %v5440 = vpop.f32.mrb[0].mxu0
      %5441 = vmatprep.mubr.bf16.mxu0 0
      %5442 = vmatmul.mubr.bf16.gmra.mrb[0].mxu0 %v5309
      %v5443 = vpop.f32.mrb[0].mxu0
      %v5444 = vadd.f32 0.0, %v5443
      %v5445 = vpop.f32.mrb[0].mxu0
      %v5446 = vpop.f32.mrb[0].mxu0
      %v5447 = vadd.f32 0.0, %v5446
      %v5448 = vpop.f32.mrb[0].mxu0
      %5449 = vmatprep.mubr.bf16.mxu0 0
      %5450 = vmatmul.mubr.bf16.gmra.mrb[0].mxu0 %v5312
      %v5451 = vpop.f32.mrb[0].mxu0
      %v5452 = vadd.f32 0.0, %v5451
      %v5453 = vpop.f32.mrb[0].mxu0
      %v5454 = vpop.f32.mrb[0].mxu0
      %v5455 = vadd.f32 0.0, %v5454
      %v5456 = vpop.f32.mrb[0].mxu0
      %5457 = vmatprep.mubr.bf16.mxu0 0
      %5458 = vmatmul.mubr.bf16.gmra.mrb[0].mxu0 %v5315
      %v5459 = vpop.f32.mrb[0].mxu0
      %v5460 = vadd.f32 0.0, %v5459
      %v5461 = vpop.f32.mrb[0].mxu0
      %v5462 = vpop.f32.mrb[0].mxu0
      %v5463 = vadd.f32 0.0, %v5462
      %v5464 = vpop.f32.mrb[0].mxu0
      %5465 = vmatprep.mubr.bf16.mxu0 0
      %5466 = vmatmul.mubr.bf16.gmra.mrb[0].mxu0 %v5318
      %v5467 = vpop.f32.mrb[0].mxu0
      %v5468 = vadd.f32 0.0, %v5467
      %v5469 = vpop.f32.mrb[0].mxu0
      %v5470 = vpop.f32.mrb[0].mxu0
      %v5471 = vadd.f32 0.0, %v5470
      %v5472 = vpop.f32.mrb[0].mxu0
      %5473 = vmatprep.mubr.bf16.mxu0 0
      %5474 = vmatmul.mubr.bf16.gmra.mrb[0].mxu0 %v5321
      %v5475 = vpop.f32.mrb[0].mxu0
      %v5476 = vadd.f32 0.0, %v5475
      %v5477 = vpop.f32.mrb[0].mxu0
      %v5478 = vpop.f32.mrb[0].mxu0
      %v5479 = vadd.f32 0.0, %v5478
      %v5480 = vpop.f32.mrb[0].mxu0
      %5481 = vmatprep.mubr.bf16.mxu0 0
      %5482 = vmatmul.mubr.bf16.gmra.mrb[0].mxu0 %v5324
      %v5483 = vpop.f32.mrb[0].mxu0
      %v5484 = vadd.f32 0.0, %v5483
      %v5485 = vpop.f32.mrb[0].mxu0
      %v5486 = vpop.f32.mrb[0].mxu0
      %v5487 = vadd.f32 0.0, %v5486
      %v5488 = vpop.f32.mrb[0].mxu0
      %5489 = vdwg.mxu0
      %v5490 = vadd.f32 %v5131, %v5364
      %v5491 = vadd.f32 %v5132, %v5367
      %v5492 = vadd.f32 %v5133, %v5372
      %v5493 = vadd.f32 %v5134, %v5375
      %v5494 = vadd.f32 %v5135, %v5380
      %v5495 = vadd.f32 %v5136, %v5383
      %v5496 = vadd.f32 %v5137, %v5388
      %v5497 = vadd.f32 %v5138, %v5391
      %v5498 = vadd.f32 %v5139, %v5396
      %v5499 = vadd.f32 %v5140, %v5399
      %v5500 = vadd.f32 %v5141, %v5404
      %v5501 = vadd.f32 %v5142, %v5407
      %v5502 = vadd.f32 %v5143, %v5412
      %v5503 = vadd.f32 %v5144, %v5415
      %v5504 = vadd.f32 %v5145, %v5420
      %v5505 = vadd.f32 %v5146, %v5423
      %v5506 = vadd.f32 %v5147, %v5428
      %v5507 = vadd.f32 %v5148, %v5431
      %v5508 = vadd.f32 %v5149, %v5436
      %v5509 = vadd.f32 %v5150, %v5439
      %v5510 = vadd.f32 %v5151, %v5444
      %v5511 = vadd.f32 %v5152, %v5447
      %v5512 = vadd.f32 %v5153, %v5452
      %v5513 = vadd.f32 %v5154, %v5455
      %v5514 = vadd.f32 %v5155, %v5460
      %v5515 = vadd.f32 %v5156, %v5463
      %v5516 = vadd.f32 %v5157, %v5468
      %v5517 = vadd.f32 %v5158, %v5471
      %v5518 = vadd.f32 %v5159, %v5476
      %v5519 = vadd.f32 %v5160, %v5479
      %v5520 = vadd.f32 %v5161, %v5484
      %v5521 = vadd.f32 %v5162, %v5487
      %v5522 = vld [vmem:[%s5163] sm:$0xf]
      %v5523 = vld [vmem:[%s5163 + $0x4] sm:$0xf]
      %v5524 = vld [vmem:[%s5163 + $0x8] sm:$0x1]
      %v5525 = vld [vmem:[%s5163 + $0xc] sm:$0xf]
      %v5526 = vld [vmem:[%s5163 + $0x10] sm:$0xf]
      %v5527 = vld [vmem:[%s5163 + $0x14] sm:$0x1]
      %v5528 = vld [vmem:[%s5163 + $0x18] sm:$0xf]
      %v5529 = vld [vmem:[%s5163 + $0x1c] sm:$0xf]
      %v5530 = vld [vmem:[%s5163 + $0x20] sm:$0x1]
      %v5531 = vld [vmem:[%s5163 + $0x24] sm:$0xf]
      %v5532 = vld [vmem:[%s5163 + $0x28] sm:$0xf]
      %v5533 = vld [vmem:[%s5163 + $0x2c] sm:$0x1]
      %v5534 = vld [vmem:[%s5163 + $0x30] sm:$0xf]
      %v5535 = vld [vmem:[%s5163 + $0x34] sm:$0xf]
      %v5536 = vld [vmem:[%s5163 + $0x38] sm:$0x1]
      %v5537 = vld [vmem:[%s5163 + $0x3c] sm:$0xf]
      %v5538 = vld [vmem:[%s5163 + $0x40] sm:$0xf]
      %v5539 = vld [vmem:[%s5163 + $0x44] sm:$0x1]
      %v5540 = vld [vmem:[%s5163 + $0x48] sm:$0xf]
      %v5541 = vld [vmem:[%s5163 + $0x4c] sm:$0xf]
      %v5542 = vld [vmem:[%s5163 + $0x50] sm:$0x1]
      %v5543 = vld [vmem:[%s5163 + $0x54] sm:$0xf]
      %v5544 = vld [vmem:[%s5163 + $0x58] sm:$0xf]
      %v5545 = vld [vmem:[%s5163 + $0x5c] sm:$0x1]
      %v5546 = vld [vmem:[%s5163 + $0x60] sm:$0xf]
      %v5547 = vld [vmem:[%s5163 + $0x64] sm:$0xf]
      %v5548 = vld [vmem:[%s5163 + $0x68] sm:$0x1]
      %v5549 = vld [vmem:[%s5163 + $0x6c] sm:$0xf]
      %v5550 = vld [vmem:[%s5163 + $0x70] sm:$0xf]
      %v5551 = vld [vmem:[%s5163 + $0x74] sm:$0x1]
      %v5552 = vld [vmem:[%s5163 + $0x78] sm:$0xf]
      %v5553 = vld [vmem:[%s5163 + $0x7c] sm:$0xf]
      %v5554 = vld [vmem:[%s5163 + $0x80] sm:$0x1]
      %v5555 = vld [vmem:[%s5163 + $0x84] sm:$0xf]
      %v5556 = vld [vmem:[%s5163 + $0x88] sm:$0xf]
      %v5557 = vld [vmem:[%s5163 + $0x8c] sm:$0x1]
      %v5558 = vld [vmem:[%s5163 + $0x90] sm:$0xf]
      %v5559 = vld [vmem:[%s5163 + $0x94] sm:$0xf]
      %v5560 = vld [vmem:[%s5163 + $0x98] sm:$0x1]
      %v5561 = vld [vmem:[%s5163 + $0x9c] sm:$0xf]
      %v5562 = vld [vmem:[%s5163 + $0xa0] sm:$0xf]
      %v5563 = vld [vmem:[%s5163 + $0xa4] sm:$0x1]
      %v5564 = vld [vmem:[%s5163 + $0xa8] sm:$0xf]
      %v5565 = vld [vmem:[%s5163 + $0xac] sm:$0xf]
      %v5566 = vld [vmem:[%s5163 + $0xb0] sm:$0x1]
      %v5567 = vld [vmem:[%s5163 + $0xb4] sm:$0xf]
      %v5568 = vld [vmem:[%s5163 + $0xb8] sm:$0xf]
      %v5569 = vld [vmem:[%s5163 + $0xbc] sm:$0x1]
      %v5571 = vshrl.u32 %v5522, 16
      %v5573 = vrot.slane %v5571, 4
      %v5574 = vshll.u32 %v5522, 16
      %v5576 = vrot.slane %v5574, 5
      %v5577 = vor.u32 %v5573, %v5576
      %v5578 = vrot.slane %v5577, 4
      %v5580 = vshll.u32 %v5523, 16
      %v5582 = vrot.slane %v5580, 5
      %v5583 = vsel %vm271, %v5578, %v5582
      %v5584 = vshrl.u32 %v5523, 16
      %v5586 = vrot.slane %v5584, 4
      %v5587 = vor.u32 %v5586, %v5582
      %v5588 = vrot.slane %v5587, 4
      %v5590 = vshll.u32 %v5524, 16
      %v5592 = vrot.slane %v5590, 5
      %v5593 = vsel %vm271, %v5588, %v5592
      %v5595 = vshrl.u32 %v5525, 16
      %v5597 = vrot.slane %v5595, 4
      %v5598 = vshll.u32 %v5525, 16
      %v5600 = vrot.slane %v5598, 5
      %v5601 = vor.u32 %v5597, %v5600
      %v5602 = vrot.slane %v5601, 4
      %v5604 = vshll.u32 %v5526, 16
      %v5606 = vrot.slane %v5604, 5
      %v5607 = vsel %vm271, %v5602, %v5606
      %v5608 = vshrl.u32 %v5526, 16
      %v5610 = vrot.slane %v5608, 4
      %v5611 = vor.u32 %v5610, %v5606
      %v5612 = vrot.slane %v5611, 4
      %v5614 = vshll.u32 %v5527, 16
      %v5616 = vrot.slane %v5614, 5
      %v5617 = vsel %vm271, %v5612, %v5616
      %v5619 = vshrl.u32 %v5528, 16
      %v5621 = vrot.slane %v5619, 4
      %v5622 = vshll.u32 %v5528, 16
      %v5624 = vrot.slane %v5622, 5
      %v5625 = vor.u32 %v5621, %v5624
      %v5626 = vrot.slane %v5625, 4
      %v5628 = vshll.u32 %v5529, 16
      %v5630 = vrot.slane %v5628, 5
      %v5631 = vsel %vm271, %v5626, %v5630
      %v5632 = vshrl.u32 %v5529, 16
      %v5634 = vrot.slane %v5632, 4
      %v5635 = vor.u32 %v5634, %v5630
      %v5636 = vrot.slane %v5635, 4
      %v5638 = vshll.u32 %v5530, 16
      %v5640 = vrot.slane %v5638, 5
      %v5641 = vsel %vm271, %v5636, %v5640
      %v5643 = vshrl.u32 %v5531, 16
      %v5645 = vrot.slane %v5643, 4
      %v5646 = vshll.u32 %v5531, 16
      %v5648 = vrot.slane %v5646, 5
      %v5649 = vor.u32 %v5645, %v5648
      %v5650 = vrot.slane %v5649, 4
      %v5652 = vshll.u32 %v5532, 16
      %v5654 = vrot.slane %v5652, 5
      %v5655 = vsel %vm271, %v5650, %v5654
      %v5656 = vshrl.u32 %v5532, 16
      %v5658 = vrot.slane %v5656, 4
      %v5659 = vor.u32 %v5658, %v5654
      %v5660 = vrot.slane %v5659, 4
      %v5662 = vshll.u32 %v5533, 16
      %v5664 = vrot.slane %v5662, 5
      %v5665 = vsel %vm271, %v5660, %v5664
      %v5667 = vshrl.u32 %v5534, 16
      %v5669 = vrot.slane %v5667, 4
      %v5670 = vshll.u32 %v5534, 16
      %v5672 = vrot.slane %v5670, 5
      %v5673 = vor.u32 %v5669, %v5672
      %v5674 = vrot.slane %v5673, 4
      %v5676 = vshll.u32 %v5535, 16
      %v5678 = vrot.slane %v5676, 5
      %v5679 = vsel %vm271, %v5674, %v5678
      %v5680 = vshrl.u32 %v5535, 16
      %v5682 = vrot.slane %v5680, 4
      %v5683 = vor.u32 %v5682, %v5678
      %v5684 = vrot.slane %v5683, 4
      %v5686 = vshll.u32 %v5536, 16
      %v5688 = vrot.slane %v5686, 5
      %v5689 = vsel %vm271, %v5684, %v5688
      %v5691 = vshrl.u32 %v5537, 16
      %v5693 = vrot.slane %v5691, 4
      %v5694 = vshll.u32 %v5537, 16
      %v5696 = vrot.slane %v5694, 5
      %v5697 = vor.u32 %v5693, %v5696
      %v5698 = vrot.slane %v5697, 4
      %v5700 = vshll.u32 %v5538, 16
      %v5702 = vrot.slane %v5700, 5
      %v5703 = vsel %vm271, %v5698, %v5702
      %v5704 = vshrl.u32 %v5538, 16
      %v5706 = vrot.slane %v5704, 4
      %v5707 = vor.u32 %v5706, %v5702
      %v5708 = vrot.slane %v5707, 4
      %v5710 = vshll.u32 %v5539, 16
      %v5712 = vrot.slane %v5710, 5
      %v5713 = vsel %vm271, %v5708, %v5712
      %v5715 = vshrl.u32 %v5540, 16
      %v5717 = vrot.slane %v5715, 4
      %v5718 = vshll.u32 %v5540, 16
      %v5720 = vrot.slane %v5718, 5
      %v5721 = vor.u32 %v5717, %v5720
      %v5722 = vrot.slane %v5721, 4
      %v5724 = vshll.u32 %v5541, 16
      %v5726 = vrot.slane %v5724, 5
      %v5727 = vsel %vm271, %v5722, %v5726
      %v5728 = vshrl.u32 %v5541, 16
      %v5730 = vrot.slane %v5728, 4
      %v5731 = vor.u32 %v5730, %v5726
      %v5732 = vrot.slane %v5731, 4
      %v5734 = vshll.u32 %v5542, 16
      %v5736 = vrot.slane %v5734, 5
      %v5737 = vsel %vm271, %v5732, %v5736
      %v5739 = vshrl.u32 %v5543, 16
      %v5741 = vrot.slane %v5739, 4
      %v5742 = vshll.u32 %v5543, 16
      %v5744 = vrot.slane %v5742, 5
      %v5745 = vor.u32 %v5741, %v5744
      %v5746 = vrot.slane %v5745, 4
      %v5748 = vshll.u32 %v5544, 16
      %v5750 = vrot.slane %v5748, 5
      %v5751 = vsel %vm271, %v5746, %v5750
      %v5752 = vshrl.u32 %v5544, 16
      %v5754 = vrot.slane %v5752, 4
      %v5755 = vor.u32 %v5754, %v5750
      %v5756 = vrot.slane %v5755, 4
      %v5758 = vshll.u32 %v5545, 16
      %v5760 = vrot.slane %v5758, 5
      %v5761 = vsel %vm271, %v5756, %v5760
      %v5763 = vshrl.u32 %v5546, 16
      %v5765 = vrot.slane %v5763, 4
      %v5766 = vshll.u32 %v5546, 16
      %v5768 = vrot.slane %v5766, 5
      %v5769 = vor.u32 %v5765, %v5768
      %v5770 = vrot.slane %v5769, 4
      %v5772 = vshll.u32 %v5547, 16
      %v5774 = vrot.slane %v5772, 5
      %v5775 = vsel %vm271, %v5770, %v5774
      %v5776 = vshrl.u32 %v5547, 16
      %v5778 = vrot.slane %v5776, 4
      %v5779 = vor.u32 %v5778, %v5774
      %v5780 = vrot.slane %v5779, 4
      %v5782 = vshll.u32 %v5548, 16
      %v5784 = vrot.slane %v5782, 5
      %v5785 = vsel %vm271, %v5780, %v5784
      %v5787 = vshrl.u32 %v5549, 16
      %v5789 = vrot.slane %v5787, 4
      %v5790 = vshll.u32 %v5549, 16
      %v5792 = vrot.slane %v5790, 5
      %v5793 = vor.u32 %v5789, %v5792
      %v5794 = vrot.slane %v5793, 4
      %v5796 = vshll.u32 %v5550, 16
      %v5798 = vrot.slane %v5796, 5
      %v5799 = vsel %vm271, %v5794, %v5798
      %v5800 = vshrl.u32 %v5550, 16
      %v5802 = vrot.slane %v5800, 4
      %v5803 = vor.u32 %v5802, %v5798
      %v5804 = vrot.slane %v5803, 4
      %v5806 = vshll.u32 %v5551, 16
      %v5808 = vrot.slane %v5806, 5
      %v5809 = vsel %vm271, %v5804, %v5808
      %v5811 = vshrl.u32 %v5552, 16
      %v5813 = vrot.slane %v5811, 4
      %v5814 = vshll.u32 %v5552, 16
      %v5816 = vrot.slane %v5814, 5
      %v5817 = vor.u32 %v5813, %v5816
      %v5818 = vrot.slane %v5817, 4
      %v5820 = vshll.u32 %v5553, 16
      %v5822 = vrot.slane %v5820, 5
      %v5823 = vsel %vm271, %v5818, %v5822
      %v5824 = vshrl.u32 %v5553, 16
      %v5826 = vrot.slane %v5824, 4
      %v5827 = vor.u32 %v5826, %v5822
      %v5828 = vrot.slane %v5827, 4
      %v5830 = vshll.u32 %v5554, 16
      %v5832 = vrot.slane %v5830, 5
      %v5833 = vsel %vm271, %v5828, %v5832
      %v5835 = vshrl.u32 %v5555, 16
      %v5837 = vrot.slane %v5835, 4
      %v5838 = vshll.u32 %v5555, 16
      %v5840 = vrot.slane %v5838, 5
      %v5841 = vor.u32 %v5837, %v5840
      %v5842 = vrot.slane %v5841, 4
      %v5844 = vshll.u32 %v5556, 16
      %v5846 = vrot.slane %v5844, 5
      %v5847 = vsel %vm271, %v5842, %v5846
      %v5848 = vshrl.u32 %v5556, 16
      %v5850 = vrot.slane %v5848, 4
      %v5851 = vor.u32 %v5850, %v5846
      %v5852 = vrot.slane %v5851, 4
      %v5854 = vshll.u32 %v5557, 16
      %v5856 = vrot.slane %v5854, 5
      %v5857 = vsel %vm271, %v5852, %v5856
      %v5859 = vshrl.u32 %v5558, 16
      %v5861 = vrot.slane %v5859, 4
      %v5862 = vshll.u32 %v5558, 16
      %v5864 = vrot.slane %v5862, 5
      %v5865 = vor.u32 %v5861, %v5864
      %v5866 = vrot.slane %v5865, 4
      %v5868 = vshll.u32 %v5559, 16
      %v5870 = vrot.slane %v5868, 5
      %v5871 = vsel %vm271, %v5866, %v5870
      %v5872 = vshrl.u32 %v5559, 16
      %v5874 = vrot.slane %v5872, 4
      %v5875 = vor.u32 %v5874, %v5870
      %v5876 = vrot.slane %v5875, 4
      %v5878 = vshll.u32 %v5560, 16
      %v5880 = vrot.slane %v5878, 5
      %v5881 = vsel %vm271, %v5876, %v5880
      %v5883 = vshrl.u32 %v5561, 16
      %v5885 = vrot.slane %v5883, 4
      %v5886 = vshll.u32 %v5561, 16
      %v5888 = vrot.slane %v5886, 5
      %v5889 = vor.u32 %v5885, %v5888
      %v5890 = vrot.slane %v5889, 4
      %v5892 = vshll.u32 %v5562, 16
      %v5894 = vrot.slane %v5892, 5
      %v5895 = vsel %vm271, %v5890, %v5894
      %v5896 = vshrl.u32 %v5562, 16
      %v5898 = vrot.slane %v5896, 4
      %v5899 = vor.u32 %v5898, %v5894
      %v5900 = vrot.slane %v5899, 4
      %v5902 = vshll.u32 %v5563, 16
      %v5904 = vrot.slane %v5902, 5
      %v5905 = vsel %vm271, %v5900, %v5904
      %v5907 = vshrl.u32 %v5564, 16
      %v5909 = vrot.slane %v5907, 4
      %v5910 = vshll.u32 %v5564, 16
      %v5912 = vrot.slane %v5910, 5
      %v5913 = vor.u32 %v5909, %v5912
      %v5914 = vrot.slane %v5913, 4
      %v5916 = vshll.u32 %v5565, 16
      %v5918 = vrot.slane %v5916, 5
      %v5919 = vsel %vm271, %v5914, %v5918
      %v5920 = vshrl.u32 %v5565, 16
      %v5922 = vrot.slane %v5920, 4
      %v5923 = vor.u32 %v5922, %v5918
      %v5924 = vrot.slane %v5923, 4
      %v5926 = vshll.u32 %v5566, 16
      %v5928 = vrot.slane %v5926, 5
      %v5929 = vsel %vm271, %v5924, %v5928
      %v5931 = vshrl.u32 %v5567, 16
      %v5933 = vrot.slane %v5931, 4
      %v5934 = vshll.u32 %v5567, 16
      %v5936 = vrot.slane %v5934, 5
      %v5937 = vor.u32 %v5933, %v5936
      %v5938 = vrot.slane %v5937, 4
      %v5940 = vshll.u32 %v5568, 16
      %v5942 = vrot.slane %v5940, 5
      %v5943 = vsel %vm271, %v5938, %v5942
      %v5944 = vshrl.u32 %v5568, 16
      %v5946 = vrot.slane %v5944, 4
      %v5947 = vor.u32 %v5946, %v5942
      %v5948 = vrot.slane %v5947, 4
      %v5950 = vshll.u32 %v5569, 16
      %v5952 = vrot.slane %v5950, 5
      %v5953 = vsel %vm271, %v5948, %v5952
      %s5954 = scalar_lea.vmem %s1, 32
      %v5955 = vld [vmem:[%s5954] sm:$0x3]
      %v5956 = vunpack.c.l.b16 %v5583
      %v5957 = vunpack.c.l.b16 %v5593
      %v5958 = vunpack.c.l.b16 %v5607
      %v5959 = vunpack.c.l.b16 %v5617
      %v5960 = vunpack.c.l.b16 %v5631
      %v5961 = vunpack.c.l.b16 %v5641
      %v5962 = vunpack.c.l.b16 %v5655
      %v5963 = vunpack.c.l.b16 %v5665
      %v5964 = vunpack.c.l.b16 %v5679
      %v5965 = vunpack.c.l.b16 %v5689
      %v5966 = vunpack.c.l.b16 %v5703
      %v5967 = vunpack.c.l.b16 %v5713
      %v5968 = vunpack.c.l.b16 %v5727
      %v5969 = vunpack.c.l.b16 %v5737
      %v5970 = vunpack.c.l.b16 %v5751
      %v5971 = vunpack.c.l.b16 %v5761
      %v5972 = vunpack.c.l.b16 %v5775
      %v5973 = vunpack.c.l.b16 %v5785
      %v5974 = vunpack.c.l.b16 %v5799
      %v5975 = vunpack.c.l.b16 %v5809
      %v5976 = vunpack.c.l.b16 %v5823
      %v5977 = vunpack.c.l.b16 %v5833
      %v5978 = vunpack.c.l.b16 %v5847
      %v5979 = vunpack.c.l.b16 %v5857
      %v5980 = vunpack.c.l.b16 %v5871
      %v5981 = vunpack.c.l.b16 %v5881
      %v5982 = vunpack.c.l.b16 %v5895
      %v5983 = vunpack.c.l.b16 %v5905
      %v5984 = vunpack.c.l.b16 %v5919
      %v5985 = vunpack.c.l.b16 %v5929
      %v5986 = vunpack.c.l.b16 %v5943
      %v5987 = vunpack.c.l.b16 %v5953
      %v5988 = vpack.c.b16 %v5957, %v5956
      %v5989 = vpack.c.b16 %v5959, %v5958
      %v5990 = vpack.c.b16 %v5961, %v5960
      %v5991 = vpack.c.b16 %v5963, %v5962
      %v5992 = vpack.c.b16 %v5965, %v5964
      %v5993 = vpack.c.b16 %v5967, %v5966
      %v5994 = vpack.c.b16 %v5969, %v5968
      %v5995 = vpack.c.b16 %v5971, %v5970
      %v5996 = vpack.c.b16 %v5973, %v5972
      %v5997 = vpack.c.b16 %v5975, %v5974
      %v5998 = vpack.c.b16 %v5977, %v5976
      %v5999 = vpack.c.b16 %v5979, %v5978
      %v6000 = vpack.c.b16 %v5981, %v5980
      %v6001 = vpack.c.b16 %v5983, %v5982
      %v6002 = vpack.c.b16 %v5985, %v5984
      %v6003 = vpack.c.b16 %v5987, %v5986
      %v6005 = vsel %vm706, %v5988, 0
      %v6008 = vsel %vm706, %v5989, 0
      %v6011 = vsel %vm706, %v5990, 0
      %v6014 = vsel %vm706, %v5991, 0
      %v6017 = vsel %vm706, %v5992, 0
      %v6020 = vsel %vm706, %v5993, 0
      %v6023 = vsel %vm706, %v5994, 0
      %v6026 = vsel %vm706, %v5995, 0
      %v6029 = vsel %vm706, %v5996, 0
      %v6032 = vsel %vm706, %v5997, 0
      %v6035 = vsel %vm706, %v5998, 0
      %v6038 = vsel %vm706, %v5999, 0
      %v6041 = vsel %vm706, %v6000, 0
      %v6044 = vsel %vm706, %v6001, 0
      %v6047 = vsel %vm706, %v6002, 0
      %v6050 = vsel %vm706, %v6003, 0
      %v6053 = vsel %vm755, %v5955, 0
      %6055 = vmatprep.subr.bf16.mxu0 0
      %6056 = vmatpush1.bf16.msra.mxu0 %v6053
      %6057 = vmatprep.subr.bf16.mxu0 0
      %6058 = vmatpush1.bf16.msra.mxu0 0
      %6059 = vmatprep.subr.bf16.mxu0 0
      %6060 = vmatpush1.bf16.msra.mxu0 0
      %6061 = vmatprep.subr.bf16.mxu0 0
      %6062 = vmatpush1.bf16.msra.mxu0 0
      %6063 = vmatprep.subr.bf16.mxu0 0
      %6064 = vmatpush1.bf16.msra.mxu0 0
      %6065 = vmatprep.subr.bf16.mxu0 0
      %6066 = vmatpush1.bf16.msra.mxu0 0
      %6067 = vmatprep.subr.bf16.mxu0 0
      %6068 = vmatpush1.bf16.msra.mxu0 0
      %6069 = vmatprep.subr.bf16.mxu0 0
      %6070 = vmatpush1.bf16.msra.mxu0 0
      %6071 = vmatprep.subr.bf16.mxu0 0
      %6072 = vmatpush1.bf16.msra.mxu0 0
      %6073 = vmatprep.subr.bf16.mxu0 0
      %6074 = vmatpush1.bf16.msra.mxu0 0
      %6075 = vmatprep.subr.bf16.mxu0 0
      %6076 = vmatpush1.bf16.msra.mxu0 0
      %6077 = vmatprep.subr.bf16.mxu0 0
      %6078 = vmatpush1.bf16.msra.mxu0 0
      %6079 = vmatprep.subr.bf16.mxu0 0
      %6080 = vmatpush1.bf16.msra.mxu0 0
      %6081 = vmatprep.subr.bf16.mxu0 0
      %6082 = vmatpush1.bf16.msra.mxu0 0
      %6083 = vmatprep.subr.bf16.mxu0 0
      %6084 = vmatpush1.bf16.msra.mxu0 0
      %6085 = vmatprep.subr.bf16.mxu0 0
      %6086 = vmatpush1.bf16.msra.mxu0 0
      %6087 = vmatprep.mubr.bf16.mxu0 0
      %6088 = vmatmul.mubr.bf16.gmra.mrb[0].mxu0 %v6005
      %v6089 = vpop.f32.mrb[0].mxu0
      %v6090 = vadd.f32 0.0, %v6089
      %v6091 = vpop.f32.mrb[0].mxu0
      %v6092 = vpop.f32.mrb[0].mxu0
      %v6093 = vadd.f32 0.0, %v6092
      %v6094 = vpop.f32.mrb[0].mxu0
      %6095 = vmatprep.mubr.bf16.mxu0 0
      %6096 = vmatmul.mubr.bf16.gmra.mrb[0].mxu0 %v6008
      %v6097 = vpop.f32.mrb[0].mxu0
      %v6098 = vadd.f32 0.0, %v6097
      %v6099 = vpop.f32.mrb[0].mxu0
      %v6100 = vpop.f32.mrb[0].mxu0
      %v6101 = vadd.f32 0.0, %v6100
      %v6102 = vpop.f32.mrb[0].mxu0
      %6103 = vmatprep.mubr.bf16.mxu0 0
      %6104 = vmatmul.mubr.bf16.gmra.mrb[0].mxu0 %v6011
      %v6105 = vpop.f32.mrb[0].mxu0
      %v6106 = vadd.f32 0.0, %v6105
      %v6107 = vpop.f32.mrb[0].mxu0
      %v6108 = vpop.f32.mrb[0].mxu0
      %v6109 = vadd.f32 0.0, %v6108
      %v6110 = vpop.f32.mrb[0].mxu0
      %6111 = vmatprep.mubr.bf16.mxu0 0
      %6112 = vmatmul.mubr.bf16.gmra.mrb[0].mxu0 %v6014
      %v6113 = vpop.f32.mrb[0].mxu0
      %v6114 = vadd.f32 0.0, %v6113
      %v6115 = vpop.f32.mrb[0].mxu0
      %v6116 = vpop.f32.mrb[0].mxu0
      %v6117 = vadd.f32 0.0, %v6116
      %v6118 = vpop.f32.mrb[0].mxu0
      %6119 = vmatprep.mubr.bf16.mxu0 0
      %6120 = vmatmul.mubr.bf16.gmra.mrb[0].mxu0 %v6017
      %v6121 = vpop.f32.mrb[0].mxu0
      %v6122 = vadd.f32 0.0, %v6121
      %v6123 = vpop.f32.mrb[0].mxu0
      %v6124 = vpop.f32.mrb[0].mxu0
      %v6125 = vadd.f32 0.0, %v6124
      %v6126 = vpop.f32.mrb[0].mxu0
      %6127 = vmatprep.mubr.bf16.mxu0 0
      %6128 = vmatmul.mubr.bf16.gmra.mrb[0].mxu0 %v6020
      %v6129 = vpop.f32.mrb[0].mxu0
      %v6130 = vadd.f32 0.0, %v6129
      %v6131 = vpop.f32.mrb[0].mxu0
      %v6132 = vpop.f32.mrb[0].mxu0
      %v6133 = vadd.f32 0.0, %v6132
      %v6134 = vpop.f32.mrb[0].mxu0
      %6135 = vmatprep.mubr.bf16.mxu0 0
      %6136 = vmatmul.mubr.bf16.gmra.mrb[0].mxu0 %v6023
      %v6137 = vpop.f32.mrb[0].mxu0
      %v6138 = vadd.f32 0.0, %v6137
      %v6139 = vpop.f32.mrb[0].mxu0
      %v6140 = vpop.f32.mrb[0].mxu0
      %v6141 = vadd.f32 0.0, %v6140
      %v6142 = vpop.f32.mrb[0].mxu0
      %6143 = vmatprep.mubr.bf16.mxu0 0
      %6144 = vmatmul.mubr.bf16.gmra.mrb[0].mxu0 %v6026
      %v6145 = vpop.f32.mrb[0].mxu0
      %v6146 = vadd.f32 0.0, %v6145
      %v6147 = vpop.f32.mrb[0].mxu0
      %v6148 = vpop.f32.mrb[0].mxu0
      %v6149 = vadd.f32 0.0, %v6148
      %v6150 = vpop.f32.mrb[0].mxu0
      %6151 = vmatprep.mubr.bf16.mxu0 0
      %6152 = vmatmul.mubr.bf16.gmra.mrb[0].mxu0 %v6029
      %v6153 = vpop.f32.mrb[0].mxu0
      %v6154 = vadd.f32 0.0, %v6153
      %v6155 = vpop.f32.mrb[0].mxu0
      %v6156 = vpop.f32.mrb[0].mxu0
      %v6157 = vadd.f32 0.0, %v6156
      %v6158 = vpop.f32.mrb[0].mxu0
      %6159 = vmatprep.mubr.bf16.mxu0 0
      %6160 = vmatmul.mubr.bf16.gmra.mrb[0].mxu0 %v6032
      %v6161 = vpop.f32.mrb[0].mxu0
      %v6162 = vadd.f32 0.0, %v6161
      %v6163 = vpop.f32.mrb[0].mxu0
      %v6164 = vpop.f32.mrb[0].mxu0
      %v6165 = vadd.f32 0.0, %v6164
      %v6166 = vpop.f32.mrb[0].mxu0
      %6167 = vmatprep.mubr.bf16.mxu0 0
      %6168 = vmatmul.mubr.bf16.gmra.mrb[0].mxu0 %v6035
      %v6169 = vpop.f32.mrb[0].mxu0
      %v6170 = vadd.f32 0.0, %v6169
      %v6171 = vpop.f32.mrb[0].mxu0
      %v6172 = vpop.f32.mrb[0].mxu0
      %v6173 = vadd.f32 0.0, %v6172
      %v6174 = vpop.f32.mrb[0].mxu0
      %6175 = vmatprep.mubr.bf16.mxu0 0
      %6176 = vmatmul.mubr.bf16.gmra.mrb[0].mxu0 %v6038
      %v6177 = vpop.f32.mrb[0].mxu0
      %v6178 = vadd.f32 0.0, %v6177
      %v6179 = vpop.f32.mrb[0].mxu0
      %v6180 = vpop.f32.mrb[0].mxu0
      %v6181 = vadd.f32 0.0, %v6180
      %v6182 = vpop.f32.mrb[0].mxu0
      %6183 = vmatprep.mubr.bf16.mxu0 0
      %6184 = vmatmul.mubr.bf16.gmra.mrb[0].mxu0 %v6041
      %v6185 = vpop.f32.mrb[0].mxu0
      %v6186 = vadd.f32 0.0, %v6185
      %v6187 = vpop.f32.mrb[0].mxu0
      %v6188 = vpop.f32.mrb[0].mxu0
      %v6189 = vadd.f32 0.0, %v6188
      %v6190 = vpop.f32.mrb[0].mxu0
      %6191 = vmatprep.mubr.bf16.mxu0 0
      %6192 = vmatmul.mubr.bf16.gmra.mrb[0].mxu0 %v6044
      %v6193 = vpop.f32.mrb[0].mxu0
      %v6194 = vadd.f32 0.0, %v6193
      %v6195 = vpop.f32.mrb[0].mxu0
      %v6196 = vpop.f32.mrb[0].mxu0
      %v6197 = vadd.f32 0.0, %v6196
      %v6198 = vpop.f32.mrb[0].mxu0
      %6199 = vmatprep.mubr.bf16.mxu0 0
      %6200 = vmatmul.mubr.bf16.gmra.mrb[0].mxu0 %v6047
      %v6201 = vpop.f32.mrb[0].mxu0
      %v6202 = vadd.f32 0.0, %v6201
      %v6203 = vpop.f32.mrb[0].mxu0
      %v6204 = vpop.f32.mrb[0].mxu0
      %v6205 = vadd.f32 0.0, %v6204
      %v6206 = vpop.f32.mrb[0].mxu0
      %6207 = vmatprep.mubr.bf16.mxu0 0
      %6208 = vmatmul.mubr.bf16.gmra.mrb[0].mxu0 %v6050
      %v6209 = vpop.f32.mrb[0].mxu0
      %v6210 = vadd.f32 0.0, %v6209
      %v6211 = vpop.f32.mrb[0].mxu0
      %v6212 = vpop.f32.mrb[0].mxu0
      %v6213 = vadd.f32 0.0, %v6212
      %v6214 = vpop.f32.mrb[0].mxu0
      %6215 = vdwg.mxu0
      %v6216 = vadd.f32 %v5490, %v6090
      %v6217 = vadd.f32 %v5491, %v6093
      %v6218 = vadd.f32 %v5492, %v6098
      %v6219 = vadd.f32 %v5493, %v6101
      %v6220 = vadd.f32 %v5494, %v6106
      %v6221 = vadd.f32 %v5495, %v6109
      %v6222 = vadd.f32 %v5496, %v6114
      %v6223 = vadd.f32 %v5497, %v6117
      %v6224 = vadd.f32 %v5498, %v6122
      %v6225 = vadd.f32 %v5499, %v6125
      %v6226 = vadd.f32 %v5500, %v6130
      %v6227 = vadd.f32 %v5501, %v6133
      %v6228 = vadd.f32 %v5502, %v6138
      %v6229 = vadd.f32 %v5503, %v6141
      %v6230 = vadd.f32 %v5504, %v6146
      %v6231 = vadd.f32 %v5505, %v6149
      %v6232 = vadd.f32 %v5506, %v6154
      %v6233 = vadd.f32 %v5507, %v6157
      %v6234 = vadd.f32 %v5508, %v6162
      %v6235 = vadd.f32 %v5509, %v6165
      %v6236 = vadd.f32 %v5510, %v6170
      %v6237 = vadd.f32 %v5511, %v6173
      %v6238 = vadd.f32 %v5512, %v6178
      %v6239 = vadd.f32 %v5513, %v6181
      %v6240 = vadd.f32 %v5514, %v6186
      %v6241 = vadd.f32 %v5515, %v6189
      %v6242 = vadd.f32 %v5516, %v6194
      %v6243 = vadd.f32 %v5517, %v6197
      %v6244 = vadd.f32 %v5518, %v6202
      %v6245 = vadd.f32 %v5519, %v6205
      %v6246 = vadd.f32 %v5520, %v6210
      %v6247 = vadd.f32 %v5521, %v6213
      %v6248 = vld [vmem:[%s5163] sm:$0xe]
      %v6249 = vld [vmem:[%s5163 + $0xc] sm:$0xe]
      %v6250 = vld [vmem:[%s5163 + $0x18] sm:$0xe]
      %v6251 = vld [vmem:[%s5163 + $0x24] sm:$0xe]
      %v6252 = vld [vmem:[%s5163 + $0x30] sm:$0xe]
      %v6253 = vld [vmem:[%s5163 + $0x3c] sm:$0xe]
      %v6254 = vld [vmem:[%s5163 + $0x48] sm:$0xe]
      %v6255 = vld [vmem:[%s5163 + $0x54] sm:$0xe]
      %v6256 = vld [vmem:[%s5163 + $0x60] sm:$0xe]
      %v6257 = vld [vmem:[%s5163 + $0x6c] sm:$0xe]
      %v6258 = vld [vmem:[%s5163 + $0x78] sm:$0xe]
      %v6259 = vld [vmem:[%s5163 + $0x84] sm:$0xe]
      %v6260 = vld [vmem:[%s5163 + $0x90] sm:$0xe]
      %v6261 = vld [vmem:[%s5163 + $0x9c] sm:$0xe]
      %v6262 = vld [vmem:[%s5163 + $0xa8] sm:$0xe]
      %v6263 = vld [vmem:[%s5163 + $0xb4] sm:$0xe]
      %v6312 = vrot.slane %v6248, 5
      %v6313 = vrot.slane %v6312, 4
      %v6314 = vrot.slane %v5523, 5
      %v6315 = vsel %vm1262, %v6313, %v6314
      %v6316 = vrot.slane %v6314, 4
      %v6317 = vrot.slane %v5524, 5
      %v6318 = vsel %vm1262, %v6316, %v6317
      %v6319 = vrot.slane %v6249, 5
      %v6320 = vrot.slane %v6319, 4
      %v6321 = vrot.slane %v5526, 5
      %v6322 = vsel %vm1262, %v6320, %v6321
      %v6323 = vrot.slane %v6321, 4
      %v6324 = vrot.slane %v5527, 5
      %v6325 = vsel %vm1262, %v6323, %v6324
      %v6326 = vrot.slane %v6250, 5
      %v6327 = vrot.slane %v6326, 4
      %v6328 = vrot.slane %v5529, 5
      %v6329 = vsel %vm1262, %v6327, %v6328
      %v6330 = vrot.slane %v6328, 4
      %v6331 = vrot.slane %v5530, 5
      %v6332 = vsel %vm1262, %v6330, %v6331
      %v6333 = vrot.slane %v6251, 5
      %v6334 = vrot.slane %v6333, 4
      %v6335 = vrot.slane %v5532, 5
      %v6336 = vsel %vm1262, %v6334, %v6335
      %v6337 = vrot.slane %v6335, 4
      %v6338 = vrot.slane %v5533, 5
      %v6339 = vsel %vm1262, %v6337, %v6338
      %v6340 = vrot.slane %v6252, 5
      %v6341 = vrot.slane %v6340, 4
      %v6342 = vrot.slane %v5535, 5
      %v6343 = vsel %vm1262, %v6341, %v6342
      %v6344 = vrot.slane %v6342, 4
      %v6345 = vrot.slane %v5536, 5
      %v6346 = vsel %vm1262, %v6344, %v6345
      %v6347 = vrot.slane %v6253, 5
      %v6348 = vrot.slane %v6347, 4
      %v6349 = vrot.slane %v5538, 5
      %v6350 = vsel %vm1262, %v6348, %v6349
      %v6351 = vrot.slane %v6349, 4
      %v6352 = vrot.slane %v5539, 5
      %v6353 = vsel %vm1262, %v6351, %v6352
      %v6354 = vrot.slane %v6254, 5
      %v6355 = vrot.slane %v6354, 4
      %v6356 = vrot.slane %v5541, 5
      %v6357 = vsel %vm1262, %v6355, %v6356
      %v6358 = vrot.slane %v6356, 4
      %v6359 = vrot.slane %v5542, 5
      %v6360 = vsel %vm1262, %v6358, %v6359
      %v6361 = vrot.slane %v6255, 5
      %v6362 = vrot.slane %v6361, 4
      %v6363 = vrot.slane %v5544, 5
      %v6364 = vsel %vm1262, %v6362, %v6363
      %v6365 = vrot.slane %v6363, 4
      %v6366 = vrot.slane %v5545, 5
      %v6367 = vsel %vm1262, %v6365, %v6366
      %v6368 = vrot.slane %v6256, 5
      %v6369 = vrot.slane %v6368, 4
      %v6370 = vrot.slane %v5547, 5
      %v6371 = vsel %vm1262, %v6369, %v6370
      %v6372 = vrot.slane %v6370, 4
      %v6373 = vrot.slane %v5548, 5
      %v6374 = vsel %vm1262, %v6372, %v6373
      %v6375 = vrot.slane %v6257, 5
      %v6376 = vrot.slane %v6375, 4
      %v6377 = vrot.slane %v5550, 5
      %v6378 = vsel %vm1262, %v6376, %v6377
      %v6379 = vrot.slane %v6377, 4
      %v6380 = vrot.slane %v5551, 5
      %v6381 = vsel %vm1262, %v6379, %v6380
      %v6382 = vrot.slane %v6258, 5
      %v6383 = vrot.slane %v6382, 4
      %v6384 = vrot.slane %v5553, 5
      %v6385 = vsel %vm1262, %v6383, %v6384
      %v6386 = vrot.slane %v6384, 4
      %v6387 = vrot.slane %v5554, 5
      %v6388 = vsel %vm1262, %v6386, %v6387
      %v6389 = vrot.slane %v6259, 5
      %v6390 = vrot.slane %v6389, 4
      %v6391 = vrot.slane %v5556, 5
      %v6392 = vsel %vm1262, %v6390, %v6391
      %v6393 = vrot.slane %v6391, 4
      %v6394 = vrot.slane %v5557, 5
      %v6395 = vsel %vm1262, %v6393, %v6394
      %v6396 = vrot.slane %v6260, 5
      %v6397 = vrot.slane %v6396, 4
      %v6398 = vrot.slane %v5559, 5
      %v6399 = vsel %vm1262, %v6397, %v6398
      %v6400 = vrot.slane %v6398, 4
      %v6401 = vrot.slane %v5560, 5
      %v6402 = vsel %vm1262, %v6400, %v6401
      %v6403 = vrot.slane %v6261, 5
      %v6404 = vrot.slane %v6403, 4
      %v6405 = vrot.slane %v5562, 5
      %v6406 = vsel %vm1262, %v6404, %v6405
      %v6407 = vrot.slane %v6405, 4
      %v6408 = vrot.slane %v5563, 5
      %v6409 = vsel %vm1262, %v6407, %v6408
      %v6410 = vrot.slane %v6262, 5
      %v6411 = vrot.slane %v6410, 4
      %v6412 = vrot.slane %v5565, 5
      %v6413 = vsel %vm1262, %v6411, %v6412
      %v6414 = vrot.slane %v6412, 4
      %v6415 = vrot.slane %v5566, 5
      %v6416 = vsel %vm1262, %v6414, %v6415
      %v6417 = vrot.slane %v6263, 5
      %v6418 = vrot.slane %v6417, 4
      %v6419 = vrot.slane %v5568, 5
      %v6420 = vsel %vm1262, %v6418, %v6419
      %v6421 = vrot.slane %v6419, 4
      %v6422 = vrot.slane %v5569, 5
      %v6423 = vsel %vm1262, %v6421, %v6422
      %s6424 = scalar_lea.vmem %s1, 34
      %v6425 = vld [vmem:[%s6424] sm:$0x3]
      %v6426 = vunpack.c.l.b16 %v6315
      %v6427 = vunpack.c.l.b16 %v6318
      %v6428 = vunpack.c.l.b16 %v6322
      %v6429 = vunpack.c.l.b16 %v6325
      %v6430 = vunpack.c.l.b16 %v6329
      %v6431 = vunpack.c.l.b16 %v6332
      %v6432 = vunpack.c.l.b16 %v6336
      %v6433 = vunpack.c.l.b16 %v6339
      %v6434 = vunpack.c.l.b16 %v6343
      %v6435 = vunpack.c.l.b16 %v6346
      %v6436 = vunpack.c.l.b16 %v6350
      %v6437 = vunpack.c.l.b16 %v6353
      %v6438 = vunpack.c.l.b16 %v6357
      %v6439 = vunpack.c.l.b16 %v6360
      %v6440 = vunpack.c.l.b16 %v6364
      %v6441 = vunpack.c.l.b16 %v6367
      %v6442 = vunpack.c.l.b16 %v6371
      %v6443 = vunpack.c.l.b16 %v6374
      %v6444 = vunpack.c.l.b16 %v6378
      %v6445 = vunpack.c.l.b16 %v6381
      %v6446 = vunpack.c.l.b16 %v6385
      %v6447 = vunpack.c.l.b16 %v6388
      %v6448 = vunpack.c.l.b16 %v6392
      %v6449 = vunpack.c.l.b16 %v6395
      %v6450 = vunpack.c.l.b16 %v6399
      %v6451 = vunpack.c.l.b16 %v6402
      %v6452 = vunpack.c.l.b16 %v6406
      %v6453 = vunpack.c.l.b16 %v6409
      %v6454 = vunpack.c.l.b16 %v6413
      %v6455 = vunpack.c.l.b16 %v6416
      %v6456 = vunpack.c.l.b16 %v6420
      %v6457 = vunpack.c.l.b16 %v6423
      %v6458 = vpack.c.b16 %v6427, %v6426
      %v6459 = vpack.c.b16 %v6429, %v6428
      %v6460 = vpack.c.b16 %v6431, %v6430
      %v6461 = vpack.c.b16 %v6433, %v6432
      %v6462 = vpack.c.b16 %v6435, %v6434
      %v6463 = vpack.c.b16 %v6437, %v6436
      %v6464 = vpack.c.b16 %v6439, %v6438
      %v6465 = vpack.c.b16 %v6441, %v6440
      %v6466 = vpack.c.b16 %v6443, %v6442
      %v6467 = vpack.c.b16 %v6445, %v6444
      %v6468 = vpack.c.b16 %v6447, %v6446
      %v6469 = vpack.c.b16 %v6449, %v6448
      %v6470 = vpack.c.b16 %v6451, %v6450
      %v6471 = vpack.c.b16 %v6453, %v6452
      %v6472 = vpack.c.b16 %v6455, %v6454
      %v6473 = vpack.c.b16 %v6457, %v6456
      %v6475 = vsel %vm706, %v6458, 0
      %v6478 = vsel %vm706, %v6459, 0
      %v6481 = vsel %vm706, %v6460, 0
      %v6484 = vsel %vm706, %v6461, 0
      %v6487 = vsel %vm706, %v6462, 0
      %v6490 = vsel %vm706, %v6463, 0
      %v6493 = vsel %vm706, %v6464, 0
      %v6496 = vsel %vm706, %v6465, 0
      %v6499 = vsel %vm706, %v6466, 0
      %v6502 = vsel %vm706, %v6467, 0
      %v6505 = vsel %vm706, %v6468, 0
      %v6508 = vsel %vm706, %v6469, 0
      %v6511 = vsel %vm706, %v6470, 0
      %v6514 = vsel %vm706, %v6471, 0
      %v6517 = vsel %vm706, %v6472, 0
      %v6520 = vsel %vm706, %v6473, 0
      %v6523 = vsel %vm755, %v6425, 0
      %6525 = vmatprep.subr.bf16.mxu0 0
      %6526 = vmatpush1.bf16.msra.mxu0 %v6523
      %6527 = vmatprep.subr.bf16.mxu0 0
      %6528 = vmatpush1.bf16.msra.mxu0 0
      %6529 = vmatprep.subr.bf16.mxu0 0
      %6530 = vmatpush1.bf16.msra.mxu0 0
      %6531 = vmatprep.subr.bf16.mxu0 0
      %6532 = vmatpush1.bf16.msra.mxu0 0
      %6533 = vmatprep.subr.bf16.mxu0 0
      %6534 = vmatpush1.bf16.msra.mxu0 0
      %6535 = vmatprep.subr.bf16.mxu0 0
      %6536 = vmatpush1.bf16.msra.mxu0 0
      %6537 = vmatprep.subr.bf16.mxu0 0
      %6538 = vmatpush1.bf16.msra.mxu0 0
      %6539 = vmatprep.subr.bf16.mxu0 0
      %6540 = vmatpush1.bf16.msra.mxu0 0
      %6541 = vmatprep.subr.bf16.mxu0 0
      %6542 = vmatpush1.bf16.msra.mxu0 0
      %6543 = vmatprep.subr.bf16.mxu0 0
      %6544 = vmatpush1.bf16.msra.mxu0 0
      %6545 = vmatprep.subr.bf16.mxu0 0
      %6546 = vmatpush1.bf16.msra.mxu0 0
      %6547 = vmatprep.subr.bf16.mxu0 0
      %6548 = vmatpush1.bf16.msra.mxu0 0
      %6549 = vmatprep.subr.bf16.mxu0 0
      %6550 = vmatpush1.bf16.msra.mxu0 0
      %6551 = vmatprep.subr.bf16.mxu0 0
      %6552 = vmatpush1.bf16.msra.mxu0 0
      %6553 = vmatprep.subr.bf16.mxu0 0
      %6554 = vmatpush1.bf16.msra.mxu0 0
      %6555 = vmatprep.subr.bf16.mxu0 0
      %6556 = vmatpush1.bf16.msra.mxu0 0
      %6557 = vmatprep.mubr.bf16.mxu0 0
      %6558 = vmatmul.mubr.bf16.gmra.mrb[0].mxu0 %v6475
      %v6559 = vpop.f32.mrb[0].mxu0
      %v6560 = vadd.f32 0.0, %v6559
      %v6561 = vpop.f32.mrb[0].mxu0
      %v6562 = vpop.f32.mrb[0].mxu0
      %v6563 = vadd.f32 0.0, %v6562
      %v6564 = vpop.f32.mrb[0].mxu0
      %6565 = vmatprep.mubr.bf16.mxu0 0
      %6566 = vmatmul.mubr.bf16.gmra.mrb[0].mxu0 %v6478
      %v6567 = vpop.f32.mrb[0].mxu0
      %v6568 = vadd.f32 0.0, %v6567
      %v6569 = vpop.f32.mrb[0].mxu0
      %v6570 = vpop.f32.mrb[0].mxu0
      %v6571 = vadd.f32 0.0, %v6570
      %v6572 = vpop.f32.mrb[0].mxu0
      %6573 = vmatprep.mubr.bf16.mxu0 0
      %6574 = vmatmul.mubr.bf16.gmra.mrb[0].mxu0 %v6481
      %v6575 = vpop.f32.mrb[0].mxu0
      %v6576 = vadd.f32 0.0, %v6575
      %v6577 = vpop.f32.mrb[0].mxu0
      %v6578 = vpop.f32.mrb[0].mxu0
      %v6579 = vadd.f32 0.0, %v6578
      %v6580 = vpop.f32.mrb[0].mxu0
      %6581 = vmatprep.mubr.bf16.mxu0 0
      %6582 = vmatmul.mubr.bf16.gmra.mrb[0].mxu0 %v6484
      %v6583 = vpop.f32.mrb[0].mxu0
      %v6584 = vadd.f32 0.0, %v6583
      %v6585 = vpop.f32.mrb[0].mxu0
      %v6586 = vpop.f32.mrb[0].mxu0
      %v6587 = vadd.f32 0.0, %v6586
      %v6588 = vpop.f32.mrb[0].mxu0
      %6589 = vmatprep.mubr.bf16.mxu0 0
      %6590 = vmatmul.mubr.bf16.gmra.mrb[0].mxu0 %v6487
      %v6591 = vpop.f32.mrb[0].mxu0
      %v6592 = vadd.f32 0.0, %v6591
      %v6593 = vpop.f32.mrb[0].mxu0
      %v6594 = vpop.f32.mrb[0].mxu0
      %v6595 = vadd.f32 0.0, %v6594
      %v6596 = vpop.f32.mrb[0].mxu0
      %6597 = vmatprep.mubr.bf16.mxu0 0
      %6598 = vmatmul.mubr.bf16.gmra.mrb[0].mxu0 %v6490
      %v6599 = vpop.f32.mrb[0].mxu0
      %v6600 = vadd.f32 0.0, %v6599
      %v6601 = vpop.f32.mrb[0].mxu0
      %v6602 = vpop.f32.mrb[0].mxu0
      %v6603 = vadd.f32 0.0, %v6602
      %v6604 = vpop.f32.mrb[0].mxu0
      %6605 = vmatprep.mubr.bf16.mxu0 0
      %6606 = vmatmul.mubr.bf16.gmra.mrb[0].mxu0 %v6493
      %v6607 = vpop.f32.mrb[0].mxu0
      %v6608 = vadd.f32 0.0, %v6607
      %v6609 = vpop.f32.mrb[0].mxu0
      %v6610 = vpop.f32.mrb[0].mxu0
      %v6611 = vadd.f32 0.0, %v6610
      %v6612 = vpop.f32.mrb[0].mxu0
      %6613 = vmatprep.mubr.bf16.mxu0 0
      %6614 = vmatmul.mubr.bf16.gmra.mrb[0].mxu0 %v6496
      %v6615 = vpop.f32.mrb[0].mxu0
      %v6616 = vadd.f32 0.0, %v6615
      %v6617 = vpop.f32.mrb[0].mxu0
      %v6618 = vpop.f32.mrb[0].mxu0
      %v6619 = vadd.f32 0.0, %v6618
      %v6620 = vpop.f32.mrb[0].mxu0
      %6621 = vmatprep.mubr.bf16.mxu0 0
      %6622 = vmatmul.mubr.bf16.gmra.mrb[0].mxu0 %v6499
      %v6623 = vpop.f32.mrb[0].mxu0
      %v6624 = vadd.f32 0.0, %v6623
      %v6625 = vpop.f32.mrb[0].mxu0
      %v6626 = vpop.f32.mrb[0].mxu0
      %v6627 = vadd.f32 0.0, %v6626
      %v6628 = vpop.f32.mrb[0].mxu0
      %6629 = vmatprep.mubr.bf16.mxu0 0
      %6630 = vmatmul.mubr.bf16.gmra.mrb[0].mxu0 %v6502
      %v6631 = vpop.f32.mrb[0].mxu0
      %v6632 = vadd.f32 0.0, %v6631
      %v6633 = vpop.f32.mrb[0].mxu0
      %v6634 = vpop.f32.mrb[0].mxu0
      %v6635 = vadd.f32 0.0, %v6634
      %v6636 = vpop.f32.mrb[0].mxu0
      %6637 = vmatprep.mubr.bf16.mxu0 0
      %6638 = vmatmul.mubr.bf16.gmra.mrb[0].mxu0 %v6505
      %v6639 = vpop.f32.mrb[0].mxu0
      %v6640 = vadd.f32 0.0, %v6639
      %v6641 = vpop.f32.mrb[0].mxu0
      %v6642 = vpop.f32.mrb[0].mxu0
      %v6643 = vadd.f32 0.0, %v6642
      %v6644 = vpop.f32.mrb[0].mxu0
      %6645 = vmatprep.mubr.bf16.mxu0 0
      %6646 = vmatmul.mubr.bf16.gmra.mrb[0].mxu0 %v6508
      %v6647 = vpop.f32.mrb[0].mxu0
      %v6648 = vadd.f32 0.0, %v6647
      %v6649 = vpop.f32.mrb[0].mxu0
      %v6650 = vpop.f32.mrb[0].mxu0
      %v6651 = vadd.f32 0.0, %v6650
      %v6652 = vpop.f32.mrb[0].mxu0
      %6653 = vmatprep.mubr.bf16.mxu0 0
      %6654 = vmatmul.mubr.bf16.gmra.mrb[0].mxu0 %v6511
      %v6655 = vpop.f32.mrb[0].mxu0
      %v6656 = vadd.f32 0.0, %v6655
      %v6657 = vpop.f32.mrb[0].mxu0
      %v6658 = vpop.f32.mrb[0].mxu0
      %v6659 = vadd.f32 0.0, %v6658
      %v6660 = vpop.f32.mrb[0].mxu0
      %6661 = vmatprep.mubr.bf16.mxu0 0
      %6662 = vmatmul.mubr.bf16.gmra.mrb[0].mxu0 %v6514
      %v6663 = vpop.f32.mrb[0].mxu0
      %v6664 = vadd.f32 0.0, %v6663
      %v6665 = vpop.f32.mrb[0].mxu0
      %v6666 = vpop.f32.mrb[0].mxu0
      %v6667 = vadd.f32 0.0, %v6666
      %v6668 = vpop.f32.mrb[0].mxu0
      %6669 = vmatprep.mubr.bf16.mxu0 0
      %6670 = vmatmul.mubr.bf16.gmra.mrb[0].mxu0 %v6517
      %v6671 = vpop.f32.mrb[0].mxu0
      %v6672 = vadd.f32 0.0, %v6671
      %v6673 = vpop.f32.mrb[0].mxu0
      %v6674 = vpop.f32.mrb[0].mxu0
      %v6675 = vadd.f32 0.0, %v6674
      %v6676 = vpop.f32.mrb[0].mxu0
      %6677 = vmatprep.mubr.bf16.mxu0 0
      %6678 = vmatmul.mubr.bf16.gmra.mrb[0].mxu0 %v6520
      %v6679 = vpop.f32.mrb[0].mxu0
      %v6680 = vadd.f32 0.0, %v6679
      %v6681 = vpop.f32.mrb[0].mxu0
      %v6682 = vpop.f32.mrb[0].mxu0
      %v6683 = vadd.f32 0.0, %v6682
      %v6684 = vpop.f32.mrb[0].mxu0
      %6685 = vdwg.mxu0
      %v6686 = vadd.f32 %v6216, %v6560
      %v6687 = vadd.f32 %v6217, %v6563
      %v6688 = vadd.f32 %v6218, %v6568
      %v6689 = vadd.f32 %v6219, %v6571
      %v6690 = vadd.f32 %v6220, %v6576
      %v6691 = vadd.f32 %v6221, %v6579
      %v6692 = vadd.f32 %v6222, %v6584
      %v6693 = vadd.f32 %v6223, %v6587
      %v6694 = vadd.f32 %v6224, %v6592
      %v6695 = vadd.f32 %v6225, %v6595
      %v6696 = vadd.f32 %v6226, %v6600
      %v6697 = vadd.f32 %v6227, %v6603
      %v6698 = vadd.f32 %v6228, %v6608
      %v6699 = vadd.f32 %v6229, %v6611
      %v6700 = vadd.f32 %v6230, %v6616
      %v6701 = vadd.f32 %v6231, %v6619
      %v6702 = vadd.f32 %v6232, %v6624
      %v6703 = vadd.f32 %v6233, %v6627
      %v6704 = vadd.f32 %v6234, %v6632
      %v6705 = vadd.f32 %v6235, %v6635
      %v6706 = vadd.f32 %v6236, %v6640
      %v6707 = vadd.f32 %v6237, %v6643
      %v6708 = vadd.f32 %v6238, %v6648
      %v6709 = vadd.f32 %v6239, %v6651
      %v6710 = vadd.f32 %v6240, %v6656
      %v6711 = vadd.f32 %v6241, %v6659
      %v6712 = vadd.f32 %v6242, %v6664
      %v6713 = vadd.f32 %v6243, %v6667
      %v6714 = vadd.f32 %v6244, %v6672
      %v6715 = vadd.f32 %v6245, %v6675
      %v6716 = vadd.f32 %v6246, %v6680
      %v6717 = vadd.f32 %v6247, %v6683
      %v6718 = vpack.c.bf16 %v6687, %v6686
      %v6719 = vpack.c.bf16 %v6689, %v6688
      %v6720 = vpack.c.bf16 %v6691, %v6690
      %v6721 = vpack.c.bf16 %v6693, %v6692
      %v6722 = vpack.c.bf16 %v6695, %v6694
      %v6723 = vpack.c.bf16 %v6697, %v6696
      %v6724 = vpack.c.bf16 %v6699, %v6698
      %v6725 = vpack.c.bf16 %v6701, %v6700
      %v6726 = vpack.c.bf16 %v6703, %v6702
      %v6727 = vpack.c.bf16 %v6705, %v6704
      %v6728 = vpack.c.bf16 %v6707, %v6706
      %v6729 = vpack.c.bf16 %v6709, %v6708
      %v6730 = vpack.c.bf16 %v6711, %v6710
      %v6731 = vpack.c.bf16 %v6713, %v6712
      %v6732 = vpack.c.bf16 %v6715, %v6714
      %v6733 = vpack.c.bf16 %v6717, %v6716
      %v6750 = vunpack.c.l.b16 %v6718
      %v6751 = vunpack.c.h.b16 %v6718
      %v6752 = vunpack.c.l.b16 %v6719
      %v6753 = vunpack.c.h.b16 %v6719
      %v6754 = vunpack.c.l.b16 %v6720
      %v6755 = vunpack.c.h.b16 %v6720
      %v6756 = vunpack.c.l.b16 %v6721
      %v6757 = vunpack.c.h.b16 %v6721
      %v6758 = vunpack.c.l.b16 %v6722
      %v6759 = vunpack.c.h.b16 %v6722
      %v6760 = vunpack.c.l.b16 %v6723
      %v6761 = vunpack.c.h.b16 %v6723
      %v6762 = vunpack.c.l.b16 %v6724
      %v6763 = vunpack.c.h.b16 %v6724
      %v6764 = vunpack.c.l.b16 %v6725
      %v6765 = vunpack.c.h.b16 %v6725
      %v6766 = vunpack.c.l.b16 %v6726
      %v6767 = vunpack.c.h.b16 %v6726
      %v6768 = vunpack.c.l.b16 %v6727
      %v6769 = vunpack.c.h.b16 %v6727
      %v6770 = vunpack.c.l.b16 %v6728
      %v6771 = vunpack.c.h.b16 %v6728
      %v6772 = vunpack.c.l.b16 %v6729
      %v6773 = vunpack.c.h.b16 %v6729
      %v6774 = vunpack.c.l.b16 %v6730
      %v6775 = vunpack.c.h.b16 %v6730
      %v6776 = vunpack.c.l.b16 %v6731
      %v6777 = vunpack.c.h.b16 %v6731
      %v6778 = vunpack.c.l.b16 %v6732
      %v6779 = vunpack.c.h.b16 %v6732
      %v6780 = vunpack.c.l.b16 %v6733
      %v6781 = vunpack.c.h.b16 %v6733
      %v6782 = vpack.c.b16 %v6750, %v6750
      %v6783 = vpack.c.b16 %v6751, %v6751
      %v6784 = vpack.c.b16 %v6752, %v6752
      %v6785 = vpack.c.b16 %v6753, %v6753
      %v6786 = vpack.c.b16 %v6754, %v6754
      %v6787 = vpack.c.b16 %v6755, %v6755
      %v6788 = vpack.c.b16 %v6756, %v6756
      %v6789 = vpack.c.b16 %v6757, %v6757
      %v6790 = vpack.c.b16 %v6758, %v6758
      %v6791 = vpack.c.b16 %v6759, %v6759
      %v6792 = vpack.c.b16 %v6760, %v6760
      %v6793 = vpack.c.b16 %v6761, %v6761
      %v6794 = vpack.c.b16 %v6762, %v6762
      %v6795 = vpack.c.b16 %v6763, %v6763
      %v6796 = vpack.c.b16 %v6764, %v6764
      %v6797 = vpack.c.b16 %v6765, %v6765
      %v6798 = vpack.c.b16 %v6766, %v6766
      %v6799 = vpack.c.b16 %v6767, %v6767
      %v6800 = vpack.c.b16 %v6768, %v6768
      %v6801 = vpack.c.b16 %v6769, %v6769
      %v6802 = vpack.c.b16 %v6770, %v6770
      %v6803 = vpack.c.b16 %v6771, %v6771
      %v6804 = vpack.c.b16 %v6772, %v6772
      %v6805 = vpack.c.b16 %v6773, %v6773
      %v6806 = vpack.c.b16 %v6774, %v6774
      %v6807 = vpack.c.b16 %v6775, %v6775
      %v6808 = vpack.c.b16 %v6776, %v6776
      %v6809 = vpack.c.b16 %v6777, %v6777
      %v6810 = vpack.c.b16 %v6778, %v6778
      %v6811 = vpack.c.b16 %v6779, %v6779
      %v6812 = vpack.c.b16 %v6780, %v6780
      %v6813 = vpack.c.b16 %v6781, %v6781
      %s6846 = scalar_lea.vmem %s210, 8
      %6847 = vst.msk [vmem:[%s6846] sm:$0xf] %vm3352, %v6782
      %6848 = vst.msk [vmem:[%s6846 + $0x4] sm:$0xf] %vm3352, %v6783
      %6849 = vst.msk [vmem:[%s6846 + $0x10] sm:$0xf] %vm3352, %v6784
      %6850 = vst.msk [vmem:[%s6846 + $0x14] sm:$0xf] %vm3352, %v6785
      %6851 = vst.msk [vmem:[%s6846 + $0x20] sm:$0xf] %vm3352, %v6786
      %6852 = vst.msk [vmem:[%s6846 + $0x24] sm:$0xf] %vm3352, %v6787
      %6853 = vst.msk [vmem:[%s6846 + $0x30] sm:$0xf] %vm3352, %v6788
      %6854 = vst.msk [vmem:[%s6846 + $0x34] sm:$0xf] %vm3352, %v6789
      %6855 = vst.msk [vmem:[%s6846 + $0x40] sm:$0xf] %vm3352, %v6790
      %6856 = vst.msk [vmem:[%s6846 + $0x44] sm:$0xf] %vm3352, %v6791
      %6857 = vst.msk [vmem:[%s6846 + $0x50] sm:$0xf] %vm3352, %v6792
      %6858 = vst.msk [vmem:[%s6846 + $0x54] sm:$0xf] %vm3352, %v6793
      %6859 = vst.msk [vmem:[%s6846 + $0x60] sm:$0xf] %vm3352, %v6794
      %6860 = vst.msk [vmem:[%s6846 + $0x64] sm:$0xf] %vm3352, %v6795
      %6861 = vst.msk [vmem:[%s6846 + $0x70] sm:$0xf] %vm3352, %v6796
      %6862 = vst.msk [vmem:[%s6846 + $0x74] sm:$0xf] %vm3352, %v6797
      %6863 = vst.msk [vmem:[%s6846 + $0x80] sm:$0xf] %vm3352, %v6798
      %6864 = vst.msk [vmem:[%s6846 + $0x84] sm:$0xf] %vm3352, %v6799
      %6865 = vst.msk [vmem:[%s6846 + $0x90] sm:$0xf] %vm3352, %v6800
      %6866 = vst.msk [vmem:[%s6846 + $0x94] sm:$0xf] %vm3352, %v6801
      %6867 = vst.msk [vmem:[%s6846 + $0xa0] sm:$0xf] %vm3352, %v6802
      %6868 = vst.msk [vmem:[%s6846 + $0xa4] sm:$0xf] %vm3352, %v6803
      %6869 = vst.msk [vmem:[%s6846 + $0xb0] sm:$0xf] %vm3352, %v6804
      %6870 = vst.msk [vmem:[%s6846 + $0xb4] sm:$0xf] %vm3352, %v6805
      %6871 = vst.msk [vmem:[%s6846 + $0xc0] sm:$0xf] %vm3352, %v6806
      %6872 = vst.msk [vmem:[%s6846 + $0xc4] sm:$0xf] %vm3352, %v6807
      %6873 = vst.msk [vmem:[%s6846 + $0xd0] sm:$0xf] %vm3352, %v6808
      %6874 = vst.msk [vmem:[%s6846 + $0xd4] sm:$0xf] %vm3352, %v6809
      %6875 = vst.msk [vmem:[%s6846 + $0xe0] sm:$0xf] %vm3352, %v6810
      %6876 = vst.msk [vmem:[%s6846 + $0xe4] sm:$0xf] %vm3352, %v6811
      %6877 = vst.msk [vmem:[%s6846 + $0xf0] sm:$0xf] %vm3352, %v6812
      %6878 = vst.msk [vmem:[%s6846 + $0xf4] sm:$0xf] %vm3352, %v6813
      %v6879 = vsel %vm3418, %v6686, 0.0
      %v6880 = vsel %vm3419, %v6687, 0.0
      %v6881 = vsel %vm3420, %v6688, 0.0
      %v6882 = vsel %vm3421, %v6689, 0.0
      %v6883 = vsel %vm3422, %v6690, 0.0
      %v6884 = vsel %vm3423, %v6691, 0.0
      %v6885 = vsel %vm3424, %v6692, 0.0
      %v6886 = vsel %vm3425, %v6693, 0.0
      %v6887 = vsel %vm3426, %v6694, 0.0
      %v6888 = vsel %vm3427, %v6695, 0.0
      %v6889 = vsel %vm3428, %v6696, 0.0
      %v6890 = vsel %vm3429, %v6697, 0.0
      %v6891 = vsel %vm3430, %v6698, 0.0
      %v6892 = vsel %vm3431, %v6699, 0.0
      %v6893 = vsel %vm3432, %v6700, 0.0
      %v6894 = vsel %vm3433, %v6701, 0.0
      %v6895 = vsel %vm3434, %v6702, 0.0
      %v6896 = vsel %vm3435, %v6703, 0.0
      %v6897 = vsel %vm3436, %v6704, 0.0
      %v6898 = vsel %vm3437, %v6705, 0.0
      %v6899 = vsel %vm3438, %v6706, 0.0
      %v6900 = vsel %vm3439, %v6707, 0.0
      %v6901 = vsel %vm3440, %v6708, 0.0
      %v6902 = vsel %vm3441, %v6709, 0.0
      %v6903 = vsel %vm3442, %v6710, 0.0
      %v6904 = vsel %vm3443, %v6711, 0.0
      %v6905 = vsel %vm3444, %v6712, 0.0
      %v6906 = vsel %vm3445, %v6713, 0.0
      %v6907 = vsel %vm3446, %v6714, 0.0
      %v6908 = vsel %vm3447, %v6715, 0.0
      %v6909 = vsel %vm3448, %v6716, 0.0
      %v6910 = vsel %vm3449, %v6717, 0.0
      %v6911 = vsel %vm3482, %v6879, 0.0
      %v6912 = vsel %vm3482, %v6880, 0.0
      %v6913 = vadd.f32 %v6911, %v6912
      %v6914 = vsel %vm3482, %v6881, 0.0
      %v6915 = vadd.f32 %v6913, %v6914
      %v6916 = vsel %vm3482, %v6882, 0.0
      %v6917 = vadd.f32 %v6915, %v6916
      %v6918 = vsel %vm3482, %v6883, 0.0
      %v6919 = vadd.f32 %v6917, %v6918
      %v6920 = vsel %vm3482, %v6884, 0.0
      %v6921 = vadd.f32 %v6919, %v6920
      %v6922 = vsel %vm3482, %v6885, 0.0
      %v6923 = vadd.f32 %v6921, %v6922
      %v6924 = vsel %vm3482, %v6886, 0.0
      %v6925 = vadd.f32 %v6923, %v6924
      %v6926 = vsel %vm3482, %v6887, 0.0
      %v6927 = vadd.f32 %v6925, %v6926
      %v6928 = vsel %vm3482, %v6888, 0.0
      %v6929 = vadd.f32 %v6927, %v6928
      %v6930 = vsel %vm3482, %v6889, 0.0
      %v6931 = vadd.f32 %v6929, %v6930
      %v6932 = vsel %vm3482, %v6890, 0.0
      %v6933 = vadd.f32 %v6931, %v6932
      %v6934 = vsel %vm3482, %v6891, 0.0
      %v6935 = vadd.f32 %v6933, %v6934
      %v6936 = vsel %vm3482, %v6892, 0.0
      %v6937 = vadd.f32 %v6935, %v6936
      %v6938 = vsel %vm3482, %v6893, 0.0
      %v6939 = vadd.f32 %v6937, %v6938
      %v6940 = vsel %vm3482, %v6894, 0.0
      %v6941 = vadd.f32 %v6939, %v6940
      %v6942 = vsel %vm3482, %v6895, 0.0
      %v6943 = vadd.f32 %v6941, %v6942
      %v6944 = vsel %vm3482, %v6896, 0.0
      %v6945 = vadd.f32 %v6943, %v6944
      %v6946 = vsel %vm3482, %v6897, 0.0
      %v6947 = vadd.f32 %v6945, %v6946
      %v6948 = vsel %vm3482, %v6898, 0.0
      %v6949 = vadd.f32 %v6947, %v6948
      %v6950 = vsel %vm3482, %v6899, 0.0
      %v6951 = vadd.f32 %v6949, %v6950
      %v6952 = vsel %vm3482, %v6900, 0.0
      %v6953 = vadd.f32 %v6951, %v6952
      %v6954 = vsel %vm3482, %v6901, 0.0
      %v6955 = vadd.f32 %v6953, %v6954
      %v6956 = vsel %vm3482, %v6902, 0.0
      %v6957 = vadd.f32 %v6955, %v6956
      %v6958 = vsel %vm3482, %v6903, 0.0
      %v6959 = vadd.f32 %v6957, %v6958
      %v6960 = vsel %vm3482, %v6904, 0.0
      %v6961 = vadd.f32 %v6959, %v6960
      %v6962 = vsel %vm3482, %v6905, 0.0
      %v6963 = vadd.f32 %v6961, %v6962
      %v6964 = vsel %vm3482, %v6906, 0.0
      %v6965 = vadd.f32 %v6963, %v6964
      %v6966 = vsel %vm3482, %v6907, 0.0
      %v6967 = vadd.f32 %v6965, %v6966
      %v6968 = vsel %vm3482, %v6908, 0.0
      %v6969 = vadd.f32 %v6967, %v6968
      %v6970 = vsel %vm3482, %v6909, 0.0
      %v6971 = vadd.f32 %v6969, %v6970
      %v6972 = vsel %vm3482, %v6910, 0.0
      %v6973 = vadd.f32 %v6971, %v6972
      %v6974 = vrot.slane %v6973, 4
      %v6975 = vadd.f32 %v6973, %v6974
      %v6976 = vrot.slane %v6975, 2
      %v6977 = vadd.f32 %v6975, %v6976
      %v6978 = vrot.slane %v6977, 1
      %v6979 = vadd.f32 %v6977, %v6978
      %v6980 = vmul.f32 %v6979, 0.00390625
      %v6981 = vsub.f32 %v6686, %v6980
      %v6982 = vsub.f32 %v6687, %v6980
      %v6983 = vsub.f32 %v6688, %v6980
      %v6984 = vsub.f32 %v6689, %v6980
      %v6985 = vsub.f32 %v6690, %v6980
      %v6986 = vsub.f32 %v6691, %v6980
      %v6987 = vsub.f32 %v6692, %v6980
      %v6988 = vsub.f32 %v6693, %v6980
      %v6989 = vsub.f32 %v6694, %v6980
      %v6990 = vsub.f32 %v6695, %v6980
      %v6991 = vsub.f32 %v6696, %v6980
      %v6992 = vsub.f32 %v6697, %v6980
      %v6993 = vsub.f32 %v6698, %v6980
      %v6994 = vsub.f32 %v6699, %v6980
      %v6995 = vsub.f32 %v6700, %v6980
      %v6996 = vsub.f32 %v6701, %v6980
      %v6997 = vsub.f32 %v6702, %v6980
      %v6998 = vsub.f32 %v6703, %v6980
      %v6999 = vsub.f32 %v6704, %v6980
      %v7000 = vsub.f32 %v6705, %v6980
      %v7001 = vsub.f32 %v6706, %v6980
      %v7002 = vsub.f32 %v6707, %v6980
      %v7003 = vsub.f32 %v6708, %v6980
      %v7004 = vsub.f32 %v6709, %v6980
      %v7005 = vsub.f32 %v6710, %v6980
      %v7006 = vsub.f32 %v6711, %v6980
      %v7007 = vsub.f32 %v6712, %v6980
      %v7008 = vsub.f32 %v6713, %v6980
      %v7009 = vsub.f32 %v6714, %v6980
      %v7010 = vsub.f32 %v6715, %v6980
      %v7011 = vsub.f32 %v6716, %v6980
      %v7012 = vsub.f32 %v6717, %v6980
      %v7013 = vsel %vm3418, %v6981, 0.0
      %v7014 = vsel %vm3419, %v6982, 0.0
      %v7015 = vsel %vm3420, %v6983, 0.0
      %v7016 = vsel %vm3421, %v6984, 0.0
      %v7017 = vsel %vm3422, %v6985, 0.0
      %v7018 = vsel %vm3423, %v6986, 0.0
      %v7019 = vsel %vm3424, %v6987, 0.0
      %v7020 = vsel %vm3425, %v6988, 0.0
      %v7021 = vsel %vm3426, %v6989, 0.0
      %v7022 = vsel %vm3427, %v6990, 0.0
      %v7023 = vsel %vm3428, %v6991, 0.0
      %v7024 = vsel %vm3429, %v6992, 0.0
      %v7025 = vsel %vm3430, %v6993, 0.0
      %v7026 = vsel %vm3431, %v6994, 0.0
      %v7027 = vsel %vm3432, %v6995, 0.0
      %v7028 = vsel %vm3433, %v6996, 0.0
      %v7029 = vsel %vm3434, %v6997, 0.0
      %v7030 = vsel %vm3435, %v6998, 0.0
      %v7031 = vsel %vm3436, %v6999, 0.0
      %v7032 = vsel %vm3437, %v7000, 0.0
      %v7033 = vsel %vm3438, %v7001, 0.0
      %v7034 = vsel %vm3439, %v7002, 0.0
      %v7035 = vsel %vm3440, %v7003, 0.0
      %v7036 = vsel %vm3441, %v7004, 0.0
      %v7037 = vsel %vm3442, %v7005, 0.0
      %v7038 = vsel %vm3443, %v7006, 0.0
      %v7039 = vsel %vm3444, %v7007, 0.0
      %v7040 = vsel %vm3445, %v7008, 0.0
      %v7041 = vsel %vm3446, %v7009, 0.0
      %v7042 = vsel %vm3447, %v7010, 0.0
      %v7043 = vsel %vm3448, %v7011, 0.0
      %v7044 = vsel %vm3449, %v7012, 0.0
      %7045 = vst.msk [vmem:[%s214 + $0x1] sm:$0x1] %vm3617, %v6979
      %v7046 = vmul.f32 %v7013, %v7013
      %v7047 = vmul.f32 %v7014, %v7014
      %v7048 = vmul.f32 %v7015, %v7015
      %v7049 = vmul.f32 %v7016, %v7016
      %v7050 = vmul.f32 %v7017, %v7017
      %v7051 = vmul.f32 %v7018, %v7018
      %v7052 = vmul.f32 %v7019, %v7019
      %v7053 = vmul.f32 %v7020, %v7020
      %v7054 = vmul.f32 %v7021, %v7021
      %v7055 = vmul.f32 %v7022, %v7022
      %v7056 = vmul.f32 %v7023, %v7023
      %v7057 = vmul.f32 %v7024, %v7024
      %v7058 = vmul.f32 %v7025, %v7025
      %v7059 = vmul.f32 %v7026, %v7026
      %v7060 = vmul.f32 %v7027, %v7027
      %v7061 = vmul.f32 %v7028, %v7028
      %v7062 = vmul.f32 %v7029, %v7029
      %v7063 = vmul.f32 %v7030, %v7030
      %v7064 = vmul.f32 %v7031, %v7031
      %v7065 = vmul.f32 %v7032, %v7032
      %v7066 = vmul.f32 %v7033, %v7033
      %v7067 = vmul.f32 %v7034, %v7034
      %v7068 = vmul.f32 %v7035, %v7035
      %v7069 = vmul.f32 %v7036, %v7036
      %v7070 = vmul.f32 %v7037, %v7037
      %v7071 = vmul.f32 %v7038, %v7038
      %v7072 = vmul.f32 %v7039, %v7039
      %v7073 = vmul.f32 %v7040, %v7040
      %v7074 = vmul.f32 %v7041, %v7041
      %v7075 = vmul.f32 %v7042, %v7042
      %v7076 = vmul.f32 %v7043, %v7043
      %v7077 = vmul.f32 %v7044, %v7044
      %v7078 = vsel %vm3482, %v7046, 0.0
      %v7079 = vsel %vm3482, %v7047, 0.0
      %v7080 = vadd.f32 %v7078, %v7079
      %v7081 = vsel %vm3482, %v7048, 0.0
      %v7082 = vadd.f32 %v7080, %v7081
      %v7083 = vsel %vm3482, %v7049, 0.0
      %v7084 = vadd.f32 %v7082, %v7083
      %v7085 = vsel %vm3482, %v7050, 0.0
      %v7086 = vadd.f32 %v7084, %v7085
      %v7087 = vsel %vm3482, %v7051, 0.0
      %v7088 = vadd.f32 %v7086, %v7087
      %v7089 = vsel %vm3482, %v7052, 0.0
      %v7090 = vadd.f32 %v7088, %v7089
      %v7091 = vsel %vm3482, %v7053, 0.0
      %v7092 = vadd.f32 %v7090, %v7091
      %v7093 = vsel %vm3482, %v7054, 0.0
      %v7094 = vadd.f32 %v7092, %v7093
      %v7095 = vsel %vm3482, %v7055, 0.0
      %v7096 = vadd.f32 %v7094, %v7095
      %v7097 = vsel %vm3482, %v7056, 0.0
      %v7098 = vadd.f32 %v7096, %v7097
      %v7099 = vsel %vm3482, %v7057, 0.0
      %v7100 = vadd.f32 %v7098, %v7099
      %v7101 = vsel %vm3482, %v7058, 0.0
      %v7102 = vadd.f32 %v7100, %v7101
      %v7103 = vsel %vm3482, %v7059, 0.0
      %v7104 = vadd.f32 %v7102, %v7103
      %v7105 = vsel %vm3482, %v7060, 0.0
      %v7106 = vadd.f32 %v7104, %v7105
      %v7107 = vsel %vm3482, %v7061, 0.0
      %v7108 = vadd.f32 %v7106, %v7107
      %v7109 = vsel %vm3482, %v7062, 0.0
      %v7110 = vadd.f32 %v7108, %v7109
      %v7111 = vsel %vm3482, %v7063, 0.0
      %v7112 = vadd.f32 %v7110, %v7111
      %v7113 = vsel %vm3482, %v7064, 0.0
      %v7114 = vadd.f32 %v7112, %v7113
      %v7115 = vsel %vm3482, %v7065, 0.0
      %v7116 = vadd.f32 %v7114, %v7115
      %v7117 = vsel %vm3482, %v7066, 0.0
      %v7118 = vadd.f32 %v7116, %v7117
      %v7119 = vsel %vm3482, %v7067, 0.0
      %v7120 = vadd.f32 %v7118, %v7119
      %v7121 = vsel %vm3482, %v7068, 0.0
      %v7122 = vadd.f32 %v7120, %v7121
      %v7123 = vsel %vm3482, %v7069, 0.0
      %v7124 = vadd.f32 %v7122, %v7123
      %v7125 = vsel %vm3482, %v7070, 0.0
      %v7126 = vadd.f32 %v7124, %v7125
      %v7127 = vsel %vm3482, %v7071, 0.0
      %v7128 = vadd.f32 %v7126, %v7127
      %v7129 = vsel %vm3482, %v7072, 0.0
      %v7130 = vadd.f32 %v7128, %v7129
      %v7131 = vsel %vm3482, %v7073, 0.0
      %v7132 = vadd.f32 %v7130, %v7131
      %v7133 = vsel %vm3482, %v7074, 0.0
      %v7134 = vadd.f32 %v7132, %v7133
      %v7135 = vsel %vm3482, %v7075, 0.0
      %v7136 = vadd.f32 %v7134, %v7135
      %v7137 = vsel %vm3482, %v7076, 0.0
      %v7138 = vadd.f32 %v7136, %v7137
      %v7139 = vsel %vm3482, %v7077, 0.0
      %v7140 = vadd.f32 %v7138, %v7139
      %v7141 = vrot.slane %v7140, 4
      %v7142 = vadd.f32 %v7140, %v7141
      %v7143 = vrot.slane %v7142, 2
      %v7144 = vadd.f32 %v7142, %v7143
      %v7145 = vrot.slane %v7144, 1
      %v7146 = vadd.f32 %v7144, %v7145
      %7147 = vst.msk [vmem:[%s218 + $0x1] sm:$0x1] %vm3617, %v7146
      %p7148 = scmp.lt.s32.totalorder %s16, 1
      %s7149 = scalar_select %p7148, %s16, 1
      %s7150 = smul.addr %s7149, 64
      %s7151 = smul.addr %s7150, 4
      %s7152 = scalar_lea.vmem %s2, %s7151
      %p7153 = scmp.lt.s32.totalorder %s16, 1
      %s7154 = scalar_select %p7153, %s16, 1
      %s7155 = smul.addr %s7154, 2
      %s7156 = scalar_lea.vmem %s3, %s7155
      %p7157 = scmp.lt.s32.totalorder %s16, 1
      %s7158 = scalar_select %p7157, %s16, 1
      %s7159 = smul.addr %s7158, 2
      %s7160 = scalar_lea.vmem %s4, %s7159
      // Predicated region
      $region29: #{_lambda_.2} parent=27 // pred_check
        %p7161 = pneg %p81
      $region30: #{_lambda_.2} parent=27 // pred_check_branch
        %7163 = sbr.rel (%p7161) target = $region32
      $region31: #{_lambda_.2} parent=27 // pred_region
        _
      $region32: #{_lambda_.2} parent=27 // pred_fallthru
        _
      // Predicated region
      $region33: #{_lambda_.2} parent=27 // pred_check
        %p7164 = pneg %p107
      $region34: #{_lambda_.2} parent=27 // pred_check_branch
        %7166 = sbr.rel (%p7164) target = $region36
      $region35: #{_lambda_.2} parent=27 // pred_region
        _
      $region36: #{_lambda_.2} parent=27 // pred_fallthru
        _
      // Predicated region
      $region37: #{_lambda_.2} parent=27 // pred_check
        %p7167 = pneg %p133
      $region38: #{_lambda_.2} parent=27 // pred_check_branch
        %7169 = sbr.rel (%p7167) target = $region40
      $region39: #{_lambda_.2} parent=27 // pred_region
        _
      $region40: #{_lambda_.2} parent=27 // pred_fallthru
        _
    $region28: #{_lambda_.2} parent=5 // pred_fallthru
      _
    %p7170 = scmp.le.s32.totalorder 2, %s11
    // Predicated region
    $region41: #{_lambda_.2} parent=5 // pred_check
      %p7171 = pneg %p7170
    $region42: #{_lambda_.2} parent=5 // pred_check_branch
      %7173 = sbr.rel (%p7171) target = $region44
    $region43: #{_lambda_.2} parent=5 // pred_region
      %s7174 = ssub.s32 %s11, 2
      // Predicated region
      $region45: #{_lambda_.2} parent=43 // pred_check
        %p7175 = pneg %p87
      $region46: #{_lambda_.2} parent=43 // pred_check_branch
        %7177 = sbr.rel (%p7175) target = $region48
      $region47: #{_lambda_.2} parent=43 // pred_region
        %p7178 = scmp.lt.s32.totalorder %s17, 1
        %s7179 = scalar_select %p7178, %s17, 1
        %s7180 = smul.addr %s7179, 64
        %s7181 = smul.addr %s7180, 4
        %s7182 = scalar_lea.vmem %s2, %s7181
      $region48: #{_lambda_.2} parent=43 // pred_fallthru
        _
      // Predicated region
      $region49: #{_lambda_.2} parent=43 // pred_check
        %p7183 = pneg %p113
      $region50: #{_lambda_.2} parent=43 // pred_check_branch
        %7185 = sbr.rel (%p7183) target = $region52
      $region51: #{_lambda_.2} parent=43 // pred_region
        %p7186 = scmp.lt.s32.totalorder %s17, 1
        %s7187 = scalar_select %p7186, %s17, 1
        %s7188 = smul.addr %s7187, 2
        %s7189 = scalar_lea.vmem %s3, %s7188
      $region52: #{_lambda_.2} parent=43 // pred_fallthru
        _
      // Predicated region
      $region53: #{_lambda_.2} parent=43 // pred_check
        %p7190 = pneg %p139
      $region54: #{_lambda_.2} parent=43 // pred_check_branch
        %7192 = sbr.rel (%p7190) target = $region56
      $region55: #{_lambda_.2} parent=43 // pred_region
        %p7193 = scmp.lt.s32.totalorder %s17, 1
        %s7194 = scalar_select %p7193, %s17, 1
        %s7195 = smul.addr %s7194, 2
        %s7196 = scalar_lea.vmem %s4, %s7195
      $region56: #{_lambda_.2} parent=43 // pred_fallthru
        _
    $region44: #{_lambda_.2} parent=5 // pred_fallthru
      _
  $region6: #{_lambda_.2} parent=0 // loop_footer
    %s15 = sadd.s32 1, %s11
  $region7: #{_lambda_.2} parent=0 // loop_footer_branch
    %10 = sbr.rel target = $region3
  $region8: #{_lambda_.2} parent=0 // loop_exit
    _

</llo_original>
